<compile_context>
chip_gen: v6e
topology: v6e:2x2x1
jax: 0.10.0
libtpu: 0.0.40
codegen_flags: <defaults>
</compile_context>

<pallas_src>
import jax
import jax.numpy as jnp
from jax.experimental import pallas as pl
from jax.experimental.pallas import tpu as pltpu

CHANNELS = 1
IMG_SIZE = 150
LATENT_DIM = 60
HIDDEN = 512
OUT_DIM = CHANNELS * IMG_SIZE * IMG_SIZE      # 22500
TILE_N = 5632                                 # 44 * 128 lanes; 4 grid steps
EPS = 1e-5
SLOPE = 0.2                                   # LeakyReLU negative slope
VMEM_LIMIT_BYTES = 32 * 1024 * 1024


def _dim_semantics():
    """CORE_PARALLEL on v7x (2 TCs/chip) to shard the W3 stream; else parallel."""
    kind = ""
    try:
        kind = jax.devices()[0].device_kind.lower()
    except Exception:
        pass
    if "7" in kind:
        cp = getattr(pltpu, "CORE_PARALLEL", None)
        if cp is not None:
            return (cp,)
    return ("parallel",)


def decoder_kernel(z_ref, w1_ref, b1_ref, w2_ref, b2_ref, g_ref, beta_ref,
                   w3_ref, b3_ref, out_ref):
    """Grid axis j tiles the output dim of the final (512 x ~22.5K) linear.

    The small front network (~2 MFLOP) is recomputed every grid step so each
    step is fully independent (core-parallel on v7x); it hides under the
    ~5.8 MB contiguous W3 tile DMA.
    """
    # ---- front network (tiny, recomputed per step) ----
    z = z_ref[...].astype(jnp.float32)
    # Linear(60 -> 512) + LeakyReLU(0.2)
    h = jnp.dot(z, w1_ref[...], preferred_element_type=jnp.float32) + b1_ref[...]
    h = jnp.where(h > 0, h, SLOPE * h)
    # Linear(512 -> 512)
    h = jnp.dot(h, w2_ref[...], preferred_element_type=jnp.float32) + b2_ref[...]
    # BatchNorm1d(512) — PyTorch train-mode forward: batch stats, biased var.
    mean = jnp.mean(h, axis=0, keepdims=True)
    var = jnp.mean((h - mean) ** 2, axis=0, keepdims=True)
    h = g_ref[...] * (h - mean) * jax.lax.rsqrt(var + EPS) + beta_ref[...]
    # LeakyReLU(0.2)
    h = jnp.where(h > 0, h, SLOPE * h)

    # ---- HBM-bound tail: one pre-tiled W3 block (bf16) + Tanh ----
    acc = jnp.dot(h.astype(jnp.bfloat16), w3_ref[...],
                  preferred_element_type=jnp.float32)
    out_ref[...] = jnp.tanh(acc + b3_ref[...])


def prepare_params(params, tile_n=TILE_N):
    """One-time prepack (outside the per-call hot path).

    W3 -> bf16, zero-padded to grid_n*tile_n columns, and re-laid-out as a
    contiguous (grid_n, HIDDEN, tile_n) slab so each grid step is a single
    contiguous DMA.  b3 is padded/tiled alongside.  Biases/affine -> (1, N).
    """
    w1, b1, w2, b2, gamma, beta, w3, b3 = params
    grid_n = pl.cdiv(OUT_DIM, tile_n)
    n_pad = grid_n * tile_n

    w3_bf16 = w3.astype(jnp.bfloat16)
    w3p = jnp.zeros((HIDDEN, n_pad), jnp.bfloat16).at[:, :OUT_DIM].set(w3_bf16)
    w3t = jnp.transpose(w3p.reshape(HIDDEN, grid_n, tile_n), (1, 0, 2))

    b3p = jnp.zeros((n_pad,), jnp.float32).at[:OUT_DIM].set(b3)
    b3t = b3p.reshape(grid_n, 1, tile_n)

    return (w1,
            b1.reshape(1, -1),
            w2,
            b2.reshape(1, -1),
            gamma.reshape(1, -1),
            beta.reshape(1, -1),
            w3t,
            b3t)


@jax.jit
def decoder_forward(z, kparams):
    w1, b1, w2, b2, gamma, beta, w3t, b3t = kparams
    B = z.shape[0]
    grid_n, _, tile_n = w3t.shape

    cost = pl.CostEstimate(
        flops=int(2 * B * HIDDEN * grid_n * tile_n
                  + grid_n * 2 * B * (LATENT_DIM * HIDDEN + HIDDEN * HIDDEN)),
        transcendentals=int(B * grid_n * tile_n),
        bytes_accessed=int(grid_n * HIDDEN * tile_n * 2   # bf16 W3 stream
                           + B * OUT_DIM * 4              # f32 output
                           + HIDDEN * HIDDEN * 4),        # resident W2
    )

    out = pl.pallas_call(
        decoder_kernel,
        out_shape=jax.ShapeDtypeStruct((B, OUT_DIM), jnp.float32),
        grid_spec=pltpu.PrefetchScalarGridSpec(
            num_scalar_prefetch=0,
            grid=(grid_n,),
            in_specs=[
                pl.BlockSpec((B, LATENT_DIM), lambda j: (0, 0)),       # z
                pl.BlockSpec((LATENT_DIM, HIDDEN), lambda j: (0, 0)),  # W1
                pl.BlockSpec((1, HIDDEN), lambda j: (0, 0)),           # b1
                pl.BlockSpec((HIDDEN, HIDDEN), lambda j: (0, 0)),      # W2
                pl.BlockSpec((1, HIDDEN), lambda j: (0, 0)),           # b2
                pl.BlockSpec((1, HIDDEN), lambda j: (0, 0)),           # gamma
                pl.BlockSpec((1, HIDDEN), lambda j: (0, 0)),           # beta
                pl.BlockSpec((pl.Squeezed(), HIDDEN, tile_n),
                             lambda j: (j, 0, 0)),                     # W3 tile
                pl.BlockSpec((pl.Squeezed(), 1, tile_n),
                             lambda j: (j, 0, 0)),                     # b3 tile
            ],
            out_specs=pl.BlockSpec((B, tile_n), lambda j: (0, j)),
        ),
        compiler_params=pltpu.CompilerParams(
            dimension_semantics=_dim_semantics(),
            vmem_limit_bytes=VMEM_LIMIT_BYTES),
        cost_estimate=cost,
    )(z, w1, b1, w2, b2, gamma, beta, w3t, b3t)

    return out.reshape(B, CHANNELS, IMG_SIZE, IMG_SIZE)


def init_params(key):
    """Deterministic synthetic init (PyTorch-Linear-style uniform bounds)."""
    k1, k2, k3 = jax.random.split(key, 3)

    def lin(k, fan_in, fan_out):
        bound = 1.0 / jnp.sqrt(jnp.float32(fan_in))
        kw, kb = jax.random.split(k)
        w = jax.random.uniform(kw, (fan_in, fan_out), jnp.float32, -bound, bound)
        b = jax.random.uniform(kb, (fan_out,), jnp.float32, -bound, bound)
        return w, b

    w1, b1 = lin(k1, LATENT_DIM, HIDDEN)
    w2, b2 = lin(k2, HIDDEN, HIDDEN)
    w3, b3 = lin(k3, HIDDEN, OUT_DIM)
    gamma = jnp.ones((HIDDEN,), jnp.float32)
    beta = jnp.zeros((HIDDEN,), jnp.float32)
    return (w1, b1, w2, b2, gamma, beta, w3, b3)


def decoder_ref(z, params):
    """Pure-JAX f32 reference (module semantics) for correctness checking."""
    w1, b1, w2, b2, gamma, beta, w3, b3 = params
    hi = jax.lax.Precision.HIGHEST
    h = jnp.dot(z, w1, precision=hi) + b1
    h = jnp.where(h > 0, h, SLOPE * h)
    h = jnp.dot(h, w2, precision=hi) + b2
    mean = jnp.mean(h, axis=0, keepdims=True)
    var = jnp.mean((h - mean) ** 2, axis=0, keepdims=True)
    h = gamma * (h - mean) * jax.lax.rsqrt(var + EPS) + beta
    h = jnp.where(h > 0, h, SLOPE * h)
    img_flat = jnp.tanh(jnp.dot(h, w3, precision=hi) + b3)
    return img_flat.reshape(z.shape[0], CHANNELS, IMG_SIZE, IMG_SIZE)


if __name__ == "__main__":
    key = jax.random.PRNGKey(0)
    kz, kp = jax.random.split(key)

    B = 4  # small batch; block batch dim == full array dim (required by spec)
    z = jax.random.normal(kz, (B, LATENT_DIM), jnp.float32)
    params = init_params(kp)
    kparams = jax.tree_util.tree_map(
        jax.block_until_ready, prepare_params(params))  # one-time prepack

    img = jax.block_until_ready(decoder_forward(z, kparams))
    assert img.shape == (B, CHANNELS, IMG_SIZE, IMG_SIZE), img.shape

    ref = decoder_ref(z, params)
    # Tolerance absorbs the intentional bf16 quantization of W3 / the bf16
    # MXU inputs on the final matmul (observed max error ~3e-3).
    err = float(jnp.max(jnp.abs(img - ref)))
    assert err < 1e-2, err

    print("KERNEL_OK")
</pallas_src>

<mosaic_0001>
module attributes {stable_mosaic.version = 11 : i64} {
  func.func @decoder_kernel(%arg0: i32, %arg1: memref<4x60xf32, #tpu.memory_space<vmem>>, %arg2: memref<60x512xf32, #tpu.memory_space<vmem>>, %arg3: memref<1x512xf32, #tpu.memory_space<vmem>>, %arg4: memref<512x512xf32, #tpu.memory_space<vmem>>, %arg5: memref<1x512xf32, #tpu.memory_space<vmem>>, %arg6: memref<1x512xf32, #tpu.memory_space<vmem>>, %arg7: memref<1x512xf32, #tpu.memory_space<vmem>>, %arg8: memref<1x512x5632xbf16, #tpu.memory_space<vmem>>, %arg9: memref<1x1x5632xf32, #tpu.memory_space<vmem>>, %arg10: memref<4x5632xf32, #tpu.memory_space<vmem>>) attributes {dimension_semantics = [#tpu.dimension_semantics<parallel>], iteration_bounds = array<i64: 4>, scalar_prefetch = 0 : i64, scratch_operands = 0 : i64, tpu.core_type = #tpu.core_type<tc>, window_params = [{pipeline_mode = #tpu.pipeline_mode<synchronous>, transform_indices = @transform_0, window_bounds = array<i64: 4, 60>}, {pipeline_mode = #tpu.pipeline_mode<synchronous>, transform_indices = @transform_1, window_bounds = array<i64: 60, 512>}, {pipeline_mode = #tpu.pipeline_mode<synchronous>, transform_indices = @transform_2, window_bounds = array<i64: 1, 512>}, {pipeline_mode = #tpu.pipeline_mode<synchronous>, transform_indices = @transform_3, window_bounds = array<i64: 512, 512>}, {pipeline_mode = #tpu.pipeline_mode<synchronous>, transform_indices = @transform_4, window_bounds = array<i64: 1, 512>}, {pipeline_mode = #tpu.pipeline_mode<synchronous>, transform_indices = @transform_5, window_bounds = array<i64: 1, 512>}, {pipeline_mode = #tpu.pipeline_mode<synchronous>, transform_indices = @transform_6, window_bounds = array<i64: 1, 512>}, {transform_indices = @transform_7, window_bounds = array<i64: 1, 512, 5632>}, {transform_indices = @transform_8, window_bounds = array<i64: 1, 1, 5632>}, {transform_indices = @transform_9, window_bounds = array<i64: 4, 5632>}]} {
    %c0 = arith.constant 0 : index
    %c0_0 = arith.constant 0 : index
    %0 = vector.load %arg1[%c0, %c0_0] : memref<4x60xf32, #tpu.memory_space<vmem>>, vector<4x60xf32>
    %c0_1 = arith.constant 0 : index
    %c0_2 = arith.constant 0 : index
    %1 = vector.load %arg2[%c0_1, %c0_2] : memref<60x512xf32, #tpu.memory_space<vmem>>, vector<60x512xf32>
    %cst = arith.constant dense<0.000000e+00> : vector<4x512xf32>
    %2 = tpu.matmul %0, %1, %cst {dimension_numbers = #tpu.dot_dimension_numbers<[1], [0], [0], [1], [0, 0, 1, 1], [], []>} : vector<4x60xf32>, vector<60x512xf32>, vector<4x512xf32> -> vector<4x512xf32>
    %c0_3 = arith.constant 0 : index
    %c0_4 = arith.constant 0 : index
    %3 = vector.load %arg3[%c0_3, %c0_4] : memref<1x512xf32, #tpu.memory_space<vmem>>, vector<1x512xf32>
    %4 = vector.broadcast %3 : vector<1x512xf32> to vector<4x512xf32>
    %5 = arith.addf %2, %4 : vector<4x512xf32>
    %cst_5 = arith.constant 0.000000e+00 : f32
    %6 = vector.broadcast %cst_5 : f32 to vector<4x512xf32>
    %7 = arith.cmpf ogt, %5, %6 : vector<4x512xf32>
    %cst_6 = arith.constant 2.000000e-01 : f32
    %8 = vector.broadcast %cst_6 : f32 to vector<4x512xf32>
    %9 = arith.mulf %8, %5 : vector<4x512xf32>
    %10 = arith.select %7, %5, %9 : vector<4x512xi1>, vector<4x512xf32>
    %c0_7 = arith.constant 0 : index
    %c0_8 = arith.constant 0 : index
    %11 = vector.load %arg4[%c0_7, %c0_8] : memref<512x512xf32, #tpu.memory_space<vmem>>, vector<512x512xf32>
    %cst_9 = arith.constant dense<0.000000e+00> : vector<4x512xf32>
    %12 = tpu.matmul %10, %11, %cst_9 {dimension_numbers = #tpu.dot_dimension_numbers<[1], [0], [0], [1], [0, 0, 1, 1], [], []>} : vector<4x512xf32>, vector<512x512xf32>, vector<4x512xf32> -> vector<4x512xf32>
    %c0_10 = arith.constant 0 : index
    %c0_11 = arith.constant 0 : index
    %13 = vector.load %arg5[%c0_10, %c0_11] : memref<1x512xf32, #tpu.memory_space<vmem>>, vector<1x512xf32>
    %14 = vector.broadcast %13 : vector<1x512xf32> to vector<4x512xf32>
    %15 = arith.addf %12, %14 : vector<4x512xf32>
    %cst_12 = arith.constant dense<0.000000e+00> : vector<512xf32>
    %16 = vector.multi_reduction <add>, %15, %cst_12 [0] : vector<4x512xf32> to vector<512xf32>
    %17 = vector.shape_cast %16 : vector<512xf32> to vector<1x512xf32>
    %cst_13 = arith.constant 4.000000e+00 : f32
    %18 = vector.broadcast %cst_13 : f32 to vector<1x512xf32>
    %19 = arith.divf %17, %18 : vector<1x512xf32>
    %20 = vector.broadcast %19 : vector<1x512xf32> to vector<4x512xf32>
    %21 = arith.subf %15, %20 : vector<4x512xf32>
    %22 = arith.mulf %21, %21 : vector<4x512xf32>
    %cst_14 = arith.constant dense<0.000000e+00> : vector<512xf32>
    %23 = vector.multi_reduction <add>, %22, %cst_14 [0] : vector<4x512xf32> to vector<512xf32>
    %24 = vector.shape_cast %23 : vector<512xf32> to vector<1x512xf32>
    %cst_15 = arith.constant 4.000000e+00 : f32
    %25 = vector.broadcast %cst_15 : f32 to vector<1x512xf32>
    %26 = arith.divf %24, %25 : vector<1x512xf32>
    %c0_16 = arith.constant 0 : index
    %c0_17 = arith.constant 0 : index
    %27 = vector.load %arg6[%c0_16, %c0_17] : memref<1x512xf32, #tpu.memory_space<vmem>>, vector<1x512xf32>
    %28 = vector.broadcast %19 : vector<1x512xf32> to vector<4x512xf32>
    %29 = arith.subf %15, %28 : vector<4x512xf32>
    %30 = vector.broadcast %27 : vector<1x512xf32> to vector<4x512xf32>
    %31 = arith.mulf %30, %29 : vector<4x512xf32>
    %cst_18 = arith.constant 9.99999974E-6 : f32
    %32 = vector.broadcast %cst_18 : f32 to vector<1x512xf32>
    %33 = arith.addf %26, %32 : vector<1x512xf32>
    %34 = math.rsqrt %33 : vector<1x512xf32>
    %35 = vector.broadcast %34 : vector<1x512xf32> to vector<4x512xf32>
    %36 = arith.mulf %31, %35 : vector<4x512xf32>
    %c0_19 = arith.constant 0 : index
    %c0_20 = arith.constant 0 : index
    %37 = vector.load %arg7[%c0_19, %c0_20] : memref<1x512xf32, #tpu.memory_space<vmem>>, vector<1x512xf32>
    %38 = vector.broadcast %37 : vector<1x512xf32> to vector<4x512xf32>
    %39 = arith.addf %36, %38 : vector<4x512xf32>
    %cst_21 = arith.constant 0.000000e+00 : f32
    %40 = vector.broadcast %cst_21 : f32 to vector<4x512xf32>
    %41 = arith.cmpf ogt, %39, %40 : vector<4x512xf32>
    %cst_22 = arith.constant 2.000000e-01 : f32
    %42 = vector.broadcast %cst_22 : f32 to vector<4x512xf32>
    %43 = arith.mulf %42, %39 : vector<4x512xf32>
    %44 = arith.select %41, %39, %43 : vector<4x512xi1>, vector<4x512xf32>
    %45 = arith.truncf %44 : vector<4x512xf32> to vector<4x512xbf16>
    %c0_23 = arith.constant 0 : index
    %c0_24 = arith.constant 0 : index
    %c0_25 = arith.constant 0 : index
    %46 = vector.load %arg8[%c0_23, %c0_24, %c0_25] : memref<1x512x5632xbf16, #tpu.memory_space<vmem>>, vector<1x512x5632xbf16>
    %47 = vector.shape_cast %46 : vector<1x512x5632xbf16> to vector<512x5632xbf16>
    %cst_26 = arith.constant dense<0.000000e+00> : vector<4x5632xf32>
    %48 = tpu.matmul %45, %47, %cst_26 {dimension_numbers = #tpu.dot_dimension_numbers<[1], [0], [0], [1], [0, 0, 1, 1], [], []>} : vector<4x512xbf16>, vector<512x5632xbf16>, vector<4x5632xf32> -> vector<4x5632xf32>
    %c0_27 = arith.constant 0 : index
    %c0_28 = arith.constant 0 : index
    %c0_29 = arith.constant 0 : index
    %49 = vector.load %arg9[%c0_27, %c0_28, %c0_29] : memref<1x1x5632xf32, #tpu.memory_space<vmem>>, vector<1x1x5632xf32>
    %50 = vector.shape_cast %49 : vector<1x1x5632xf32> to vector<1x5632xf32>
    %51 = vector.broadcast %50 : vector<1x5632xf32> to vector<4x5632xf32>
    %52 = arith.addf %48, %51 : vector<4x5632xf32>
    %53 = math.tanh %52 : vector<4x5632xf32>
    %c0_30 = arith.constant 0 : index
    %c0_31 = arith.constant 0 : index
    %54 = vector.load %arg10[%c0_30, %c0_31] : memref<4x5632xf32, #tpu.memory_space<vmem>>, vector<4x5632xf32>
    tpu.vector_store %arg10[%c0_30, %c0_31], %53 {strides = array<i32>} : memref<4x5632xf32, #tpu.memory_space<vmem>>, vector<4x5632xf32>,
    return
  }
  func.func @transform_0(%arg0: i32) -> (i32, i32) {
    %c0_i32 = arith.constant 0 : i32
    %c0_i32_0 = arith.constant 0 : i32
    %c0_i32_1 = arith.constant 0 : i32
    return %c0_i32, %c0_i32_0 : i32, i32
  }
  func.func @transform_1(%arg0: i32) -> (i32, i32) {
    %c0_i32 = arith.constant 0 : i32
    %c0_i32_0 = arith.constant 0 : i32
    %c0_i32_1 = arith.constant 0 : i32
    return %c0_i32, %c0_i32_0 : i32, i32
  }
  func.func @transform_2(%arg0: i32) -> (i32, i32) {
    %c0_i32 = arith.constant 0 : i32
    %c0_i32_0 = arith.constant 0 : i32
    %c0_i32_1 = arith.constant 0 : i32
    return %c0_i32, %c0_i32_0 : i32, i32
  }
  func.func @transform_3(%arg0: i32) -> (i32, i32) {
    %c0_i32 = arith.constant 0 : i32
    %c0_i32_0 = arith.constant 0 : i32
    %c0_i32_1 = arith.constant 0 : i32
    return %c0_i32, %c0_i32_0 : i32, i32
  }
  func.func @transform_4(%arg0: i32) -> (i32, i32) {
    %c0_i32 = arith.constant 0 : i32
    %c0_i32_0 = arith.constant 0 : i32
    %c0_i32_1 = arith.constant 0 : i32
    return %c0_i32, %c0_i32_0 : i32, i32
  }
  func.func @transform_5(%arg0: i32) -> (i32, i32) {
    %c0_i32 = arith.constant 0 : i32
    %c0_i32_0 = arith.constant 0 : i32
    %c0_i32_1 = arith.constant 0 : i32
    return %c0_i32, %c0_i32_0 : i32, i32
  }
  func.func @transform_6(%arg0: i32) -> (i32, i32) {
    %c0_i32 = arith.constant 0 : i32
    %c0_i32_0 = arith.constant 0 : i32
    %c0_i32_1 = arith.constant 0 : i32
    return %c0_i32, %c0_i32_0 : i32, i32
  }
  func.func @transform_7(%arg0: i32) -> (i32, i32, i32) {
    %c0_i32 = arith.constant 0 : i32
    %c0_i32_0 = arith.constant 0 : i32
    %c0_i32_1 = arith.constant 0 : i32
    return %arg0, %c0_i32, %c0_i32_0 : i32, i32, i32
  }
  func.func @transform_8(%arg0: i32) -> (i32, i32, i32) {
    %c0_i32 = arith.constant 0 : i32
    %c0_i32_0 = arith.constant 0 : i32
    %c0_i32_1 = arith.constant 0 : i32
    return %arg0, %c0_i32, %c0_i32_0 : i32, i32, i32
  }
  func.func @transform_9(%arg0: i32) -> (i32, i32) {
    %c0_i32 = arith.constant 0 : i32
    %c0_i32_0 = arith.constant 0 : i32
    return %c0_i32, %arg0 : i32, i32
  }
}

</mosaic_0001>

<llo_original>
// kernel: decoder_forward.1
$region0: #{decoder_forward.1}
  #allocation0 [shape = 'u32[]', space=smem, size = 0x4, offset = 0x4, fixed_abs, tag = 'smem constant byte address 0x4 - core index']
  #allocation1 [shape = 'u32[144,128]{1,0:T(1,128)}', space=vmem, size = 0x12000, scoped, tag = 'internal scratch']
  %s0 = inlined_call_operand.hbm [shape: f32[4,60], index: 0, kind: input, shape index: {}]
  %s1 = inlined_call_operand.hbm [shape: f32[60,512], index: 1, kind: input, shape index: {}]
  %s2 = inlined_call_operand.hbm [shape: f32[1,512], index: 2, kind: input, shape index: {}]
  %s3 = inlined_call_operand.hbm [shape: f32[512,512], index: 3, kind: input, shape index: {}]
  %s4 = inlined_call_operand.hbm [shape: f32[1,512], index: 4, kind: input, shape index: {}]
  %s5 = inlined_call_operand.hbm [shape: f32[1,512], index: 5, kind: input, shape index: {}]
  %s6 = inlined_call_operand.hbm [shape: f32[1,512], index: 6, kind: input, shape index: {}]
  %s7 = inlined_call_operand.hbm [shape: bf16[4,512,5632], index: 7, kind: input, shape index: {}]
  %s8 = inlined_call_operand.hbm [shape: f32[4,1,5632], index: 8, kind: input, shape index: {}]
  %s9 = inlined_call_operand.vmem [shape: f32[4,22500], index: 9, kind: output, shape index: {}]
  %s10 = sld [smem:[#allocation0]]
  $region105: #{decoder_forward.1} parent=0
    _
  %s12 = ssub.s32 1, %s10
  %s13 = scalar_select 0, %s12, %s10
  $region1: #{decoder_forward.1} parent=0
    #allocation2 [shape = 'u8[2048]{0}', space=vmem, size = 0x800, scoped, tag = 'input window, operand 0, single buffered']
    #allocation3 [shape = 's32[2]{0}', space=sflag, size = 0x8, scoped, tag = 'scoped memory for decoder_forward.1']
    #allocation4 [shape = 'u8[131072]{0}', space=vmem, size = 0x20000, scoped, tag = 'input window, operand 1, single buffered']
    #allocation5 [shape = 's32[1]{0}', space=sflag, size = 0x4, scoped, tag = 'scoped memory for decoder_forward.1']
    #allocation6 [shape = 'u8[2048]{0}', space=vmem, size = 0x800, scoped, tag = 'input window, operand 2, single buffered']
    #allocation7 [shape = 'u8[1048576]{0}', space=vmem, size = 0x100000, scoped, tag = 'input window, operand 3, single buffered']
    #allocation8 [shape = 's32[1]{0}', space=sflag, size = 0x4, scoped, tag = 'scoped memory for decoder_forward.1']
    #allocation9 [shape = 'u8[2048]{0}', space=vmem, size = 0x800, scoped, tag = 'input window, operand 4, single buffered']
    #allocation10 [shape = 'u8[2048]{0}', space=vmem, size = 0x800, scoped, tag = 'input window, operand 5, single buffered']
    #allocation11 [shape = 's32[1]{0}', space=sflag, size = 0x4, scoped, tag = 'scoped memory for decoder_forward.1']
    #allocation12 [shape = 'u8[2048]{0}', space=vmem, size = 0x800, scoped, tag = 'input window, operand 6, single buffered']
    #allocation13 [shape = 'u8[11534336]{0}', space=vmem, size = 0xb00000, scoped, tag = 'input window, operand 7']
    #allocation14 [shape = 's32[2]{0}', space=sflag, size = 0x8, scoped, tag = 'scoped memory for decoder_forward.1']
    #allocation15 [shape = 'u8[45056]{0}', space=vmem, size = 0xb000, scoped, tag = 'input window, operand 8']
    %14 = vsyncpa [#allocation3], 0
    %15 = vsyncpa [#allocation5], 0
    %16 = vsyncpa [#allocation8], 0
    %17 = vsyncpa [#allocation11], 0
    %18 = vsyncpa [#allocation14], 0
    %s19 = scalar_lea.sflag [#allocation14], 1
    %20 = vsyncpa %s19, 0
    loop: start=0, step=1, limit=6
    $region2: #{decoder_forward.1} parent=1 // loop_pre_header
      _
    $region3: #{decoder_forward.1} parent=1 // loop_header
      %s22 = sphi 0, %s26
      %p23 = scmp.ge.s32.totalorder %s22, 6
      %s30 = sphi 0, %s30
      %s32 = sphi 0, %s30
      %s33 = sphi 0, %s32
      %s47 = sphi 0, %s33
      %s51 = sphi 0, %s51
      %s53 = sphi 0, %s51
      %s54 = sphi 0, %s53
      %s68 = sphi 0, %s54
      %s72 = sphi 0, %s72
      %s74 = sphi 0, %s72
      %s75 = sphi 0, %s74
      %s89 = sphi 0, %s75
      %s93 = sphi 0, %s93
      %s95 = sphi 0, %s93
      %s96 = sphi 0, %s95
      %s110 = sphi 0, %s96
      %s114 = sphi 0, %s114
      %s116 = sphi 0, %s114
      %s117 = sphi 0, %s116
      %s131 = sphi 0, %s117
      %s135 = sphi 0, %s135
      %s137 = sphi 0, %s135
      %s138 = sphi 0, %s137
      %s152 = sphi 0, %s138
      %s156 = sphi 0, %s156
      %s158 = sphi 0, %s156
      %s159 = sphi 0, %s158
      %s173 = sphi 0, %s159
      %s179 = sphi 0, %s181
      %s182 = sphi 0, %s179
      %s183 = sphi 0, %s182
      %s199 = sphi 0, %s183
      %s205 = sphi 0, %s207
      %s208 = sphi 0, %s205
      %s209 = sphi 0, %s208
      %s225 = sphi 0, %s209
      %s231 = sphi 0, %s233
      %s234 = sphi 0, %s231
      %s235 = sphi 0, %s234
      %s251 = sphi 0, %s235
    $region4: #{decoder_forward.1} parent=1 // loop_header_branch
      %25 = sbr.rel (%p23) target = $region8
    $region5: #{decoder_forward.1} parent=1 // loop_body
      %s27 = ssub.s32 %s22, 1
      %s28 = ssub.s32 %s22, 2
      %s29 = sadd.s32 %s22, 1
      %s31 = sadd.s32 %s30, 1
      %p34 = scmp.eq.s32.totalorder %s22, 3
      %p35 = scmp.ne.s32.totalorder %s30, %s32
      %p36 = scmp.eq.s32.totalorder %s22, 0
      %p37 = por %p35, %p36
      %p38 = scmp.ne.s32.totalorder %s30, %s32
      %p39 = scmp.eq.s32.totalorder %s27, 3
      %p40 = por %p38, %p39
      %p41 = scmp.ne.s32.totalorder %s32, %s33
      %p42 = scmp.eq.s32.totalorder %s27, 0
      %p43 = por %p41, %p42
      %p44 = scmp.ne.s32.totalorder %s32, %s33
      %p45 = scmp.eq.s32.totalorder %s28, 3
      %p46 = por %p44, %p45
      %p48 = scmp.ne.s32.totalorder %s33, %s47
      %p49 = scmp.eq.s32.totalorder %s28, 0
      %p50 = por %p48, %p49
      %s52 = sadd.s32 %s51, 1
      %p55 = scmp.eq.s32.totalorder %s22, 3
      %p56 = scmp.ne.s32.totalorder %s51, %s53
      %p57 = scmp.eq.s32.totalorder %s22, 0
      %p58 = por %p56, %p57
      %p59 = scmp.ne.s32.totalorder %s51, %s53
      %p60 = scmp.eq.s32.totalorder %s27, 3
      %p61 = por %p59, %p60
      %p62 = scmp.ne.s32.totalorder %s53, %s54
      %p63 = scmp.eq.s32.totalorder %s27, 0
      %p64 = por %p62, %p63
      %p65 = scmp.ne.s32.totalorder %s53, %s54
      %p66 = scmp.eq.s32.totalorder %s28, 3
      %p67 = por %p65, %p66
      %p69 = scmp.ne.s32.totalorder %s54, %s68
      %p70 = scmp.eq.s32.totalorder %s28, 0
      %p71 = por %p69, %p70
      %s73 = sadd.s32 %s72, 1
      %p76 = scmp.eq.s32.totalorder %s22, 3
      %p77 = scmp.ne.s32.totalorder %s72, %s74
      %p78 = scmp.eq.s32.totalorder %s22, 0
      %p79 = por %p77, %p78
      %p80 = scmp.ne.s32.totalorder %s72, %s74
      %p81 = scmp.eq.s32.totalorder %s27, 3
      %p82 = por %p80, %p81
      %p83 = scmp.ne.s32.totalorder %s74, %s75
      %p84 = scmp.eq.s32.totalorder %s27, 0
      %p85 = por %p83, %p84
      %p86 = scmp.ne.s32.totalorder %s74, %s75
      %p87 = scmp.eq.s32.totalorder %s28, 3
      %p88 = por %p86, %p87
      %p90 = scmp.ne.s32.totalorder %s75, %s89
      %p91 = scmp.eq.s32.totalorder %s28, 0
      %p92 = por %p90, %p91
      %s94 = sadd.s32 %s93, 1
      %p97 = scmp.eq.s32.totalorder %s22, 3
      %p98 = scmp.ne.s32.totalorder %s93, %s95
      %p99 = scmp.eq.s32.totalorder %s22, 0
      %p100 = por %p98, %p99
      %p101 = scmp.ne.s32.totalorder %s93, %s95
      %p102 = scmp.eq.s32.totalorder %s27, 3
      %p103 = por %p101, %p102
      %p104 = scmp.ne.s32.totalorder %s95, %s96
      %p105 = scmp.eq.s32.totalorder %s27, 0
      %p106 = por %p104, %p105
      %p107 = scmp.ne.s32.totalorder %s95, %s96
      %p108 = scmp.eq.s32.totalorder %s28, 3
      %p109 = por %p107, %p108
      %p111 = scmp.ne.s32.totalorder %s96, %s110
      %p112 = scmp.eq.s32.totalorder %s28, 0
      %p113 = por %p111, %p112
      %s115 = sadd.s32 %s114, 1
      %p118 = scmp.eq.s32.totalorder %s22, 3
      %p119 = scmp.ne.s32.totalorder %s114, %s116
      %p120 = scmp.eq.s32.totalorder %s22, 0
      %p121 = por %p119, %p120
      %p122 = scmp.ne.s32.totalorder %s114, %s116
      %p123 = scmp.eq.s32.totalorder %s27, 3
      %p124 = por %p122, %p123
      %p125 = scmp.ne.s32.totalorder %s116, %s117
      %p126 = scmp.eq.s32.totalorder %s27, 0
      %p127 = por %p125, %p126
      %p128 = scmp.ne.s32.totalorder %s116, %s117
      %p129 = scmp.eq.s32.totalorder %s28, 3
      %p130 = por %p128, %p129
      %p132 = scmp.ne.s32.totalorder %s117, %s131
      %p133 = scmp.eq.s32.totalorder %s28, 0
      %p134 = por %p132, %p133
      %s136 = sadd.s32 %s135, 1
      %p139 = scmp.eq.s32.totalorder %s22, 3
      %p140 = scmp.ne.s32.totalorder %s135, %s137
      %p141 = scmp.eq.s32.totalorder %s22, 0
      %p142 = por %p140, %p141
      %p143 = scmp.ne.s32.totalorder %s135, %s137
      %p144 = scmp.eq.s32.totalorder %s27, 3
      %p145 = por %p143, %p144
      %p146 = scmp.ne.s32.totalorder %s137, %s138
      %p147 = scmp.eq.s32.totalorder %s27, 0
      %p148 = por %p146, %p147
      %p149 = scmp.ne.s32.totalorder %s137, %s138
      %p150 = scmp.eq.s32.totalorder %s28, 3
      %p151 = por %p149, %p150
      %p153 = scmp.ne.s32.totalorder %s138, %s152
      %p154 = scmp.eq.s32.totalorder %s28, 0
      %p155 = por %p153, %p154
      %s157 = sadd.s32 %s156, 1
      %p160 = scmp.eq.s32.totalorder %s22, 3
      %p161 = scmp.ne.s32.totalorder %s156, %s158
      %p162 = scmp.eq.s32.totalorder %s22, 0
      %p163 = por %p161, %p162
      %p164 = scmp.ne.s32.totalorder %s156, %s158
      %p165 = scmp.eq.s32.totalorder %s27, 3
      %p166 = por %p164, %p165
      %p167 = scmp.ne.s32.totalorder %s158, %s159
      %p168 = scmp.eq.s32.totalorder %s27, 0
      %p169 = por %p167, %p168
      %p170 = scmp.ne.s32.totalorder %s158, %s159
      %p171 = scmp.eq.s32.totalorder %s28, 3
      %p172 = por %p170, %p171
      %p174 = scmp.ne.s32.totalorder %s159, %s173
      %p175 = scmp.eq.s32.totalorder %s28, 0
      %p176 = por %p174, %p175
      %s177 = ssub.s32 %s22, %s29
      %p178 = scmp.eq.s32.totalorder %s177, 0
      %s180 = sadd.s32 %s179, 1
      %s181 = scalar_select %p178, %s179, %s180
      %p184 = pneg %p178
      %p185 = scmp.eq.s32.totalorder %s22, 3
      %p186 = por %p184, %p185
      %p187 = scmp.ne.s32.totalorder %s179, %s182
      %p188 = scmp.eq.s32.totalorder %s22, 0
      %p189 = por %p187, %p188
      %p190 = scmp.ne.s32.totalorder %s179, %s182
      %p191 = scmp.eq.s32.totalorder %s27, 3
      %p192 = por %p190, %p191
      %p193 = scmp.ne.s32.totalorder %s182, %s183
      %p194 = scmp.eq.s32.totalorder %s27, 0
      %p195 = por %p193, %p194
      %p196 = scmp.ne.s32.totalorder %s182, %s183
      %p197 = scmp.eq.s32.totalorder %s28, 3
      %p198 = por %p196, %p197
      %p200 = scmp.ne.s32.totalorder %s183, %s199
      %p201 = scmp.eq.s32.totalorder %s28, 0
      %p202 = por %p200, %p201
      %s203 = ssub.s32 %s22, %s29
      %p204 = scmp.eq.s32.totalorder %s203, 0
      %s206 = sadd.s32 %s205, 1
      %s207 = scalar_select %p204, %s205, %s206
      %p210 = pneg %p204
      %p211 = scmp.eq.s32.totalorder %s22, 3
      %p212 = por %p210, %p211
      %p213 = scmp.ne.s32.totalorder %s205, %s208
      %p214 = scmp.eq.s32.totalorder %s22, 0
      %p215 = por %p213, %p214
      %p216 = scmp.ne.s32.totalorder %s205, %s208
      %p217 = scmp.eq.s32.totalorder %s27, 3
      %p218 = por %p216, %p217
      %p219 = scmp.ne.s32.totalorder %s208, %s209
      %p220 = scmp.eq.s32.totalorder %s27, 0
      %p221 = por %p219, %p220
      %p222 = scmp.ne.s32.totalorder %s208, %s209
      %p223 = scmp.eq.s32.totalorder %s28, 3
      %p224 = por %p222, %p223
      %p226 = scmp.ne.s32.totalorder %s209, %s225
      %p227 = scmp.eq.s32.totalorder %s28, 0
      %p228 = por %p226, %p227
      %s229 = ssub.s32 %s22, %s29
      %p230 = scmp.eq.s32.totalorder %s229, 0
      %s232 = sadd.s32 %s231, 1
      %s233 = scalar_select %p230, %s231, %s232
      %p236 = pneg %p230
      %p237 = scmp.eq.s32.totalorder %s22, 3
      %p238 = por %p236, %p237
      %p239 = scmp.ne.s32.totalorder %s231, %s234
      %p240 = scmp.eq.s32.totalorder %s22, 0
      %p241 = por %p239, %p240
      %p242 = scmp.ne.s32.totalorder %s231, %s234
      %p243 = scmp.eq.s32.totalorder %s27, 3
      %p244 = por %p242, %p243
      %p245 = scmp.ne.s32.totalorder %s234, %s235
      %p246 = scmp.eq.s32.totalorder %s27, 0
      %p247 = por %p245, %p246
      %p248 = scmp.ne.s32.totalorder %s234, %s235
      %p249 = scmp.eq.s32.totalorder %s28, 3
      %p250 = por %p248, %p249
      %p252 = scmp.ne.s32.totalorder %s235, %s251
      %p253 = scmp.eq.s32.totalorder %s28, 0
      %p254 = por %p252, %p253
      %p255 = scmp.le.s32.totalorder 1, %s22
      %p256 = scmp.lt.s32.totalorder %s22, 5
      %p257 = pnand %p255, %p256
      %p258 = pneg %p257
      // Predicated region
      $region9: #{decoder_forward.1} parent=5 // pred_check
        _
      $region10: #{decoder_forward.1} parent=5 // pred_check_branch
        %260 = sbr.rel (%p257) target = $region12
      $region11: #{decoder_forward.1} parent=5 // pred_region
        %s261 = ssub.s32 %s22, 1
        // Predicated region
        $region13: #{decoder_forward.1} parent=11 // pred_check
          %p262 = pneg %p43
        $region14: #{decoder_forward.1} parent=11 // pred_check_branch
          %264 = sbr.rel (%p262) target = $region16
        $region15: #{decoder_forward.1} parent=11 // pred_region
          %s266 = ssub.s32 64, 64
          %267 = vsyncadd [#allocation3], %s266
          %s269 = sshll.u32 [#allocation2], 4
          %s270 = int_to_ptr.vmem [resolvable:$true] %s269
          %272 = dma.hbm_to_vmem [thread:$0]  %s0, 64, %s270, [#allocation3]
        $region16: #{decoder_forward.1} parent=11 // pred_fallthru
          _
        // Predicated region
        $region17: #{decoder_forward.1} parent=11 // pred_check
          %p273 = pneg %p64
        $region18: #{decoder_forward.1} parent=11 // pred_check_branch
          %275 = sbr.rel (%p273) target = $region20
        $region19: #{decoder_forward.1} parent=11 // pred_region
          %s277 = ssub.s32 4096, 4096
          %278 = vsyncadd [#allocation5], %s277
          %s279 = sshll.u32 [#allocation4], 4
          %s280 = int_to_ptr.vmem [resolvable:$true] %s279
          %285 = dma.hbm_to_vmem [thread:$0]  %s1, 4096, %s280, [#allocation5], 512, 512, 32
        $region20: #{decoder_forward.1} parent=11 // pred_fallthru
          _
        // Predicated region
        $region21: #{decoder_forward.1} parent=11 // pred_check
          %p286 = pneg %p85
        $region22: #{decoder_forward.1} parent=11 // pred_check_branch
          %288 = sbr.rel (%p286) target = $region24
        $region23: #{decoder_forward.1} parent=11 // pred_region
          %s290 = ssub.s32 64, 64
          %291 = vsyncadd [#allocation5], %s290
          %s293 = sshll.u32 [#allocation6], 4
          %s294 = int_to_ptr.vmem [resolvable:$true] %s293
          %296 = dma.hbm_to_vmem [thread:$0]  %s2, 64, %s294, [#allocation5]
        $region24: #{decoder_forward.1} parent=11 // pred_fallthru
          _
        // Predicated region
        $region25: #{decoder_forward.1} parent=11 // pred_check
          %p297 = pneg %p106
        $region26: #{decoder_forward.1} parent=11 // pred_check_branch
          %299 = sbr.rel (%p297) target = $region28
        $region27: #{decoder_forward.1} parent=11 // pred_region
          %s301 = ssub.s32 32768, 32768
          %302 = vsyncadd [#allocation8], %s301
          %s303 = sshll.u32 [#allocation7], 4
          %s304 = int_to_ptr.vmem [resolvable:$true] %s303
          %309 = dma.hbm_to_vmem [thread:$0]  %s3, 32768, %s304, [#allocation8], 512, 512, 32
        $region28: #{decoder_forward.1} parent=11 // pred_fallthru
          _
        // Predicated region
        $region29: #{decoder_forward.1} parent=11 // pred_check
          %p310 = pneg %p127
        $region30: #{decoder_forward.1} parent=11 // pred_check_branch
          %312 = sbr.rel (%p310) target = $region32
        $region31: #{decoder_forward.1} parent=11 // pred_region
          %s314 = ssub.s32 64, 64
          %315 = vsyncadd [#allocation8], %s314
          %s317 = sshll.u32 [#allocation9], 4
          %s318 = int_to_ptr.vmem [resolvable:$true] %s317
          %320 = dma.hbm_to_vmem [thread:$0]  %s4, 64, %s318, [#allocation8]
        $region32: #{decoder_forward.1} parent=11 // pred_fallthru
          _
        // Predicated region
        $region33: #{decoder_forward.1} parent=11 // pred_check
          %p321 = pneg %p148
        $region34: #{decoder_forward.1} parent=11 // pred_check_branch
          %323 = sbr.rel (%p321) target = $region36
        $region35: #{decoder_forward.1} parent=11 // pred_region
          %s325 = ssub.s32 64, 64
          %326 = vsyncadd [#allocation11], %s325
          %s328 = sshll.u32 [#allocation10], 4
          %s329 = int_to_ptr.vmem [resolvable:$true] %s328
          %331 = dma.hbm_to_vmem [thread:$0]  %s5, 64, %s329, [#allocation11]
        $region36: #{decoder_forward.1} parent=11 // pred_fallthru
          _
        // Predicated region
        $region37: #{decoder_forward.1} parent=11 // pred_check
          %p332 = pneg %p169
        $region38: #{decoder_forward.1} parent=11 // pred_check_branch
          %334 = sbr.rel (%p332) target = $region40
        $region39: #{decoder_forward.1} parent=11 // pred_region
          %s336 = ssub.s32 64, 64
          %337 = vsyncadd [#allocation11], %s336
          %s339 = sshll.u32 [#allocation12], 4
          %s340 = int_to_ptr.vmem [resolvable:$true] %s339
          %342 = dma.hbm_to_vmem [thread:$0]  %s6, 64, %s340, [#allocation11]
        $region40: #{decoder_forward.1} parent=11 // pred_fallthru
          _
      $region12: #{decoder_forward.1} parent=5 // pred_fallthru
        _
      %p343 = scmp.lt.s32.totalorder %s22, 4
      // Predicated region
      $region41: #{decoder_forward.1} parent=5 // pred_check
        %p344 = pneg %p343
      $region42: #{decoder_forward.1} parent=5 // pred_check_branch
        %346 = sbr.rel (%p344) target = $region44
      $region43: #{decoder_forward.1} parent=5 // pred_region
        // Predicated region
        $region45: #{decoder_forward.1} parent=43 // pred_check
          %p347 = pneg %p189
        $region46: #{decoder_forward.1} parent=43 // pred_check_branch
          %349 = sbr.rel (%p347) target = $region48
        $region47: #{decoder_forward.1} parent=43 // pred_region
          %s350 = sand.u32 %s22, 1
          %s351 = scalar_lea.sflag [#allocation14], %s350
          %s352 = sand.u32 %s179, 1
          %s353 = smul.addr %s352, 11264
          %s354 = scalar_lea.vmem [#allocation13], %s353
          %s356 = ssub.s32 180224, 180224
          %357 = vsyncadd %s351, %s356
          %s358 = smul.addr %s22, 2816
          %s359 = smul.addr %s358, 64
          %s360 = scalar_lea.hbm %s7, %s359
          %s361 = sshll.u32 %s354, 4
          %s362 = int_to_ptr.vmem [resolvable:$true] %s361
          %367 = dma.hbm_to_vmem [thread:$0]  %s360, 180224, %s362, %s351, 2816, 2816, 176
        $region48: #{decoder_forward.1} parent=43 // pred_fallthru
          _
        // Predicated region
        $region49: #{decoder_forward.1} parent=43 // pred_check
          %p368 = pneg %p215
        $region50: #{decoder_forward.1} parent=43 // pred_check_branch
          %370 = sbr.rel (%p368) target = $region52
        $region51: #{decoder_forward.1} parent=43 // pred_region
          %s371 = sand.u32 %s22, 1
          %s372 = scalar_lea.sflag [#allocation14], %s371
          %s373 = sand.u32 %s205, 1
          %s374 = smul.addr %s373, 44
          %s375 = scalar_lea.vmem [#allocation15], %s374
          %s377 = ssub.s32 704, 704
          %378 = vsyncadd %s372, %s377
          %s379 = smul.addr %s22, 44
          %s380 = smul.addr %s379, 16
          %s381 = scalar_lea.hbm %s8, %s380
          %s383 = sshll.u32 %s375, 4
          %s384 = int_to_ptr.vmem [resolvable:$true] %s383
          %386 = dma.hbm_to_vmem [thread:$0]  %s381, 704, %s384, %s372
        $region52: #{decoder_forward.1} parent=43 // pred_fallthru
          _
      $region44: #{decoder_forward.1} parent=5 // pred_fallthru
        _
      %p387 = scmp.le.s32.totalorder 1, %s22
      %p388 = scmp.lt.s32.totalorder %s22, 5
      %p389 = pnand %p387, %p388
      %p390 = pneg %p389
      // Predicated region
      $region53: #{decoder_forward.1} parent=5 // pred_check
        _
      $region54: #{decoder_forward.1} parent=5 // pred_check_branch
        %392 = sbr.rel (%p389) target = $region56
      $region55: #{decoder_forward.1} parent=5 // pred_region
        %s393 = ssub.s32 %s22, 1
        // Predicated region
        $region57: #{decoder_forward.1} parent=55 // pred_check
          %p394 = pneg %p43
        $region58: #{decoder_forward.1} parent=55 // pred_check_branch
          %396 = sbr.rel (%p394) target = $region60
        $region59: #{decoder_forward.1} parent=55 // pred_region
          %397 = dma.done [#allocation3], 64
        $region60: #{decoder_forward.1} parent=55 // pred_fallthru
          _
        // Predicated region
        $region61: #{decoder_forward.1} parent=55 // pred_check
          %p398 = pneg %p64
        $region62: #{decoder_forward.1} parent=55 // pred_check_branch
          %400 = sbr.rel (%p398) target = $region64
        $region63: #{decoder_forward.1} parent=55 // pred_region
          %401 = dma.done [#allocation5], 4096
        $region64: #{decoder_forward.1} parent=55 // pred_fallthru
          _
        // Predicated region
        $region65: #{decoder_forward.1} parent=55 // pred_check
          %p402 = pneg %p85
        $region66: #{decoder_forward.1} parent=55 // pred_check_branch
          %404 = sbr.rel (%p402) target = $region68
        $region67: #{decoder_forward.1} parent=55 // pred_region
          %405 = dma.done [#allocation5], 64
        $region68: #{decoder_forward.1} parent=55 // pred_fallthru
          _
        // Predicated region
        $region69: #{decoder_forward.1} parent=55 // pred_check
          %p406 = pneg %p106
        $region70: #{decoder_forward.1} parent=55 // pred_check_branch
          %408 = sbr.rel (%p406) target = $region72
        $region71: #{decoder_forward.1} parent=55 // pred_region
          %409 = dma.done [#allocation8], 32768
        $region72: #{decoder_forward.1} parent=55 // pred_fallthru
          _
        // Predicated region
        $region73: #{decoder_forward.1} parent=55 // pred_check
          %p410 = pneg %p127
        $region74: #{decoder_forward.1} parent=55 // pred_check_branch
          %412 = sbr.rel (%p410) target = $region76
        $region75: #{decoder_forward.1} parent=55 // pred_region
          %413 = dma.done [#allocation8], 64
        $region76: #{decoder_forward.1} parent=55 // pred_fallthru
          _
        // Predicated region
        $region77: #{decoder_forward.1} parent=55 // pred_check
          %p414 = pneg %p148
        $region78: #{decoder_forward.1} parent=55 // pred_check_branch
          %416 = sbr.rel (%p414) target = $region80
        $region79: #{decoder_forward.1} parent=55 // pred_region
          %417 = dma.done [#allocation11], 64
        $region80: #{decoder_forward.1} parent=55 // pred_fallthru
          _
        // Predicated region
        $region81: #{decoder_forward.1} parent=55 // pred_check
          %p418 = pneg %p169
        $region82: #{decoder_forward.1} parent=55 // pred_check_branch
          %420 = sbr.rel (%p418) target = $region84
        $region83: #{decoder_forward.1} parent=55 // pred_region
          %421 = dma.done [#allocation11], 64
        $region84: #{decoder_forward.1} parent=55 // pred_fallthru
          _
        %s422 = sand.u32 %s27, 1
        %s423 = scalar_lea.sflag [#allocation14], %s422
        %s424 = sand.u32 %s182, 1
        %s425 = smul.addr %s424, 11264
        %s426 = scalar_lea.vmem [#allocation13], %s425
        // Predicated region
        $region85: #{decoder_forward.1} parent=55 // pred_check
          %p427 = pneg %p195
        $region86: #{decoder_forward.1} parent=55 // pred_check_branch
          %429 = sbr.rel (%p427) target = $region88
        $region87: #{decoder_forward.1} parent=55 // pred_region
          %430 = dma.done %s423, 180224
        $region88: #{decoder_forward.1} parent=55 // pred_fallthru
          _
        %s431 = sand.u32 %s27, 1
        %s432 = scalar_lea.sflag [#allocation14], %s431
        %s433 = sand.u32 %s208, 1
        %s434 = smul.addr %s433, 44
        %s435 = scalar_lea.vmem [#allocation15], %s434
        // Predicated region
        $region89: #{decoder_forward.1} parent=55 // pred_check
          %p436 = pneg %p221
        $region90: #{decoder_forward.1} parent=55 // pred_check_branch
          %438 = sbr.rel (%p436) target = $region92
        $region91: #{decoder_forward.1} parent=55 // pred_region
          %439 = dma.done %s432, 704
        $region92: #{decoder_forward.1} parent=55 // pred_fallthru
          _
        %p440 = pneg %p43
        %p441 = pneg %p40
        %p442 = pneg %p64
        %p443 = pneg %p61
        %p444 = pneg %p85
        %p445 = pneg %p82
        %p446 = pneg %p106
        %p447 = pneg %p103
        %p448 = pneg %p127
        %p449 = pneg %p124
        %p450 = pneg %p148
        %p451 = pneg %p145
        %p452 = pneg %p169
        %p453 = pneg %p166
        %s454 = sand.u32 %s27, 1
        %s455 = scalar_lea.sflag [#allocation14], %s454
        %s456 = sand.u32 %s182, 1
        %s457 = smul.addr %s456, 11264
        %s458 = scalar_lea.vmem [#allocation13], %s457
        %p459 = pneg %p195
        %p460 = pneg %p192
        %s461 = sand.u32 %s27, 1
        %s462 = scalar_lea.sflag [#allocation14], %s461
        %s463 = sand.u32 %s208, 1
        %s464 = smul.addr %s463, 44
        %s465 = scalar_lea.vmem [#allocation15], %s464
        %p466 = pneg %p221
        %p467 = pneg %p218
        %p468 = pneg %p247
        %p469 = pneg %p244
        %s470 = smul.u32 44, %s27
        %p471 = scmp.lt.s32.totalorder %s470, 175
        %s472 = scalar_select %p471, %s470, 175
        %s473 = smul.addr %s472, 4
        %s474 = scalar_lea.vmem %s9, %s473
        %s475 = smul.u32 44, %s27
        %p476 = scmp.lt.s32.totalorder %s475, 175
        %s477 = scalar_select %p476, %s475, 175
        %s478 = smul.addr %s477, 4
        %s479 = scalar_lea.vmem %s9, %s478
        %s480 = smul.u32 44, %s27
        %v481 = vld [vmem:[#allocation2] sm:$0xf]
        %v482 = vld [vmem:[#allocation4] sm:$0xff]
        %v483 = vld [vmem:[#allocation4 + $0x8] sm:$0xff]
        %v484 = vld [vmem:[#allocation4 + $0x10] sm:$0xff]
        %v485 = vld [vmem:[#allocation4 + $0x18] sm:$0xff]
        %v486 = vld [vmem:[#allocation4 + $0x20] sm:$0xff]
        %v487 = vld [vmem:[#allocation4 + $0x28] sm:$0xff]
        %v488 = vld [vmem:[#allocation4 + $0x30] sm:$0xff]
        %v489 = vld [vmem:[#allocation4 + $0x38] sm:$0xff]
        %v490 = vld [vmem:[#allocation4 + $0x40] sm:$0xff]
        %v491 = vld [vmem:[#allocation4 + $0x48] sm:$0xff]
        %v492 = vld [vmem:[#allocation4 + $0x50] sm:$0xff]
        %v493 = vld [vmem:[#allocation4 + $0x58] sm:$0xff]
        %v494 = vld [vmem:[#allocation4 + $0x60] sm:$0xff]
        %v495 = vld [vmem:[#allocation4 + $0x68] sm:$0xff]
        %v496 = vld [vmem:[#allocation4 + $0x70] sm:$0xff]
        %v497 = vld [vmem:[#allocation4 + $0x78] sm:$0xff]
        %v498 = vld [vmem:[#allocation4 + $0x80] sm:$0xff]
        %v499 = vld [vmem:[#allocation4 + $0x88] sm:$0xff]
        %v500 = vld [vmem:[#allocation4 + $0x90] sm:$0xff]
        %v501 = vld [vmem:[#allocation4 + $0x98] sm:$0xff]
        %v502 = vld [vmem:[#allocation4 + $0xa0] sm:$0xff]
        %v503 = vld [vmem:[#allocation4 + $0xa8] sm:$0xff]
        %v504 = vld [vmem:[#allocation4 + $0xb0] sm:$0xff]
        %v505 = vld [vmem:[#allocation4 + $0xb8] sm:$0xff]
        %v506 = vld [vmem:[#allocation4 + $0xc0] sm:$0xff]
        %v507 = vld [vmem:[#allocation4 + $0xc8] sm:$0xff]
        %v508 = vld [vmem:[#allocation4 + $0xd0] sm:$0xff]
        %v509 = vld [vmem:[#allocation4 + $0xd8] sm:$0xff]
        %v510 = vld [vmem:[#allocation4 + $0xe0] sm:$0xf]
        %v511 = vld [vmem:[#allocation4 + $0xe8] sm:$0xf]
        %v512 = vld [vmem:[#allocation4 + $0xf0] sm:$0xf]
        %v513 = vld [vmem:[#allocation4 + $0xf8] sm:$0xf]
        %v514 = vld [vmem:[#allocation6] sm:$0xf]
        %v516 = vlaneseq
        %v517 = vshrl.u32 %v516, 7
        %v518 = vsub.s32 0, %v517
        %v519 = vrot.slane %v514, %v518
        %v520 = vlaneseq
        %v521 = vshrl.u32 %v520, 7
        %v522 = vsub.s32 1, %v521
        %v523 = vrot.slane %v514, %v522
        %v524 = vlaneseq
        %v525 = vshrl.u32 %v524, 7
        %v526 = vsub.s32 2, %v525
        %v527 = vrot.slane %v514, %v526
        %v528 = vlaneseq
        %v529 = vshrl.u32 %v528, 7
        %v530 = vsub.s32 3, %v529
        %v531 = vrot.slane %v514, %v530
        %vm536 = vcmask 490496
        %v538 = vsel %vm536, %v481, 0
        %vm540 = vcmask 1043456
        %v542 = vsel %vm540, %v510, 0
        %v545 = vsel %vm540, %v511, 0
        %v548 = vsel %vm540, %v512, 0
        %v551 = vsel %vm540, %v513, 0
        %553 = vmatprep.subr.mxu0 0.0
        %554 = vmatpush1.msra.mxu0 0.0
        %555 = vmatprep.subr.mxu0 0.0
        %556 = vmatpush1.msra.mxu0 0.0
        %557 = vmatprep.subr.mxu0 0.0
        %558 = vmatpush1.msra.mxu0 0.0
        %559 = vmatprep.subr.mxu0 0.0
        %560 = vmatpush1.msra.mxu0 0.0
        %561 = vmatprep.subr.mxu0 0.0
        %562 = vmatpush1.msra.mxu0 0.0
        %563 = vmatprep.subr.mxu0 0.0
        %564 = vmatpush1.msra.mxu0 0.0
        %565 = vmatprep.subr.mxu0 0.0
        %566 = vmatpush1.msra.mxu0 0.0
        %567 = vmatprep.subr.mxu0 0.0
        %568 = vmatpush1.msra.mxu0 0.0
        %569 = vmatprep.subr.mxu0 %v545
        %570 = vmatpush1.msra.mxu0 %v542
        %571 = vmatprep.subr.mxu0 %v507
        %572 = vmatpush1.msra.mxu0 %v506
        %573 = vmatprep.subr.mxu0 %v503
        %574 = vmatpush1.msra.mxu0 %v502
        %575 = vmatprep.subr.mxu0 %v499
        %576 = vmatpush1.msra.mxu0 %v498
        %577 = vmatprep.subr.mxu0 %v495
        %578 = vmatpush1.msra.mxu0 %v494
        %579 = vmatprep.subr.mxu0 %v491
        %580 = vmatpush1.msra.mxu0 %v490
        %581 = vmatprep.subr.mxu0 %v487
        %582 = vmatpush1.msra.mxu0 %v486
        %583 = vmatprep.subr.mxu0 %v483
        %584 = vmatpush1.msra.mxu0 %v482
        %585 = vmatprep.subr.mxu0 0.0
        %586 = vmatpush2.msra.mxu0 0.0
        %587 = vmatprep.subr.mxu0 0.0
        %588 = vmatpush2.msra.mxu0 0.0
        %589 = vmatprep.subr.mxu0 0.0
        %590 = vmatpush2.msra.mxu0 0.0
        %591 = vmatprep.subr.mxu0 0.0
        %592 = vmatpush2.msra.mxu0 0.0
        %593 = vmatprep.subr.mxu0 0.0
        %594 = vmatpush2.msra.mxu0 0.0
        %595 = vmatprep.subr.mxu0 0.0
        %596 = vmatpush2.msra.mxu0 0.0
        %597 = vmatprep.subr.mxu0 0.0
        %598 = vmatpush2.msra.mxu0 0.0
        %599 = vmatprep.subr.mxu0 0.0
        %600 = vmatpush2.msra.mxu0 0.0
        %601 = vmatprep.subr.mxu0 0.0
        %602 = vmatpush2.msra.mxu0 0.0
        %603 = vmatprep.subr.mxu0 0.0
        %604 = vmatpush2.msra.mxu0 0.0
        %605 = vmatprep.subr.mxu0 0.0
        %606 = vmatpush2.msra.mxu0 0.0
        %607 = vmatprep.subr.mxu0 0.0
        %608 = vmatpush2.msra.mxu0 0.0
        %609 = vmatprep.subr.mxu0 0.0
        %610 = vmatpush2.msra.mxu0 0.0
        %611 = vmatprep.subr.mxu0 0.0
        %612 = vmatpush2.msra.mxu0 0.0
        %613 = vmatprep.subr.mxu0 0.0
        %614 = vmatpush2.msra.mxu0 0.0
        %615 = vmatprep.subr.mxu0 0.0
        %616 = vmatpush2.msra.mxu0 0.0
        %617 = vmatprep.mubr.f32.mxu0 0.0
        %618 = vmatmul.mubr.f32.gmra.mxu0 %v538
        %v619 = vpop.f32.mrf.mxu0
        %v620 = vadd.f32 %v519, %v619
        %v621 = vpop.f32.mrf.mxu0
        %v622 = vadd.f32 %v523, %v621
        %623 = vdwg.mxu0
        %624 = vmatprep.subr.mxu0 0.0
        %625 = vmatpush1.msra.mxu0 0.0
        %626 = vmatprep.subr.mxu0 0.0
        %627 = vmatpush1.msra.mxu0 0.0
        %628 = vmatprep.subr.mxu0 0.0
        %629 = vmatpush1.msra.mxu0 0.0
        %630 = vmatprep.subr.mxu0 0.0
        %631 = vmatpush1.msra.mxu0 0.0
        %632 = vmatprep.subr.mxu0 0.0
        %633 = vmatpush1.msra.mxu0 0.0
        %634 = vmatprep.subr.mxu0 0.0
        %635 = vmatpush1.msra.mxu0 0.0
        %636 = vmatprep.subr.mxu0 0.0
        %637 = vmatpush1.msra.mxu0 0.0
        %638 = vmatprep.subr.mxu0 0.0
        %639 = vmatpush1.msra.mxu0 0.0
        %640 = vmatprep.subr.mxu0 %v551
        %641 = vmatpush1.msra.mxu0 %v548
        %642 = vmatprep.subr.mxu0 %v509
        %643 = vmatpush1.msra.mxu0 %v508
        %644 = vmatprep.subr.mxu0 %v505
        %645 = vmatpush1.msra.mxu0 %v504
        %646 = vmatprep.subr.mxu0 %v501
        %647 = vmatpush1.msra.mxu0 %v500
        %648 = vmatprep.subr.mxu0 %v497
        %649 = vmatpush1.msra.mxu0 %v496
        %650 = vmatprep.subr.mxu0 %v493
        %651 = vmatpush1.msra.mxu0 %v492
        %652 = vmatprep.subr.mxu0 %v489
        %653 = vmatpush1.msra.mxu0 %v488
        %654 = vmatprep.subr.mxu0 %v485
        %655 = vmatpush1.msra.mxu0 %v484
        %656 = vmatprep.subr.mxu0 0.0
        %657 = vmatpush2.msra.mxu0 0.0
        %658 = vmatprep.subr.mxu0 0.0
        %659 = vmatpush2.msra.mxu0 0.0
        %660 = vmatprep.subr.mxu0 0.0
        %661 = vmatpush2.msra.mxu0 0.0
        %662 = vmatprep.subr.mxu0 0.0
        %663 = vmatpush2.msra.mxu0 0.0
        %664 = vmatprep.subr.mxu0 0.0
        %665 = vmatpush2.msra.mxu0 0.0
        %666 = vmatprep.subr.mxu0 0.0
        %667 = vmatpush2.msra.mxu0 0.0
        %668 = vmatprep.subr.mxu0 0.0
        %669 = vmatpush2.msra.mxu0 0.0
        %670 = vmatprep.subr.mxu0 0.0
        %671 = vmatpush2.msra.mxu0 0.0
        %672 = vmatprep.subr.mxu0 0.0
        %673 = vmatpush2.msra.mxu0 0.0
        %674 = vmatprep.subr.mxu0 0.0
        %675 = vmatpush2.msra.mxu0 0.0
        %676 = vmatprep.subr.mxu0 0.0
        %677 = vmatpush2.msra.mxu0 0.0
        %678 = vmatprep.subr.mxu0 0.0
        %679 = vmatpush2.msra.mxu0 0.0
        %680 = vmatprep.subr.mxu0 0.0
        %681 = vmatpush2.msra.mxu0 0.0
        %682 = vmatprep.subr.mxu0 0.0
        %683 = vmatpush2.msra.mxu0 0.0
        %684 = vmatprep.subr.mxu0 0.0
        %685 = vmatpush2.msra.mxu0 0.0
        %686 = vmatprep.subr.mxu0 0.0
        %687 = vmatpush2.msra.mxu0 0.0
        %688 = vmatprep.mubr.f32.mxu0 0.0
        %689 = vmatmul.mubr.f32.gmra.mxu0 %v538
        %v690 = vpop.f32.mrf.mxu0
        %v691 = vadd.f32 %v527, %v690
        %v692 = vpop.f32.mrf.mxu0
        %v693 = vadd.f32 %v531, %v692
        %694 = vdwg.mxu0
        %vm695 = vcmp.gt.f32.partialorder %v620, 0.0
        %vm696 = vcmp.gt.f32.partialorder %v622, 0.0
        %vm697 = vcmp.gt.f32.partialorder %v691, 0.0
        %vm698 = vcmp.gt.f32.partialorder %v693, 0.0
        %v699 = vmul.f32 %v620, 0.2
        %v700 = vmul.f32 %v622, 0.2
        %v701 = vmul.f32 %v691, 0.2
        %v702 = vmul.f32 %v693, 0.2
        %v703 = vsel %vm695, %v620, %v699
        %v704 = vsel %vm696, %v622, %v700
        %v705 = vsel %vm697, %v691, %v701
        %v706 = vsel %vm698, %v693, %v702
        %v707 = vld [vmem:[#allocation7] sm:$0xff]
        %v708 = vld [vmem:[#allocation7 + $0x8] sm:$0xff]
        %v709 = vld [vmem:[#allocation7 + $0x10] sm:$0xff]
        %v710 = vld [vmem:[#allocation7 + $0x18] sm:$0xff]
        %v711 = vld [vmem:[#allocation7 + $0x20] sm:$0xff]
        %v712 = vld [vmem:[#allocation7 + $0x28] sm:$0xff]
        %v713 = vld [vmem:[#allocation7 + $0x30] sm:$0xff]
        %v714 = vld [vmem:[#allocation7 + $0x38] sm:$0xff]
        %v715 = vld [vmem:[#allocation7 + $0x40] sm:$0xff]
        %v716 = vld [vmem:[#allocation7 + $0x48] sm:$0xff]
        %v717 = vld [vmem:[#allocation7 + $0x50] sm:$0xff]
        %v718 = vld [vmem:[#allocation7 + $0x58] sm:$0xff]
        %v719 = vld [vmem:[#allocation7 + $0x60] sm:$0xff]
        %v720 = vld [vmem:[#allocation7 + $0x68] sm:$0xff]
        %v721 = vld [vmem:[#allocation7 + $0x70] sm:$0xff]
        %v722 = vld [vmem:[#allocation7 + $0x78] sm:$0xff]
        %v723 = vld [vmem:[#allocation7 + $0x80] sm:$0xff]
        %v724 = vld [vmem:[#allocation7 + $0x88] sm:$0xff]
        %v725 = vld [vmem:[#allocation7 + $0x90] sm:$0xff]
        %v726 = vld [vmem:[#allocation7 + $0x98] sm:$0xff]
        %v727 = vld [vmem:[#allocation7 + $0xa0] sm:$0xff]
        %v728 = vld [vmem:[#allocation7 + $0xa8] sm:$0xff]
        %v729 = vld [vmem:[#allocation7 + $0xb0] sm:$0xff]
        %v730 = vld [vmem:[#allocation7 + $0xb8] sm:$0xff]
        %v731 = vld [vmem:[#allocation7 + $0xc0] sm:$0xff]
        %v732 = vld [vmem:[#allocation7 + $0xc8] sm:$0xff]
        %v733 = vld [vmem:[#allocation7 + $0xd0] sm:$0xff]
        %v734 = vld [vmem:[#allocation7 + $0xd8] sm:$0xff]
        %v735 = vld [vmem:[#allocation7 + $0xe0] sm:$0xff]
        %v736 = vld [vmem:[#allocation7 + $0xe8] sm:$0xff]
        %v737 = vld [vmem:[#allocation7 + $0xf0] sm:$0xff]
        %v738 = vld [vmem:[#allocation7 + $0xf8] sm:$0xff]
        %v739 = vld [vmem:[#allocation7 + $0x100] sm:$0xff]
        %v740 = vld [vmem:[#allocation7 + $0x108] sm:$0xff]
        %v741 = vld [vmem:[#allocation7 + $0x110] sm:$0xff]
        %v742 = vld [vmem:[#allocation7 + $0x118] sm:$0xff]
        %v743 = vld [vmem:[#allocation7 + $0x120] sm:$0xff]
        %v744 = vld [vmem:[#allocation7 + $0x128] sm:$0xff]
        %v745 = vld [vmem:[#allocation7 + $0x130] sm:$0xff]
        %v746 = vld [vmem:[#allocation7 + $0x138] sm:$0xff]
        %v747 = vld [vmem:[#allocation7 + $0x140] sm:$0xff]
        %v748 = vld [vmem:[#allocation7 + $0x148] sm:$0xff]
        %v749 = vld [vmem:[#allocation7 + $0x150] sm:$0xff]
        %v750 = vld [vmem:[#allocation7 + $0x158] sm:$0xff]
        %v751 = vld [vmem:[#allocation7 + $0x160] sm:$0xff]
        %v752 = vld [vmem:[#allocation7 + $0x168] sm:$0xff]
        %v753 = vld [vmem:[#allocation7 + $0x170] sm:$0xff]
        %v754 = vld [vmem:[#allocation7 + $0x178] sm:$0xff]
        %v755 = vld [vmem:[#allocation7 + $0x180] sm:$0xff]
        %v756 = vld [vmem:[#allocation7 + $0x188] sm:$0xff]
        %v757 = vld [vmem:[#allocation7 + $0x190] sm:$0xff]
        %v758 = vld [vmem:[#allocation7 + $0x198] sm:$0xff]
        %v759 = vld [vmem:[#allocation7 + $0x1a0] sm:$0xff]
        %v760 = vld [vmem:[#allocation7 + $0x1a8] sm:$0xff]
        %v761 = vld [vmem:[#allocation7 + $0x1b0] sm:$0xff]
        %v762 = vld [vmem:[#allocation7 + $0x1b8] sm:$0xff]
        %v763 = vld [vmem:[#allocation7 + $0x1c0] sm:$0xff]
        %v764 = vld [vmem:[#allocation7 + $0x1c8] sm:$0xff]
        %v765 = vld [vmem:[#allocation7 + $0x1d0] sm:$0xff]
        %v766 = vld [vmem:[#allocation7 + $0x1d8] sm:$0xff]
        %v767 = vld [vmem:[#allocation7 + $0x1e0] sm:$0xff]
        %v768 = vld [vmem:[#allocation7 + $0x1e8] sm:$0xff]
        %v769 = vld [vmem:[#allocation7 + $0x1f0] sm:$0xff]
        %v770 = vld [vmem:[#allocation7 + $0x1f8] sm:$0xff]
        %v771 = vld [vmem:[#allocation7 + $0x200] sm:$0xff]
        %v772 = vld [vmem:[#allocation7 + $0x208] sm:$0xff]
        %v773 = vld [vmem:[#allocation7 + $0x210] sm:$0xff]
        %v774 = vld [vmem:[#allocation7 + $0x218] sm:$0xff]
        %v775 = vld [vmem:[#allocation7 + $0x220] sm:$0xff]
        %v776 = vld [vmem:[#allocation7 + $0x228] sm:$0xff]
        %v777 = vld [vmem:[#allocation7 + $0x230] sm:$0xff]
        %v778 = vld [vmem:[#allocation7 + $0x238] sm:$0xff]
        %v779 = vld [vmem:[#allocation7 + $0x240] sm:$0xff]
        %v780 = vld [vmem:[#allocation7 + $0x248] sm:$0xff]
        %v781 = vld [vmem:[#allocation7 + $0x250] sm:$0xff]
        %v782 = vld [vmem:[#allocation7 + $0x258] sm:$0xff]
        %v783 = vld [vmem:[#allocation7 + $0x260] sm:$0xff]
        %v784 = vld [vmem:[#allocation7 + $0x268] sm:$0xff]
        %v785 = vld [vmem:[#allocation7 + $0x270] sm:$0xff]
        %v786 = vld [vmem:[#allocation7 + $0x278] sm:$0xff]
        %v787 = vld [vmem:[#allocation7 + $0x280] sm:$0xff]
        %v788 = vld [vmem:[#allocation7 + $0x288] sm:$0xff]
        %v789 = vld [vmem:[#allocation7 + $0x290] sm:$0xff]
        %v790 = vld [vmem:[#allocation7 + $0x298] sm:$0xff]
        %v791 = vld [vmem:[#allocation7 + $0x2a0] sm:$0xff]
        %v792 = vld [vmem:[#allocation7 + $0x2a8] sm:$0xff]
        %v793 = vld [vmem:[#allocation7 + $0x2b0] sm:$0xff]
        %v794 = vld [vmem:[#allocation7 + $0x2b8] sm:$0xff]
        %v795 = vld [vmem:[#allocation7 + $0x2c0] sm:$0xff]
        %v796 = vld [vmem:[#allocation7 + $0x2c8] sm:$0xff]
        %v797 = vld [vmem:[#allocation7 + $0x2d0] sm:$0xff]
        %v798 = vld [vmem:[#allocation7 + $0x2d8] sm:$0xff]
        %v799 = vld [vmem:[#allocation7 + $0x2e0] sm:$0xff]
        %v800 = vld [vmem:[#allocation7 + $0x2e8] sm:$0xff]
        %v801 = vld [vmem:[#allocation7 + $0x2f0] sm:$0xff]
        %v802 = vld [vmem:[#allocation7 + $0x2f8] sm:$0xff]
        %v803 = vld [vmem:[#allocation7 + $0x300] sm:$0xff]
        %v804 = vld [vmem:[#allocation7 + $0x308] sm:$0xff]
        %v805 = vld [vmem:[#allocation7 + $0x310] sm:$0xff]
        %v806 = vld [vmem:[#allocation7 + $0x318] sm:$0xff]
        %v807 = vld [vmem:[#allocation7 + $0x320] sm:$0xff]
        %v808 = vld [vmem:[#allocation7 + $0x328] sm:$0xff]
        %v809 = vld [vmem:[#allocation7 + $0x330] sm:$0xff]
        %v810 = vld [vmem:[#allocation7 + $0x338] sm:$0xff]
        %v811 = vld [vmem:[#allocation7 + $0x340] sm:$0xff]
        %v812 = vld [vmem:[#allocation7 + $0x348] sm:$0xff]
        %v813 = vld [vmem:[#allocation7 + $0x350] sm:$0xff]
        %v814 = vld [vmem:[#allocation7 + $0x358] sm:$0xff]
        %v815 = vld [vmem:[#allocation7 + $0x360] sm:$0xff]
        %v816 = vld [vmem:[#allocation7 + $0x368] sm:$0xff]
        %v817 = vld [vmem:[#allocation7 + $0x370] sm:$0xff]
        %v818 = vld [vmem:[#allocation7 + $0x378] sm:$0xff]
        %v819 = vld [vmem:[#allocation7 + $0x380] sm:$0xff]
        %v820 = vld [vmem:[#allocation7 + $0x388] sm:$0xff]
        %v821 = vld [vmem:[#allocation7 + $0x390] sm:$0xff]
        %v822 = vld [vmem:[#allocation7 + $0x398] sm:$0xff]
        %v823 = vld [vmem:[#allocation7 + $0x3a0] sm:$0xff]
        %v824 = vld [vmem:[#allocation7 + $0x3a8] sm:$0xff]
        %v825 = vld [vmem:[#allocation7 + $0x3b0] sm:$0xff]
        %v826 = vld [vmem:[#allocation7 + $0x3b8] sm:$0xff]
        %v827 = vld [vmem:[#allocation7 + $0x3c0] sm:$0xff]
        %v828 = vld [vmem:[#allocation7 + $0x3c8] sm:$0xff]
        %v829 = vld [vmem:[#allocation7 + $0x3d0] sm:$0xff]
        %v830 = vld [vmem:[#allocation7 + $0x3d8] sm:$0xff]
        %v831 = vld [vmem:[#allocation7 + $0x3e0] sm:$0xff]
        %v832 = vld [vmem:[#allocation7 + $0x3e8] sm:$0xff]
        %v833 = vld [vmem:[#allocation7 + $0x3f0] sm:$0xff]
        %v834 = vld [vmem:[#allocation7 + $0x3f8] sm:$0xff]
        %v835 = vld [vmem:[#allocation7 + $0x400] sm:$0xff]
        %v836 = vld [vmem:[#allocation7 + $0x408] sm:$0xff]
        %v837 = vld [vmem:[#allocation7 + $0x410] sm:$0xff]
        %v838 = vld [vmem:[#allocation7 + $0x418] sm:$0xff]
        %v839 = vld [vmem:[#allocation7 + $0x420] sm:$0xff]
        %v840 = vld [vmem:[#allocation7 + $0x428] sm:$0xff]
        %v841 = vld [vmem:[#allocation7 + $0x430] sm:$0xff]
        %v842 = vld [vmem:[#allocation7 + $0x438] sm:$0xff]
        %v843 = vld [vmem:[#allocation7 + $0x440] sm:$0xff]
        %v844 = vld [vmem:[#allocation7 + $0x448] sm:$0xff]
        %v845 = vld [vmem:[#allocation7 + $0x450] sm:$0xff]
        %v846 = vld [vmem:[#allocation7 + $0x458] sm:$0xff]
        %v847 = vld [vmem:[#allocation7 + $0x460] sm:$0xff]
        %v848 = vld [vmem:[#allocation7 + $0x468] sm:$0xff]
        %v849 = vld [vmem:[#allocation7 + $0x470] sm:$0xff]
        %v850 = vld [vmem:[#allocation7 + $0x478] sm:$0xff]
        %v851 = vld [vmem:[#allocation7 + $0x480] sm:$0xff]
        %v852 = vld [vmem:[#allocation7 + $0x488] sm:$0xff]
        %v853 = vld [vmem:[#allocation7 + $0x490] sm:$0xff]
        %v854 = vld [vmem:[#allocation7 + $0x498] sm:$0xff]
        %v855 = vld [vmem:[#allocation7 + $0x4a0] sm:$0xff]
        %v856 = vld [vmem:[#allocation7 + $0x4a8] sm:$0xff]
        %v857 = vld [vmem:[#allocation7 + $0x4b0] sm:$0xff]
        %v858 = vld [vmem:[#allocation7 + $0x4b8] sm:$0xff]
        %v859 = vld [vmem:[#allocation7 + $0x4c0] sm:$0xff]
        %v860 = vld [vmem:[#allocation7 + $0x4c8] sm:$0xff]
        %v861 = vld [vmem:[#allocation7 + $0x4d0] sm:$0xff]
        %v862 = vld [vmem:[#allocation7 + $0x4d8] sm:$0xff]
        %v863 = vld [vmem:[#allocation7 + $0x4e0] sm:$0xff]
        %v864 = vld [vmem:[#allocation7 + $0x4e8] sm:$0xff]
        %v865 = vld [vmem:[#allocation7 + $0x4f0] sm:$0xff]
        %v866 = vld [vmem:[#allocation7 + $0x4f8] sm:$0xff]
        %v867 = vld [vmem:[#allocation7 + $0x500] sm:$0xff]
        %v868 = vld [vmem:[#allocation7 + $0x508] sm:$0xff]
        %v869 = vld [vmem:[#allocation7 + $0x510] sm:$0xff]
        %v870 = vld [vmem:[#allocation7 + $0x518] sm:$0xff]
        %v871 = vld [vmem:[#allocation7 + $0x520] sm:$0xff]
        %v872 = vld [vmem:[#allocation7 + $0x528] sm:$0xff]
        %v873 = vld [vmem:[#allocation7 + $0x530] sm:$0xff]
        %v874 = vld [vmem:[#allocation7 + $0x538] sm:$0xff]
        %v875 = vld [vmem:[#allocation7 + $0x540] sm:$0xff]
        %v876 = vld [vmem:[#allocation7 + $0x548] sm:$0xff]
        %v877 = vld [vmem:[#allocation7 + $0x550] sm:$0xff]
        %v878 = vld [vmem:[#allocation7 + $0x558] sm:$0xff]
        %v879 = vld [vmem:[#allocation7 + $0x560] sm:$0xff]
        %v880 = vld [vmem:[#allocation7 + $0x568] sm:$0xff]
        %v881 = vld [vmem:[#allocation7 + $0x570] sm:$0xff]
        %v882 = vld [vmem:[#allocation7 + $0x578] sm:$0xff]
        %v883 = vld [vmem:[#allocation7 + $0x580] sm:$0xff]
        %v884 = vld [vmem:[#allocation7 + $0x588] sm:$0xff]
        %v885 = vld [vmem:[#allocation7 + $0x590] sm:$0xff]
        %v886 = vld [vmem:[#allocation7 + $0x598] sm:$0xff]
        %v887 = vld [vmem:[#allocation7 + $0x5a0] sm:$0xff]
        %v888 = vld [vmem:[#allocation7 + $0x5a8] sm:$0xff]
        %v889 = vld [vmem:[#allocation7 + $0x5b0] sm:$0xff]
        %v890 = vld [vmem:[#allocation7 + $0x5b8] sm:$0xff]
        %v891 = vld [vmem:[#allocation7 + $0x5c0] sm:$0xff]
        %v892 = vld [vmem:[#allocation7 + $0x5c8] sm:$0xff]
        %v893 = vld [vmem:[#allocation7 + $0x5d0] sm:$0xff]
        %v894 = vld [vmem:[#allocation7 + $0x5d8] sm:$0xff]
        %v895 = vld [vmem:[#allocation7 + $0x5e0] sm:$0xff]
        %v896 = vld [vmem:[#allocation7 + $0x5e8] sm:$0xff]
        %v897 = vld [vmem:[#allocation7 + $0x5f0] sm:$0xff]
        %v898 = vld [vmem:[#allocation7 + $0x5f8] sm:$0xff]
        %v899 = vld [vmem:[#allocation7 + $0x600] sm:$0xff]
        %v900 = vld [vmem:[#allocation7 + $0x608] sm:$0xff]
        %v901 = vld [vmem:[#allocation7 + $0x610] sm:$0xff]
        %v902 = vld [vmem:[#allocation7 + $0x618] sm:$0xff]
        %v903 = vld [vmem:[#allocation7 + $0x620] sm:$0xff]
        %v904 = vld [vmem:[#allocation7 + $0x628] sm:$0xff]
        %v905 = vld [vmem:[#allocation7 + $0x630] sm:$0xff]
        %v906 = vld [vmem:[#allocation7 + $0x638] sm:$0xff]
        %v907 = vld [vmem:[#allocation7 + $0x640] sm:$0xff]
        %v908 = vld [vmem:[#allocation7 + $0x648] sm:$0xff]
        %v909 = vld [vmem:[#allocation7 + $0x650] sm:$0xff]
        %v910 = vld [vmem:[#allocation7 + $0x658] sm:$0xff]
        %v911 = vld [vmem:[#allocation7 + $0x660] sm:$0xff]
        %v912 = vld [vmem:[#allocation7 + $0x668] sm:$0xff]
        %v913 = vld [vmem:[#allocation7 + $0x670] sm:$0xff]
        %v914 = vld [vmem:[#allocation7 + $0x678] sm:$0xff]
        %v915 = vld [vmem:[#allocation7 + $0x680] sm:$0xff]
        %v916 = vld [vmem:[#allocation7 + $0x688] sm:$0xff]
        %v917 = vld [vmem:[#allocation7 + $0x690] sm:$0xff]
        %v918 = vld [vmem:[#allocation7 + $0x698] sm:$0xff]
        %v919 = vld [vmem:[#allocation7 + $0x6a0] sm:$0xff]
        %v920 = vld [vmem:[#allocation7 + $0x6a8] sm:$0xff]
        %v921 = vld [vmem:[#allocation7 + $0x6b0] sm:$0xff]
        %v922 = vld [vmem:[#allocation7 + $0x6b8] sm:$0xff]
        %v923 = vld [vmem:[#allocation7 + $0x6c0] sm:$0xff]
        %v924 = vld [vmem:[#allocation7 + $0x6c8] sm:$0xff]
        %v925 = vld [vmem:[#allocation7 + $0x6d0] sm:$0xff]
        %v926 = vld [vmem:[#allocation7 + $0x6d8] sm:$0xff]
        %v927 = vld [vmem:[#allocation7 + $0x6e0] sm:$0xff]
        %v928 = vld [vmem:[#allocation7 + $0x6e8] sm:$0xff]
        %v929 = vld [vmem:[#allocation7 + $0x6f0] sm:$0xff]
        %v930 = vld [vmem:[#allocation7 + $0x6f8] sm:$0xff]
        %v931 = vld [vmem:[#allocation7 + $0x700] sm:$0xff]
        %v932 = vld [vmem:[#allocation7 + $0x708] sm:$0xff]
        %v933 = vld [vmem:[#allocation7 + $0x710] sm:$0xff]
        %v934 = vld [vmem:[#allocation7 + $0x718] sm:$0xff]
        %v935 = vld [vmem:[#allocation7 + $0x720] sm:$0xff]
        %v936 = vld [vmem:[#allocation7 + $0x728] sm:$0xff]
        %v937 = vld [vmem:[#allocation7 + $0x730] sm:$0xff]
        %v938 = vld [vmem:[#allocation7 + $0x738] sm:$0xff]
        %v939 = vld [vmem:[#allocation7 + $0x740] sm:$0xff]
        %v940 = vld [vmem:[#allocation7 + $0x748] sm:$0xff]
        %v941 = vld [vmem:[#allocation7 + $0x750] sm:$0xff]
        %v942 = vld [vmem:[#allocation7 + $0x758] sm:$0xff]
        %v943 = vld [vmem:[#allocation7 + $0x760] sm:$0xff]
        %v944 = vld [vmem:[#allocation7 + $0x768] sm:$0xff]
        %v945 = vld [vmem:[#allocation7 + $0x770] sm:$0xff]
        %v946 = vld [vmem:[#allocation7 + $0x778] sm:$0xff]
        %v947 = vld [vmem:[#allocation7 + $0x780] sm:$0xff]
        %v948 = vld [vmem:[#allocation7 + $0x788] sm:$0xff]
        %v949 = vld [vmem:[#allocation7 + $0x790] sm:$0xff]
        %v950 = vld [vmem:[#allocation7 + $0x798] sm:$0xff]
        %v951 = vld [vmem:[#allocation7 + $0x7a0] sm:$0xff]
        %v952 = vld [vmem:[#allocation7 + $0x7a8] sm:$0xff]
        %v953 = vld [vmem:[#allocation7 + $0x7b0] sm:$0xff]
        %v954 = vld [vmem:[#allocation7 + $0x7b8] sm:$0xff]
        %v955 = vld [vmem:[#allocation7 + $0x7c0] sm:$0xff]
        %v956 = vld [vmem:[#allocation7 + $0x7c8] sm:$0xff]
        %v957 = vld [vmem:[#allocation7 + $0x7d0] sm:$0xff]
        %v958 = vld [vmem:[#allocation7 + $0x7d8] sm:$0xff]
        %v959 = vld [vmem:[#allocation7 + $0x7e0] sm:$0xff]
        %v960 = vld [vmem:[#allocation7 + $0x7e8] sm:$0xff]
        %v961 = vld [vmem:[#allocation7 + $0x7f0] sm:$0xff]
        %v962 = vld [vmem:[#allocation7 + $0x7f8] sm:$0xff]
        %v963 = vld [vmem:[#allocation9] sm:$0xf]
        %v965 = vlaneseq
        %v966 = vshrl.u32 %v965, 7
        %v967 = vsub.s32 0, %v966
        %v968 = vrot.slane %v963, %v967
        %v969 = vlaneseq
        %v970 = vshrl.u32 %v969, 7
        %v971 = vsub.s32 1, %v970
        %v972 = vrot.slane %v963, %v971
        %v973 = vlaneseq
        %v974 = vshrl.u32 %v973, 7
        %v975 = vsub.s32 2, %v974
        %v976 = vrot.slane %v963, %v975
        %v977 = vlaneseq
        %v978 = vshrl.u32 %v977, 7
        %v979 = vsub.s32 3, %v978
        %v980 = vrot.slane %v963, %v979
        %985 = vmatprep.subr.mxu0 %v768
        %986 = vmatpush1.msra.mxu0 %v767
        %987 = vmatprep.subr.mxu0 %v764
        %988 = vmatpush1.msra.mxu0 %v763
        %989 = vmatprep.subr.mxu0 %v760
        %990 = vmatpush1.msra.mxu0 %v759
        %991 = vmatprep.subr.mxu0 %v756
        %992 = vmatpush1.msra.mxu0 %v755
        %993 = vmatprep.subr.mxu0 %v752
        %994 = vmatpush1.msra.mxu0 %v751
        %995 = vmatprep.subr.mxu0 %v748
        %996 = vmatpush1.msra.mxu0 %v747
        %997 = vmatprep.subr.mxu0 %v744
        %998 = vmatpush1.msra.mxu0 %v743
        %999 = vmatprep.subr.mxu0 %v740
        %1000 = vmatpush1.msra.mxu0 %v739
        %1001 = vmatprep.subr.mxu0 %v736
        %1002 = vmatpush1.msra.mxu0 %v735
        %1003 = vmatprep.subr.mxu0 %v732
        %1004 = vmatpush1.msra.mxu0 %v731
        %1005 = vmatprep.subr.mxu0 %v728
        %1006 = vmatpush1.msra.mxu0 %v727
        %1007 = vmatprep.subr.mxu0 %v724
        %1008 = vmatpush1.msra.mxu0 %v723
        %1009 = vmatprep.subr.mxu0 %v720
        %1010 = vmatpush1.msra.mxu0 %v719
        %1011 = vmatprep.subr.mxu0 %v716
        %1012 = vmatpush1.msra.mxu0 %v715
        %1013 = vmatprep.subr.mxu0 %v712
        %1014 = vmatpush1.msra.mxu0 %v711
        %1015 = vmatprep.subr.mxu0 %v708
        %1016 = vmatpush1.msra.mxu0 %v707
        %1017 = vmatprep.subr.mxu0 %v832
        %1018 = vmatpush2.msra.mxu0 %v831
        %1019 = vmatprep.subr.mxu0 %v828
        %1020 = vmatpush2.msra.mxu0 %v827
        %1021 = vmatprep.subr.mxu0 %v824
        %1022 = vmatpush2.msra.mxu0 %v823
        %1023 = vmatprep.subr.mxu0 %v820
        %1024 = vmatpush2.msra.mxu0 %v819
        %1025 = vmatprep.subr.mxu0 %v816
        %1026 = vmatpush2.msra.mxu0 %v815
        %1027 = vmatprep.subr.mxu0 %v812
        %1028 = vmatpush2.msra.mxu0 %v811
        %1029 = vmatprep.subr.mxu0 %v808
        %1030 = vmatpush2.msra.mxu0 %v807
        %1031 = vmatprep.subr.mxu0 %v804
        %1032 = vmatpush2.msra.mxu0 %v803
        %1033 = vmatprep.subr.mxu0 %v800
        %1034 = vmatpush2.msra.mxu0 %v799
        %1035 = vmatprep.subr.mxu0 %v796
        %1036 = vmatpush2.msra.mxu0 %v795
        %1037 = vmatprep.subr.mxu0 %v792
        %1038 = vmatpush2.msra.mxu0 %v791
        %1039 = vmatprep.subr.mxu0 %v788
        %1040 = vmatpush2.msra.mxu0 %v787
        %1041 = vmatprep.subr.mxu0 %v784
        %1042 = vmatpush2.msra.mxu0 %v783
        %1043 = vmatprep.subr.mxu0 %v780
        %1044 = vmatpush2.msra.mxu0 %v779
        %1045 = vmatprep.subr.mxu0 %v776
        %1046 = vmatpush2.msra.mxu0 %v775
        %1047 = vmatprep.subr.mxu0 %v772
        %1048 = vmatpush2.msra.mxu0 %v771
        %1049 = vmatprep.mubr.f32.mxu0 %v704
        %1050 = vmatmul.mubr.f32.gmra.mxu0 %v703
        %v1051 = vpop.f32.mrf.mxu0
        %v1052 = vadd.f32 %v968, %v1051
        %v1053 = vpop.f32.mrf.mxu0
        %v1054 = vadd.f32 %v972, %v1053
        %1055 = vdwg.mxu0
        %1056 = vmatprep.subr.mxu0 %v896
        %1057 = vmatpush1.msra.mxu0 %v895
        %1058 = vmatprep.subr.mxu0 %v892
        %1059 = vmatpush1.msra.mxu0 %v891
        %1060 = vmatprep.subr.mxu0 %v888
        %1061 = vmatpush1.msra.mxu0 %v887
        %1062 = vmatprep.subr.mxu0 %v884
        %1063 = vmatpush1.msra.mxu0 %v883
        %1064 = vmatprep.subr.mxu0 %v880
        %1065 = vmatpush1.msra.mxu0 %v879
        %1066 = vmatprep.subr.mxu0 %v876
        %1067 = vmatpush1.msra.mxu0 %v875
        %1068 = vmatprep.subr.mxu0 %v872
        %1069 = vmatpush1.msra.mxu0 %v871
        %1070 = vmatprep.subr.mxu0 %v868
        %1071 = vmatpush1.msra.mxu0 %v867
        %1072 = vmatprep.subr.mxu0 %v864
        %1073 = vmatpush1.msra.mxu0 %v863
        %1074 = vmatprep.subr.mxu0 %v860
        %1075 = vmatpush1.msra.mxu0 %v859
        %1076 = vmatprep.subr.mxu0 %v856
        %1077 = vmatpush1.msra.mxu0 %v855
        %1078 = vmatprep.subr.mxu0 %v852
        %1079 = vmatpush1.msra.mxu0 %v851
        %1080 = vmatprep.subr.mxu0 %v848
        %1081 = vmatpush1.msra.mxu0 %v847
        %1082 = vmatprep.subr.mxu0 %v844
        %1083 = vmatpush1.msra.mxu0 %v843
        %1084 = vmatprep.subr.mxu0 %v840
        %1085 = vmatpush1.msra.mxu0 %v839
        %1086 = vmatprep.subr.mxu0 %v836
        %1087 = vmatpush1.msra.mxu0 %v835
        %1088 = vmatprep.subr.mxu0 %v960
        %1089 = vmatpush2.msra.mxu0 %v959
        %1090 = vmatprep.subr.mxu0 %v956
        %1091 = vmatpush2.msra.mxu0 %v955
        %1092 = vmatprep.subr.mxu0 %v952
        %1093 = vmatpush2.msra.mxu0 %v951
        %1094 = vmatprep.subr.mxu0 %v948
        %1095 = vmatpush2.msra.mxu0 %v947
        %1096 = vmatprep.subr.mxu0 %v944
        %1097 = vmatpush2.msra.mxu0 %v943
        %1098 = vmatprep.subr.mxu0 %v940
        %1099 = vmatpush2.msra.mxu0 %v939
        %1100 = vmatprep.subr.mxu0 %v936
        %1101 = vmatpush2.msra.mxu0 %v935
        %1102 = vmatprep.subr.mxu0 %v932
        %1103 = vmatpush2.msra.mxu0 %v931
        %1104 = vmatprep.subr.mxu0 %v928
        %1105 = vmatpush2.msra.mxu0 %v927
        %1106 = vmatprep.subr.mxu0 %v924
        %1107 = vmatpush2.msra.mxu0 %v923
        %1108 = vmatprep.subr.mxu0 %v920
        %1109 = vmatpush2.msra.mxu0 %v919
        %1110 = vmatprep.subr.mxu0 %v916
        %1111 = vmatpush2.msra.mxu0 %v915
        %1112 = vmatprep.subr.mxu0 %v912
        %1113 = vmatpush2.msra.mxu0 %v911
        %1114 = vmatprep.subr.mxu0 %v908
        %1115 = vmatpush2.msra.mxu0 %v907
        %1116 = vmatprep.subr.mxu0 %v904
        %1117 = vmatpush2.msra.mxu0 %v903
        %1118 = vmatprep.subr.mxu0 %v900
        %1119 = vmatpush2.msra.mxu0 %v899
        %1120 = vmatprep.mubr.f32.mxu0 %v706
        %1121 = vmatmul.mubr.f32.gmra.mxu0 %v705
        %v1122 = vpop.f32.mrf.mxu0
        %v1123 = vadd.f32 %v1052, %v1122
        %v1124 = vpop.f32.mrf.mxu0
        %v1125 = vadd.f32 %v1054, %v1124
        %1126 = vdwg.mxu0
        %1127 = vmatprep.subr.mxu0 %v770
        %1128 = vmatpush1.msra.mxu0 %v769
        %1129 = vmatprep.subr.mxu0 %v766
        %1130 = vmatpush1.msra.mxu0 %v765
        %1131 = vmatprep.subr.mxu0 %v762
        %1132 = vmatpush1.msra.mxu0 %v761
        %1133 = vmatprep.subr.mxu0 %v758
        %1134 = vmatpush1.msra.mxu0 %v757
        %1135 = vmatprep.subr.mxu0 %v754
        %1136 = vmatpush1.msra.mxu0 %v753
        %1137 = vmatprep.subr.mxu0 %v750
        %1138 = vmatpush1.msra.mxu0 %v749
        %1139 = vmatprep.subr.mxu0 %v746
        %1140 = vmatpush1.msra.mxu0 %v745
        %1141 = vmatprep.subr.mxu0 %v742
        %1142 = vmatpush1.msra.mxu0 %v741
        %1143 = vmatprep.subr.mxu0 %v738
        %1144 = vmatpush1.msra.mxu0 %v737
        %1145 = vmatprep.subr.mxu0 %v734
        %1146 = vmatpush1.msra.mxu0 %v733
        %1147 = vmatprep.subr.mxu0 %v730
        %1148 = vmatpush1.msra.mxu0 %v729
        %1149 = vmatprep.subr.mxu0 %v726
        %1150 = vmatpush1.msra.mxu0 %v725
        %1151 = vmatprep.subr.mxu0 %v722
        %1152 = vmatpush1.msra.mxu0 %v721
        %1153 = vmatprep.subr.mxu0 %v718
        %1154 = vmatpush1.msra.mxu0 %v717
        %1155 = vmatprep.subr.mxu0 %v714
        %1156 = vmatpush1.msra.mxu0 %v713
        %1157 = vmatprep.subr.mxu0 %v710
        %1158 = vmatpush1.msra.mxu0 %v709
        %1159 = vmatprep.subr.mxu0 %v834
        %1160 = vmatpush2.msra.mxu0 %v833
        %1161 = vmatprep.subr.mxu0 %v830
        %1162 = vmatpush2.msra.mxu0 %v829
        %1163 = vmatprep.subr.mxu0 %v826
        %1164 = vmatpush2.msra.mxu0 %v825
        %1165 = vmatprep.subr.mxu0 %v822
        %1166 = vmatpush2.msra.mxu0 %v821
        %1167 = vmatprep.subr.mxu0 %v818
        %1168 = vmatpush2.msra.mxu0 %v817
        %1169 = vmatprep.subr.mxu0 %v814
        %1170 = vmatpush2.msra.mxu0 %v813
        %1171 = vmatprep.subr.mxu0 %v810
        %1172 = vmatpush2.msra.mxu0 %v809
        %1173 = vmatprep.subr.mxu0 %v806
        %1174 = vmatpush2.msra.mxu0 %v805
        %1175 = vmatprep.subr.mxu0 %v802
        %1176 = vmatpush2.msra.mxu0 %v801
        %1177 = vmatprep.subr.mxu0 %v798
        %1178 = vmatpush2.msra.mxu0 %v797
        %1179 = vmatprep.subr.mxu0 %v794
        %1180 = vmatpush2.msra.mxu0 %v793
        %1181 = vmatprep.subr.mxu0 %v790
        %1182 = vmatpush2.msra.mxu0 %v789
        %1183 = vmatprep.subr.mxu0 %v786
        %1184 = vmatpush2.msra.mxu0 %v785
        %1185 = vmatprep.subr.mxu0 %v782
        %1186 = vmatpush2.msra.mxu0 %v781
        %1187 = vmatprep.subr.mxu0 %v778
        %1188 = vmatpush2.msra.mxu0 %v777
        %1189 = vmatprep.subr.mxu0 %v774
        %1190 = vmatpush2.msra.mxu0 %v773
        %1191 = vmatprep.mubr.f32.mxu0 %v704
        %1192 = vmatmul.mubr.f32.gmra.mxu0 %v703
        %v1193 = vpop.f32.mrf.mxu0
        %v1194 = vadd.f32 %v976, %v1193
        %v1195 = vpop.f32.mrf.mxu0
        %v1196 = vadd.f32 %v980, %v1195
        %1197 = vdwg.mxu0
        %1198 = vmatprep.subr.mxu0 %v898
        %1199 = vmatpush1.msra.mxu0 %v897
        %1200 = vmatprep.subr.mxu0 %v894
        %1201 = vmatpush1.msra.mxu0 %v893
        %1202 = vmatprep.subr.mxu0 %v890
        %1203 = vmatpush1.msra.mxu0 %v889
        %1204 = vmatprep.subr.mxu0 %v886
        %1205 = vmatpush1.msra.mxu0 %v885
        %1206 = vmatprep.subr.mxu0 %v882
        %1207 = vmatpush1.msra.mxu0 %v881
        %1208 = vmatprep.subr.mxu0 %v878
        %1209 = vmatpush1.msra.mxu0 %v877
        %1210 = vmatprep.subr.mxu0 %v874
        %1211 = vmatpush1.msra.mxu0 %v873
        %1212 = vmatprep.subr.mxu0 %v870
        %1213 = vmatpush1.msra.mxu0 %v869
        %1214 = vmatprep.subr.mxu0 %v866
        %1215 = vmatpush1.msra.mxu0 %v865
        %1216 = vmatprep.subr.mxu0 %v862
        %1217 = vmatpush1.msra.mxu0 %v861
        %1218 = vmatprep.subr.mxu0 %v858
        %1219 = vmatpush1.msra.mxu0 %v857
        %1220 = vmatprep.subr.mxu0 %v854
        %1221 = vmatpush1.msra.mxu0 %v853
        %1222 = vmatprep.subr.mxu0 %v850
        %1223 = vmatpush1.msra.mxu0 %v849
        %1224 = vmatprep.subr.mxu0 %v846
        %1225 = vmatpush1.msra.mxu0 %v845
        %1226 = vmatprep.subr.mxu0 %v842
        %1227 = vmatpush1.msra.mxu0 %v841
        %1228 = vmatprep.subr.mxu0 %v838
        %1229 = vmatpush1.msra.mxu0 %v837
        %1230 = vmatprep.subr.mxu0 %v962
        %1231 = vmatpush2.msra.mxu0 %v961
        %1232 = vmatprep.subr.mxu0 %v958
        %1233 = vmatpush2.msra.mxu0 %v957
        %1234 = vmatprep.subr.mxu0 %v954
        %1235 = vmatpush2.msra.mxu0 %v953
        %1236 = vmatprep.subr.mxu0 %v950
        %1237 = vmatpush2.msra.mxu0 %v949
        %1238 = vmatprep.subr.mxu0 %v946
        %1239 = vmatpush2.msra.mxu0 %v945
        %1240 = vmatprep.subr.mxu0 %v942
        %1241 = vmatpush2.msra.mxu0 %v941
        %1242 = vmatprep.subr.mxu0 %v938
        %1243 = vmatpush2.msra.mxu0 %v937
        %1244 = vmatprep.subr.mxu0 %v934
        %1245 = vmatpush2.msra.mxu0 %v933
        %1246 = vmatprep.subr.mxu0 %v930
        %1247 = vmatpush2.msra.mxu0 %v929
        %1248 = vmatprep.subr.mxu0 %v926
        %1249 = vmatpush2.msra.mxu0 %v925
        %1250 = vmatprep.subr.mxu0 %v922
        %1251 = vmatpush2.msra.mxu0 %v921
        %1252 = vmatprep.subr.mxu0 %v918
        %1253 = vmatpush2.msra.mxu0 %v917
        %1254 = vmatprep.subr.mxu0 %v914
        %1255 = vmatpush2.msra.mxu0 %v913
        %1256 = vmatprep.subr.mxu0 %v910
        %1257 = vmatpush2.msra.mxu0 %v909
        %1258 = vmatprep.subr.mxu0 %v906
        %1259 = vmatpush2.msra.mxu0 %v905
        %1260 = vmatprep.subr.mxu0 %v902
        %1261 = vmatpush2.msra.mxu0 %v901
        %1262 = vmatprep.mubr.f32.mxu0 %v706
        %1263 = vmatmul.mubr.f32.gmra.mxu0 %v705
        %v1264 = vpop.f32.mrf.mxu0
        %v1265 = vadd.f32 %v1194, %v1264
        %v1266 = vpop.f32.mrf.mxu0
        %v1267 = vadd.f32 %v1196, %v1266
        %1268 = vdwg.mxu0
        %v1269 = vsel %vm540, %v1123, 0.0
        %v1270 = vrot.slane %v1269, 4
        %v1271 = vadd.f32 %v1269, %v1270
        %v1272 = vrot.slane %v1271, 2
        %v1273 = vadd.f32 %v1271, %v1272
        %v1274 = vrot.slane %v1273, 1
        %v1275 = vadd.f32 %v1273, %v1274
        %v1276 = vsel %vm540, %v1125, 0.0
        %v1277 = vrot.slane %v1276, 4
        %v1278 = vadd.f32 %v1276, %v1277
        %v1279 = vrot.slane %v1278, 2
        %v1280 = vadd.f32 %v1278, %v1279
        %v1281 = vrot.slane %v1280, 1
        %v1282 = vadd.f32 %v1280, %v1281
        %v1283 = vsel %vm540, %v1265, 0.0
        %v1284 = vrot.slane %v1283, 4
        %v1285 = vadd.f32 %v1283, %v1284
        %v1286 = vrot.slane %v1285, 2
        %v1287 = vadd.f32 %v1285, %v1286
        %v1288 = vrot.slane %v1287, 1
        %v1289 = vadd.f32 %v1287, %v1288
        %v1290 = vsel %vm540, %v1267, 0.0
        %v1291 = vrot.slane %v1290, 4
        %v1292 = vadd.f32 %v1290, %v1291
        %v1293 = vrot.slane %v1292, 2
        %v1294 = vadd.f32 %v1292, %v1293
        %v1295 = vrot.slane %v1294, 1
        %v1296 = vadd.f32 %v1294, %v1295
        %v1297 = vrcp.pop 4.0
        %v1298 = vmul.f32 %v1275, %v1297
        %v1299 = vmul.f32 %v1282, %v1297
        %v1300 = vmul.f32 %v1289, %v1297
        %v1301 = vmul.f32 %v1296, %v1297
        %v1302 = vsub.f32 %v1123, %v1298
        %v1303 = vsub.f32 %v1125, %v1299
        %v1304 = vsub.f32 %v1265, %v1300
        %v1305 = vsub.f32 %v1267, %v1301
        %v1306 = vmul.f32 %v1302, %v1302
        %v1307 = vmul.f32 %v1303, %v1303
        %v1308 = vmul.f32 %v1304, %v1304
        %v1309 = vmul.f32 %v1305, %v1305
        %v1310 = vsel %vm540, %v1306, 0.0
        %v1311 = vrot.slane %v1310, 4
        %v1312 = vadd.f32 %v1310, %v1311
        %v1313 = vrot.slane %v1312, 2
        %v1314 = vadd.f32 %v1312, %v1313
        %v1315 = vrot.slane %v1314, 1
        %v1316 = vadd.f32 %v1314, %v1315
        %v1317 = vsel %vm540, %v1307, 0.0
        %v1318 = vrot.slane %v1317, 4
        %v1319 = vadd.f32 %v1317, %v1318
        %v1320 = vrot.slane %v1319, 2
        %v1321 = vadd.f32 %v1319, %v1320
        %v1322 = vrot.slane %v1321, 1
        %v1323 = vadd.f32 %v1321, %v1322
        %v1324 = vsel %vm540, %v1308, 0.0
        %v1325 = vrot.slane %v1324, 4
        %v1326 = vadd.f32 %v1324, %v1325
        %v1327 = vrot.slane %v1326, 2
        %v1328 = vadd.f32 %v1326, %v1327
        %v1329 = vrot.slane %v1328, 1
        %v1330 = vadd.f32 %v1328, %v1329
        %v1331 = vsel %vm540, %v1309, 0.0
        %v1332 = vrot.slane %v1331, 4
        %v1333 = vadd.f32 %v1331, %v1332
        %v1334 = vrot.slane %v1333, 2
        %v1335 = vadd.f32 %v1333, %v1334
        %v1336 = vrot.slane %v1335, 1
        %v1337 = vadd.f32 %v1335, %v1336
        %v1338 = vmul.f32 %v1316, %v1297
        %v1339 = vmul.f32 %v1323, %v1297
        %v1340 = vmul.f32 %v1330, %v1297
        %v1341 = vmul.f32 %v1337, %v1297
        %v1342 = vld [vmem:[#allocation10] sm:$0xf]
        %v1344 = vlaneseq
        %v1345 = vshrl.u32 %v1344, 7
        %v1346 = vsub.s32 0, %v1345
        %v1347 = vrot.slane %v1342, %v1346
        %v1348 = vlaneseq
        %v1349 = vshrl.u32 %v1348, 7
        %v1350 = vsub.s32 1, %v1349
        %v1351 = vrot.slane %v1342, %v1350
        %v1352 = vlaneseq
        %v1353 = vshrl.u32 %v1352, 7
        %v1354 = vsub.s32 2, %v1353
        %v1355 = vrot.slane %v1342, %v1354
        %v1356 = vlaneseq
        %v1357 = vshrl.u32 %v1356, 7
        %v1358 = vsub.s32 3, %v1357
        %v1359 = vrot.slane %v1342, %v1358
        %v1364 = vmul.f32 %v1347, %v1302
        %v1365 = vmul.f32 %v1351, %v1303
        %v1366 = vmul.f32 %v1355, %v1304
        %v1367 = vmul.f32 %v1359, %v1305
        %v1368 = vadd.f32 %v1338, 1e-05
        %v1369 = vadd.f32 %v1339, 1e-05
        %v1370 = vadd.f32 %v1340, 1e-05
        %v1371 = vadd.f32 %v1341, 1e-05
        %v1372 = vrsqrt.pop %v1368
        %v1373 = vrsqrt.pop %v1369
        %v1374 = vrsqrt.pop %v1370
        %v1375 = vrsqrt.pop %v1371
        %v1376 = vmul.f32 %v1364, %v1372
        %v1377 = vmul.f32 %v1365, %v1373
        %v1378 = vmul.f32 %v1366, %v1374
        %v1379 = vmul.f32 %v1367, %v1375
        %v1380 = vld [vmem:[#allocation12] sm:$0xf]
        %v1382 = vlaneseq
        %v1383 = vshrl.u32 %v1382, 7
        %v1384 = vsub.s32 0, %v1383
        %v1385 = vrot.slane %v1380, %v1384
        %v1386 = vlaneseq
        %v1387 = vshrl.u32 %v1386, 7
        %v1388 = vsub.s32 1, %v1387
        %v1389 = vrot.slane %v1380, %v1388
        %v1390 = vlaneseq
        %v1391 = vshrl.u32 %v1390, 7
        %v1392 = vsub.s32 2, %v1391
        %v1393 = vrot.slane %v1380, %v1392
        %v1394 = vlaneseq
        %v1395 = vshrl.u32 %v1394, 7
        %v1396 = vsub.s32 3, %v1395
        %v1397 = vrot.slane %v1380, %v1396
        %v1402 = vadd.f32 %v1376, %v1385
        %v1403 = vadd.f32 %v1377, %v1389
        %v1404 = vadd.f32 %v1378, %v1393
        %v1405 = vadd.f32 %v1379, %v1397
        %vm1406 = vcmp.gt.f32.partialorder %v1402, 0.0
        %vm1407 = vcmp.gt.f32.partialorder %v1403, 0.0
        %vm1408 = vcmp.gt.f32.partialorder %v1404, 0.0
        %vm1409 = vcmp.gt.f32.partialorder %v1405, 0.0
        %v1410 = vmul.f32 %v1402, 0.2
        %v1411 = vmul.f32 %v1403, 0.2
        %v1412 = vmul.f32 %v1404, 0.2
        %v1413 = vmul.f32 %v1405, 0.2
        %v1414 = vsel %vm1406, %v1402, %v1410
        %v1415 = vsel %vm1407, %v1403, %v1411
        %v1416 = vsel %vm1408, %v1404, %v1412
        %v1417 = vsel %vm1409, %v1405, %v1413
        %v1418 = vpack.c.bf16 %v1414, %v1414
        %v1419 = vpack.c.bf16 %v1415, %v1415
        %v1420 = vpack.c.bf16 %v1416, %v1416
        %v1421 = vpack.c.bf16 %v1417, %v1417
        %v1422 = vld [vmem:[%s426] sm:$0xff]
        %v1423 = vld [vmem:[%s426 + $0x8] sm:$0xff]
        %v1424 = vld [vmem:[%s426 + $0x10] sm:$0xff]
        %v1425 = vld [vmem:[%s426 + $0x18] sm:$0xff]
        %v1426 = vld [vmem:[%s426 + $0x20] sm:$0xff]
        %v1427 = vld [vmem:[%s426 + $0x28] sm:$0xff]
        %v1428 = vld [vmem:[%s426 + $0x30] sm:$0xff]
        %v1429 = vld [vmem:[%s426 + $0x38] sm:$0xff]
        %v1430 = vld [vmem:[%s426 + $0x40] sm:$0xff]
        %v1431 = vld [vmem:[%s426 + $0x48] sm:$0xff]
        %v1432 = vld [vmem:[%s426 + $0x50] sm:$0xff]
        %v1433 = vld [vmem:[%s426 + $0x58] sm:$0xff]
        %v1434 = vld [vmem:[%s426 + $0x60] sm:$0xff]
        %v1435 = vld [vmem:[%s426 + $0x68] sm:$0xff]
        %v1436 = vld [vmem:[%s426 + $0x70] sm:$0xff]
        %v1437 = vld [vmem:[%s426 + $0x78] sm:$0xff]
        %v1438 = vld [vmem:[%s426 + $0x80] sm:$0xff]
        %v1439 = vld [vmem:[%s426 + $0x88] sm:$0xff]
        %v1440 = vld [vmem:[%s426 + $0x90] sm:$0xff]
        %v1441 = vld [vmem:[%s426 + $0x98] sm:$0xff]
        %v1442 = vld [vmem:[%s426 + $0xa0] sm:$0xff]
        %v1443 = vld [vmem:[%s426 + $0xa8] sm:$0xff]
        %v1444 = vld [vmem:[%s426 + $0xb0] sm:$0xff]
        %v1445 = vld [vmem:[%s426 + $0xb8] sm:$0xff]
        %v1446 = vld [vmem:[%s426 + $0xc0] sm:$0xff]
        %v1447 = vld [vmem:[%s426 + $0xc8] sm:$0xff]
        %v1448 = vld [vmem:[%s426 + $0xd0] sm:$0xff]
        %v1449 = vld [vmem:[%s426 + $0xd8] sm:$0xff]
        %v1450 = vld [vmem:[%s426 + $0xe0] sm:$0xff]
        %v1451 = vld [vmem:[%s426 + $0xe8] sm:$0xff]
        %v1452 = vld [vmem:[%s426 + $0xf0] sm:$0xff]
        %v1453 = vld [vmem:[%s426 + $0xf8] sm:$0xff]
        %v1454 = vld [vmem:[%s426 + $0x100] sm:$0xff]
        %v1455 = vld [vmem:[%s426 + $0x108] sm:$0xff]
        %v1456 = vld [vmem:[%s426 + $0x110] sm:$0xff]
        %v1457 = vld [vmem:[%s426 + $0x118] sm:$0xff]
        %v1458 = vld [vmem:[%s426 + $0x120] sm:$0xff]
        %v1459 = vld [vmem:[%s426 + $0x128] sm:$0xff]
        %v1460 = vld [vmem:[%s426 + $0x130] sm:$0xff]
        %v1461 = vld [vmem:[%s426 + $0x138] sm:$0xff]
        %v1462 = vld [vmem:[%s426 + $0x140] sm:$0xff]
        %v1463 = vld [vmem:[%s426 + $0x148] sm:$0xff]
        %v1464 = vld [vmem:[%s426 + $0x150] sm:$0xff]
        %v1465 = vld [vmem:[%s426 + $0x158] sm:$0xff]
        %v1466 = vld [vmem:[%s426 + $0x160] sm:$0xff]
        %v1467 = vld [vmem:[%s426 + $0x168] sm:$0xff]
        %v1468 = vld [vmem:[%s426 + $0x170] sm:$0xff]
        %v1469 = vld [vmem:[%s426 + $0x178] sm:$0xff]
        %v1470 = vld [vmem:[%s426 + $0x180] sm:$0xff]
        %v1471 = vld [vmem:[%s426 + $0x188] sm:$0xff]
        %v1472 = vld [vmem:[%s426 + $0x190] sm:$0xff]
        %v1473 = vld [vmem:[%s426 + $0x198] sm:$0xff]
        %v1474 = vld [vmem:[%s426 + $0x1a0] sm:$0xff]
        %v1475 = vld [vmem:[%s426 + $0x1a8] sm:$0xff]
        %v1476 = vld [vmem:[%s426 + $0x1b0] sm:$0xff]
        %v1477 = vld [vmem:[%s426 + $0x1b8] sm:$0xff]
        %v1478 = vld [vmem:[%s426 + $0x1c0] sm:$0xff]
        %v1479 = vld [vmem:[%s426 + $0x1c8] sm:$0xff]
        %v1480 = vld [vmem:[%s426 + $0x1d0] sm:$0xff]
        %v1481 = vld [vmem:[%s426 + $0x1d8] sm:$0xff]
        %v1482 = vld [vmem:[%s426 + $0x1e0] sm:$0xff]
        %v1483 = vld [vmem:[%s426 + $0x1e8] sm:$0xff]
        %v1484 = vld [vmem:[%s426 + $0x1f0] sm:$0xff]
        %v1485 = vld [vmem:[%s426 + $0x1f8] sm:$0xff]
        %v1486 = vld [vmem:[%s426 + $0x200] sm:$0xff]
        %v1487 = vld [vmem:[%s426 + $0x208] sm:$0xff]
        %v1488 = vld [vmem:[%s426 + $0x210] sm:$0xff]
        %v1489 = vld [vmem:[%s426 + $0x218] sm:$0xff]
        %v1490 = vld [vmem:[%s426 + $0x220] sm:$0xff]
        %v1491 = vld [vmem:[%s426 + $0x228] sm:$0xff]
        %v1492 = vld [vmem:[%s426 + $0x230] sm:$0xff]
        %v1493 = vld [vmem:[%s426 + $0x238] sm:$0xff]
        %v1494 = vld [vmem:[%s426 + $0x240] sm:$0xff]
        %v1495 = vld [vmem:[%s426 + $0x248] sm:$0xff]
        %v1496 = vld [vmem:[%s426 + $0x250] sm:$0xff]
        %v1497 = vld [vmem:[%s426 + $0x258] sm:$0xff]
        %v1498 = vld [vmem:[%s426 + $0x260] sm:$0xff]
        %v1499 = vld [vmem:[%s426 + $0x268] sm:$0xff]
        %v1500 = vld [vmem:[%s426 + $0x270] sm:$0xff]
        %v1501 = vld [vmem:[%s426 + $0x278] sm:$0xff]
        %v1502 = vld [vmem:[%s426 + $0x280] sm:$0xff]
        %v1503 = vld [vmem:[%s426 + $0x288] sm:$0xff]
        %v1504 = vld [vmem:[%s426 + $0x290] sm:$0xff]
        %v1505 = vld [vmem:[%s426 + $0x298] sm:$0xff]
        %v1506 = vld [vmem:[%s426 + $0x2a0] sm:$0xff]
        %v1507 = vld [vmem:[%s426 + $0x2a8] sm:$0xff]
        %v1508 = vld [vmem:[%s426 + $0x2b0] sm:$0xff]
        %v1509 = vld [vmem:[%s426 + $0x2b8] sm:$0xff]
        %v1510 = vld [vmem:[%s426 + $0x2c0] sm:$0xff]
        %v1511 = vld [vmem:[%s426 + $0x2c8] sm:$0xff]
        %v1512 = vld [vmem:[%s426 + $0x2d0] sm:$0xff]
        %v1513 = vld [vmem:[%s426 + $0x2d8] sm:$0xff]
        %v1514 = vld [vmem:[%s426 + $0x2e0] sm:$0xff]
        %v1515 = vld [vmem:[%s426 + $0x2e8] sm:$0xff]
        %v1516 = vld [vmem:[%s426 + $0x2f0] sm:$0xff]
        %v1517 = vld [vmem:[%s426 + $0x2f8] sm:$0xff]
        %v1518 = vld [vmem:[%s426 + $0x300] sm:$0xff]
        %v1519 = vld [vmem:[%s426 + $0x308] sm:$0xff]
        %v1520 = vld [vmem:[%s426 + $0x310] sm:$0xff]
        %v1521 = vld [vmem:[%s426 + $0x318] sm:$0xff]
        %v1522 = vld [vmem:[%s426 + $0x320] sm:$0xff]
        %v1523 = vld [vmem:[%s426 + $0x328] sm:$0xff]
        %v1524 = vld [vmem:[%s426 + $0x330] sm:$0xff]
        %v1525 = vld [vmem:[%s426 + $0x338] sm:$0xff]
        %v1526 = vld [vmem:[%s426 + $0x340] sm:$0xff]
        %v1527 = vld [vmem:[%s426 + $0x348] sm:$0xff]
        %v1528 = vld [vmem:[%s426 + $0x350] sm:$0xff]
        %v1529 = vld [vmem:[%s426 + $0x358] sm:$0xff]
        %v1530 = vld [vmem:[%s426 + $0x360] sm:$0xff]
        %v1531 = vld [vmem:[%s426 + $0x368] sm:$0xff]
        %v1532 = vld [vmem:[%s426 + $0x370] sm:$0xff]
        %v1533 = vld [vmem:[%s426 + $0x378] sm:$0xff]
        %v1534 = vld [vmem:[%s426 + $0x380] sm:$0xff]
        %v1535 = vld [vmem:[%s426 + $0x388] sm:$0xff]
        %v1536 = vld [vmem:[%s426 + $0x390] sm:$0xff]
        %v1537 = vld [vmem:[%s426 + $0x398] sm:$0xff]
        %v1538 = vld [vmem:[%s426 + $0x3a0] sm:$0xff]
        %v1539 = vld [vmem:[%s426 + $0x3a8] sm:$0xff]
        %v1540 = vld [vmem:[%s426 + $0x3b0] sm:$0xff]
        %v1541 = vld [vmem:[%s426 + $0x3b8] sm:$0xff]
        %v1542 = vld [vmem:[%s426 + $0x3c0] sm:$0xff]
        %v1543 = vld [vmem:[%s426 + $0x3c8] sm:$0xff]
        %v1544 = vld [vmem:[%s426 + $0x3d0] sm:$0xff]
        %v1545 = vld [vmem:[%s426 + $0x3d8] sm:$0xff]
        %v1546 = vld [vmem:[%s426 + $0x3e0] sm:$0xff]
        %v1547 = vld [vmem:[%s426 + $0x3e8] sm:$0xff]
        %v1548 = vld [vmem:[%s426 + $0x3f0] sm:$0xff]
        %v1549 = vld [vmem:[%s426 + $0x3f8] sm:$0xff]
        %v1550 = vld [vmem:[%s426 + $0x400] sm:$0xff]
        %v1551 = vld [vmem:[%s426 + $0x408] sm:$0xff]
        %v1552 = vld [vmem:[%s426 + $0x410] sm:$0xff]
        %v1553 = vld [vmem:[%s426 + $0x418] sm:$0xff]
        %v1554 = vld [vmem:[%s426 + $0x420] sm:$0xff]
        %v1555 = vld [vmem:[%s426 + $0x428] sm:$0xff]
        %v1556 = vld [vmem:[%s426 + $0x430] sm:$0xff]
        %v1557 = vld [vmem:[%s426 + $0x438] sm:$0xff]
        %v1558 = vld [vmem:[%s426 + $0x440] sm:$0xff]
        %v1559 = vld [vmem:[%s426 + $0x448] sm:$0xff]
        %v1560 = vld [vmem:[%s426 + $0x450] sm:$0xff]
        %v1561 = vld [vmem:[%s426 + $0x458] sm:$0xff]
        %v1562 = vld [vmem:[%s426 + $0x460] sm:$0xff]
        %v1563 = vld [vmem:[%s426 + $0x468] sm:$0xff]
        %v1564 = vld [vmem:[%s426 + $0x470] sm:$0xff]
        %v1565 = vld [vmem:[%s426 + $0x478] sm:$0xff]
        %v1566 = vld [vmem:[%s426 + $0x480] sm:$0xff]
        %v1567 = vld [vmem:[%s426 + $0x488] sm:$0xff]
        %v1568 = vld [vmem:[%s426 + $0x490] sm:$0xff]
        %v1569 = vld [vmem:[%s426 + $0x498] sm:$0xff]
        %v1570 = vld [vmem:[%s426 + $0x4a0] sm:$0xff]
        %v1571 = vld [vmem:[%s426 + $0x4a8] sm:$0xff]
        %v1572 = vld [vmem:[%s426 + $0x4b0] sm:$0xff]
        %v1573 = vld [vmem:[%s426 + $0x4b8] sm:$0xff]
        %v1574 = vld [vmem:[%s426 + $0x4c0] sm:$0xff]
        %v1575 = vld [vmem:[%s426 + $0x4c8] sm:$0xff]
        %v1576 = vld [vmem:[%s426 + $0x4d0] sm:$0xff]
        %v1577 = vld [vmem:[%s426 + $0x4d8] sm:$0xff]
        %v1578 = vld [vmem:[%s426 + $0x4e0] sm:$0xff]
        %v1579 = vld [vmem:[%s426 + $0x4e8] sm:$0xff]
        %v1580 = vld [vmem:[%s426 + $0x4f0] sm:$0xff]
        %v1581 = vld [vmem:[%s426 + $0x4f8] sm:$0xff]
        %v1582 = vld [vmem:[%s426 + $0x500] sm:$0xff]
        %v1583 = vld [vmem:[%s426 + $0x508] sm:$0xff]
        %v1584 = vld [vmem:[%s426 + $0x510] sm:$0xff]
        %v1585 = vld [vmem:[%s426 + $0x518] sm:$0xff]
        %v1586 = vld [vmem:[%s426 + $0x520] sm:$0xff]
        %v1587 = vld [vmem:[%s426 + $0x528] sm:$0xff]
        %v1588 = vld [vmem:[%s426 + $0x530] sm:$0xff]
        %v1589 = vld [vmem:[%s426 + $0x538] sm:$0xff]
        %v1590 = vld [vmem:[%s426 + $0x540] sm:$0xff]
        %v1591 = vld [vmem:[%s426 + $0x548] sm:$0xff]
        %v1592 = vld [vmem:[%s426 + $0x550] sm:$0xff]
        %v1593 = vld [vmem:[%s426 + $0x558] sm:$0xff]
        %v1594 = vld [vmem:[%s426 + $0x560] sm:$0xff]
        %v1595 = vld [vmem:[%s426 + $0x568] sm:$0xff]
        %v1596 = vld [vmem:[%s426 + $0x570] sm:$0xff]
        %v1597 = vld [vmem:[%s426 + $0x578] sm:$0xff]
        %v1598 = vld [vmem:[%s426 + $0x580] sm:$0xff]
        %v1599 = vld [vmem:[%s426 + $0x588] sm:$0xff]
        %v1600 = vld [vmem:[%s426 + $0x590] sm:$0xff]
        %v1601 = vld [vmem:[%s426 + $0x598] sm:$0xff]
        %v1602 = vld [vmem:[%s426 + $0x5a0] sm:$0xff]
        %v1603 = vld [vmem:[%s426 + $0x5a8] sm:$0xff]
        %v1604 = vld [vmem:[%s426 + $0x5b0] sm:$0xff]
        %v1605 = vld [vmem:[%s426 + $0x5b8] sm:$0xff]
        %v1606 = vld [vmem:[%s426 + $0x5c0] sm:$0xff]
        %v1607 = vld [vmem:[%s426 + $0x5c8] sm:$0xff]
        %v1608 = vld [vmem:[%s426 + $0x5d0] sm:$0xff]
        %v1609 = vld [vmem:[%s426 + $0x5d8] sm:$0xff]
        %v1610 = vld [vmem:[%s426 + $0x5e0] sm:$0xff]
        %v1611 = vld [vmem:[%s426 + $0x5e8] sm:$0xff]
        %v1612 = vld [vmem:[%s426 + $0x5f0] sm:$0xff]
        %v1613 = vld [vmem:[%s426 + $0x5f8] sm:$0xff]
        %v1614 = vld [vmem:[%s426 + $0x600] sm:$0xff]
        %v1615 = vld [vmem:[%s426 + $0x608] sm:$0xff]
        %v1616 = vld [vmem:[%s426 + $0x610] sm:$0xff]
        %v1617 = vld [vmem:[%s426 + $0x618] sm:$0xff]
        %v1618 = vld [vmem:[%s426 + $0x620] sm:$0xff]
        %v1619 = vld [vmem:[%s426 + $0x628] sm:$0xff]
        %v1620 = vld [vmem:[%s426 + $0x630] sm:$0xff]
        %v1621 = vld [vmem:[%s426 + $0x638] sm:$0xff]
        %v1622 = vld [vmem:[%s426 + $0x640] sm:$0xff]
        %v1623 = vld [vmem:[%s426 + $0x648] sm:$0xff]
        %v1624 = vld [vmem:[%s426 + $0x650] sm:$0xff]
        %v1625 = vld [vmem:[%s426 + $0x658] sm:$0xff]
        %v1626 = vld [vmem:[%s426 + $0x660] sm:$0xff]
        %v1627 = vld [vmem:[%s426 + $0x668] sm:$0xff]
        %v1628 = vld [vmem:[%s426 + $0x670] sm:$0xff]
        %v1629 = vld [vmem:[%s426 + $0x678] sm:$0xff]
        %v1630 = vld [vmem:[%s426 + $0x680] sm:$0xff]
        %v1631 = vld [vmem:[%s426 + $0x688] sm:$0xff]
        %v1632 = vld [vmem:[%s426 + $0x690] sm:$0xff]
        %v1633 = vld [vmem:[%s426 + $0x698] sm:$0xff]
        %v1634 = vld [vmem:[%s426 + $0x6a0] sm:$0xff]
        %v1635 = vld [vmem:[%s426 + $0x6a8] sm:$0xff]
        %v1636 = vld [vmem:[%s426 + $0x6b0] sm:$0xff]
        %v1637 = vld [vmem:[%s426 + $0x6b8] sm:$0xff]
        %v1638 = vld [vmem:[%s426 + $0x6c0] sm:$0xff]
        %v1639 = vld [vmem:[%s426 + $0x6c8] sm:$0xff]
        %v1640 = vld [vmem:[%s426 + $0x6d0] sm:$0xff]
        %v1641 = vld [vmem:[%s426 + $0x6d8] sm:$0xff]
        %v1642 = vld [vmem:[%s426 + $0x6e0] sm:$0xff]
        %v1643 = vld [vmem:[%s426 + $0x6e8] sm:$0xff]
        %v1644 = vld [vmem:[%s426 + $0x6f0] sm:$0xff]
        %v1645 = vld [vmem:[%s426 + $0x6f8] sm:$0xff]
        %v1646 = vld [vmem:[%s426 + $0x700] sm:$0xff]
        %v1647 = vld [vmem:[%s426 + $0x708] sm:$0xff]
        %v1648 = vld [vmem:[%s426 + $0x710] sm:$0xff]
        %v1649 = vld [vmem:[%s426 + $0x718] sm:$0xff]
        %v1650 = vld [vmem:[%s426 + $0x720] sm:$0xff]
        %v1651 = vld [vmem:[%s426 + $0x728] sm:$0xff]
        %v1652 = vld [vmem:[%s426 + $0x730] sm:$0xff]
        %v1653 = vld [vmem:[%s426 + $0x738] sm:$0xff]
        %v1654 = vld [vmem:[%s426 + $0x740] sm:$0xff]
        %v1655 = vld [vmem:[%s426 + $0x748] sm:$0xff]
        %v1656 = vld [vmem:[%s426 + $0x750] sm:$0xff]
        %v1657 = vld [vmem:[%s426 + $0x758] sm:$0xff]
        %v1658 = vld [vmem:[%s426 + $0x760] sm:$0xff]
        %v1659 = vld [vmem:[%s426 + $0x768] sm:$0xff]
        %v1660 = vld [vmem:[%s426 + $0x770] sm:$0xff]
        %v1661 = vld [vmem:[%s426 + $0x778] sm:$0xff]
        %v1662 = vld [vmem:[%s426 + $0x780] sm:$0xff]
        %v1663 = vld [vmem:[%s426 + $0x788] sm:$0xff]
        %v1664 = vld [vmem:[%s426 + $0x790] sm:$0xff]
        %v1665 = vld [vmem:[%s426 + $0x798] sm:$0xff]
        %v1666 = vld [vmem:[%s426 + $0x7a0] sm:$0xff]
        %v1667 = vld [vmem:[%s426 + $0x7a8] sm:$0xff]
        %v1668 = vld [vmem:[%s426 + $0x7b0] sm:$0xff]
        %v1669 = vld [vmem:[%s426 + $0x7b8] sm:$0xff]
        %v1670 = vld [vmem:[%s426 + $0x7c0] sm:$0xff]
        %v1671 = vld [vmem:[%s426 + $0x7c8] sm:$0xff]
        %v1672 = vld [vmem:[%s426 + $0x7d0] sm:$0xff]
        %v1673 = vld [vmem:[%s426 + $0x7d8] sm:$0xff]
        %v1674 = vld [vmem:[%s426 + $0x7e0] sm:$0xff]
        %v1675 = vld [vmem:[%s426 + $0x7e8] sm:$0xff]
        %v1676 = vld [vmem:[%s426 + $0x7f0] sm:$0xff]
        %v1677 = vld [vmem:[%s426 + $0x7f8] sm:$0xff]
        %v1678 = vld [vmem:[%s426 + $0x800] sm:$0xff]
        %v1679 = vld [vmem:[%s426 + $0x808] sm:$0xff]
        %v1680 = vld [vmem:[%s426 + $0x810] sm:$0xff]
        %v1681 = vld [vmem:[%s426 + $0x818] sm:$0xff]
        %v1682 = vld [vmem:[%s426 + $0x820] sm:$0xff]
        %v1683 = vld [vmem:[%s426 + $0x828] sm:$0xff]
        %v1684 = vld [vmem:[%s426 + $0x830] sm:$0xff]
        %v1685 = vld [vmem:[%s426 + $0x838] sm:$0xff]
        %v1686 = vld [vmem:[%s426 + $0x840] sm:$0xff]
        %v1687 = vld [vmem:[%s426 + $0x848] sm:$0xff]
        %v1688 = vld [vmem:[%s426 + $0x850] sm:$0xff]
        %v1689 = vld [vmem:[%s426 + $0x858] sm:$0xff]
        %v1690 = vld [vmem:[%s426 + $0x860] sm:$0xff]
        %v1691 = vld [vmem:[%s426 + $0x868] sm:$0xff]
        %v1692 = vld [vmem:[%s426 + $0x870] sm:$0xff]
        %v1693 = vld [vmem:[%s426 + $0x878] sm:$0xff]
        %v1694 = vld [vmem:[%s426 + $0x880] sm:$0xff]
        %v1695 = vld [vmem:[%s426 + $0x888] sm:$0xff]
        %v1696 = vld [vmem:[%s426 + $0x890] sm:$0xff]
        %v1697 = vld [vmem:[%s426 + $0x898] sm:$0xff]
        %v1698 = vld [vmem:[%s426 + $0x8a0] sm:$0xff]
        %v1699 = vld [vmem:[%s426 + $0x8a8] sm:$0xff]
        %v1700 = vld [vmem:[%s426 + $0x8b0] sm:$0xff]
        %v1701 = vld [vmem:[%s426 + $0x8b8] sm:$0xff]
        %v1702 = vld [vmem:[%s426 + $0x8c0] sm:$0xff]
        %v1703 = vld [vmem:[%s426 + $0x8c8] sm:$0xff]
        %v1704 = vld [vmem:[%s426 + $0x8d0] sm:$0xff]
        %v1705 = vld [vmem:[%s426 + $0x8d8] sm:$0xff]
        %v1706 = vld [vmem:[%s426 + $0x8e0] sm:$0xff]
        %v1707 = vld [vmem:[%s426 + $0x8e8] sm:$0xff]
        %v1708 = vld [vmem:[%s426 + $0x8f0] sm:$0xff]
        %v1709 = vld [vmem:[%s426 + $0x8f8] sm:$0xff]
        %v1710 = vld [vmem:[%s426 + $0x900] sm:$0xff]
        %v1711 = vld [vmem:[%s426 + $0x908] sm:$0xff]
        %v1712 = vld [vmem:[%s426 + $0x910] sm:$0xff]
        %v1713 = vld [vmem:[%s426 + $0x918] sm:$0xff]
        %v1714 = vld [vmem:[%s426 + $0x920] sm:$0xff]
        %v1715 = vld [vmem:[%s426 + $0x928] sm:$0xff]
        %v1716 = vld [vmem:[%s426 + $0x930] sm:$0xff]
        %v1717 = vld [vmem:[%s426 + $0x938] sm:$0xff]
        %v1718 = vld [vmem:[%s426 + $0x940] sm:$0xff]
        %v1719 = vld [vmem:[%s426 + $0x948] sm:$0xff]
        %v1720 = vld [vmem:[%s426 + $0x950] sm:$0xff]
        %v1721 = vld [vmem:[%s426 + $0x958] sm:$0xff]
        %v1722 = vld [vmem:[%s426 + $0x960] sm:$0xff]
        %v1723 = vld [vmem:[%s426 + $0x968] sm:$0xff]
        %v1724 = vld [vmem:[%s426 + $0x970] sm:$0xff]
        %v1725 = vld [vmem:[%s426 + $0x978] sm:$0xff]
        %v1726 = vld [vmem:[%s426 + $0x980] sm:$0xff]
        %v1727 = vld [vmem:[%s426 + $0x988] sm:$0xff]
        %v1728 = vld [vmem:[%s426 + $0x990] sm:$0xff]
        %v1729 = vld [vmem:[%s426 + $0x998] sm:$0xff]
        %v1730 = vld [vmem:[%s426 + $0x9a0] sm:$0xff]
        %v1731 = vld [vmem:[%s426 + $0x9a8] sm:$0xff]
        %v1732 = vld [vmem:[%s426 + $0x9b0] sm:$0xff]
        %v1733 = vld [vmem:[%s426 + $0x9b8] sm:$0xff]
        %v1734 = vld [vmem:[%s426 + $0x9c0] sm:$0xff]
        %v1735 = vld [vmem:[%s426 + $0x9c8] sm:$0xff]
        %v1736 = vld [vmem:[%s426 + $0x9d0] sm:$0xff]
        %v1737 = vld [vmem:[%s426 + $0x9d8] sm:$0xff]
        %v1738 = vld [vmem:[%s426 + $0x9e0] sm:$0xff]
        %v1739 = vld [vmem:[%s426 + $0x9e8] sm:$0xff]
        %v1740 = vld [vmem:[%s426 + $0x9f0] sm:$0xff]
        %v1741 = vld [vmem:[%s426 + $0x9f8] sm:$0xff]
        %v1742 = vld [vmem:[%s426 + $0xa00] sm:$0xff]
        %v1743 = vld [vmem:[%s426 + $0xa08] sm:$0xff]
        %v1744 = vld [vmem:[%s426 + $0xa10] sm:$0xff]
        %v1745 = vld [vmem:[%s426 + $0xa18] sm:$0xff]
        %v1746 = vld [vmem:[%s426 + $0xa20] sm:$0xff]
        %v1747 = vld [vmem:[%s426 + $0xa28] sm:$0xff]
        %v1748 = vld [vmem:[%s426 + $0xa30] sm:$0xff]
        %v1749 = vld [vmem:[%s426 + $0xa38] sm:$0xff]
        %v1750 = vld [vmem:[%s426 + $0xa40] sm:$0xff]
        %v1751 = vld [vmem:[%s426 + $0xa48] sm:$0xff]
        %v1752 = vld [vmem:[%s426 + $0xa50] sm:$0xff]
        %v1753 = vld [vmem:[%s426 + $0xa58] sm:$0xff]
        %v1754 = vld [vmem:[%s426 + $0xa60] sm:$0xff]
        %v1755 = vld [vmem:[%s426 + $0xa68] sm:$0xff]
        %v1756 = vld [vmem:[%s426 + $0xa70] sm:$0xff]
        %v1757 = vld [vmem:[%s426 + $0xa78] sm:$0xff]
        %v1758 = vld [vmem:[%s426 + $0xa80] sm:$0xff]
        %v1759 = vld [vmem:[%s426 + $0xa88] sm:$0xff]
        %v1760 = vld [vmem:[%s426 + $0xa90] sm:$0xff]
        %v1761 = vld [vmem:[%s426 + $0xa98] sm:$0xff]
        %v1762 = vld [vmem:[%s426 + $0xaa0] sm:$0xff]
        %v1763 = vld [vmem:[%s426 + $0xaa8] sm:$0xff]
        %v1764 = vld [vmem:[%s426 + $0xab0] sm:$0xff]
        %v1765 = vld [vmem:[%s426 + $0xab8] sm:$0xff]
        %v1766 = vld [vmem:[%s426 + $0xac0] sm:$0xff]
        %v1767 = vld [vmem:[%s426 + $0xac8] sm:$0xff]
        %v1768 = vld [vmem:[%s426 + $0xad0] sm:$0xff]
        %v1769 = vld [vmem:[%s426 + $0xad8] sm:$0xff]
        %v1770 = vld [vmem:[%s426 + $0xae0] sm:$0xff]
        %v1771 = vld [vmem:[%s426 + $0xae8] sm:$0xff]
        %v1772 = vld [vmem:[%s426 + $0xaf0] sm:$0xff]
        %v1773 = vld [vmem:[%s426 + $0xaf8] sm:$0xff]
        %v1774 = vld [vmem:[%s426 + $0xb00] sm:$0xff]
        %v1775 = vld [vmem:[%s426 + $0xb08] sm:$0xff]
        %v1776 = vld [vmem:[%s426 + $0xb10] sm:$0xff]
        %v1777 = vld [vmem:[%s426 + $0xb18] sm:$0xff]
        %v1778 = vld [vmem:[%s426 + $0xb20] sm:$0xff]
        %v1779 = vld [vmem:[%s426 + $0xb28] sm:$0xff]
        %v1780 = vld [vmem:[%s426 + $0xb30] sm:$0xff]
        %v1781 = vld [vmem:[%s426 + $0xb38] sm:$0xff]
        %v1782 = vld [vmem:[%s426 + $0xb40] sm:$0xff]
        %v1783 = vld [vmem:[%s426 + $0xb48] sm:$0xff]
        %v1784 = vld [vmem:[%s426 + $0xb50] sm:$0xff]
        %v1785 = vld [vmem:[%s426 + $0xb58] sm:$0xff]
        %v1786 = vld [vmem:[%s426 + $0xb60] sm:$0xff]
        %v1787 = vld [vmem:[%s426 + $0xb68] sm:$0xff]
        %v1788 = vld [vmem:[%s426 + $0xb70] sm:$0xff]
        %v1789 = vld [vmem:[%s426 + $0xb78] sm:$0xff]
        %v1790 = vld [vmem:[%s426 + $0xb80] sm:$0xff]
        %v1791 = vld [vmem:[%s426 + $0xb88] sm:$0xff]
        %v1792 = vld [vmem:[%s426 + $0xb90] sm:$0xff]
        %v1793 = vld [vmem:[%s426 + $0xb98] sm:$0xff]
        %v1794 = vld [vmem:[%s426 + $0xba0] sm:$0xff]
        %v1795 = vld [vmem:[%s426 + $0xba8] sm:$0xff]
        %v1796 = vld [vmem:[%s426 + $0xbb0] sm:$0xff]
        %v1797 = vld [vmem:[%s426 + $0xbb8] sm:$0xff]
        %v1798 = vld [vmem:[%s426 + $0xbc0] sm:$0xff]
        %v1799 = vld [vmem:[%s426 + $0xbc8] sm:$0xff]
        %v1800 = vld [vmem:[%s426 + $0xbd0] sm:$0xff]
        %v1801 = vld [vmem:[%s426 + $0xbd8] sm:$0xff]
        %v1802 = vld [vmem:[%s426 + $0xbe0] sm:$0xff]
        %v1803 = vld [vmem:[%s426 + $0xbe8] sm:$0xff]
        %v1804 = vld [vmem:[%s426 + $0xbf0] sm:$0xff]
        %v1805 = vld [vmem:[%s426 + $0xbf8] sm:$0xff]
        %v1806 = vld [vmem:[%s426 + $0xc00] sm:$0xff]
        %v1807 = vld [vmem:[%s426 + $0xc08] sm:$0xff]
        %v1808 = vld [vmem:[%s426 + $0xc10] sm:$0xff]
        %v1809 = vld [vmem:[%s426 + $0xc18] sm:$0xff]
        %v1810 = vld [vmem:[%s426 + $0xc20] sm:$0xff]
        %v1811 = vld [vmem:[%s426 + $0xc28] sm:$0xff]
        %v1812 = vld [vmem:[%s426 + $0xc30] sm:$0xff]
        %v1813 = vld [vmem:[%s426 + $0xc38] sm:$0xff]
        %v1814 = vld [vmem:[%s426 + $0xc40] sm:$0xff]
        %v1815 = vld [vmem:[%s426 + $0xc48] sm:$0xff]
        %v1816 = vld [vmem:[%s426 + $0xc50] sm:$0xff]
        %v1817 = vld [vmem:[%s426 + $0xc58] sm:$0xff]
        %v1818 = vld [vmem:[%s426 + $0xc60] sm:$0xff]
        %v1819 = vld [vmem:[%s426 + $0xc68] sm:$0xff]
        %v1820 = vld [vmem:[%s426 + $0xc70] sm:$0xff]
        %v1821 = vld [vmem:[%s426 + $0xc78] sm:$0xff]
        %v1822 = vld [vmem:[%s426 + $0xc80] sm:$0xff]
        %v1823 = vld [vmem:[%s426 + $0xc88] sm:$0xff]
        %v1824 = vld [vmem:[%s426 + $0xc90] sm:$0xff]
        %v1825 = vld [vmem:[%s426 + $0xc98] sm:$0xff]
        %v1826 = vld [vmem:[%s426 + $0xca0] sm:$0xff]
        %v1827 = vld [vmem:[%s426 + $0xca8] sm:$0xff]
        %v1828 = vld [vmem:[%s426 + $0xcb0] sm:$0xff]
        %v1829 = vld [vmem:[%s426 + $0xcb8] sm:$0xff]
        %v1830 = vld [vmem:[%s426 + $0xcc0] sm:$0xff]
        %v1831 = vld [vmem:[%s426 + $0xcc8] sm:$0xff]
        %v1832 = vld [vmem:[%s426 + $0xcd0] sm:$0xff]
        %v1833 = vld [vmem:[%s426 + $0xcd8] sm:$0xff]
        %v1834 = vld [vmem:[%s426 + $0xce0] sm:$0xff]
        %v1835 = vld [vmem:[%s426 + $0xce8] sm:$0xff]
        %v1836 = vld [vmem:[%s426 + $0xcf0] sm:$0xff]
        %v1837 = vld [vmem:[%s426 + $0xcf8] sm:$0xff]
        %v1838 = vld [vmem:[%s426 + $0xd00] sm:$0xff]
        %v1839 = vld [vmem:[%s426 + $0xd08] sm:$0xff]
        %v1840 = vld [vmem:[%s426 + $0xd10] sm:$0xff]
        %v1841 = vld [vmem:[%s426 + $0xd18] sm:$0xff]
        %v1842 = vld [vmem:[%s426 + $0xd20] sm:$0xff]
        %v1843 = vld [vmem:[%s426 + $0xd28] sm:$0xff]
        %v1844 = vld [vmem:[%s426 + $0xd30] sm:$0xff]
        %v1845 = vld [vmem:[%s426 + $0xd38] sm:$0xff]
        %v1846 = vld [vmem:[%s426 + $0xd40] sm:$0xff]
        %v1847 = vld [vmem:[%s426 + $0xd48] sm:$0xff]
        %v1848 = vld [vmem:[%s426 + $0xd50] sm:$0xff]
        %v1849 = vld [vmem:[%s426 + $0xd58] sm:$0xff]
        %v1850 = vld [vmem:[%s426 + $0xd60] sm:$0xff]
        %v1851 = vld [vmem:[%s426 + $0xd68] sm:$0xff]
        %v1852 = vld [vmem:[%s426 + $0xd70] sm:$0xff]
        %v1853 = vld [vmem:[%s426 + $0xd78] sm:$0xff]
        %v1854 = vld [vmem:[%s426 + $0xd80] sm:$0xff]
        %v1855 = vld [vmem:[%s426 + $0xd88] sm:$0xff]
        %v1856 = vld [vmem:[%s426 + $0xd90] sm:$0xff]
        %v1857 = vld [vmem:[%s426 + $0xd98] sm:$0xff]
        %v1858 = vld [vmem:[%s426 + $0xda0] sm:$0xff]
        %v1859 = vld [vmem:[%s426 + $0xda8] sm:$0xff]
        %v1860 = vld [vmem:[%s426 + $0xdb0] sm:$0xff]
        %v1861 = vld [vmem:[%s426 + $0xdb8] sm:$0xff]
        %v1862 = vld [vmem:[%s426 + $0xdc0] sm:$0xff]
        %v1863 = vld [vmem:[%s426 + $0xdc8] sm:$0xff]
        %v1864 = vld [vmem:[%s426 + $0xdd0] sm:$0xff]
        %v1865 = vld [vmem:[%s426 + $0xdd8] sm:$0xff]
        %v1866 = vld [vmem:[%s426 + $0xde0] sm:$0xff]
        %v1867 = vld [vmem:[%s426 + $0xde8] sm:$0xff]
        %v1868 = vld [vmem:[%s426 + $0xdf0] sm:$0xff]
        %v1869 = vld [vmem:[%s426 + $0xdf8] sm:$0xff]
        %v1870 = vld [vmem:[%s426 + $0xe00] sm:$0xff]
        %v1871 = vld [vmem:[%s426 + $0xe08] sm:$0xff]
        %v1872 = vld [vmem:[%s426 + $0xe10] sm:$0xff]
        %v1873 = vld [vmem:[%s426 + $0xe18] sm:$0xff]
        %v1874 = vld [vmem:[%s426 + $0xe20] sm:$0xff]
        %v1875 = vld [vmem:[%s426 + $0xe28] sm:$0xff]
        %v1876 = vld [vmem:[%s426 + $0xe30] sm:$0xff]
        %v1877 = vld [vmem:[%s426 + $0xe38] sm:$0xff]
        %v1878 = vld [vmem:[%s426 + $0xe40] sm:$0xff]
        %v1879 = vld [vmem:[%s426 + $0xe48] sm:$0xff]
        %v1880 = vld [vmem:[%s426 + $0xe50] sm:$0xff]
        %v1881 = vld [vmem:[%s426 + $0xe58] sm:$0xff]
        %v1882 = vld [vmem:[%s426 + $0xe60] sm:$0xff]
        %v1883 = vld [vmem:[%s426 + $0xe68] sm:$0xff]
        %v1884 = vld [vmem:[%s426 + $0xe70] sm:$0xff]
        %v1885 = vld [vmem:[%s426 + $0xe78] sm:$0xff]
        %v1886 = vld [vmem:[%s426 + $0xe80] sm:$0xff]
        %v1887 = vld [vmem:[%s426 + $0xe88] sm:$0xff]
        %v1888 = vld [vmem:[%s426 + $0xe90] sm:$0xff]
        %v1889 = vld [vmem:[%s426 + $0xe98] sm:$0xff]
        %v1890 = vld [vmem:[%s426 + $0xea0] sm:$0xff]
        %v1891 = vld [vmem:[%s426 + $0xea8] sm:$0xff]
        %v1892 = vld [vmem:[%s426 + $0xeb0] sm:$0xff]
        %v1893 = vld [vmem:[%s426 + $0xeb8] sm:$0xff]
        %v1894 = vld [vmem:[%s426 + $0xec0] sm:$0xff]
        %v1895 = vld [vmem:[%s426 + $0xec8] sm:$0xff]
        %v1896 = vld [vmem:[%s426 + $0xed0] sm:$0xff]
        %v1897 = vld [vmem:[%s426 + $0xed8] sm:$0xff]
        %v1898 = vld [vmem:[%s426 + $0xee0] sm:$0xff]
        %v1899 = vld [vmem:[%s426 + $0xee8] sm:$0xff]
        %v1900 = vld [vmem:[%s426 + $0xef0] sm:$0xff]
        %v1901 = vld [vmem:[%s426 + $0xef8] sm:$0xff]
        %v1902 = vld [vmem:[%s426 + $0xf00] sm:$0xff]
        %v1903 = vld [vmem:[%s426 + $0xf08] sm:$0xff]
        %v1904 = vld [vmem:[%s426 + $0xf10] sm:$0xff]
        %v1905 = vld [vmem:[%s426 + $0xf18] sm:$0xff]
        %v1906 = vld [vmem:[%s426 + $0xf20] sm:$0xff]
        %v1907 = vld [vmem:[%s426 + $0xf28] sm:$0xff]
        %v1908 = vld [vmem:[%s426 + $0xf30] sm:$0xff]
        %v1909 = vld [vmem:[%s426 + $0xf38] sm:$0xff]
        %v1910 = vld [vmem:[%s426 + $0xf40] sm:$0xff]
        %v1911 = vld [vmem:[%s426 + $0xf48] sm:$0xff]
        %v1912 = vld [vmem:[%s426 + $0xf50] sm:$0xff]
        %v1913 = vld [vmem:[%s426 + $0xf58] sm:$0xff]
        %v1914 = vld [vmem:[%s426 + $0xf60] sm:$0xff]
        %v1915 = vld [vmem:[%s426 + $0xf68] sm:$0xff]
        %v1916 = vld [vmem:[%s426 + $0xf70] sm:$0xff]
        %v1917 = vld [vmem:[%s426 + $0xf78] sm:$0xff]
        %v1918 = vld [vmem:[%s426 + $0xf80] sm:$0xff]
        %v1919 = vld [vmem:[%s426 + $0xf88] sm:$0xff]
        %v1920 = vld [vmem:[%s426 + $0xf90] sm:$0xff]
        %v1921 = vld [vmem:[%s426 + $0xf98] sm:$0xff]
        %v1922 = vld [vmem:[%s426 + $0xfa0] sm:$0xff]
        %v1923 = vld [vmem:[%s426 + $0xfa8] sm:$0xff]
        %v1924 = vld [vmem:[%s426 + $0xfb0] sm:$0xff]
        %v1925 = vld [vmem:[%s426 + $0xfb8] sm:$0xff]
        %v1926 = vld [vmem:[%s426 + $0xfc0] sm:$0xff]
        %v1927 = vld [vmem:[%s426 + $0xfc8] sm:$0xff]
        %v1928 = vld [vmem:[%s426 + $0xfd0] sm:$0xff]
        %v1929 = vld [vmem:[%s426 + $0xfd8] sm:$0xff]
        %v1930 = vld [vmem:[%s426 + $0xfe0] sm:$0xff]
        %v1931 = vld [vmem:[%s426 + $0xfe8] sm:$0xff]
        %v1932 = vld [vmem:[%s426 + $0xff0] sm:$0xff]
        %v1933 = vld [vmem:[%s426 + $0xff8] sm:$0xff]
        %v1934 = vld [vmem:[%s426 + $0x1000] sm:$0xff]
        %v1935 = vld [vmem:[%s426 + $0x1008] sm:$0xff]
        %v1936 = vld [vmem:[%s426 + $0x1010] sm:$0xff]
        %v1937 = vld [vmem:[%s426 + $0x1018] sm:$0xff]
        %v1938 = vld [vmem:[%s426 + $0x1020] sm:$0xff]
        %v1939 = vld [vmem:[%s426 + $0x1028] sm:$0xff]
        %v1940 = vld [vmem:[%s426 + $0x1030] sm:$0xff]
        %v1941 = vld [vmem:[%s426 + $0x1038] sm:$0xff]
        %v1942 = vld [vmem:[%s426 + $0x1040] sm:$0xff]
        %v1943 = vld [vmem:[%s426 + $0x1048] sm:$0xff]
        %v1944 = vld [vmem:[%s426 + $0x1050] sm:$0xff]
        %v1945 = vld [vmem:[%s426 + $0x1058] sm:$0xff]
        %v1946 = vld [vmem:[%s426 + $0x1060] sm:$0xff]
        %v1947 = vld [vmem:[%s426 + $0x1068] sm:$0xff]
        %v1948 = vld [vmem:[%s426 + $0x1070] sm:$0xff]
        %v1949 = vld [vmem:[%s426 + $0x1078] sm:$0xff]
        %v1950 = vld [vmem:[%s426 + $0x1080] sm:$0xff]
        %v1951 = vld [vmem:[%s426 + $0x1088] sm:$0xff]
        %v1952 = vld [vmem:[%s426 + $0x1090] sm:$0xff]
        %v1953 = vld [vmem:[%s426 + $0x1098] sm:$0xff]
        %v1954 = vld [vmem:[%s426 + $0x10a0] sm:$0xff]
        %v1955 = vld [vmem:[%s426 + $0x10a8] sm:$0xff]
        %v1956 = vld [vmem:[%s426 + $0x10b0] sm:$0xff]
        %v1957 = vld [vmem:[%s426 + $0x10b8] sm:$0xff]
        %v1958 = vld [vmem:[%s426 + $0x10c0] sm:$0xff]
        %v1959 = vld [vmem:[%s426 + $0x10c8] sm:$0xff]
        %v1960 = vld [vmem:[%s426 + $0x10d0] sm:$0xff]
        %v1961 = vld [vmem:[%s426 + $0x10d8] sm:$0xff]
        %v1962 = vld [vmem:[%s426 + $0x10e0] sm:$0xff]
        %v1963 = vld [vmem:[%s426 + $0x10e8] sm:$0xff]
        %v1964 = vld [vmem:[%s426 + $0x10f0] sm:$0xff]
        %v1965 = vld [vmem:[%s426 + $0x10f8] sm:$0xff]
        %v1966 = vld [vmem:[%s426 + $0x1100] sm:$0xff]
        %v1967 = vld [vmem:[%s426 + $0x1108] sm:$0xff]
        %v1968 = vld [vmem:[%s426 + $0x1110] sm:$0xff]
        %v1969 = vld [vmem:[%s426 + $0x1118] sm:$0xff]
        %v1970 = vld [vmem:[%s426 + $0x1120] sm:$0xff]
        %v1971 = vld [vmem:[%s426 + $0x1128] sm:$0xff]
        %v1972 = vld [vmem:[%s426 + $0x1130] sm:$0xff]
        %v1973 = vld [vmem:[%s426 + $0x1138] sm:$0xff]
        %v1974 = vld [vmem:[%s426 + $0x1140] sm:$0xff]
        %v1975 = vld [vmem:[%s426 + $0x1148] sm:$0xff]
        %v1976 = vld [vmem:[%s426 + $0x1150] sm:$0xff]
        %v1977 = vld [vmem:[%s426 + $0x1158] sm:$0xff]
        %v1978 = vld [vmem:[%s426 + $0x1160] sm:$0xff]
        %v1979 = vld [vmem:[%s426 + $0x1168] sm:$0xff]
        %v1980 = vld [vmem:[%s426 + $0x1170] sm:$0xff]
        %v1981 = vld [vmem:[%s426 + $0x1178] sm:$0xff]
        %v1982 = vld [vmem:[%s426 + $0x1180] sm:$0xff]
        %v1983 = vld [vmem:[%s426 + $0x1188] sm:$0xff]
        %v1984 = vld [vmem:[%s426 + $0x1190] sm:$0xff]
        %v1985 = vld [vmem:[%s426 + $0x1198] sm:$0xff]
        %v1986 = vld [vmem:[%s426 + $0x11a0] sm:$0xff]
        %v1987 = vld [vmem:[%s426 + $0x11a8] sm:$0xff]
        %v1988 = vld [vmem:[%s426 + $0x11b0] sm:$0xff]
        %v1989 = vld [vmem:[%s426 + $0x11b8] sm:$0xff]
        %v1990 = vld [vmem:[%s426 + $0x11c0] sm:$0xff]
        %v1991 = vld [vmem:[%s426 + $0x11c8] sm:$0xff]
        %v1992 = vld [vmem:[%s426 + $0x11d0] sm:$0xff]
        %v1993 = vld [vmem:[%s426 + $0x11d8] sm:$0xff]
        %v1994 = vld [vmem:[%s426 + $0x11e0] sm:$0xff]
        %v1995 = vld [vmem:[%s426 + $0x11e8] sm:$0xff]
        %v1996 = vld [vmem:[%s426 + $0x11f0] sm:$0xff]
        %v1997 = vld [vmem:[%s426 + $0x11f8] sm:$0xff]
        %v1998 = vld [vmem:[%s426 + $0x1200] sm:$0xff]
        %v1999 = vld [vmem:[%s426 + $0x1208] sm:$0xff]
        %v2000 = vld [vmem:[%s426 + $0x1210] sm:$0xff]
        %v2001 = vld [vmem:[%s426 + $0x1218] sm:$0xff]
        %v2002 = vld [vmem:[%s426 + $0x1220] sm:$0xff]
        %v2003 = vld [vmem:[%s426 + $0x1228] sm:$0xff]
        %v2004 = vld [vmem:[%s426 + $0x1230] sm:$0xff]
        %v2005 = vld [vmem:[%s426 + $0x1238] sm:$0xff]
        %v2006 = vld [vmem:[%s426 + $0x1240] sm:$0xff]
        %v2007 = vld [vmem:[%s426 + $0x1248] sm:$0xff]
        %v2008 = vld [vmem:[%s426 + $0x1250] sm:$0xff]
        %v2009 = vld [vmem:[%s426 + $0x1258] sm:$0xff]
        %v2010 = vld [vmem:[%s426 + $0x1260] sm:$0xff]
        %v2011 = vld [vmem:[%s426 + $0x1268] sm:$0xff]
        %v2012 = vld [vmem:[%s426 + $0x1270] sm:$0xff]
        %v2013 = vld [vmem:[%s426 + $0x1278] sm:$0xff]
        %v2014 = vld [vmem:[%s426 + $0x1280] sm:$0xff]
        %v2015 = vld [vmem:[%s426 + $0x1288] sm:$0xff]
        %v2016 = vld [vmem:[%s426 + $0x1290] sm:$0xff]
        %v2017 = vld [vmem:[%s426 + $0x1298] sm:$0xff]
        %v2018 = vld [vmem:[%s426 + $0x12a0] sm:$0xff]
        %v2019 = vld [vmem:[%s426 + $0x12a8] sm:$0xff]
        %v2020 = vld [vmem:[%s426 + $0x12b0] sm:$0xff]
        %v2021 = vld [vmem:[%s426 + $0x12b8] sm:$0xff]
        %v2022 = vld [vmem:[%s426 + $0x12c0] sm:$0xff]
        %v2023 = vld [vmem:[%s426 + $0x12c8] sm:$0xff]
        %v2024 = vld [vmem:[%s426 + $0x12d0] sm:$0xff]
        %v2025 = vld [vmem:[%s426 + $0x12d8] sm:$0xff]
        %v2026 = vld [vmem:[%s426 + $0x12e0] sm:$0xff]
        %v2027 = vld [vmem:[%s426 + $0x12e8] sm:$0xff]
        %v2028 = vld [vmem:[%s426 + $0x12f0] sm:$0xff]
        %v2029 = vld [vmem:[%s426 + $0x12f8] sm:$0xff]
        %v2030 = vld [vmem:[%s426 + $0x1300] sm:$0xff]
        %v2031 = vld [vmem:[%s426 + $0x1308] sm:$0xff]
        %v2032 = vld [vmem:[%s426 + $0x1310] sm:$0xff]
        %v2033 = vld [vmem:[%s426 + $0x1318] sm:$0xff]
        %v2034 = vld [vmem:[%s426 + $0x1320] sm:$0xff]
        %v2035 = vld [vmem:[%s426 + $0x1328] sm:$0xff]
        %v2036 = vld [vmem:[%s426 + $0x1330] sm:$0xff]
        %v2037 = vld [vmem:[%s426 + $0x1338] sm:$0xff]
        %v2038 = vld [vmem:[%s426 + $0x1340] sm:$0xff]
        %v2039 = vld [vmem:[%s426 + $0x1348] sm:$0xff]
        %v2040 = vld [vmem:[%s426 + $0x1350] sm:$0xff]
        %v2041 = vld [vmem:[%s426 + $0x1358] sm:$0xff]
        %v2042 = vld [vmem:[%s426 + $0x1360] sm:$0xff]
        %v2043 = vld [vmem:[%s426 + $0x1368] sm:$0xff]
        %v2044 = vld [vmem:[%s426 + $0x1370] sm:$0xff]
        %v2045 = vld [vmem:[%s426 + $0x1378] sm:$0xff]
        %v2046 = vld [vmem:[%s426 + $0x1380] sm:$0xff]
        %v2047 = vld [vmem:[%s426 + $0x1388] sm:$0xff]
        %v2048 = vld [vmem:[%s426 + $0x1390] sm:$0xff]
        %v2049 = vld [vmem:[%s426 + $0x1398] sm:$0xff]
        %v2050 = vld [vmem:[%s426 + $0x13a0] sm:$0xff]
        %v2051 = vld [vmem:[%s426 + $0x13a8] sm:$0xff]
        %v2052 = vld [vmem:[%s426 + $0x13b0] sm:$0xff]
        %v2053 = vld [vmem:[%s426 + $0x13b8] sm:$0xff]
        %v2054 = vld [vmem:[%s426 + $0x13c0] sm:$0xff]
        %v2055 = vld [vmem:[%s426 + $0x13c8] sm:$0xff]
        %v2056 = vld [vmem:[%s426 + $0x13d0] sm:$0xff]
        %v2057 = vld [vmem:[%s426 + $0x13d8] sm:$0xff]
        %v2058 = vld [vmem:[%s426 + $0x13e0] sm:$0xff]
        %v2059 = vld [vmem:[%s426 + $0x13e8] sm:$0xff]
        %v2060 = vld [vmem:[%s426 + $0x13f0] sm:$0xff]
        %v2061 = vld [vmem:[%s426 + $0x13f8] sm:$0xff]
        %v2062 = vld [vmem:[%s426 + $0x1400] sm:$0xff]
        %v2063 = vld [vmem:[%s426 + $0x1408] sm:$0xff]
        %v2064 = vld [vmem:[%s426 + $0x1410] sm:$0xff]
        %v2065 = vld [vmem:[%s426 + $0x1418] sm:$0xff]
        %v2066 = vld [vmem:[%s426 + $0x1420] sm:$0xff]
        %v2067 = vld [vmem:[%s426 + $0x1428] sm:$0xff]
        %v2068 = vld [vmem:[%s426 + $0x1430] sm:$0xff]
        %v2069 = vld [vmem:[%s426 + $0x1438] sm:$0xff]
        %v2070 = vld [vmem:[%s426 + $0x1440] sm:$0xff]
        %v2071 = vld [vmem:[%s426 + $0x1448] sm:$0xff]
        %v2072 = vld [vmem:[%s426 + $0x1450] sm:$0xff]
        %v2073 = vld [vmem:[%s426 + $0x1458] sm:$0xff]
        %v2074 = vld [vmem:[%s426 + $0x1460] sm:$0xff]
        %v2075 = vld [vmem:[%s426 + $0x1468] sm:$0xff]
        %v2076 = vld [vmem:[%s426 + $0x1470] sm:$0xff]
        %v2077 = vld [vmem:[%s426 + $0x1478] sm:$0xff]
        %v2078 = vld [vmem:[%s426 + $0x1480] sm:$0xff]
        %v2079 = vld [vmem:[%s426 + $0x1488] sm:$0xff]
        %v2080 = vld [vmem:[%s426 + $0x1490] sm:$0xff]
        %v2081 = vld [vmem:[%s426 + $0x1498] sm:$0xff]
        %v2082 = vld [vmem:[%s426 + $0x14a0] sm:$0xff]
        %v2083 = vld [vmem:[%s426 + $0x14a8] sm:$0xff]
        %v2084 = vld [vmem:[%s426 + $0x14b0] sm:$0xff]
        %v2085 = vld [vmem:[%s426 + $0x14b8] sm:$0xff]
        %v2086 = vld [vmem:[%s426 + $0x14c0] sm:$0xff]
        %v2087 = vld [vmem:[%s426 + $0x14c8] sm:$0xff]
        %v2088 = vld [vmem:[%s426 + $0x14d0] sm:$0xff]
        %v2089 = vld [vmem:[%s426 + $0x14d8] sm:$0xff]
        %v2090 = vld [vmem:[%s426 + $0x14e0] sm:$0xff]
        %v2091 = vld [vmem:[%s426 + $0x14e8] sm:$0xff]
        %v2092 = vld [vmem:[%s426 + $0x14f0] sm:$0xff]
        %v2093 = vld [vmem:[%s426 + $0x14f8] sm:$0xff]
        %v2094 = vld [vmem:[%s426 + $0x1500] sm:$0xff]
        %v2095 = vld [vmem:[%s426 + $0x1508] sm:$0xff]
        %v2096 = vld [vmem:[%s426 + $0x1510] sm:$0xff]
        %v2097 = vld [vmem:[%s426 + $0x1518] sm:$0xff]
        %v2098 = vld [vmem:[%s426 + $0x1520] sm:$0xff]
        %v2099 = vld [vmem:[%s426 + $0x1528] sm:$0xff]
        %v2100 = vld [vmem:[%s426 + $0x1530] sm:$0xff]
        %v2101 = vld [vmem:[%s426 + $0x1538] sm:$0xff]
        %v2102 = vld [vmem:[%s426 + $0x1540] sm:$0xff]
        %v2103 = vld [vmem:[%s426 + $0x1548] sm:$0xff]
        %v2104 = vld [vmem:[%s426 + $0x1550] sm:$0xff]
        %v2105 = vld [vmem:[%s426 + $0x1558] sm:$0xff]
        %v2106 = vld [vmem:[%s426 + $0x1560] sm:$0xff]
        %v2107 = vld [vmem:[%s426 + $0x1568] sm:$0xff]
        %v2108 = vld [vmem:[%s426 + $0x1570] sm:$0xff]
        %v2109 = vld [vmem:[%s426 + $0x1578] sm:$0xff]
        %v2110 = vld [vmem:[%s426 + $0x1580] sm:$0xff]
        %v2111 = vld [vmem:[%s426 + $0x1588] sm:$0xff]
        %v2112 = vld [vmem:[%s426 + $0x1590] sm:$0xff]
        %v2113 = vld [vmem:[%s426 + $0x1598] sm:$0xff]
        %v2114 = vld [vmem:[%s426 + $0x15a0] sm:$0xff]
        %v2115 = vld [vmem:[%s426 + $0x15a8] sm:$0xff]
        %v2116 = vld [vmem:[%s426 + $0x15b0] sm:$0xff]
        %v2117 = vld [vmem:[%s426 + $0x15b8] sm:$0xff]
        %v2118 = vld [vmem:[%s426 + $0x15c0] sm:$0xff]
        %v2119 = vld [vmem:[%s426 + $0x15c8] sm:$0xff]
        %v2120 = vld [vmem:[%s426 + $0x15d0] sm:$0xff]
        %v2121 = vld [vmem:[%s426 + $0x15d8] sm:$0xff]
        %v2122 = vld [vmem:[%s426 + $0x15e0] sm:$0xff]
        %v2123 = vld [vmem:[%s426 + $0x15e8] sm:$0xff]
        %v2124 = vld [vmem:[%s426 + $0x15f0] sm:$0xff]
        %v2125 = vld [vmem:[%s426 + $0x15f8] sm:$0xff]
        %v2126 = vld [vmem:[%s426 + $0x1600] sm:$0xff]
        %v2127 = vld [vmem:[%s426 + $0x1608] sm:$0xff]
        %v2128 = vld [vmem:[%s426 + $0x1610] sm:$0xff]
        %v2129 = vld [vmem:[%s426 + $0x1618] sm:$0xff]
        %v2130 = vld [vmem:[%s426 + $0x1620] sm:$0xff]
        %v2131 = vld [vmem:[%s426 + $0x1628] sm:$0xff]
        %v2132 = vld [vmem:[%s426 + $0x1630] sm:$0xff]
        %v2133 = vld [vmem:[%s426 + $0x1638] sm:$0xff]
        %v2134 = vld [vmem:[%s426 + $0x1640] sm:$0xff]
        %v2135 = vld [vmem:[%s426 + $0x1648] sm:$0xff]
        %v2136 = vld [vmem:[%s426 + $0x1650] sm:$0xff]
        %v2137 = vld [vmem:[%s426 + $0x1658] sm:$0xff]
        %v2138 = vld [vmem:[%s426 + $0x1660] sm:$0xff]
        %v2139 = vld [vmem:[%s426 + $0x1668] sm:$0xff]
        %v2140 = vld [vmem:[%s426 + $0x1670] sm:$0xff]
        %v2141 = vld [vmem:[%s426 + $0x1678] sm:$0xff]
        %v2142 = vld [vmem:[%s426 + $0x1680] sm:$0xff]
        %v2143 = vld [vmem:[%s426 + $0x1688] sm:$0xff]
        %v2144 = vld [vmem:[%s426 + $0x1690] sm:$0xff]
        %v2145 = vld [vmem:[%s426 + $0x1698] sm:$0xff]
        %v2146 = vld [vmem:[%s426 + $0x16a0] sm:$0xff]
        %v2147 = vld [vmem:[%s426 + $0x16a8] sm:$0xff]
        %v2148 = vld [vmem:[%s426 + $0x16b0] sm:$0xff]
        %v2149 = vld [vmem:[%s426 + $0x16b8] sm:$0xff]
        %v2150 = vld [vmem:[%s426 + $0x16c0] sm:$0xff]
        %v2151 = vld [vmem:[%s426 + $0x16c8] sm:$0xff]
        %v2152 = vld [vmem:[%s426 + $0x16d0] sm:$0xff]
        %v2153 = vld [vmem:[%s426 + $0x16d8] sm:$0xff]
        %v2154 = vld [vmem:[%s426 + $0x16e0] sm:$0xff]
        %v2155 = vld [vmem:[%s426 + $0x16e8] sm:$0xff]
        %v2156 = vld [vmem:[%s426 + $0x16f0] sm:$0xff]
        %v2157 = vld [vmem:[%s426 + $0x16f8] sm:$0xff]
        %v2158 = vld [vmem:[%s426 + $0x1700] sm:$0xff]
        %v2159 = vld [vmem:[%s426 + $0x1708] sm:$0xff]
        %v2160 = vld [vmem:[%s426 + $0x1710] sm:$0xff]
        %v2161 = vld [vmem:[%s426 + $0x1718] sm:$0xff]
        %v2162 = vld [vmem:[%s426 + $0x1720] sm:$0xff]
        %v2163 = vld [vmem:[%s426 + $0x1728] sm:$0xff]
        %v2164 = vld [vmem:[%s426 + $0x1730] sm:$0xff]
        %v2165 = vld [vmem:[%s426 + $0x1738] sm:$0xff]
        %v2166 = vld [vmem:[%s426 + $0x1740] sm:$0xff]
        %v2167 = vld [vmem:[%s426 + $0x1748] sm:$0xff]
        %v2168 = vld [vmem:[%s426 + $0x1750] sm:$0xff]
        %v2169 = vld [vmem:[%s426 + $0x1758] sm:$0xff]
        %v2170 = vld [vmem:[%s426 + $0x1760] sm:$0xff]
        %v2171 = vld [vmem:[%s426 + $0x1768] sm:$0xff]
        %v2172 = vld [vmem:[%s426 + $0x1770] sm:$0xff]
        %v2173 = vld [vmem:[%s426 + $0x1778] sm:$0xff]
        %v2174 = vld [vmem:[%s426 + $0x1780] sm:$0xff]
        %v2175 = vld [vmem:[%s426 + $0x1788] sm:$0xff]
        %v2176 = vld [vmem:[%s426 + $0x1790] sm:$0xff]
        %v2177 = vld [vmem:[%s426 + $0x1798] sm:$0xff]
        %v2178 = vld [vmem:[%s426 + $0x17a0] sm:$0xff]
        %v2179 = vld [vmem:[%s426 + $0x17a8] sm:$0xff]
        %v2180 = vld [vmem:[%s426 + $0x17b0] sm:$0xff]
        %v2181 = vld [vmem:[%s426 + $0x17b8] sm:$0xff]
        %v2182 = vld [vmem:[%s426 + $0x17c0] sm:$0xff]
        %v2183 = vld [vmem:[%s426 + $0x17c8] sm:$0xff]
        %v2184 = vld [vmem:[%s426 + $0x17d0] sm:$0xff]
        %v2185 = vld [vmem:[%s426 + $0x17d8] sm:$0xff]
        %v2186 = vld [vmem:[%s426 + $0x17e0] sm:$0xff]
        %v2187 = vld [vmem:[%s426 + $0x17e8] sm:$0xff]
        %v2188 = vld [vmem:[%s426 + $0x17f0] sm:$0xff]
        %v2189 = vld [vmem:[%s426 + $0x17f8] sm:$0xff]
        %v2190 = vld [vmem:[%s426 + $0x1800] sm:$0xff]
        %v2191 = vld [vmem:[%s426 + $0x1808] sm:$0xff]
        %v2192 = vld [vmem:[%s426 + $0x1810] sm:$0xff]
        %v2193 = vld [vmem:[%s426 + $0x1818] sm:$0xff]
        %v2194 = vld [vmem:[%s426 + $0x1820] sm:$0xff]
        %v2195 = vld [vmem:[%s426 + $0x1828] sm:$0xff]
        %v2196 = vld [vmem:[%s426 + $0x1830] sm:$0xff]
        %v2197 = vld [vmem:[%s426 + $0x1838] sm:$0xff]
        %v2198 = vld [vmem:[%s426 + $0x1840] sm:$0xff]
        %v2199 = vld [vmem:[%s426 + $0x1848] sm:$0xff]
        %v2200 = vld [vmem:[%s426 + $0x1850] sm:$0xff]
        %v2201 = vld [vmem:[%s426 + $0x1858] sm:$0xff]
        %v2202 = vld [vmem:[%s426 + $0x1860] sm:$0xff]
        %v2203 = vld [vmem:[%s426 + $0x1868] sm:$0xff]
        %v2204 = vld [vmem:[%s426 + $0x1870] sm:$0xff]
        %v2205 = vld [vmem:[%s426 + $0x1878] sm:$0xff]
        %v2206 = vld [vmem:[%s426 + $0x1880] sm:$0xff]
        %v2207 = vld [vmem:[%s426 + $0x1888] sm:$0xff]
        %v2208 = vld [vmem:[%s426 + $0x1890] sm:$0xff]
        %v2209 = vld [vmem:[%s426 + $0x1898] sm:$0xff]
        %v2210 = vld [vmem:[%s426 + $0x18a0] sm:$0xff]
        %v2211 = vld [vmem:[%s426 + $0x18a8] sm:$0xff]
        %v2212 = vld [vmem:[%s426 + $0x18b0] sm:$0xff]
        %v2213 = vld [vmem:[%s426 + $0x18b8] sm:$0xff]
        %v2214 = vld [vmem:[%s426 + $0x18c0] sm:$0xff]
        %v2215 = vld [vmem:[%s426 + $0x18c8] sm:$0xff]
        %v2216 = vld [vmem:[%s426 + $0x18d0] sm:$0xff]
        %v2217 = vld [vmem:[%s426 + $0x18d8] sm:$0xff]
        %v2218 = vld [vmem:[%s426 + $0x18e0] sm:$0xff]
        %v2219 = vld [vmem:[%s426 + $0x18e8] sm:$0xff]
        %v2220 = vld [vmem:[%s426 + $0x18f0] sm:$0xff]
        %v2221 = vld [vmem:[%s426 + $0x18f8] sm:$0xff]
        %v2222 = vld [vmem:[%s426 + $0x1900] sm:$0xff]
        %v2223 = vld [vmem:[%s426 + $0x1908] sm:$0xff]
        %v2224 = vld [vmem:[%s426 + $0x1910] sm:$0xff]
        %v2225 = vld [vmem:[%s426 + $0x1918] sm:$0xff]
        %v2226 = vld [vmem:[%s426 + $0x1920] sm:$0xff]
        %v2227 = vld [vmem:[%s426 + $0x1928] sm:$0xff]
        %v2228 = vld [vmem:[%s426 + $0x1930] sm:$0xff]
        %v2229 = vld [vmem:[%s426 + $0x1938] sm:$0xff]
        %v2230 = vld [vmem:[%s426 + $0x1940] sm:$0xff]
        %v2231 = vld [vmem:[%s426 + $0x1948] sm:$0xff]
        %v2232 = vld [vmem:[%s426 + $0x1950] sm:$0xff]
        %v2233 = vld [vmem:[%s426 + $0x1958] sm:$0xff]
        %v2234 = vld [vmem:[%s426 + $0x1960] sm:$0xff]
        %v2235 = vld [vmem:[%s426 + $0x1968] sm:$0xff]
        %v2236 = vld [vmem:[%s426 + $0x1970] sm:$0xff]
        %v2237 = vld [vmem:[%s426 + $0x1978] sm:$0xff]
        %v2238 = vld [vmem:[%s426 + $0x1980] sm:$0xff]
        %v2239 = vld [vmem:[%s426 + $0x1988] sm:$0xff]
        %v2240 = vld [vmem:[%s426 + $0x1990] sm:$0xff]
        %v2241 = vld [vmem:[%s426 + $0x1998] sm:$0xff]
        %v2242 = vld [vmem:[%s426 + $0x19a0] sm:$0xff]
        %v2243 = vld [vmem:[%s426 + $0x19a8] sm:$0xff]
        %v2244 = vld [vmem:[%s426 + $0x19b0] sm:$0xff]
        %v2245 = vld [vmem:[%s426 + $0x19b8] sm:$0xff]
        %v2246 = vld [vmem:[%s426 + $0x19c0] sm:$0xff]
        %v2247 = vld [vmem:[%s426 + $0x19c8] sm:$0xff]
        %v2248 = vld [vmem:[%s426 + $0x19d0] sm:$0xff]
        %v2249 = vld [vmem:[%s426 + $0x19d8] sm:$0xff]
        %v2250 = vld [vmem:[%s426 + $0x19e0] sm:$0xff]
        %v2251 = vld [vmem:[%s426 + $0x19e8] sm:$0xff]
        %v2252 = vld [vmem:[%s426 + $0x19f0] sm:$0xff]
        %v2253 = vld [vmem:[%s426 + $0x19f8] sm:$0xff]
        %v2254 = vld [vmem:[%s426 + $0x1a00] sm:$0xff]
        %v2255 = vld [vmem:[%s426 + $0x1a08] sm:$0xff]
        %v2256 = vld [vmem:[%s426 + $0x1a10] sm:$0xff]
        %v2257 = vld [vmem:[%s426 + $0x1a18] sm:$0xff]
        %v2258 = vld [vmem:[%s426 + $0x1a20] sm:$0xff]
        %v2259 = vld [vmem:[%s426 + $0x1a28] sm:$0xff]
        %v2260 = vld [vmem:[%s426 + $0x1a30] sm:$0xff]
        %v2261 = vld [vmem:[%s426 + $0x1a38] sm:$0xff]
        %v2262 = vld [vmem:[%s426 + $0x1a40] sm:$0xff]
        %v2263 = vld [vmem:[%s426 + $0x1a48] sm:$0xff]
        %v2264 = vld [vmem:[%s426 + $0x1a50] sm:$0xff]
        %v2265 = vld [vmem:[%s426 + $0x1a58] sm:$0xff]
        %v2266 = vld [vmem:[%s426 + $0x1a60] sm:$0xff]
        %v2267 = vld [vmem:[%s426 + $0x1a68] sm:$0xff]
        %v2268 = vld [vmem:[%s426 + $0x1a70] sm:$0xff]
        %v2269 = vld [vmem:[%s426 + $0x1a78] sm:$0xff]
        %v2270 = vld [vmem:[%s426 + $0x1a80] sm:$0xff]
        %v2271 = vld [vmem:[%s426 + $0x1a88] sm:$0xff]
        %v2272 = vld [vmem:[%s426 + $0x1a90] sm:$0xff]
        %v2273 = vld [vmem:[%s426 + $0x1a98] sm:$0xff]
        %v2274 = vld [vmem:[%s426 + $0x1aa0] sm:$0xff]
        %v2275 = vld [vmem:[%s426 + $0x1aa8] sm:$0xff]
        %v2276 = vld [vmem:[%s426 + $0x1ab0] sm:$0xff]
        %v2277 = vld [vmem:[%s426 + $0x1ab8] sm:$0xff]
        %v2278 = vld [vmem:[%s426 + $0x1ac0] sm:$0xff]
        %v2279 = vld [vmem:[%s426 + $0x1ac8] sm:$0xff]
        %v2280 = vld [vmem:[%s426 + $0x1ad0] sm:$0xff]
        %v2281 = vld [vmem:[%s426 + $0x1ad8] sm:$0xff]
        %v2282 = vld [vmem:[%s426 + $0x1ae0] sm:$0xff]
        %v2283 = vld [vmem:[%s426 + $0x1ae8] sm:$0xff]
        %v2284 = vld [vmem:[%s426 + $0x1af0] sm:$0xff]
        %v2285 = vld [vmem:[%s426 + $0x1af8] sm:$0xff]
        %v2286 = vld [vmem:[%s426 + $0x1b00] sm:$0xff]
        %v2287 = vld [vmem:[%s426 + $0x1b08] sm:$0xff]
        %v2288 = vld [vmem:[%s426 + $0x1b10] sm:$0xff]
        %v2289 = vld [vmem:[%s426 + $0x1b18] sm:$0xff]
        %v2290 = vld [vmem:[%s426 + $0x1b20] sm:$0xff]
        %v2291 = vld [vmem:[%s426 + $0x1b28] sm:$0xff]
        %v2292 = vld [vmem:[%s426 + $0x1b30] sm:$0xff]
        %v2293 = vld [vmem:[%s426 + $0x1b38] sm:$0xff]
        %v2294 = vld [vmem:[%s426 + $0x1b40] sm:$0xff]
        %v2295 = vld [vmem:[%s426 + $0x1b48] sm:$0xff]
        %v2296 = vld [vmem:[%s426 + $0x1b50] sm:$0xff]
        %v2297 = vld [vmem:[%s426 + $0x1b58] sm:$0xff]
        %v2298 = vld [vmem:[%s426 + $0x1b60] sm:$0xff]
        %v2299 = vld [vmem:[%s426 + $0x1b68] sm:$0xff]
        %v2300 = vld [vmem:[%s426 + $0x1b70] sm:$0xff]
        %v2301 = vld [vmem:[%s426 + $0x1b78] sm:$0xff]
        %v2302 = vld [vmem:[%s426 + $0x1b80] sm:$0xff]
        %v2303 = vld [vmem:[%s426 + $0x1b88] sm:$0xff]
        %v2304 = vld [vmem:[%s426 + $0x1b90] sm:$0xff]
        %v2305 = vld [vmem:[%s426 + $0x1b98] sm:$0xff]
        %v2306 = vld [vmem:[%s426 + $0x1ba0] sm:$0xff]
        %v2307 = vld [vmem:[%s426 + $0x1ba8] sm:$0xff]
        %v2308 = vld [vmem:[%s426 + $0x1bb0] sm:$0xff]
        %v2309 = vld [vmem:[%s426 + $0x1bb8] sm:$0xff]
        %v2310 = vld [vmem:[%s426 + $0x1bc0] sm:$0xff]
        %v2311 = vld [vmem:[%s426 + $0x1bc8] sm:$0xff]
        %v2312 = vld [vmem:[%s426 + $0x1bd0] sm:$0xff]
        %v2313 = vld [vmem:[%s426 + $0x1bd8] sm:$0xff]
        %v2314 = vld [vmem:[%s426 + $0x1be0] sm:$0xff]
        %v2315 = vld [vmem:[%s426 + $0x1be8] sm:$0xff]
        %v2316 = vld [vmem:[%s426 + $0x1bf0] sm:$0xff]
        %v2317 = vld [vmem:[%s426 + $0x1bf8] sm:$0xff]
        %v2318 = vld [vmem:[%s426 + $0x1c00] sm:$0xff]
        %v2319 = vld [vmem:[%s426 + $0x1c08] sm:$0xff]
        %v2320 = vld [vmem:[%s426 + $0x1c10] sm:$0xff]
        %v2321 = vld [vmem:[%s426 + $0x1c18] sm:$0xff]
        %v2322 = vld [vmem:[%s426 + $0x1c20] sm:$0xff]
        %v2323 = vld [vmem:[%s426 + $0x1c28] sm:$0xff]
        %v2324 = vld [vmem:[%s426 + $0x1c30] sm:$0xff]
        %v2325 = vld [vmem:[%s426 + $0x1c38] sm:$0xff]
        %v2326 = vld [vmem:[%s426 + $0x1c40] sm:$0xff]
        %v2327 = vld [vmem:[%s426 + $0x1c48] sm:$0xff]
        %v2328 = vld [vmem:[%s426 + $0x1c50] sm:$0xff]
        %v2329 = vld [vmem:[%s426 + $0x1c58] sm:$0xff]
        %v2330 = vld [vmem:[%s426 + $0x1c60] sm:$0xff]
        %v2331 = vld [vmem:[%s426 + $0x1c68] sm:$0xff]
        %v2332 = vld [vmem:[%s426 + $0x1c70] sm:$0xff]
        %v2333 = vld [vmem:[%s426 + $0x1c78] sm:$0xff]
        %v2334 = vld [vmem:[%s426 + $0x1c80] sm:$0xff]
        %v2335 = vld [vmem:[%s426 + $0x1c88] sm:$0xff]
        %v2336 = vld [vmem:[%s426 + $0x1c90] sm:$0xff]
        %v2337 = vld [vmem:[%s426 + $0x1c98] sm:$0xff]
        %v2338 = vld [vmem:[%s426 + $0x1ca0] sm:$0xff]
        %v2339 = vld [vmem:[%s426 + $0x1ca8] sm:$0xff]
        %v2340 = vld [vmem:[%s426 + $0x1cb0] sm:$0xff]
        %v2341 = vld [vmem:[%s426 + $0x1cb8] sm:$0xff]
        %v2342 = vld [vmem:[%s426 + $0x1cc0] sm:$0xff]
        %v2343 = vld [vmem:[%s426 + $0x1cc8] sm:$0xff]
        %v2344 = vld [vmem:[%s426 + $0x1cd0] sm:$0xff]
        %v2345 = vld [vmem:[%s426 + $0x1cd8] sm:$0xff]
        %v2346 = vld [vmem:[%s426 + $0x1ce0] sm:$0xff]
        %v2347 = vld [vmem:[%s426 + $0x1ce8] sm:$0xff]
        %v2348 = vld [vmem:[%s426 + $0x1cf0] sm:$0xff]
        %v2349 = vld [vmem:[%s426 + $0x1cf8] sm:$0xff]
        %v2350 = vld [vmem:[%s426 + $0x1d00] sm:$0xff]
        %v2351 = vld [vmem:[%s426 + $0x1d08] sm:$0xff]
        %v2352 = vld [vmem:[%s426 + $0x1d10] sm:$0xff]
        %v2353 = vld [vmem:[%s426 + $0x1d18] sm:$0xff]
        %v2354 = vld [vmem:[%s426 + $0x1d20] sm:$0xff]
        %v2355 = vld [vmem:[%s426 + $0x1d28] sm:$0xff]
        %v2356 = vld [vmem:[%s426 + $0x1d30] sm:$0xff]
        %v2357 = vld [vmem:[%s426 + $0x1d38] sm:$0xff]
        %v2358 = vld [vmem:[%s426 + $0x1d40] sm:$0xff]
        %v2359 = vld [vmem:[%s426 + $0x1d48] sm:$0xff]
        %v2360 = vld [vmem:[%s426 + $0x1d50] sm:$0xff]
        %v2361 = vld [vmem:[%s426 + $0x1d58] sm:$0xff]
        %v2362 = vld [vmem:[%s426 + $0x1d60] sm:$0xff]
        %v2363 = vld [vmem:[%s426 + $0x1d68] sm:$0xff]
        %v2364 = vld [vmem:[%s426 + $0x1d70] sm:$0xff]
        %v2365 = vld [vmem:[%s426 + $0x1d78] sm:$0xff]
        %v2366 = vld [vmem:[%s426 + $0x1d80] sm:$0xff]
        %v2367 = vld [vmem:[%s426 + $0x1d88] sm:$0xff]
        %v2368 = vld [vmem:[%s426 + $0x1d90] sm:$0xff]
        %v2369 = vld [vmem:[%s426 + $0x1d98] sm:$0xff]
        %v2370 = vld [vmem:[%s426 + $0x1da0] sm:$0xff]
        %v2371 = vld [vmem:[%s426 + $0x1da8] sm:$0xff]
        %v2372 = vld [vmem:[%s426 + $0x1db0] sm:$0xff]
        %v2373 = vld [vmem:[%s426 + $0x1db8] sm:$0xff]
        %v2374 = vld [vmem:[%s426 + $0x1dc0] sm:$0xff]
        %v2375 = vld [vmem:[%s426 + $0x1dc8] sm:$0xff]
        %v2376 = vld [vmem:[%s426 + $0x1dd0] sm:$0xff]
        %v2377 = vld [vmem:[%s426 + $0x1dd8] sm:$0xff]
        %v2378 = vld [vmem:[%s426 + $0x1de0] sm:$0xff]
        %v2379 = vld [vmem:[%s426 + $0x1de8] sm:$0xff]
        %v2380 = vld [vmem:[%s426 + $0x1df0] sm:$0xff]
        %v2381 = vld [vmem:[%s426 + $0x1df8] sm:$0xff]
        %v2382 = vld [vmem:[%s426 + $0x1e00] sm:$0xff]
        %v2383 = vld [vmem:[%s426 + $0x1e08] sm:$0xff]
        %v2384 = vld [vmem:[%s426 + $0x1e10] sm:$0xff]
        %v2385 = vld [vmem:[%s426 + $0x1e18] sm:$0xff]
        %v2386 = vld [vmem:[%s426 + $0x1e20] sm:$0xff]
        %v2387 = vld [vmem:[%s426 + $0x1e28] sm:$0xff]
        %v2388 = vld [vmem:[%s426 + $0x1e30] sm:$0xff]
        %v2389 = vld [vmem:[%s426 + $0x1e38] sm:$0xff]
        %v2390 = vld [vmem:[%s426 + $0x1e40] sm:$0xff]
        %v2391 = vld [vmem:[%s426 + $0x1e48] sm:$0xff]
        %v2392 = vld [vmem:[%s426 + $0x1e50] sm:$0xff]
        %v2393 = vld [vmem:[%s426 + $0x1e58] sm:$0xff]
        %v2394 = vld [vmem:[%s426 + $0x1e60] sm:$0xff]
        %v2395 = vld [vmem:[%s426 + $0x1e68] sm:$0xff]
        %v2396 = vld [vmem:[%s426 + $0x1e70] sm:$0xff]
        %v2397 = vld [vmem:[%s426 + $0x1e78] sm:$0xff]
        %v2398 = vld [vmem:[%s426 + $0x1e80] sm:$0xff]
        %v2399 = vld [vmem:[%s426 + $0x1e88] sm:$0xff]
        %v2400 = vld [vmem:[%s426 + $0x1e90] sm:$0xff]
        %v2401 = vld [vmem:[%s426 + $0x1e98] sm:$0xff]
        %v2402 = vld [vmem:[%s426 + $0x1ea0] sm:$0xff]
        %v2403 = vld [vmem:[%s426 + $0x1ea8] sm:$0xff]
        %v2404 = vld [vmem:[%s426 + $0x1eb0] sm:$0xff]
        %v2405 = vld [vmem:[%s426 + $0x1eb8] sm:$0xff]
        %v2406 = vld [vmem:[%s426 + $0x1ec0] sm:$0xff]
        %v2407 = vld [vmem:[%s426 + $0x1ec8] sm:$0xff]
        %v2408 = vld [vmem:[%s426 + $0x1ed0] sm:$0xff]
        %v2409 = vld [vmem:[%s426 + $0x1ed8] sm:$0xff]
        %v2410 = vld [vmem:[%s426 + $0x1ee0] sm:$0xff]
        %v2411 = vld [vmem:[%s426 + $0x1ee8] sm:$0xff]
        %v2412 = vld [vmem:[%s426 + $0x1ef0] sm:$0xff]
        %v2413 = vld [vmem:[%s426 + $0x1ef8] sm:$0xff]
        %v2414 = vld [vmem:[%s426 + $0x1f00] sm:$0xff]
        %v2415 = vld [vmem:[%s426 + $0x1f08] sm:$0xff]
        %v2416 = vld [vmem:[%s426 + $0x1f10] sm:$0xff]
        %v2417 = vld [vmem:[%s426 + $0x1f18] sm:$0xff]
        %v2418 = vld [vmem:[%s426 + $0x1f20] sm:$0xff]
        %v2419 = vld [vmem:[%s426 + $0x1f28] sm:$0xff]
        %v2420 = vld [vmem:[%s426 + $0x1f30] sm:$0xff]
        %v2421 = vld [vmem:[%s426 + $0x1f38] sm:$0xff]
        %v2422 = vld [vmem:[%s426 + $0x1f40] sm:$0xff]
        %v2423 = vld [vmem:[%s426 + $0x1f48] sm:$0xff]
        %v2424 = vld [vmem:[%s426 + $0x1f50] sm:$0xff]
        %v2425 = vld [vmem:[%s426 + $0x1f58] sm:$0xff]
        %v2426 = vld [vmem:[%s426 + $0x1f60] sm:$0xff]
        %v2427 = vld [vmem:[%s426 + $0x1f68] sm:$0xff]
        %v2428 = vld [vmem:[%s426 + $0x1f70] sm:$0xff]
        %v2429 = vld [vmem:[%s426 + $0x1f78] sm:$0xff]
        %v2430 = vld [vmem:[%s426 + $0x1f80] sm:$0xff]
        %v2431 = vld [vmem:[%s426 + $0x1f88] sm:$0xff]
        %v2432 = vld [vmem:[%s426 + $0x1f90] sm:$0xff]
        %v2433 = vld [vmem:[%s426 + $0x1f98] sm:$0xff]
        %v2434 = vld [vmem:[%s426 + $0x1fa0] sm:$0xff]
        %v2435 = vld [vmem:[%s426 + $0x1fa8] sm:$0xff]
        %v2436 = vld [vmem:[%s426 + $0x1fb0] sm:$0xff]
        %v2437 = vld [vmem:[%s426 + $0x1fb8] sm:$0xff]
        %v2438 = vld [vmem:[%s426 + $0x1fc0] sm:$0xff]
        %v2439 = vld [vmem:[%s426 + $0x1fc8] sm:$0xff]
        %v2440 = vld [vmem:[%s426 + $0x1fd0] sm:$0xff]
        %v2441 = vld [vmem:[%s426 + $0x1fd8] sm:$0xff]
        %v2442 = vld [vmem:[%s426 + $0x1fe0] sm:$0xff]
        %v2443 = vld [vmem:[%s426 + $0x1fe8] sm:$0xff]
        %v2444 = vld [vmem:[%s426 + $0x1ff0] sm:$0xff]
        %v2445 = vld [vmem:[%s426 + $0x1ff8] sm:$0xff]
        %v2446 = vld [vmem:[%s426 + $0x2000] sm:$0xff]
        %v2447 = vld [vmem:[%s426 + $0x2008] sm:$0xff]
        %v2448 = vld [vmem:[%s426 + $0x2010] sm:$0xff]
        %v2449 = vld [vmem:[%s426 + $0x2018] sm:$0xff]
        %v2450 = vld [vmem:[%s426 + $0x2020] sm:$0xff]
        %v2451 = vld [vmem:[%s426 + $0x2028] sm:$0xff]
        %v2452 = vld [vmem:[%s426 + $0x2030] sm:$0xff]
        %v2453 = vld [vmem:[%s426 + $0x2038] sm:$0xff]
        %v2454 = vld [vmem:[%s426 + $0x2040] sm:$0xff]
        %v2455 = vld [vmem:[%s426 + $0x2048] sm:$0xff]
        %v2456 = vld [vmem:[%s426 + $0x2050] sm:$0xff]
        %v2457 = vld [vmem:[%s426 + $0x2058] sm:$0xff]
        %v2458 = vld [vmem:[%s426 + $0x2060] sm:$0xff]
        %v2459 = vld [vmem:[%s426 + $0x2068] sm:$0xff]
        %v2460 = vld [vmem:[%s426 + $0x2070] sm:$0xff]
        %v2461 = vld [vmem:[%s426 + $0x2078] sm:$0xff]
        %v2462 = vld [vmem:[%s426 + $0x2080] sm:$0xff]
        %v2463 = vld [vmem:[%s426 + $0x2088] sm:$0xff]
        %v2464 = vld [vmem:[%s426 + $0x2090] sm:$0xff]
        %v2465 = vld [vmem:[%s426 + $0x2098] sm:$0xff]
        %v2466 = vld [vmem:[%s426 + $0x20a0] sm:$0xff]
        %v2467 = vld [vmem:[%s426 + $0x20a8] sm:$0xff]
        %v2468 = vld [vmem:[%s426 + $0x20b0] sm:$0xff]
        %v2469 = vld [vmem:[%s426 + $0x20b8] sm:$0xff]
        %v2470 = vld [vmem:[%s426 + $0x20c0] sm:$0xff]
        %v2471 = vld [vmem:[%s426 + $0x20c8] sm:$0xff]
        %v2472 = vld [vmem:[%s426 + $0x20d0] sm:$0xff]
        %v2473 = vld [vmem:[%s426 + $0x20d8] sm:$0xff]
        %v2474 = vld [vmem:[%s426 + $0x20e0] sm:$0xff]
        %v2475 = vld [vmem:[%s426 + $0x20e8] sm:$0xff]
        %v2476 = vld [vmem:[%s426 + $0x20f0] sm:$0xff]
        %v2477 = vld [vmem:[%s426 + $0x20f8] sm:$0xff]
        %v2478 = vld [vmem:[%s426 + $0x2100] sm:$0xff]
        %v2479 = vld [vmem:[%s426 + $0x2108] sm:$0xff]
        %v2480 = vld [vmem:[%s426 + $0x2110] sm:$0xff]
        %v2481 = vld [vmem:[%s426 + $0x2118] sm:$0xff]
        %v2482 = vld [vmem:[%s426 + $0x2120] sm:$0xff]
        %v2483 = vld [vmem:[%s426 + $0x2128] sm:$0xff]
        %v2484 = vld [vmem:[%s426 + $0x2130] sm:$0xff]
        %v2485 = vld [vmem:[%s426 + $0x2138] sm:$0xff]
        %v2486 = vld [vmem:[%s426 + $0x2140] sm:$0xff]
        %v2487 = vld [vmem:[%s426 + $0x2148] sm:$0xff]
        %v2488 = vld [vmem:[%s426 + $0x2150] sm:$0xff]
        %v2489 = vld [vmem:[%s426 + $0x2158] sm:$0xff]
        %v2490 = vld [vmem:[%s426 + $0x2160] sm:$0xff]
        %v2491 = vld [vmem:[%s426 + $0x2168] sm:$0xff]
        %v2492 = vld [vmem:[%s426 + $0x2170] sm:$0xff]
        %v2493 = vld [vmem:[%s426 + $0x2178] sm:$0xff]
        %v2494 = vld [vmem:[%s426 + $0x2180] sm:$0xff]
        %v2495 = vld [vmem:[%s426 + $0x2188] sm:$0xff]
        %v2496 = vld [vmem:[%s426 + $0x2190] sm:$0xff]
        %v2497 = vld [vmem:[%s426 + $0x2198] sm:$0xff]
        %v2498 = vld [vmem:[%s426 + $0x21a0] sm:$0xff]
        %v2499 = vld [vmem:[%s426 + $0x21a8] sm:$0xff]
        %v2500 = vld [vmem:[%s426 + $0x21b0] sm:$0xff]
        %v2501 = vld [vmem:[%s426 + $0x21b8] sm:$0xff]
        %v2502 = vld [vmem:[%s426 + $0x21c0] sm:$0xff]
        %v2503 = vld [vmem:[%s426 + $0x21c8] sm:$0xff]
        %v2504 = vld [vmem:[%s426 + $0x21d0] sm:$0xff]
        %v2505 = vld [vmem:[%s426 + $0x21d8] sm:$0xff]
        %v2506 = vld [vmem:[%s426 + $0x21e0] sm:$0xff]
        %v2507 = vld [vmem:[%s426 + $0x21e8] sm:$0xff]
        %v2508 = vld [vmem:[%s426 + $0x21f0] sm:$0xff]
        %v2509 = vld [vmem:[%s426 + $0x21f8] sm:$0xff]
        %v2510 = vld [vmem:[%s426 + $0x2200] sm:$0xff]
        %v2511 = vld [vmem:[%s426 + $0x2208] sm:$0xff]
        %v2512 = vld [vmem:[%s426 + $0x2210] sm:$0xff]
        %v2513 = vld [vmem:[%s426 + $0x2218] sm:$0xff]
        %v2514 = vld [vmem:[%s426 + $0x2220] sm:$0xff]
        %v2515 = vld [vmem:[%s426 + $0x2228] sm:$0xff]
        %v2516 = vld [vmem:[%s426 + $0x2230] sm:$0xff]
        %v2517 = vld [vmem:[%s426 + $0x2238] sm:$0xff]
        %v2518 = vld [vmem:[%s426 + $0x2240] sm:$0xff]
        %v2519 = vld [vmem:[%s426 + $0x2248] sm:$0xff]
        %v2520 = vld [vmem:[%s426 + $0x2250] sm:$0xff]
        %v2521 = vld [vmem:[%s426 + $0x2258] sm:$0xff]
        %v2522 = vld [vmem:[%s426 + $0x2260] sm:$0xff]
        %v2523 = vld [vmem:[%s426 + $0x2268] sm:$0xff]
        %v2524 = vld [vmem:[%s426 + $0x2270] sm:$0xff]
        %v2525 = vld [vmem:[%s426 + $0x2278] sm:$0xff]
        %v2526 = vld [vmem:[%s426 + $0x2280] sm:$0xff]
        %v2527 = vld [vmem:[%s426 + $0x2288] sm:$0xff]
        %v2528 = vld [vmem:[%s426 + $0x2290] sm:$0xff]
        %v2529 = vld [vmem:[%s426 + $0x2298] sm:$0xff]
        %v2530 = vld [vmem:[%s426 + $0x22a0] sm:$0xff]
        %v2531 = vld [vmem:[%s426 + $0x22a8] sm:$0xff]
        %v2532 = vld [vmem:[%s426 + $0x22b0] sm:$0xff]
        %v2533 = vld [vmem:[%s426 + $0x22b8] sm:$0xff]
        %v2534 = vld [vmem:[%s426 + $0x22c0] sm:$0xff]
        %v2535 = vld [vmem:[%s426 + $0x22c8] sm:$0xff]
        %v2536 = vld [vmem:[%s426 + $0x22d0] sm:$0xff]
        %v2537 = vld [vmem:[%s426 + $0x22d8] sm:$0xff]
        %v2538 = vld [vmem:[%s426 + $0x22e0] sm:$0xff]
        %v2539 = vld [vmem:[%s426 + $0x22e8] sm:$0xff]
        %v2540 = vld [vmem:[%s426 + $0x22f0] sm:$0xff]
        %v2541 = vld [vmem:[%s426 + $0x22f8] sm:$0xff]
        %v2542 = vld [vmem:[%s426 + $0x2300] sm:$0xff]
        %v2543 = vld [vmem:[%s426 + $0x2308] sm:$0xff]
        %v2544 = vld [vmem:[%s426 + $0x2310] sm:$0xff]
        %v2545 = vld [vmem:[%s426 + $0x2318] sm:$0xff]
        %v2546 = vld [vmem:[%s426 + $0x2320] sm:$0xff]
        %v2547 = vld [vmem:[%s426 + $0x2328] sm:$0xff]
        %v2548 = vld [vmem:[%s426 + $0x2330] sm:$0xff]
        %v2549 = vld [vmem:[%s426 + $0x2338] sm:$0xff]
        %v2550 = vld [vmem:[%s426 + $0x2340] sm:$0xff]
        %v2551 = vld [vmem:[%s426 + $0x2348] sm:$0xff]
        %v2552 = vld [vmem:[%s426 + $0x2350] sm:$0xff]
        %v2553 = vld [vmem:[%s426 + $0x2358] sm:$0xff]
        %v2554 = vld [vmem:[%s426 + $0x2360] sm:$0xff]
        %v2555 = vld [vmem:[%s426 + $0x2368] sm:$0xff]
        %v2556 = vld [vmem:[%s426 + $0x2370] sm:$0xff]
        %v2557 = vld [vmem:[%s426 + $0x2378] sm:$0xff]
        %v2558 = vld [vmem:[%s426 + $0x2380] sm:$0xff]
        %v2559 = vld [vmem:[%s426 + $0x2388] sm:$0xff]
        %v2560 = vld [vmem:[%s426 + $0x2390] sm:$0xff]
        %v2561 = vld [vmem:[%s426 + $0x2398] sm:$0xff]
        %v2562 = vld [vmem:[%s426 + $0x23a0] sm:$0xff]
        %v2563 = vld [vmem:[%s426 + $0x23a8] sm:$0xff]
        %v2564 = vld [vmem:[%s426 + $0x23b0] sm:$0xff]
        %v2565 = vld [vmem:[%s426 + $0x23b8] sm:$0xff]
        %v2566 = vld [vmem:[%s426 + $0x23c0] sm:$0xff]
        %v2567 = vld [vmem:[%s426 + $0x23c8] sm:$0xff]
        %v2568 = vld [vmem:[%s426 + $0x23d0] sm:$0xff]
        %v2569 = vld [vmem:[%s426 + $0x23d8] sm:$0xff]
        %v2570 = vld [vmem:[%s426 + $0x23e0] sm:$0xff]
        %v2571 = vld [vmem:[%s426 + $0x23e8] sm:$0xff]
        %v2572 = vld [vmem:[%s426 + $0x23f0] sm:$0xff]
        %v2573 = vld [vmem:[%s426 + $0x23f8] sm:$0xff]
        %v2574 = vld [vmem:[%s426 + $0x2400] sm:$0xff]
        %v2575 = vld [vmem:[%s426 + $0x2408] sm:$0xff]
        %v2576 = vld [vmem:[%s426 + $0x2410] sm:$0xff]
        %v2577 = vld [vmem:[%s426 + $0x2418] sm:$0xff]
        %v2578 = vld [vmem:[%s426 + $0x2420] sm:$0xff]
        %v2579 = vld [vmem:[%s426 + $0x2428] sm:$0xff]
        %v2580 = vld [vmem:[%s426 + $0x2430] sm:$0xff]
        %v2581 = vld [vmem:[%s426 + $0x2438] sm:$0xff]
        %v2582 = vld [vmem:[%s426 + $0x2440] sm:$0xff]
        %v2583 = vld [vmem:[%s426 + $0x2448] sm:$0xff]
        %v2584 = vld [vmem:[%s426 + $0x2450] sm:$0xff]
        %v2585 = vld [vmem:[%s426 + $0x2458] sm:$0xff]
        %v2586 = vld [vmem:[%s426 + $0x2460] sm:$0xff]
        %v2587 = vld [vmem:[%s426 + $0x2468] sm:$0xff]
        %v2588 = vld [vmem:[%s426 + $0x2470] sm:$0xff]
        %v2589 = vld [vmem:[%s426 + $0x2478] sm:$0xff]
        %v2590 = vld [vmem:[%s426 + $0x2480] sm:$0xff]
        %v2591 = vld [vmem:[%s426 + $0x2488] sm:$0xff]
        %v2592 = vld [vmem:[%s426 + $0x2490] sm:$0xff]
        %v2593 = vld [vmem:[%s426 + $0x2498] sm:$0xff]
        %v2594 = vld [vmem:[%s426 + $0x24a0] sm:$0xff]
        %v2595 = vld [vmem:[%s426 + $0x24a8] sm:$0xff]
        %v2596 = vld [vmem:[%s426 + $0x24b0] sm:$0xff]
        %v2597 = vld [vmem:[%s426 + $0x24b8] sm:$0xff]
        %v2598 = vld [vmem:[%s426 + $0x24c0] sm:$0xff]
        %v2599 = vld [vmem:[%s426 + $0x24c8] sm:$0xff]
        %v2600 = vld [vmem:[%s426 + $0x24d0] sm:$0xff]
        %v2601 = vld [vmem:[%s426 + $0x24d8] sm:$0xff]
        %v2602 = vld [vmem:[%s426 + $0x24e0] sm:$0xff]
        %v2603 = vld [vmem:[%s426 + $0x24e8] sm:$0xff]
        %v2604 = vld [vmem:[%s426 + $0x24f0] sm:$0xff]
        %v2605 = vld [vmem:[%s426 + $0x24f8] sm:$0xff]
        %v2606 = vld [vmem:[%s426 + $0x2500] sm:$0xff]
        %v2607 = vld [vmem:[%s426 + $0x2508] sm:$0xff]
        %v2608 = vld [vmem:[%s426 + $0x2510] sm:$0xff]
        %v2609 = vld [vmem:[%s426 + $0x2518] sm:$0xff]
        %v2610 = vld [vmem:[%s426 + $0x2520] sm:$0xff]
        %v2611 = vld [vmem:[%s426 + $0x2528] sm:$0xff]
        %v2612 = vld [vmem:[%s426 + $0x2530] sm:$0xff]
        %v2613 = vld [vmem:[%s426 + $0x2538] sm:$0xff]
        %v2614 = vld [vmem:[%s426 + $0x2540] sm:$0xff]
        %v2615 = vld [vmem:[%s426 + $0x2548] sm:$0xff]
        %v2616 = vld [vmem:[%s426 + $0x2550] sm:$0xff]
        %v2617 = vld [vmem:[%s426 + $0x2558] sm:$0xff]
        %v2618 = vld [vmem:[%s426 + $0x2560] sm:$0xff]
        %v2619 = vld [vmem:[%s426 + $0x2568] sm:$0xff]
        %v2620 = vld [vmem:[%s426 + $0x2570] sm:$0xff]
        %v2621 = vld [vmem:[%s426 + $0x2578] sm:$0xff]
        %v2622 = vld [vmem:[%s426 + $0x2580] sm:$0xff]
        %v2623 = vld [vmem:[%s426 + $0x2588] sm:$0xff]
        %v2624 = vld [vmem:[%s426 + $0x2590] sm:$0xff]
        %v2625 = vld [vmem:[%s426 + $0x2598] sm:$0xff]
        %v2626 = vld [vmem:[%s426 + $0x25a0] sm:$0xff]
        %v2627 = vld [vmem:[%s426 + $0x25a8] sm:$0xff]
        %v2628 = vld [vmem:[%s426 + $0x25b0] sm:$0xff]
        %v2629 = vld [vmem:[%s426 + $0x25b8] sm:$0xff]
        %v2630 = vld [vmem:[%s426 + $0x25c0] sm:$0xff]
        %v2631 = vld [vmem:[%s426 + $0x25c8] sm:$0xff]
        %v2632 = vld [vmem:[%s426 + $0x25d0] sm:$0xff]
        %v2633 = vld [vmem:[%s426 + $0x25d8] sm:$0xff]
        %v2634 = vld [vmem:[%s426 + $0x25e0] sm:$0xff]
        %v2635 = vld [vmem:[%s426 + $0x25e8] sm:$0xff]
        %v2636 = vld [vmem:[%s426 + $0x25f0] sm:$0xff]
        %v2637 = vld [vmem:[%s426 + $0x25f8] sm:$0xff]
        %v2638 = vld [vmem:[%s426 + $0x2600] sm:$0xff]
        %v2639 = vld [vmem:[%s426 + $0x2608] sm:$0xff]
        %v2640 = vld [vmem:[%s426 + $0x2610] sm:$0xff]
        %v2641 = vld [vmem:[%s426 + $0x2618] sm:$0xff]
        %v2642 = vld [vmem:[%s426 + $0x2620] sm:$0xff]
        %v2643 = vld [vmem:[%s426 + $0x2628] sm:$0xff]
        %v2644 = vld [vmem:[%s426 + $0x2630] sm:$0xff]
        %v2645 = vld [vmem:[%s426 + $0x2638] sm:$0xff]
        %v2646 = vld [vmem:[%s426 + $0x2640] sm:$0xff]
        %v2647 = vld [vmem:[%s426 + $0x2648] sm:$0xff]
        %v2648 = vld [vmem:[%s426 + $0x2650] sm:$0xff]
        %v2649 = vld [vmem:[%s426 + $0x2658] sm:$0xff]
        %v2650 = vld [vmem:[%s426 + $0x2660] sm:$0xff]
        %v2651 = vld [vmem:[%s426 + $0x2668] sm:$0xff]
        %v2652 = vld [vmem:[%s426 + $0x2670] sm:$0xff]
        %v2653 = vld [vmem:[%s426 + $0x2678] sm:$0xff]
        %v2654 = vld [vmem:[%s426 + $0x2680] sm:$0xff]
        %v2655 = vld [vmem:[%s426 + $0x2688] sm:$0xff]
        %v2656 = vld [vmem:[%s426 + $0x2690] sm:$0xff]
        %v2657 = vld [vmem:[%s426 + $0x2698] sm:$0xff]
        %v2658 = vld [vmem:[%s426 + $0x26a0] sm:$0xff]
        %v2659 = vld [vmem:[%s426 + $0x26a8] sm:$0xff]
        %v2660 = vld [vmem:[%s426 + $0x26b0] sm:$0xff]
        %v2661 = vld [vmem:[%s426 + $0x26b8] sm:$0xff]
        %v2662 = vld [vmem:[%s426 + $0x26c0] sm:$0xff]
        %v2663 = vld [vmem:[%s426 + $0x26c8] sm:$0xff]
        %v2664 = vld [vmem:[%s426 + $0x26d0] sm:$0xff]
        %v2665 = vld [vmem:[%s426 + $0x26d8] sm:$0xff]
        %v2666 = vld [vmem:[%s426 + $0x26e0] sm:$0xff]
        %v2667 = vld [vmem:[%s426 + $0x26e8] sm:$0xff]
        %v2668 = vld [vmem:[%s426 + $0x26f0] sm:$0xff]
        %v2669 = vld [vmem:[%s426 + $0x26f8] sm:$0xff]
        %v2670 = vld [vmem:[%s426 + $0x2700] sm:$0xff]
        %v2671 = vld [vmem:[%s426 + $0x2708] sm:$0xff]
        %v2672 = vld [vmem:[%s426 + $0x2710] sm:$0xff]
        %v2673 = vld [vmem:[%s426 + $0x2718] sm:$0xff]
        %v2674 = vld [vmem:[%s426 + $0x2720] sm:$0xff]
        %v2675 = vld [vmem:[%s426 + $0x2728] sm:$0xff]
        %v2676 = vld [vmem:[%s426 + $0x2730] sm:$0xff]
        %v2677 = vld [vmem:[%s426 + $0x2738] sm:$0xff]
        %v2678 = vld [vmem:[%s426 + $0x2740] sm:$0xff]
        %v2679 = vld [vmem:[%s426 + $0x2748] sm:$0xff]
        %v2680 = vld [vmem:[%s426 + $0x2750] sm:$0xff]
        %v2681 = vld [vmem:[%s426 + $0x2758] sm:$0xff]
        %v2682 = vld [vmem:[%s426 + $0x2760] sm:$0xff]
        %v2683 = vld [vmem:[%s426 + $0x2768] sm:$0xff]
        %v2684 = vld [vmem:[%s426 + $0x2770] sm:$0xff]
        %v2685 = vld [vmem:[%s426 + $0x2778] sm:$0xff]
        %v2686 = vld [vmem:[%s426 + $0x2780] sm:$0xff]
        %v2687 = vld [vmem:[%s426 + $0x2788] sm:$0xff]
        %v2688 = vld [vmem:[%s426 + $0x2790] sm:$0xff]
        %v2689 = vld [vmem:[%s426 + $0x2798] sm:$0xff]
        %v2690 = vld [vmem:[%s426 + $0x27a0] sm:$0xff]
        %v2691 = vld [vmem:[%s426 + $0x27a8] sm:$0xff]
        %v2692 = vld [vmem:[%s426 + $0x27b0] sm:$0xff]
        %v2693 = vld [vmem:[%s426 + $0x27b8] sm:$0xff]
        %v2694 = vld [vmem:[%s426 + $0x27c0] sm:$0xff]
        %v2695 = vld [vmem:[%s426 + $0x27c8] sm:$0xff]
        %v2696 = vld [vmem:[%s426 + $0x27d0] sm:$0xff]
        %v2697 = vld [vmem:[%s426 + $0x27d8] sm:$0xff]
        %v2698 = vld [vmem:[%s426 + $0x27e0] sm:$0xff]
        %v2699 = vld [vmem:[%s426 + $0x27e8] sm:$0xff]
        %v2700 = vld [vmem:[%s426 + $0x27f0] sm:$0xff]
        %v2701 = vld [vmem:[%s426 + $0x27f8] sm:$0xff]
        %v2702 = vld [vmem:[%s426 + $0x2800] sm:$0xff]
        %v2703 = vld [vmem:[%s426 + $0x2808] sm:$0xff]
        %v2704 = vld [vmem:[%s426 + $0x2810] sm:$0xff]
        %v2705 = vld [vmem:[%s426 + $0x2818] sm:$0xff]
        %v2706 = vld [vmem:[%s426 + $0x2820] sm:$0xff]
        %v2707 = vld [vmem:[%s426 + $0x2828] sm:$0xff]
        %v2708 = vld [vmem:[%s426 + $0x2830] sm:$0xff]
        %v2709 = vld [vmem:[%s426 + $0x2838] sm:$0xff]
        %v2710 = vld [vmem:[%s426 + $0x2840] sm:$0xff]
        %v2711 = vld [vmem:[%s426 + $0x2848] sm:$0xff]
        %v2712 = vld [vmem:[%s426 + $0x2850] sm:$0xff]
        %v2713 = vld [vmem:[%s426 + $0x2858] sm:$0xff]
        %v2714 = vld [vmem:[%s426 + $0x2860] sm:$0xff]
        %v2715 = vld [vmem:[%s426 + $0x2868] sm:$0xff]
        %v2716 = vld [vmem:[%s426 + $0x2870] sm:$0xff]
        %v2717 = vld [vmem:[%s426 + $0x2878] sm:$0xff]
        %v2718 = vld [vmem:[%s426 + $0x2880] sm:$0xff]
        %v2719 = vld [vmem:[%s426 + $0x2888] sm:$0xff]
        %v2720 = vld [vmem:[%s426 + $0x2890] sm:$0xff]
        %v2721 = vld [vmem:[%s426 + $0x2898] sm:$0xff]
        %v2722 = vld [vmem:[%s426 + $0x28a0] sm:$0xff]
        %v2723 = vld [vmem:[%s426 + $0x28a8] sm:$0xff]
        %v2724 = vld [vmem:[%s426 + $0x28b0] sm:$0xff]
        %v2725 = vld [vmem:[%s426 + $0x28b8] sm:$0xff]
        %v2726 = vld [vmem:[%s426 + $0x28c0] sm:$0xff]
        %v2727 = vld [vmem:[%s426 + $0x28c8] sm:$0xff]
        %v2728 = vld [vmem:[%s426 + $0x28d0] sm:$0xff]
        %v2729 = vld [vmem:[%s426 + $0x28d8] sm:$0xff]
        %v2730 = vld [vmem:[%s426 + $0x28e0] sm:$0xff]
        %v2731 = vld [vmem:[%s426 + $0x28e8] sm:$0xff]
        %v2732 = vld [vmem:[%s426 + $0x28f0] sm:$0xff]
        %v2733 = vld [vmem:[%s426 + $0x28f8] sm:$0xff]
        %v2734 = vld [vmem:[%s426 + $0x2900] sm:$0xff]
        %v2735 = vld [vmem:[%s426 + $0x2908] sm:$0xff]
        %v2736 = vld [vmem:[%s426 + $0x2910] sm:$0xff]
        %v2737 = vld [vmem:[%s426 + $0x2918] sm:$0xff]
        %v2738 = vld [vmem:[%s426 + $0x2920] sm:$0xff]
        %v2739 = vld [vmem:[%s426 + $0x2928] sm:$0xff]
        %v2740 = vld [vmem:[%s426 + $0x2930] sm:$0xff]
        %v2741 = vld [vmem:[%s426 + $0x2938] sm:$0xff]
        %v2742 = vld [vmem:[%s426 + $0x2940] sm:$0xff]
        %v2743 = vld [vmem:[%s426 + $0x2948] sm:$0xff]
        %v2744 = vld [vmem:[%s426 + $0x2950] sm:$0xff]
        %v2745 = vld [vmem:[%s426 + $0x2958] sm:$0xff]
        %v2746 = vld [vmem:[%s426 + $0x2960] sm:$0xff]
        %v2747 = vld [vmem:[%s426 + $0x2968] sm:$0xff]
        %v2748 = vld [vmem:[%s426 + $0x2970] sm:$0xff]
        %v2749 = vld [vmem:[%s426 + $0x2978] sm:$0xff]
        %v2750 = vld [vmem:[%s426 + $0x2980] sm:$0xff]
        %v2751 = vld [vmem:[%s426 + $0x2988] sm:$0xff]
        %v2752 = vld [vmem:[%s426 + $0x2990] sm:$0xff]
        %v2753 = vld [vmem:[%s426 + $0x2998] sm:$0xff]
        %v2754 = vld [vmem:[%s426 + $0x29a0] sm:$0xff]
        %v2755 = vld [vmem:[%s426 + $0x29a8] sm:$0xff]
        %v2756 = vld [vmem:[%s426 + $0x29b0] sm:$0xff]
        %v2757 = vld [vmem:[%s426 + $0x29b8] sm:$0xff]
        %v2758 = vld [vmem:[%s426 + $0x29c0] sm:$0xff]
        %v2759 = vld [vmem:[%s426 + $0x29c8] sm:$0xff]
        %v2760 = vld [vmem:[%s426 + $0x29d0] sm:$0xff]
        %v2761 = vld [vmem:[%s426 + $0x29d8] sm:$0xff]
        %v2762 = vld [vmem:[%s426 + $0x29e0] sm:$0xff]
        %v2763 = vld [vmem:[%s426 + $0x29e8] sm:$0xff]
        %v2764 = vld [vmem:[%s426 + $0x29f0] sm:$0xff]
        %v2765 = vld [vmem:[%s426 + $0x29f8] sm:$0xff]
        %v2766 = vld [vmem:[%s426 + $0x2a00] sm:$0xff]
        %v2767 = vld [vmem:[%s426 + $0x2a08] sm:$0xff]
        %v2768 = vld [vmem:[%s426 + $0x2a10] sm:$0xff]
        %v2769 = vld [vmem:[%s426 + $0x2a18] sm:$0xff]
        %v2770 = vld [vmem:[%s426 + $0x2a20] sm:$0xff]
        %v2771 = vld [vmem:[%s426 + $0x2a28] sm:$0xff]
        %v2772 = vld [vmem:[%s426 + $0x2a30] sm:$0xff]
        %v2773 = vld [vmem:[%s426 + $0x2a38] sm:$0xff]
        %v2774 = vld [vmem:[%s426 + $0x2a40] sm:$0xff]
        %v2775 = vld [vmem:[%s426 + $0x2a48] sm:$0xff]
        %v2776 = vld [vmem:[%s426 + $0x2a50] sm:$0xff]
        %v2777 = vld [vmem:[%s426 + $0x2a58] sm:$0xff]
        %v2778 = vld [vmem:[%s426 + $0x2a60] sm:$0xff]
        %v2779 = vld [vmem:[%s426 + $0x2a68] sm:$0xff]
        %v2780 = vld [vmem:[%s426 + $0x2a70] sm:$0xff]
        %v2781 = vld [vmem:[%s426 + $0x2a78] sm:$0xff]
        %v2782 = vld [vmem:[%s426 + $0x2a80] sm:$0xff]
        %v2783 = vld [vmem:[%s426 + $0x2a88] sm:$0xff]
        %v2784 = vld [vmem:[%s426 + $0x2a90] sm:$0xff]
        %v2785 = vld [vmem:[%s426 + $0x2a98] sm:$0xff]
        %v2786 = vld [vmem:[%s426 + $0x2aa0] sm:$0xff]
        %v2787 = vld [vmem:[%s426 + $0x2aa8] sm:$0xff]
        %v2788 = vld [vmem:[%s426 + $0x2ab0] sm:$0xff]
        %v2789 = vld [vmem:[%s426 + $0x2ab8] sm:$0xff]
        %v2790 = vld [vmem:[%s426 + $0x2ac0] sm:$0xff]
        %v2791 = vld [vmem:[%s426 + $0x2ac8] sm:$0xff]
        %v2792 = vld [vmem:[%s426 + $0x2ad0] sm:$0xff]
        %v2793 = vld [vmem:[%s426 + $0x2ad8] sm:$0xff]
        %v2794 = vld [vmem:[%s426 + $0x2ae0] sm:$0xff]
        %v2795 = vld [vmem:[%s426 + $0x2ae8] sm:$0xff]
        %v2796 = vld [vmem:[%s426 + $0x2af0] sm:$0xff]
        %v2797 = vld [vmem:[%s426 + $0x2af8] sm:$0xff]
        %v2798 = vld [vmem:[%s426 + $0x2b00] sm:$0xff]
        %v2799 = vld [vmem:[%s426 + $0x2b08] sm:$0xff]
        %v2800 = vld [vmem:[%s426 + $0x2b10] sm:$0xff]
        %v2801 = vld [vmem:[%s426 + $0x2b18] sm:$0xff]
        %v2802 = vld [vmem:[%s426 + $0x2b20] sm:$0xff]
        %v2803 = vld [vmem:[%s426 + $0x2b28] sm:$0xff]
        %v2804 = vld [vmem:[%s426 + $0x2b30] sm:$0xff]
        %v2805 = vld [vmem:[%s426 + $0x2b38] sm:$0xff]
        %v2806 = vld [vmem:[%s426 + $0x2b40] sm:$0xff]
        %v2807 = vld [vmem:[%s426 + $0x2b48] sm:$0xff]
        %v2808 = vld [vmem:[%s426 + $0x2b50] sm:$0xff]
        %v2809 = vld [vmem:[%s426 + $0x2b58] sm:$0xff]
        %v2810 = vld [vmem:[%s426 + $0x2b60] sm:$0xff]
        %v2811 = vld [vmem:[%s426 + $0x2b68] sm:$0xff]
        %v2812 = vld [vmem:[%s426 + $0x2b70] sm:$0xff]
        %v2813 = vld [vmem:[%s426 + $0x2b78] sm:$0xff]
        %v2814 = vld [vmem:[%s426 + $0x2b80] sm:$0xff]
        %v2815 = vld [vmem:[%s426 + $0x2b88] sm:$0xff]
        %v2816 = vld [vmem:[%s426 + $0x2b90] sm:$0xff]
        %v2817 = vld [vmem:[%s426 + $0x2b98] sm:$0xff]
        %v2818 = vld [vmem:[%s426 + $0x2ba0] sm:$0xff]
        %v2819 = vld [vmem:[%s426 + $0x2ba8] sm:$0xff]
        %v2820 = vld [vmem:[%s426 + $0x2bb0] sm:$0xff]
        %v2821 = vld [vmem:[%s426 + $0x2bb8] sm:$0xff]
        %v2822 = vld [vmem:[%s426 + $0x2bc0] sm:$0xff]
        %v2823 = vld [vmem:[%s426 + $0x2bc8] sm:$0xff]
        %v2824 = vld [vmem:[%s426 + $0x2bd0] sm:$0xff]
        %v2825 = vld [vmem:[%s426 + $0x2bd8] sm:$0xff]
        %v2826 = vld [vmem:[%s426 + $0x2be0] sm:$0xff]
        %v2827 = vld [vmem:[%s426 + $0x2be8] sm:$0xff]
        %v2828 = vld [vmem:[%s426 + $0x2bf0] sm:$0xff]
        %v2829 = vld [vmem:[%s426 + $0x2bf8] sm:$0xff]
        %v2830 = vld [vmem:[%s435] sm:$0xff]
        %v2831 = vld [vmem:[%s435 + $0x8] sm:$0xff]
        %v2832 = vld [vmem:[%s435 + $0x10] sm:$0xff]
        %v2833 = vld [vmem:[%s435 + $0x18] sm:$0xff]
        %v2834 = vld [vmem:[%s435 + $0x20] sm:$0xff]
        %v2835 = vld [vmem:[%s435 + $0x28] sm:$0xf]
        %v2842 = vlaneseq
        %v2843 = vshrl.u32 %v2842, 7
        %v2844 = vsub.s32 0, %v2843
        %v2845 = vrot.slane %v2830, %v2844
        %v2846 = vlaneseq
        %v2847 = vshrl.u32 %v2846, 7
        %v2848 = vsub.s32 1, %v2847
        %v2849 = vrot.slane %v2830, %v2848
        %v2850 = vlaneseq
        %v2851 = vshrl.u32 %v2850, 7
        %v2852 = vsub.s32 2, %v2851
        %v2853 = vrot.slane %v2830, %v2852
        %v2854 = vlaneseq
        %v2855 = vshrl.u32 %v2854, 7
        %v2856 = vsub.s32 3, %v2855
        %v2857 = vrot.slane %v2830, %v2856
        %v2858 = vlaneseq
        %v2859 = vshrl.u32 %v2858, 7
        %v2860 = vsub.s32 4, %v2859
        %v2861 = vrot.slane %v2830, %v2860
        %v2862 = vlaneseq
        %v2863 = vshrl.u32 %v2862, 7
        %v2864 = vsub.s32 5, %v2863
        %v2865 = vrot.slane %v2830, %v2864
        %v2866 = vlaneseq
        %v2867 = vshrl.u32 %v2866, 7
        %v2868 = vsub.s32 6, %v2867
        %v2869 = vrot.slane %v2830, %v2868
        %v2870 = vlaneseq
        %v2871 = vshrl.u32 %v2870, 7
        %v2872 = vsub.s32 7, %v2871
        %v2873 = vrot.slane %v2830, %v2872
        %v2874 = vlaneseq
        %v2875 = vshrl.u32 %v2874, 7
        %v2876 = vsub.s32 0, %v2875
        %v2877 = vrot.slane %v2831, %v2876
        %v2878 = vlaneseq
        %v2879 = vshrl.u32 %v2878, 7
        %v2880 = vsub.s32 1, %v2879
        %v2881 = vrot.slane %v2831, %v2880
        %v2882 = vlaneseq
        %v2883 = vshrl.u32 %v2882, 7
        %v2884 = vsub.s32 2, %v2883
        %v2885 = vrot.slane %v2831, %v2884
        %v2886 = vlaneseq
        %v2887 = vshrl.u32 %v2886, 7
        %v2888 = vsub.s32 3, %v2887
        %v2889 = vrot.slane %v2831, %v2888
        %v2890 = vlaneseq
        %v2891 = vshrl.u32 %v2890, 7
        %v2892 = vsub.s32 4, %v2891
        %v2893 = vrot.slane %v2831, %v2892
        %v2894 = vlaneseq
        %v2895 = vshrl.u32 %v2894, 7
        %v2896 = vsub.s32 5, %v2895
        %v2897 = vrot.slane %v2831, %v2896
        %v2898 = vlaneseq
        %v2899 = vshrl.u32 %v2898, 7
        %v2900 = vsub.s32 6, %v2899
        %v2901 = vrot.slane %v2831, %v2900
        %v2902 = vlaneseq
        %v2903 = vshrl.u32 %v2902, 7
        %v2904 = vsub.s32 7, %v2903
        %v2905 = vrot.slane %v2831, %v2904
        %v2906 = vlaneseq
        %v2907 = vshrl.u32 %v2906, 7
        %v2908 = vsub.s32 0, %v2907
        %v2909 = vrot.slane %v2832, %v2908
        %v2910 = vlaneseq
        %v2911 = vshrl.u32 %v2910, 7
        %v2912 = vsub.s32 1, %v2911
        %v2913 = vrot.slane %v2832, %v2912
        %v2914 = vlaneseq
        %v2915 = vshrl.u32 %v2914, 7
        %v2916 = vsub.s32 2, %v2915
        %v2917 = vrot.slane %v2832, %v2916
        %v2918 = vlaneseq
        %v2919 = vshrl.u32 %v2918, 7
        %v2920 = vsub.s32 3, %v2919
        %v2921 = vrot.slane %v2832, %v2920
        %v2922 = vlaneseq
        %v2923 = vshrl.u32 %v2922, 7
        %v2924 = vsub.s32 4, %v2923
        %v2925 = vrot.slane %v2832, %v2924
        %v2926 = vlaneseq
        %v2927 = vshrl.u32 %v2926, 7
        %v2928 = vsub.s32 5, %v2927
        %v2929 = vrot.slane %v2832, %v2928
        %v2930 = vlaneseq
        %v2931 = vshrl.u32 %v2930, 7
        %v2932 = vsub.s32 6, %v2931
        %v2933 = vrot.slane %v2832, %v2932
        %v2934 = vlaneseq
        %v2935 = vshrl.u32 %v2934, 7
        %v2936 = vsub.s32 7, %v2935
        %v2937 = vrot.slane %v2832, %v2936
        %v2938 = vlaneseq
        %v2939 = vshrl.u32 %v2938, 7
        %v2940 = vsub.s32 0, %v2939
        %v2941 = vrot.slane %v2833, %v2940
        %v2942 = vlaneseq
        %v2943 = vshrl.u32 %v2942, 7
        %v2944 = vsub.s32 1, %v2943
        %v2945 = vrot.slane %v2833, %v2944
        %v2946 = vlaneseq
        %v2947 = vshrl.u32 %v2946, 7
        %v2948 = vsub.s32 2, %v2947
        %v2949 = vrot.slane %v2833, %v2948
        %v2950 = vlaneseq
        %v2951 = vshrl.u32 %v2950, 7
        %v2952 = vsub.s32 3, %v2951
        %v2953 = vrot.slane %v2833, %v2952
        %v2954 = vlaneseq
        %v2955 = vshrl.u32 %v2954, 7
        %v2956 = vsub.s32 4, %v2955
        %v2957 = vrot.slane %v2833, %v2956
        %v2958 = vlaneseq
        %v2959 = vshrl.u32 %v2958, 7
        %v2960 = vsub.s32 5, %v2959
        %v2961 = vrot.slane %v2833, %v2960
        %v2962 = vlaneseq
        %v2963 = vshrl.u32 %v2962, 7
        %v2964 = vsub.s32 6, %v2963
        %v2965 = vrot.slane %v2833, %v2964
        %v2966 = vlaneseq
        %v2967 = vshrl.u32 %v2966, 7
        %v2968 = vsub.s32 7, %v2967
        %v2969 = vrot.slane %v2833, %v2968
        %v2970 = vlaneseq
        %v2971 = vshrl.u32 %v2970, 7
        %v2972 = vsub.s32 0, %v2971
        %v2973 = vrot.slane %v2834, %v2972
        %v2974 = vlaneseq
        %v2975 = vshrl.u32 %v2974, 7
        %v2976 = vsub.s32 1, %v2975
        %v2977 = vrot.slane %v2834, %v2976
        %v2978 = vlaneseq
        %v2979 = vshrl.u32 %v2978, 7
        %v2980 = vsub.s32 2, %v2979
        %v2981 = vrot.slane %v2834, %v2980
        %v2982 = vlaneseq
        %v2983 = vshrl.u32 %v2982, 7
        %v2984 = vsub.s32 3, %v2983
        %v2985 = vrot.slane %v2834, %v2984
        %v2986 = vlaneseq
        %v2987 = vshrl.u32 %v2986, 7
        %v2988 = vsub.s32 4, %v2987
        %v2989 = vrot.slane %v2834, %v2988
        %v2990 = vlaneseq
        %v2991 = vshrl.u32 %v2990, 7
        %v2992 = vsub.s32 5, %v2991
        %v2993 = vrot.slane %v2834, %v2992
        %v2994 = vlaneseq
        %v2995 = vshrl.u32 %v2994, 7
        %v2996 = vsub.s32 6, %v2995
        %v2997 = vrot.slane %v2834, %v2996
        %v2998 = vlaneseq
        %v2999 = vshrl.u32 %v2998, 7
        %v3000 = vsub.s32 7, %v2999
        %v3001 = vrot.slane %v2834, %v3000
        %v3002 = vlaneseq
        %v3003 = vshrl.u32 %v3002, 7
        %v3004 = vsub.s32 0, %v3003
        %v3005 = vrot.slane %v2835, %v3004
        %v3006 = vlaneseq
        %v3007 = vshrl.u32 %v3006, 7
        %v3008 = vsub.s32 1, %v3007
        %v3009 = vrot.slane %v2835, %v3008
        %v3010 = vlaneseq
        %v3011 = vshrl.u32 %v3010, 7
        %v3012 = vsub.s32 2, %v3011
        %v3013 = vrot.slane %v2835, %v3012
        %v3014 = vlaneseq
        %v3015 = vshrl.u32 %v3014, 7
        %v3016 = vsub.s32 3, %v3015
        %v3017 = vrot.slane %v2835, %v3016
        %v4470 = vunpack.c.l.b16 %v1422
        %v4471 = vunpack.c.h.b16 %v1422
        %v4472 = vunpack.c.l.b16 %v1423
        %v4473 = vunpack.c.h.b16 %v1423
        %v4474 = vunpack.c.l.b16 %v1424
        %v4475 = vunpack.c.h.b16 %v1424
        %v4476 = vunpack.c.l.b16 %v1425
        %v4477 = vunpack.c.h.b16 %v1425
        %v4478 = vunpack.c.l.b16 %v1426
        %v4479 = vunpack.c.h.b16 %v1426
        %v4480 = vunpack.c.l.b16 %v1427
        %v4481 = vunpack.c.h.b16 %v1427
        %v4482 = vunpack.c.l.b16 %v1428
        %v4483 = vunpack.c.h.b16 %v1428
        %v4484 = vunpack.c.l.b16 %v1429
        %v4485 = vunpack.c.h.b16 %v1429
        %v4486 = vunpack.c.l.b16 %v1430
        %v4487 = vunpack.c.h.b16 %v1430
        %v4488 = vunpack.c.l.b16 %v1431
        %v4489 = vunpack.c.h.b16 %v1431
        %v4490 = vunpack.c.l.b16 %v1432
        %v4491 = vunpack.c.h.b16 %v1432
        %v4492 = vunpack.c.l.b16 %v1433
        %v4493 = vunpack.c.h.b16 %v1433
        %v4494 = vunpack.c.l.b16 %v1434
        %v4495 = vunpack.c.h.b16 %v1434
        %v4496 = vunpack.c.l.b16 %v1435
        %v4497 = vunpack.c.h.b16 %v1435
        %v4498 = vunpack.c.l.b16 %v1436
        %v4499 = vunpack.c.h.b16 %v1436
        %v4500 = vunpack.c.l.b16 %v1437
        %v4501 = vunpack.c.h.b16 %v1437
        %v4502 = vunpack.c.l.b16 %v1438
        %v4503 = vunpack.c.h.b16 %v1438
        %v4504 = vunpack.c.l.b16 %v1439
        %v4505 = vunpack.c.h.b16 %v1439
        %v4506 = vunpack.c.l.b16 %v1440
        %v4507 = vunpack.c.h.b16 %v1440
        %v4508 = vunpack.c.l.b16 %v1441
        %v4509 = vunpack.c.h.b16 %v1441
        %v4510 = vunpack.c.l.b16 %v1442
        %v4511 = vunpack.c.h.b16 %v1442
        %v4512 = vunpack.c.l.b16 %v1443
        %v4513 = vunpack.c.h.b16 %v1443
        %v4514 = vunpack.c.l.b16 %v1444
        %v4515 = vunpack.c.h.b16 %v1444
        %v4516 = vunpack.c.l.b16 %v1445
        %v4517 = vunpack.c.h.b16 %v1445
        %v4518 = vunpack.c.l.b16 %v1446
        %v4519 = vunpack.c.h.b16 %v1446
        %v4520 = vunpack.c.l.b16 %v1447
        %v4521 = vunpack.c.h.b16 %v1447
        %v4522 = vunpack.c.l.b16 %v1448
        %v4523 = vunpack.c.h.b16 %v1448
        %v4524 = vunpack.c.l.b16 %v1449
        %v4525 = vunpack.c.h.b16 %v1449
        %v4526 = vunpack.c.l.b16 %v1450
        %v4527 = vunpack.c.h.b16 %v1450
        %v4528 = vunpack.c.l.b16 %v1451
        %v4529 = vunpack.c.h.b16 %v1451
        %v4530 = vunpack.c.l.b16 %v1452
        %v4531 = vunpack.c.h.b16 %v1452
        %v4532 = vunpack.c.l.b16 %v1453
        %v4533 = vunpack.c.h.b16 %v1453
        %v4534 = vunpack.c.l.b16 %v1454
        %v4535 = vunpack.c.h.b16 %v1454
        %v4536 = vunpack.c.l.b16 %v1455
        %v4537 = vunpack.c.h.b16 %v1455
        %v4538 = vunpack.c.l.b16 %v1456
        %v4539 = vunpack.c.h.b16 %v1456
        %v4540 = vunpack.c.l.b16 %v1457
        %v4541 = vunpack.c.h.b16 %v1457
        %v4542 = vunpack.c.l.b16 %v1458
        %v4543 = vunpack.c.h.b16 %v1458
        %v4544 = vunpack.c.l.b16 %v1459
        %v4545 = vunpack.c.h.b16 %v1459
        %v4546 = vunpack.c.l.b16 %v1460
        %v4547 = vunpack.c.h.b16 %v1460
        %v4548 = vunpack.c.l.b16 %v1461
        %v4549 = vunpack.c.h.b16 %v1461
        %v4550 = vunpack.c.l.b16 %v1462
        %v4551 = vunpack.c.h.b16 %v1462
        %v4552 = vunpack.c.l.b16 %v1463
        %v4553 = vunpack.c.h.b16 %v1463
        %v4554 = vunpack.c.l.b16 %v1464
        %v4555 = vunpack.c.h.b16 %v1464
        %v4556 = vunpack.c.l.b16 %v1465
        %v4557 = vunpack.c.h.b16 %v1465
        %v4558 = vunpack.c.l.b16 %v1466
        %v4559 = vunpack.c.h.b16 %v1466
        %v4560 = vunpack.c.l.b16 %v1467
        %v4561 = vunpack.c.h.b16 %v1467
        %v4562 = vunpack.c.l.b16 %v1468
        %v4563 = vunpack.c.h.b16 %v1468
        %v4564 = vunpack.c.l.b16 %v1469
        %v4565 = vunpack.c.h.b16 %v1469
        %v4566 = vunpack.c.l.b16 %v1470
        %v4567 = vunpack.c.h.b16 %v1470
        %v4568 = vunpack.c.l.b16 %v1471
        %v4569 = vunpack.c.h.b16 %v1471
        %v4570 = vunpack.c.l.b16 %v1472
        %v4571 = vunpack.c.h.b16 %v1472
        %v4572 = vunpack.c.l.b16 %v1473
        %v4573 = vunpack.c.h.b16 %v1473
        %v4574 = vunpack.c.l.b16 %v1474
        %v4575 = vunpack.c.h.b16 %v1474
        %v4576 = vunpack.c.l.b16 %v1475
        %v4577 = vunpack.c.h.b16 %v1475
        %v4578 = vunpack.c.l.b16 %v1476
        %v4579 = vunpack.c.h.b16 %v1476
        %v4580 = vunpack.c.l.b16 %v1477
        %v4581 = vunpack.c.h.b16 %v1477
        %v4582 = vunpack.c.l.b16 %v1478
        %v4583 = vunpack.c.h.b16 %v1478
        %v4584 = vunpack.c.l.b16 %v1479
        %v4585 = vunpack.c.h.b16 %v1479
        %v4586 = vunpack.c.l.b16 %v1480
        %v4587 = vunpack.c.h.b16 %v1480
        %v4588 = vunpack.c.l.b16 %v1481
        %v4589 = vunpack.c.h.b16 %v1481
        %v4590 = vunpack.c.l.b16 %v1482
        %v4591 = vunpack.c.h.b16 %v1482
        %v4592 = vunpack.c.l.b16 %v1483
        %v4593 = vunpack.c.h.b16 %v1483
        %v4594 = vunpack.c.l.b16 %v1484
        %v4595 = vunpack.c.h.b16 %v1484
        %v4596 = vunpack.c.l.b16 %v1485
        %v4597 = vunpack.c.h.b16 %v1485
        %v4598 = vunpack.c.l.b16 %v1486
        %v4599 = vunpack.c.h.b16 %v1486
        %v4600 = vunpack.c.l.b16 %v1487
        %v4601 = vunpack.c.h.b16 %v1487
        %v4602 = vunpack.c.l.b16 %v1488
        %v4603 = vunpack.c.h.b16 %v1488
        %v4604 = vunpack.c.l.b16 %v1489
        %v4605 = vunpack.c.h.b16 %v1489
        %v4606 = vunpack.c.l.b16 %v1490
        %v4607 = vunpack.c.h.b16 %v1490
        %v4608 = vunpack.c.l.b16 %v1491
        %v4609 = vunpack.c.h.b16 %v1491
        %v4610 = vunpack.c.l.b16 %v1492
        %v4611 = vunpack.c.h.b16 %v1492
        %v4612 = vunpack.c.l.b16 %v1493
        %v4613 = vunpack.c.h.b16 %v1493
        %v4614 = vunpack.c.l.b16 %v1494
        %v4615 = vunpack.c.h.b16 %v1494
        %v4616 = vunpack.c.l.b16 %v1495
        %v4617 = vunpack.c.h.b16 %v1495
        %v4618 = vunpack.c.l.b16 %v1496
        %v4619 = vunpack.c.h.b16 %v1496
        %v4620 = vunpack.c.l.b16 %v1497
        %v4621 = vunpack.c.h.b16 %v1497
        %v4622 = vunpack.c.l.b16 %v1498
        %v4623 = vunpack.c.h.b16 %v1498
        %v4624 = vunpack.c.l.b16 %v1499
        %v4625 = vunpack.c.h.b16 %v1499
        %v4626 = vunpack.c.l.b16 %v1500
        %v4627 = vunpack.c.h.b16 %v1500
        %v4628 = vunpack.c.l.b16 %v1501
        %v4629 = vunpack.c.h.b16 %v1501
        %v4630 = vunpack.c.l.b16 %v1502
        %v4631 = vunpack.c.h.b16 %v1502
        %v4632 = vunpack.c.l.b16 %v1503
        %v4633 = vunpack.c.h.b16 %v1503
        %v4634 = vunpack.c.l.b16 %v1504
        %v4635 = vunpack.c.h.b16 %v1504
        %v4636 = vunpack.c.l.b16 %v1505
        %v4637 = vunpack.c.h.b16 %v1505
        %v4638 = vunpack.c.l.b16 %v1506
        %v4639 = vunpack.c.h.b16 %v1506
        %v4640 = vunpack.c.l.b16 %v1507
        %v4641 = vunpack.c.h.b16 %v1507
        %v4642 = vunpack.c.l.b16 %v1508
        %v4643 = vunpack.c.h.b16 %v1508
        %v4644 = vunpack.c.l.b16 %v1509
        %v4645 = vunpack.c.h.b16 %v1509
        %v4646 = vunpack.c.l.b16 %v1510
        %v4647 = vunpack.c.h.b16 %v1510
        %v4648 = vunpack.c.l.b16 %v1511
        %v4649 = vunpack.c.h.b16 %v1511
        %v4650 = vunpack.c.l.b16 %v1512
        %v4651 = vunpack.c.h.b16 %v1512
        %v4652 = vunpack.c.l.b16 %v1513
        %v4653 = vunpack.c.h.b16 %v1513
        %v4654 = vunpack.c.l.b16 %v1514
        %v4655 = vunpack.c.h.b16 %v1514
        %v4656 = vunpack.c.l.b16 %v1515
        %v4657 = vunpack.c.h.b16 %v1515
        %v4658 = vunpack.c.l.b16 %v1516
        %v4659 = vunpack.c.h.b16 %v1516
        %v4660 = vunpack.c.l.b16 %v1517
        %v4661 = vunpack.c.h.b16 %v1517
        %v4662 = vunpack.c.l.b16 %v1518
        %v4663 = vunpack.c.h.b16 %v1518
        %v4664 = vunpack.c.l.b16 %v1519
        %v4665 = vunpack.c.h.b16 %v1519
        %v4666 = vunpack.c.l.b16 %v1520
        %v4667 = vunpack.c.h.b16 %v1520
        %v4668 = vunpack.c.l.b16 %v1521
        %v4669 = vunpack.c.h.b16 %v1521
        %v4670 = vunpack.c.l.b16 %v1522
        %v4671 = vunpack.c.h.b16 %v1522
        %v4672 = vunpack.c.l.b16 %v1523
        %v4673 = vunpack.c.h.b16 %v1523
        %v4674 = vunpack.c.l.b16 %v1524
        %v4675 = vunpack.c.h.b16 %v1524
        %v4676 = vunpack.c.l.b16 %v1525
        %v4677 = vunpack.c.h.b16 %v1525
        %v4678 = vunpack.c.l.b16 %v1526
        %v4679 = vunpack.c.h.b16 %v1526
        %v4680 = vunpack.c.l.b16 %v1527
        %v4681 = vunpack.c.h.b16 %v1527
        %v4682 = vunpack.c.l.b16 %v1528
        %v4683 = vunpack.c.h.b16 %v1528
        %v4684 = vunpack.c.l.b16 %v1529
        %v4685 = vunpack.c.h.b16 %v1529
        %v4686 = vunpack.c.l.b16 %v1530
        %v4687 = vunpack.c.h.b16 %v1530
        %v4688 = vunpack.c.l.b16 %v1531
        %v4689 = vunpack.c.h.b16 %v1531
        %v4690 = vunpack.c.l.b16 %v1532
        %v4691 = vunpack.c.h.b16 %v1532
        %v4692 = vunpack.c.l.b16 %v1533
        %v4693 = vunpack.c.h.b16 %v1533
        %v4694 = vunpack.c.l.b16 %v1534
        %v4695 = vunpack.c.h.b16 %v1534
        %v4696 = vunpack.c.l.b16 %v1535
        %v4697 = vunpack.c.h.b16 %v1535
        %v4698 = vunpack.c.l.b16 %v1536
        %v4699 = vunpack.c.h.b16 %v1536
        %v4700 = vunpack.c.l.b16 %v1537
        %v4701 = vunpack.c.h.b16 %v1537
        %v4702 = vunpack.c.l.b16 %v1538
        %v4703 = vunpack.c.h.b16 %v1538
        %v4704 = vunpack.c.l.b16 %v1539
        %v4705 = vunpack.c.h.b16 %v1539
        %v4706 = vunpack.c.l.b16 %v1540
        %v4707 = vunpack.c.h.b16 %v1540
        %v4708 = vunpack.c.l.b16 %v1541
        %v4709 = vunpack.c.h.b16 %v1541
        %v4710 = vunpack.c.l.b16 %v1542
        %v4711 = vunpack.c.h.b16 %v1542
        %v4712 = vunpack.c.l.b16 %v1543
        %v4713 = vunpack.c.h.b16 %v1543
        %v4714 = vunpack.c.l.b16 %v1544
        %v4715 = vunpack.c.h.b16 %v1544
        %v4716 = vunpack.c.l.b16 %v1545
        %v4717 = vunpack.c.h.b16 %v1545
        %v4718 = vunpack.c.l.b16 %v1546
        %v4719 = vunpack.c.h.b16 %v1546
        %v4720 = vunpack.c.l.b16 %v1547
        %v4721 = vunpack.c.h.b16 %v1547
        %v4722 = vunpack.c.l.b16 %v1548
        %v4723 = vunpack.c.h.b16 %v1548
        %v4724 = vunpack.c.l.b16 %v1549
        %v4725 = vunpack.c.h.b16 %v1549
        %v4726 = vunpack.c.l.b16 %v1550
        %v4727 = vunpack.c.h.b16 %v1550
        %v4728 = vunpack.c.l.b16 %v1551
        %v4729 = vunpack.c.h.b16 %v1551
        %v4730 = vunpack.c.l.b16 %v1552
        %v4731 = vunpack.c.h.b16 %v1552
        %v4732 = vunpack.c.l.b16 %v1553
        %v4733 = vunpack.c.h.b16 %v1553
        %v4734 = vunpack.c.l.b16 %v1554
        %v4735 = vunpack.c.h.b16 %v1554
        %v4736 = vunpack.c.l.b16 %v1555
        %v4737 = vunpack.c.h.b16 %v1555
        %v4738 = vunpack.c.l.b16 %v1556
        %v4739 = vunpack.c.h.b16 %v1556
        %v4740 = vunpack.c.l.b16 %v1557
        %v4741 = vunpack.c.h.b16 %v1557
        %v4742 = vunpack.c.l.b16 %v1558
        %v4743 = vunpack.c.h.b16 %v1558
        %v4744 = vunpack.c.l.b16 %v1559
        %v4745 = vunpack.c.h.b16 %v1559
        %v4746 = vunpack.c.l.b16 %v1560
        %v4747 = vunpack.c.h.b16 %v1560
        %v4748 = vunpack.c.l.b16 %v1561
        %v4749 = vunpack.c.h.b16 %v1561
        %v4750 = vunpack.c.l.b16 %v1562
        %v4751 = vunpack.c.h.b16 %v1562
        %v4752 = vunpack.c.l.b16 %v1563
        %v4753 = vunpack.c.h.b16 %v1563
        %v4754 = vunpack.c.l.b16 %v1564
        %v4755 = vunpack.c.h.b16 %v1564
        %v4756 = vunpack.c.l.b16 %v1565
        %v4757 = vunpack.c.h.b16 %v1565
        %v4758 = vunpack.c.l.b16 %v1566
        %v4759 = vunpack.c.h.b16 %v1566
        %v4760 = vunpack.c.l.b16 %v1567
        %v4761 = vunpack.c.h.b16 %v1567
        %v4762 = vunpack.c.l.b16 %v1568
        %v4763 = vunpack.c.h.b16 %v1568
        %v4764 = vunpack.c.l.b16 %v1569
        %v4765 = vunpack.c.h.b16 %v1569
        %v4766 = vunpack.c.l.b16 %v1570
        %v4767 = vunpack.c.h.b16 %v1570
        %v4768 = vunpack.c.l.b16 %v1571
        %v4769 = vunpack.c.h.b16 %v1571
        %v4770 = vunpack.c.l.b16 %v1572
        %v4771 = vunpack.c.h.b16 %v1572
        %v4772 = vunpack.c.l.b16 %v1573
        %v4773 = vunpack.c.h.b16 %v1573
        %v4774 = vunpack.c.l.b16 %v1574
        %v4775 = vunpack.c.h.b16 %v1574
        %v4776 = vunpack.c.l.b16 %v1575
        %v4777 = vunpack.c.h.b16 %v1575
        %v4778 = vunpack.c.l.b16 %v1576
        %v4779 = vunpack.c.h.b16 %v1576
        %v4780 = vunpack.c.l.b16 %v1577
        %v4781 = vunpack.c.h.b16 %v1577
        %v4782 = vunpack.c.l.b16 %v1578
        %v4783 = vunpack.c.h.b16 %v1578
        %v4784 = vunpack.c.l.b16 %v1579
        %v4785 = vunpack.c.h.b16 %v1579
        %v4786 = vunpack.c.l.b16 %v1580
        %v4787 = vunpack.c.h.b16 %v1580
        %v4788 = vunpack.c.l.b16 %v1581
        %v4789 = vunpack.c.h.b16 %v1581
        %v4790 = vunpack.c.l.b16 %v1582
        %v4791 = vunpack.c.h.b16 %v1582
        %v4792 = vunpack.c.l.b16 %v1583
        %v4793 = vunpack.c.h.b16 %v1583
        %v4794 = vunpack.c.l.b16 %v1584
        %v4795 = vunpack.c.h.b16 %v1584
        %v4796 = vunpack.c.l.b16 %v1585
        %v4797 = vunpack.c.h.b16 %v1585
        %v4798 = vunpack.c.l.b16 %v1586
        %v4799 = vunpack.c.h.b16 %v1586
        %v4800 = vunpack.c.l.b16 %v1587
        %v4801 = vunpack.c.h.b16 %v1587
        %v4802 = vunpack.c.l.b16 %v1588
        %v4803 = vunpack.c.h.b16 %v1588
        %v4804 = vunpack.c.l.b16 %v1589
        %v4805 = vunpack.c.h.b16 %v1589
        %v4806 = vunpack.c.l.b16 %v1590
        %v4807 = vunpack.c.h.b16 %v1590
        %v4808 = vunpack.c.l.b16 %v1591
        %v4809 = vunpack.c.h.b16 %v1591
        %v4810 = vunpack.c.l.b16 %v1592
        %v4811 = vunpack.c.h.b16 %v1592
        %v4812 = vunpack.c.l.b16 %v1593
        %v4813 = vunpack.c.h.b16 %v1593
        %v4814 = vunpack.c.l.b16 %v1594
        %v4815 = vunpack.c.h.b16 %v1594
        %v4816 = vunpack.c.l.b16 %v1595
        %v4817 = vunpack.c.h.b16 %v1595
        %v4818 = vunpack.c.l.b16 %v1596
        %v4819 = vunpack.c.h.b16 %v1596
        %v4820 = vunpack.c.l.b16 %v1597
        %v4821 = vunpack.c.h.b16 %v1597
        %v4822 = vunpack.c.l.b16 %v1598
        %v4823 = vunpack.c.h.b16 %v1598
        %v4824 = vunpack.c.l.b16 %v1599
        %v4825 = vunpack.c.h.b16 %v1599
        %v4826 = vunpack.c.l.b16 %v1600
        %v4827 = vunpack.c.h.b16 %v1600
        %v4828 = vunpack.c.l.b16 %v1601
        %v4829 = vunpack.c.h.b16 %v1601
        %v4830 = vunpack.c.l.b16 %v1602
        %v4831 = vunpack.c.h.b16 %v1602
        %v4832 = vunpack.c.l.b16 %v1603
        %v4833 = vunpack.c.h.b16 %v1603
        %v4834 = vunpack.c.l.b16 %v1604
        %v4835 = vunpack.c.h.b16 %v1604
        %v4836 = vunpack.c.l.b16 %v1605
        %v4837 = vunpack.c.h.b16 %v1605
        %v4838 = vunpack.c.l.b16 %v1606
        %v4839 = vunpack.c.h.b16 %v1606
        %v4840 = vunpack.c.l.b16 %v1607
        %v4841 = vunpack.c.h.b16 %v1607
        %v4842 = vunpack.c.l.b16 %v1608
        %v4843 = vunpack.c.h.b16 %v1608
        %v4844 = vunpack.c.l.b16 %v1609
        %v4845 = vunpack.c.h.b16 %v1609
        %v4846 = vunpack.c.l.b16 %v1610
        %v4847 = vunpack.c.h.b16 %v1610
        %v4848 = vunpack.c.l.b16 %v1611
        %v4849 = vunpack.c.h.b16 %v1611
        %v4850 = vunpack.c.l.b16 %v1612
        %v4851 = vunpack.c.h.b16 %v1612
        %v4852 = vunpack.c.l.b16 %v1613
        %v4853 = vunpack.c.h.b16 %v1613
        %v4854 = vunpack.c.l.b16 %v1614
        %v4855 = vunpack.c.h.b16 %v1614
        %v4856 = vunpack.c.l.b16 %v1615
        %v4857 = vunpack.c.h.b16 %v1615
        %v4858 = vunpack.c.l.b16 %v1616
        %v4859 = vunpack.c.h.b16 %v1616
        %v4860 = vunpack.c.l.b16 %v1617
        %v4861 = vunpack.c.h.b16 %v1617
        %v4862 = vunpack.c.l.b16 %v1618
        %v4863 = vunpack.c.h.b16 %v1618
        %v4864 = vunpack.c.l.b16 %v1619
        %v4865 = vunpack.c.h.b16 %v1619
        %v4866 = vunpack.c.l.b16 %v1620
        %v4867 = vunpack.c.h.b16 %v1620
        %v4868 = vunpack.c.l.b16 %v1621
        %v4869 = vunpack.c.h.b16 %v1621
        %v4870 = vunpack.c.l.b16 %v1622
        %v4871 = vunpack.c.h.b16 %v1622
        %v4872 = vunpack.c.l.b16 %v1623
        %v4873 = vunpack.c.h.b16 %v1623
        %v4874 = vunpack.c.l.b16 %v1624
        %v4875 = vunpack.c.h.b16 %v1624
        %v4876 = vunpack.c.l.b16 %v1625
        %v4877 = vunpack.c.h.b16 %v1625
        %v4878 = vunpack.c.l.b16 %v1626
        %v4879 = vunpack.c.h.b16 %v1626
        %v4880 = vunpack.c.l.b16 %v1627
        %v4881 = vunpack.c.h.b16 %v1627
        %v4882 = vunpack.c.l.b16 %v1628
        %v4883 = vunpack.c.h.b16 %v1628
        %v4884 = vunpack.c.l.b16 %v1629
        %v4885 = vunpack.c.h.b16 %v1629
        %v4886 = vunpack.c.l.b16 %v1630
        %v4887 = vunpack.c.h.b16 %v1630
        %v4888 = vunpack.c.l.b16 %v1631
        %v4889 = vunpack.c.h.b16 %v1631
        %v4890 = vunpack.c.l.b16 %v1632
        %v4891 = vunpack.c.h.b16 %v1632
        %v4892 = vunpack.c.l.b16 %v1633
        %v4893 = vunpack.c.h.b16 %v1633
        %v4894 = vunpack.c.l.b16 %v1634
        %v4895 = vunpack.c.h.b16 %v1634
        %v4896 = vunpack.c.l.b16 %v1635
        %v4897 = vunpack.c.h.b16 %v1635
        %v4898 = vunpack.c.l.b16 %v1636
        %v4899 = vunpack.c.h.b16 %v1636
        %v4900 = vunpack.c.l.b16 %v1637
        %v4901 = vunpack.c.h.b16 %v1637
        %v4902 = vunpack.c.l.b16 %v1638
        %v4903 = vunpack.c.h.b16 %v1638
        %v4904 = vunpack.c.l.b16 %v1639
        %v4905 = vunpack.c.h.b16 %v1639
        %v4906 = vunpack.c.l.b16 %v1640
        %v4907 = vunpack.c.h.b16 %v1640
        %v4908 = vunpack.c.l.b16 %v1641
        %v4909 = vunpack.c.h.b16 %v1641
        %v4910 = vunpack.c.l.b16 %v1642
        %v4911 = vunpack.c.h.b16 %v1642
        %v4912 = vunpack.c.l.b16 %v1643
        %v4913 = vunpack.c.h.b16 %v1643
        %v4914 = vunpack.c.l.b16 %v1644
        %v4915 = vunpack.c.h.b16 %v1644
        %v4916 = vunpack.c.l.b16 %v1645
        %v4917 = vunpack.c.h.b16 %v1645
        %v4918 = vunpack.c.l.b16 %v1646
        %v4919 = vunpack.c.h.b16 %v1646
        %v4920 = vunpack.c.l.b16 %v1647
        %v4921 = vunpack.c.h.b16 %v1647
        %v4922 = vunpack.c.l.b16 %v1648
        %v4923 = vunpack.c.h.b16 %v1648
        %v4924 = vunpack.c.l.b16 %v1649
        %v4925 = vunpack.c.h.b16 %v1649
        %v4926 = vunpack.c.l.b16 %v1650
        %v4927 = vunpack.c.h.b16 %v1650
        %v4928 = vunpack.c.l.b16 %v1651
        %v4929 = vunpack.c.h.b16 %v1651
        %v4930 = vunpack.c.l.b16 %v1652
        %v4931 = vunpack.c.h.b16 %v1652
        %v4932 = vunpack.c.l.b16 %v1653
        %v4933 = vunpack.c.h.b16 %v1653
        %v4934 = vunpack.c.l.b16 %v1654
        %v4935 = vunpack.c.h.b16 %v1654
        %v4936 = vunpack.c.l.b16 %v1655
        %v4937 = vunpack.c.h.b16 %v1655
        %v4938 = vunpack.c.l.b16 %v1656
        %v4939 = vunpack.c.h.b16 %v1656
        %v4940 = vunpack.c.l.b16 %v1657
        %v4941 = vunpack.c.h.b16 %v1657
        %v4942 = vunpack.c.l.b16 %v1658
        %v4943 = vunpack.c.h.b16 %v1658
        %v4944 = vunpack.c.l.b16 %v1659
        %v4945 = vunpack.c.h.b16 %v1659
        %v4946 = vunpack.c.l.b16 %v1660
        %v4947 = vunpack.c.h.b16 %v1660
        %v4948 = vunpack.c.l.b16 %v1661
        %v4949 = vunpack.c.h.b16 %v1661
        %v4950 = vunpack.c.l.b16 %v1662
        %v4951 = vunpack.c.h.b16 %v1662
        %v4952 = vunpack.c.l.b16 %v1663
        %v4953 = vunpack.c.h.b16 %v1663
        %v4954 = vunpack.c.l.b16 %v1664
        %v4955 = vunpack.c.h.b16 %v1664
        %v4956 = vunpack.c.l.b16 %v1665
        %v4957 = vunpack.c.h.b16 %v1665
        %v4958 = vunpack.c.l.b16 %v1666
        %v4959 = vunpack.c.h.b16 %v1666
        %v4960 = vunpack.c.l.b16 %v1667
        %v4961 = vunpack.c.h.b16 %v1667
        %v4962 = vunpack.c.l.b16 %v1668
        %v4963 = vunpack.c.h.b16 %v1668
        %v4964 = vunpack.c.l.b16 %v1669
        %v4965 = vunpack.c.h.b16 %v1669
        %v4966 = vunpack.c.l.b16 %v1670
        %v4967 = vunpack.c.h.b16 %v1670
        %v4968 = vunpack.c.l.b16 %v1671
        %v4969 = vunpack.c.h.b16 %v1671
        %v4970 = vunpack.c.l.b16 %v1672
        %v4971 = vunpack.c.h.b16 %v1672
        %v4972 = vunpack.c.l.b16 %v1673
        %v4973 = vunpack.c.h.b16 %v1673
        %v4974 = vunpack.c.l.b16 %v1674
        %v4975 = vunpack.c.h.b16 %v1674
        %v4976 = vunpack.c.l.b16 %v1675
        %v4977 = vunpack.c.h.b16 %v1675
        %v4978 = vunpack.c.l.b16 %v1676
        %v4979 = vunpack.c.h.b16 %v1676
        %v4980 = vunpack.c.l.b16 %v1677
        %v4981 = vunpack.c.h.b16 %v1677
        %v4982 = vunpack.c.l.b16 %v1678
        %v4983 = vunpack.c.h.b16 %v1678
        %v4984 = vunpack.c.l.b16 %v1679
        %v4985 = vunpack.c.h.b16 %v1679
        %v4986 = vunpack.c.l.b16 %v1680
        %v4987 = vunpack.c.h.b16 %v1680
        %v4988 = vunpack.c.l.b16 %v1681
        %v4989 = vunpack.c.h.b16 %v1681
        %v4990 = vunpack.c.l.b16 %v1682
        %v4991 = vunpack.c.h.b16 %v1682
        %v4992 = vunpack.c.l.b16 %v1683
        %v4993 = vunpack.c.h.b16 %v1683
        %v4994 = vunpack.c.l.b16 %v1684
        %v4995 = vunpack.c.h.b16 %v1684
        %v4996 = vunpack.c.l.b16 %v1685
        %v4997 = vunpack.c.h.b16 %v1685
        %v4998 = vunpack.c.l.b16 %v1686
        %v4999 = vunpack.c.h.b16 %v1686
        %v5000 = vunpack.c.l.b16 %v1687
        %v5001 = vunpack.c.h.b16 %v1687
        %v5002 = vunpack.c.l.b16 %v1688
        %v5003 = vunpack.c.h.b16 %v1688
        %v5004 = vunpack.c.l.b16 %v1689
        %v5005 = vunpack.c.h.b16 %v1689
        %v5006 = vunpack.c.l.b16 %v1690
        %v5007 = vunpack.c.h.b16 %v1690
        %v5008 = vunpack.c.l.b16 %v1691
        %v5009 = vunpack.c.h.b16 %v1691
        %v5010 = vunpack.c.l.b16 %v1692
        %v5011 = vunpack.c.h.b16 %v1692
        %v5012 = vunpack.c.l.b16 %v1693
        %v5013 = vunpack.c.h.b16 %v1693
        %v5014 = vunpack.c.l.b16 %v1694
        %v5015 = vunpack.c.h.b16 %v1694
        %v5016 = vunpack.c.l.b16 %v1695
        %v5017 = vunpack.c.h.b16 %v1695
        %v5018 = vunpack.c.l.b16 %v1696
        %v5019 = vunpack.c.h.b16 %v1696
        %v5020 = vunpack.c.l.b16 %v1697
        %v5021 = vunpack.c.h.b16 %v1697
        %v5022 = vunpack.c.l.b16 %v1698
        %v5023 = vunpack.c.h.b16 %v1698
        %v5024 = vunpack.c.l.b16 %v1699
        %v5025 = vunpack.c.h.b16 %v1699
        %v5026 = vunpack.c.l.b16 %v1700
        %v5027 = vunpack.c.h.b16 %v1700
        %v5028 = vunpack.c.l.b16 %v1701
        %v5029 = vunpack.c.h.b16 %v1701
        %v5030 = vunpack.c.l.b16 %v1702
        %v5031 = vunpack.c.h.b16 %v1702
        %v5032 = vunpack.c.l.b16 %v1703
        %v5033 = vunpack.c.h.b16 %v1703
        %v5034 = vunpack.c.l.b16 %v1704
        %v5035 = vunpack.c.h.b16 %v1704
        %v5036 = vunpack.c.l.b16 %v1705
        %v5037 = vunpack.c.h.b16 %v1705
        %v5038 = vunpack.c.l.b16 %v1706
        %v5039 = vunpack.c.h.b16 %v1706
        %v5040 = vunpack.c.l.b16 %v1707
        %v5041 = vunpack.c.h.b16 %v1707
        %v5042 = vunpack.c.l.b16 %v1708
        %v5043 = vunpack.c.h.b16 %v1708
        %v5044 = vunpack.c.l.b16 %v1709
        %v5045 = vunpack.c.h.b16 %v1709
        %v5046 = vunpack.c.l.b16 %v1710
        %v5047 = vunpack.c.h.b16 %v1710
        %v5048 = vunpack.c.l.b16 %v1711
        %v5049 = vunpack.c.h.b16 %v1711
        %v5050 = vunpack.c.l.b16 %v1712
        %v5051 = vunpack.c.h.b16 %v1712
        %v5052 = vunpack.c.l.b16 %v1713
        %v5053 = vunpack.c.h.b16 %v1713
        %v5054 = vunpack.c.l.b16 %v1714
        %v5055 = vunpack.c.h.b16 %v1714
        %v5056 = vunpack.c.l.b16 %v1715
        %v5057 = vunpack.c.h.b16 %v1715
        %v5058 = vunpack.c.l.b16 %v1716
        %v5059 = vunpack.c.h.b16 %v1716
        %v5060 = vunpack.c.l.b16 %v1717
        %v5061 = vunpack.c.h.b16 %v1717
        %v5062 = vunpack.c.l.b16 %v1718
        %v5063 = vunpack.c.h.b16 %v1718
        %v5064 = vunpack.c.l.b16 %v1719
        %v5065 = vunpack.c.h.b16 %v1719
        %v5066 = vunpack.c.l.b16 %v1720
        %v5067 = vunpack.c.h.b16 %v1720
        %v5068 = vunpack.c.l.b16 %v1721
        %v5069 = vunpack.c.h.b16 %v1721
        %v5070 = vunpack.c.l.b16 %v1722
        %v5071 = vunpack.c.h.b16 %v1722
        %v5072 = vunpack.c.l.b16 %v1723
        %v5073 = vunpack.c.h.b16 %v1723
        %v5074 = vunpack.c.l.b16 %v1724
        %v5075 = vunpack.c.h.b16 %v1724
        %v5076 = vunpack.c.l.b16 %v1725
        %v5077 = vunpack.c.h.b16 %v1725
        %v5078 = vunpack.c.l.b16 %v1726
        %v5079 = vunpack.c.h.b16 %v1726
        %v5080 = vunpack.c.l.b16 %v1727
        %v5081 = vunpack.c.h.b16 %v1727
        %v5082 = vunpack.c.l.b16 %v1728
        %v5083 = vunpack.c.h.b16 %v1728
        %v5084 = vunpack.c.l.b16 %v1729
        %v5085 = vunpack.c.h.b16 %v1729
        %v5086 = vunpack.c.l.b16 %v1730
        %v5087 = vunpack.c.h.b16 %v1730
        %v5088 = vunpack.c.l.b16 %v1731
        %v5089 = vunpack.c.h.b16 %v1731
        %v5090 = vunpack.c.l.b16 %v1732
        %v5091 = vunpack.c.h.b16 %v1732
        %v5092 = vunpack.c.l.b16 %v1733
        %v5093 = vunpack.c.h.b16 %v1733
        %v5094 = vunpack.c.l.b16 %v1734
        %v5095 = vunpack.c.h.b16 %v1734
        %v5096 = vunpack.c.l.b16 %v1735
        %v5097 = vunpack.c.h.b16 %v1735
        %v5098 = vunpack.c.l.b16 %v1736
        %v5099 = vunpack.c.h.b16 %v1736
        %v5100 = vunpack.c.l.b16 %v1737
        %v5101 = vunpack.c.h.b16 %v1737
        %v5102 = vunpack.c.l.b16 %v1738
        %v5103 = vunpack.c.h.b16 %v1738
        %v5104 = vunpack.c.l.b16 %v1739
        %v5105 = vunpack.c.h.b16 %v1739
        %v5106 = vunpack.c.l.b16 %v1740
        %v5107 = vunpack.c.h.b16 %v1740
        %v5108 = vunpack.c.l.b16 %v1741
        %v5109 = vunpack.c.h.b16 %v1741
        %v5110 = vunpack.c.l.b16 %v1742
        %v5111 = vunpack.c.h.b16 %v1742
        %v5112 = vunpack.c.l.b16 %v1743
        %v5113 = vunpack.c.h.b16 %v1743
        %v5114 = vunpack.c.l.b16 %v1744
        %v5115 = vunpack.c.h.b16 %v1744
        %v5116 = vunpack.c.l.b16 %v1745
        %v5117 = vunpack.c.h.b16 %v1745
        %v5118 = vunpack.c.l.b16 %v1746
        %v5119 = vunpack.c.h.b16 %v1746
        %v5120 = vunpack.c.l.b16 %v1747
        %v5121 = vunpack.c.h.b16 %v1747
        %v5122 = vunpack.c.l.b16 %v1748
        %v5123 = vunpack.c.h.b16 %v1748
        %v5124 = vunpack.c.l.b16 %v1749
        %v5125 = vunpack.c.h.b16 %v1749
        %v5126 = vunpack.c.l.b16 %v1750
        %v5127 = vunpack.c.h.b16 %v1750
        %v5128 = vunpack.c.l.b16 %v1751
        %v5129 = vunpack.c.h.b16 %v1751
        %v5130 = vunpack.c.l.b16 %v1752
        %v5131 = vunpack.c.h.b16 %v1752
        %v5132 = vunpack.c.l.b16 %v1753
        %v5133 = vunpack.c.h.b16 %v1753
        %v5134 = vunpack.c.l.b16 %v1754
        %v5135 = vunpack.c.h.b16 %v1754
        %v5136 = vunpack.c.l.b16 %v1755
        %v5137 = vunpack.c.h.b16 %v1755
        %v5138 = vunpack.c.l.b16 %v1756
        %v5139 = vunpack.c.h.b16 %v1756
        %v5140 = vunpack.c.l.b16 %v1757
        %v5141 = vunpack.c.h.b16 %v1757
        %v5142 = vunpack.c.l.b16 %v1758
        %v5143 = vunpack.c.h.b16 %v1758
        %v5144 = vunpack.c.l.b16 %v1759
        %v5145 = vunpack.c.h.b16 %v1759
        %v5146 = vunpack.c.l.b16 %v1760
        %v5147 = vunpack.c.h.b16 %v1760
        %v5148 = vunpack.c.l.b16 %v1761
        %v5149 = vunpack.c.h.b16 %v1761
        %v5150 = vunpack.c.l.b16 %v1762
        %v5151 = vunpack.c.h.b16 %v1762
        %v5152 = vunpack.c.l.b16 %v1763
        %v5153 = vunpack.c.h.b16 %v1763
        %v5154 = vunpack.c.l.b16 %v1764
        %v5155 = vunpack.c.h.b16 %v1764
        %v5156 = vunpack.c.l.b16 %v1765
        %v5157 = vunpack.c.h.b16 %v1765
        %v5158 = vunpack.c.l.b16 %v1766
        %v5159 = vunpack.c.h.b16 %v1766
        %v5160 = vunpack.c.l.b16 %v1767
        %v5161 = vunpack.c.h.b16 %v1767
        %v5162 = vunpack.c.l.b16 %v1768
        %v5163 = vunpack.c.h.b16 %v1768
        %v5164 = vunpack.c.l.b16 %v1769
        %v5165 = vunpack.c.h.b16 %v1769
        %v5166 = vunpack.c.l.b16 %v1770
        %v5167 = vunpack.c.h.b16 %v1770
        %v5168 = vunpack.c.l.b16 %v1771
        %v5169 = vunpack.c.h.b16 %v1771
        %v5170 = vunpack.c.l.b16 %v1772
        %v5171 = vunpack.c.h.b16 %v1772
        %v5172 = vunpack.c.l.b16 %v1773
        %v5173 = vunpack.c.h.b16 %v1773
        %v5174 = vunpack.c.l.b16 %v1774
        %v5175 = vunpack.c.h.b16 %v1774
        %v5176 = vunpack.c.l.b16 %v1775
        %v5177 = vunpack.c.h.b16 %v1775
        %v5178 = vunpack.c.l.b16 %v1776
        %v5179 = vunpack.c.h.b16 %v1776
        %v5180 = vunpack.c.l.b16 %v1777
        %v5181 = vunpack.c.h.b16 %v1777
        %v5182 = vunpack.c.l.b16 %v1778
        %v5183 = vunpack.c.h.b16 %v1778
        %v5184 = vunpack.c.l.b16 %v1779
        %v5185 = vunpack.c.h.b16 %v1779
        %v5186 = vunpack.c.l.b16 %v1780
        %v5187 = vunpack.c.h.b16 %v1780
        %v5188 = vunpack.c.l.b16 %v1781
        %v5189 = vunpack.c.h.b16 %v1781
        %v5190 = vunpack.c.l.b16 %v1782
        %v5191 = vunpack.c.h.b16 %v1782
        %v5192 = vunpack.c.l.b16 %v1783
        %v5193 = vunpack.c.h.b16 %v1783
        %v5194 = vunpack.c.l.b16 %v1784
        %v5195 = vunpack.c.h.b16 %v1784
        %v5196 = vunpack.c.l.b16 %v1785
        %v5197 = vunpack.c.h.b16 %v1785
        %v5198 = vunpack.c.l.b16 %v1786
        %v5199 = vunpack.c.h.b16 %v1786
        %v5200 = vunpack.c.l.b16 %v1787
        %v5201 = vunpack.c.h.b16 %v1787
        %v5202 = vunpack.c.l.b16 %v1788
        %v5203 = vunpack.c.h.b16 %v1788
        %v5204 = vunpack.c.l.b16 %v1789
        %v5205 = vunpack.c.h.b16 %v1789
        %v5206 = vunpack.c.l.b16 %v1790
        %v5207 = vunpack.c.h.b16 %v1790
        %v5208 = vunpack.c.l.b16 %v1791
        %v5209 = vunpack.c.h.b16 %v1791
        %v5210 = vunpack.c.l.b16 %v1792
        %v5211 = vunpack.c.h.b16 %v1792
        %v5212 = vunpack.c.l.b16 %v1793
        %v5213 = vunpack.c.h.b16 %v1793
        %v5214 = vunpack.c.l.b16 %v1794
        %v5215 = vunpack.c.h.b16 %v1794
        %v5216 = vunpack.c.l.b16 %v1795
        %v5217 = vunpack.c.h.b16 %v1795
        %v5218 = vunpack.c.l.b16 %v1796
        %v5219 = vunpack.c.h.b16 %v1796
        %v5220 = vunpack.c.l.b16 %v1797
        %v5221 = vunpack.c.h.b16 %v1797
        %v5222 = vunpack.c.l.b16 %v1798
        %v5223 = vunpack.c.h.b16 %v1798
        %v5224 = vunpack.c.l.b16 %v1799
        %v5225 = vunpack.c.h.b16 %v1799
        %v5226 = vunpack.c.l.b16 %v1800
        %v5227 = vunpack.c.h.b16 %v1800
        %v5228 = vunpack.c.l.b16 %v1801
        %v5229 = vunpack.c.h.b16 %v1801
        %v5230 = vunpack.c.l.b16 %v1802
        %v5231 = vunpack.c.h.b16 %v1802
        %v5232 = vunpack.c.l.b16 %v1803
        %v5233 = vunpack.c.h.b16 %v1803
        %v5234 = vunpack.c.l.b16 %v1804
        %v5235 = vunpack.c.h.b16 %v1804
        %v5236 = vunpack.c.l.b16 %v1805
        %v5237 = vunpack.c.h.b16 %v1805
        %v5238 = vunpack.c.l.b16 %v1806
        %v5239 = vunpack.c.h.b16 %v1806
        %v5240 = vunpack.c.l.b16 %v1807
        %v5241 = vunpack.c.h.b16 %v1807
        %v5242 = vunpack.c.l.b16 %v1808
        %v5243 = vunpack.c.h.b16 %v1808
        %v5244 = vunpack.c.l.b16 %v1809
        %v5245 = vunpack.c.h.b16 %v1809
        %v5246 = vunpack.c.l.b16 %v1810
        %v5247 = vunpack.c.h.b16 %v1810
        %v5248 = vunpack.c.l.b16 %v1811
        %v5249 = vunpack.c.h.b16 %v1811
        %v5250 = vunpack.c.l.b16 %v1812
        %v5251 = vunpack.c.h.b16 %v1812
        %v5252 = vunpack.c.l.b16 %v1813
        %v5253 = vunpack.c.h.b16 %v1813
        %v5254 = vunpack.c.l.b16 %v1814
        %v5255 = vunpack.c.h.b16 %v1814
        %v5256 = vunpack.c.l.b16 %v1815
        %v5257 = vunpack.c.h.b16 %v1815
        %v5258 = vunpack.c.l.b16 %v1816
        %v5259 = vunpack.c.h.b16 %v1816
        %v5260 = vunpack.c.l.b16 %v1817
        %v5261 = vunpack.c.h.b16 %v1817
        %v5262 = vunpack.c.l.b16 %v1818
        %v5263 = vunpack.c.h.b16 %v1818
        %v5264 = vunpack.c.l.b16 %v1819
        %v5265 = vunpack.c.h.b16 %v1819
        %v5266 = vunpack.c.l.b16 %v1820
        %v5267 = vunpack.c.h.b16 %v1820
        %v5268 = vunpack.c.l.b16 %v1821
        %v5269 = vunpack.c.h.b16 %v1821
        %v5270 = vunpack.c.l.b16 %v1822
        %v5271 = vunpack.c.h.b16 %v1822
        %v5272 = vunpack.c.l.b16 %v1823
        %v5273 = vunpack.c.h.b16 %v1823
        %v5274 = vunpack.c.l.b16 %v1824
        %v5275 = vunpack.c.h.b16 %v1824
        %v5276 = vunpack.c.l.b16 %v1825
        %v5277 = vunpack.c.h.b16 %v1825
        %v5278 = vunpack.c.l.b16 %v1826
        %v5279 = vunpack.c.h.b16 %v1826
        %v5280 = vunpack.c.l.b16 %v1827
        %v5281 = vunpack.c.h.b16 %v1827
        %v5282 = vunpack.c.l.b16 %v1828
        %v5283 = vunpack.c.h.b16 %v1828
        %v5284 = vunpack.c.l.b16 %v1829
        %v5285 = vunpack.c.h.b16 %v1829
        %v5286 = vunpack.c.l.b16 %v1830
        %v5287 = vunpack.c.h.b16 %v1830
        %v5288 = vunpack.c.l.b16 %v1831
        %v5289 = vunpack.c.h.b16 %v1831
        %v5290 = vunpack.c.l.b16 %v1832
        %v5291 = vunpack.c.h.b16 %v1832
        %v5292 = vunpack.c.l.b16 %v1833
        %v5293 = vunpack.c.h.b16 %v1833
        %v5294 = vunpack.c.l.b16 %v1834
        %v5295 = vunpack.c.h.b16 %v1834
        %v5296 = vunpack.c.l.b16 %v1835
        %v5297 = vunpack.c.h.b16 %v1835
        %v5298 = vunpack.c.l.b16 %v1836
        %v5299 = vunpack.c.h.b16 %v1836
        %v5300 = vunpack.c.l.b16 %v1837
        %v5301 = vunpack.c.h.b16 %v1837
        %v5302 = vunpack.c.l.b16 %v1838
        %v5303 = vunpack.c.h.b16 %v1838
        %v5304 = vunpack.c.l.b16 %v1839
        %v5305 = vunpack.c.h.b16 %v1839
        %v5306 = vunpack.c.l.b16 %v1840
        %v5307 = vunpack.c.h.b16 %v1840
        %v5308 = vunpack.c.l.b16 %v1841
        %v5309 = vunpack.c.h.b16 %v1841
        %v5310 = vunpack.c.l.b16 %v1842
        %v5311 = vunpack.c.h.b16 %v1842
        %v5312 = vunpack.c.l.b16 %v1843
        %v5313 = vunpack.c.h.b16 %v1843
        %v5314 = vunpack.c.l.b16 %v1844
        %v5315 = vunpack.c.h.b16 %v1844
        %v5316 = vunpack.c.l.b16 %v1845
        %v5317 = vunpack.c.h.b16 %v1845
        %v5318 = vunpack.c.l.b16 %v1846
        %v5319 = vunpack.c.h.b16 %v1846
        %v5320 = vunpack.c.l.b16 %v1847
        %v5321 = vunpack.c.h.b16 %v1847
        %v5322 = vunpack.c.l.b16 %v1848
        %v5323 = vunpack.c.h.b16 %v1848
        %v5324 = vunpack.c.l.b16 %v1849
        %v5325 = vunpack.c.h.b16 %v1849
        %v5326 = vunpack.c.l.b16 %v1850
        %v5327 = vunpack.c.h.b16 %v1850
        %v5328 = vunpack.c.l.b16 %v1851
        %v5329 = vunpack.c.h.b16 %v1851
        %v5330 = vunpack.c.l.b16 %v1852
        %v5331 = vunpack.c.h.b16 %v1852
        %v5332 = vunpack.c.l.b16 %v1853
        %v5333 = vunpack.c.h.b16 %v1853
        %v5334 = vunpack.c.l.b16 %v1854
        %v5335 = vunpack.c.h.b16 %v1854
        %v5336 = vunpack.c.l.b16 %v1855
        %v5337 = vunpack.c.h.b16 %v1855
        %v5338 = vunpack.c.l.b16 %v1856
        %v5339 = vunpack.c.h.b16 %v1856
        %v5340 = vunpack.c.l.b16 %v1857
        %v5341 = vunpack.c.h.b16 %v1857
        %v5342 = vunpack.c.l.b16 %v1858
        %v5343 = vunpack.c.h.b16 %v1858
        %v5344 = vunpack.c.l.b16 %v1859
        %v5345 = vunpack.c.h.b16 %v1859
        %v5346 = vunpack.c.l.b16 %v1860
        %v5347 = vunpack.c.h.b16 %v1860
        %v5348 = vunpack.c.l.b16 %v1861
        %v5349 = vunpack.c.h.b16 %v1861
        %v5350 = vunpack.c.l.b16 %v1862
        %v5351 = vunpack.c.h.b16 %v1862
        %v5352 = vunpack.c.l.b16 %v1863
        %v5353 = vunpack.c.h.b16 %v1863
        %v5354 = vunpack.c.l.b16 %v1864
        %v5355 = vunpack.c.h.b16 %v1864
        %v5356 = vunpack.c.l.b16 %v1865
        %v5357 = vunpack.c.h.b16 %v1865
        %v5358 = vunpack.c.l.b16 %v1866
        %v5359 = vunpack.c.h.b16 %v1866
        %v5360 = vunpack.c.l.b16 %v1867
        %v5361 = vunpack.c.h.b16 %v1867
        %v5362 = vunpack.c.l.b16 %v1868
        %v5363 = vunpack.c.h.b16 %v1868
        %v5364 = vunpack.c.l.b16 %v1869
        %v5365 = vunpack.c.h.b16 %v1869
        %v5366 = vunpack.c.l.b16 %v1870
        %v5367 = vunpack.c.h.b16 %v1870
        %v5368 = vunpack.c.l.b16 %v1871
        %v5369 = vunpack.c.h.b16 %v1871
        %v5370 = vunpack.c.l.b16 %v1872
        %v5371 = vunpack.c.h.b16 %v1872
        %v5372 = vunpack.c.l.b16 %v1873
        %v5373 = vunpack.c.h.b16 %v1873
        %v5374 = vunpack.c.l.b16 %v1874
        %v5375 = vunpack.c.h.b16 %v1874
        %v5376 = vunpack.c.l.b16 %v1875
        %v5377 = vunpack.c.h.b16 %v1875
        %v5378 = vunpack.c.l.b16 %v1876
        %v5379 = vunpack.c.h.b16 %v1876
        %v5380 = vunpack.c.l.b16 %v1877
        %v5381 = vunpack.c.h.b16 %v1877
        %v5382 = vunpack.c.l.b16 %v1878
        %v5383 = vunpack.c.h.b16 %v1878
        %v5384 = vunpack.c.l.b16 %v1879
        %v5385 = vunpack.c.h.b16 %v1879
        %v5386 = vunpack.c.l.b16 %v1880
        %v5387 = vunpack.c.h.b16 %v1880
        %v5388 = vunpack.c.l.b16 %v1881
        %v5389 = vunpack.c.h.b16 %v1881
        %v5390 = vunpack.c.l.b16 %v1882
        %v5391 = vunpack.c.h.b16 %v1882
        %v5392 = vunpack.c.l.b16 %v1883
        %v5393 = vunpack.c.h.b16 %v1883
        %v5394 = vunpack.c.l.b16 %v1884
        %v5395 = vunpack.c.h.b16 %v1884
        %v5396 = vunpack.c.l.b16 %v1885
        %v5397 = vunpack.c.h.b16 %v1885
        %v5398 = vunpack.c.l.b16 %v1886
        %v5399 = vunpack.c.h.b16 %v1886
        %v5400 = vunpack.c.l.b16 %v1887
        %v5401 = vunpack.c.h.b16 %v1887
        %v5402 = vunpack.c.l.b16 %v1888
        %v5403 = vunpack.c.h.b16 %v1888
        %v5404 = vunpack.c.l.b16 %v1889
        %v5405 = vunpack.c.h.b16 %v1889
        %v5406 = vunpack.c.l.b16 %v1890
        %v5407 = vunpack.c.h.b16 %v1890
        %v5408 = vunpack.c.l.b16 %v1891
        %v5409 = vunpack.c.h.b16 %v1891
        %v5410 = vunpack.c.l.b16 %v1892
        %v5411 = vunpack.c.h.b16 %v1892
        %v5412 = vunpack.c.l.b16 %v1893
        %v5413 = vunpack.c.h.b16 %v1893
        %v5414 = vunpack.c.l.b16 %v1894
        %v5415 = vunpack.c.h.b16 %v1894
        %v5416 = vunpack.c.l.b16 %v1895
        %v5417 = vunpack.c.h.b16 %v1895
        %v5418 = vunpack.c.l.b16 %v1896
        %v5419 = vunpack.c.h.b16 %v1896
        %v5420 = vunpack.c.l.b16 %v1897
        %v5421 = vunpack.c.h.b16 %v1897
        %v5422 = vunpack.c.l.b16 %v1898
        %v5423 = vunpack.c.h.b16 %v1898
        %v5424 = vunpack.c.l.b16 %v1899
        %v5425 = vunpack.c.h.b16 %v1899
        %v5426 = vunpack.c.l.b16 %v1900
        %v5427 = vunpack.c.h.b16 %v1900
        %v5428 = vunpack.c.l.b16 %v1901
        %v5429 = vunpack.c.h.b16 %v1901
        %v5430 = vunpack.c.l.b16 %v1902
        %v5431 = vunpack.c.h.b16 %v1902
        %v5432 = vunpack.c.l.b16 %v1903
        %v5433 = vunpack.c.h.b16 %v1903
        %v5434 = vunpack.c.l.b16 %v1904
        %v5435 = vunpack.c.h.b16 %v1904
        %v5436 = vunpack.c.l.b16 %v1905
        %v5437 = vunpack.c.h.b16 %v1905
        %v5438 = vunpack.c.l.b16 %v1906
        %v5439 = vunpack.c.h.b16 %v1906
        %v5440 = vunpack.c.l.b16 %v1907
        %v5441 = vunpack.c.h.b16 %v1907
        %v5442 = vunpack.c.l.b16 %v1908
        %v5443 = vunpack.c.h.b16 %v1908
        %v5444 = vunpack.c.l.b16 %v1909
        %v5445 = vunpack.c.h.b16 %v1909
        %v5446 = vunpack.c.l.b16 %v1910
        %v5447 = vunpack.c.h.b16 %v1910
        %v5448 = vunpack.c.l.b16 %v1911
        %v5449 = vunpack.c.h.b16 %v1911
        %v5450 = vunpack.c.l.b16 %v1912
        %v5451 = vunpack.c.h.b16 %v1912
        %v5452 = vunpack.c.l.b16 %v1913
        %v5453 = vunpack.c.h.b16 %v1913
        %v5454 = vunpack.c.l.b16 %v1914
        %v5455 = vunpack.c.h.b16 %v1914
        %v5456 = vunpack.c.l.b16 %v1915
        %v5457 = vunpack.c.h.b16 %v1915
        %v5458 = vunpack.c.l.b16 %v1916
        %v5459 = vunpack.c.h.b16 %v1916
        %v5460 = vunpack.c.l.b16 %v1917
        %v5461 = vunpack.c.h.b16 %v1917
        %v5462 = vunpack.c.l.b16 %v1918
        %v5463 = vunpack.c.h.b16 %v1918
        %v5464 = vunpack.c.l.b16 %v1919
        %v5465 = vunpack.c.h.b16 %v1919
        %v5466 = vunpack.c.l.b16 %v1920
        %v5467 = vunpack.c.h.b16 %v1920
        %v5468 = vunpack.c.l.b16 %v1921
        %v5469 = vunpack.c.h.b16 %v1921
        %v5470 = vunpack.c.l.b16 %v1922
        %v5471 = vunpack.c.h.b16 %v1922
        %v5472 = vunpack.c.l.b16 %v1923
        %v5473 = vunpack.c.h.b16 %v1923
        %v5474 = vunpack.c.l.b16 %v1924
        %v5475 = vunpack.c.h.b16 %v1924
        %v5476 = vunpack.c.l.b16 %v1925
        %v5477 = vunpack.c.h.b16 %v1925
        %v5478 = vunpack.c.l.b16 %v1926
        %v5479 = vunpack.c.h.b16 %v1926
        %v5480 = vunpack.c.l.b16 %v1927
        %v5481 = vunpack.c.h.b16 %v1927
        %v5482 = vunpack.c.l.b16 %v1928
        %v5483 = vunpack.c.h.b16 %v1928
        %v5484 = vunpack.c.l.b16 %v1929
        %v5485 = vunpack.c.h.b16 %v1929
        %v5486 = vunpack.c.l.b16 %v1930
        %v5487 = vunpack.c.h.b16 %v1930
        %v5488 = vunpack.c.l.b16 %v1931
        %v5489 = vunpack.c.h.b16 %v1931
        %v5490 = vunpack.c.l.b16 %v1932
        %v5491 = vunpack.c.h.b16 %v1932
        %v5492 = vunpack.c.l.b16 %v1933
        %v5493 = vunpack.c.h.b16 %v1933
        %v5494 = vunpack.c.l.b16 %v1934
        %v5495 = vunpack.c.h.b16 %v1934
        %v5496 = vunpack.c.l.b16 %v1935
        %v5497 = vunpack.c.h.b16 %v1935
        %v5498 = vunpack.c.l.b16 %v1936
        %v5499 = vunpack.c.h.b16 %v1936
        %v5500 = vunpack.c.l.b16 %v1937
        %v5501 = vunpack.c.h.b16 %v1937
        %v5502 = vunpack.c.l.b16 %v1938
        %v5503 = vunpack.c.h.b16 %v1938
        %v5504 = vunpack.c.l.b16 %v1939
        %v5505 = vunpack.c.h.b16 %v1939
        %v5506 = vunpack.c.l.b16 %v1940
        %v5507 = vunpack.c.h.b16 %v1940
        %v5508 = vunpack.c.l.b16 %v1941
        %v5509 = vunpack.c.h.b16 %v1941
        %v5510 = vunpack.c.l.b16 %v1942
        %v5511 = vunpack.c.h.b16 %v1942
        %v5512 = vunpack.c.l.b16 %v1943
        %v5513 = vunpack.c.h.b16 %v1943
        %v5514 = vunpack.c.l.b16 %v1944
        %v5515 = vunpack.c.h.b16 %v1944
        %v5516 = vunpack.c.l.b16 %v1945
        %v5517 = vunpack.c.h.b16 %v1945
        %v5518 = vunpack.c.l.b16 %v1946
        %v5519 = vunpack.c.h.b16 %v1946
        %v5520 = vunpack.c.l.b16 %v1947
        %v5521 = vunpack.c.h.b16 %v1947
        %v5522 = vunpack.c.l.b16 %v1948
        %v5523 = vunpack.c.h.b16 %v1948
        %v5524 = vunpack.c.l.b16 %v1949
        %v5525 = vunpack.c.h.b16 %v1949
        %v5526 = vunpack.c.l.b16 %v1950
        %v5527 = vunpack.c.h.b16 %v1950
        %v5528 = vunpack.c.l.b16 %v1951
        %v5529 = vunpack.c.h.b16 %v1951
        %v5530 = vunpack.c.l.b16 %v1952
        %v5531 = vunpack.c.h.b16 %v1952
        %v5532 = vunpack.c.l.b16 %v1953
        %v5533 = vunpack.c.h.b16 %v1953
        %v5534 = vunpack.c.l.b16 %v1954
        %v5535 = vunpack.c.h.b16 %v1954
        %v5536 = vunpack.c.l.b16 %v1955
        %v5537 = vunpack.c.h.b16 %v1955
        %v5538 = vunpack.c.l.b16 %v1956
        %v5539 = vunpack.c.h.b16 %v1956
        %v5540 = vunpack.c.l.b16 %v1957
        %v5541 = vunpack.c.h.b16 %v1957
        %v5542 = vunpack.c.l.b16 %v1958
        %v5543 = vunpack.c.h.b16 %v1958
        %v5544 = vunpack.c.l.b16 %v1959
        %v5545 = vunpack.c.h.b16 %v1959
        %v5546 = vunpack.c.l.b16 %v1960
        %v5547 = vunpack.c.h.b16 %v1960
        %v5548 = vunpack.c.l.b16 %v1961
        %v5549 = vunpack.c.h.b16 %v1961
        %v5550 = vunpack.c.l.b16 %v1962
        %v5551 = vunpack.c.h.b16 %v1962
        %v5552 = vunpack.c.l.b16 %v1963
        %v5553 = vunpack.c.h.b16 %v1963
        %v5554 = vunpack.c.l.b16 %v1964
        %v5555 = vunpack.c.h.b16 %v1964
        %v5556 = vunpack.c.l.b16 %v1965
        %v5557 = vunpack.c.h.b16 %v1965
        %v5558 = vunpack.c.l.b16 %v1966
        %v5559 = vunpack.c.h.b16 %v1966
        %v5560 = vunpack.c.l.b16 %v1967
        %v5561 = vunpack.c.h.b16 %v1967
        %v5562 = vunpack.c.l.b16 %v1968
        %v5563 = vunpack.c.h.b16 %v1968
        %v5564 = vunpack.c.l.b16 %v1969
        %v5565 = vunpack.c.h.b16 %v1969
        %v5566 = vunpack.c.l.b16 %v1970
        %v5567 = vunpack.c.h.b16 %v1970
        %v5568 = vunpack.c.l.b16 %v1971
        %v5569 = vunpack.c.h.b16 %v1971
        %v5570 = vunpack.c.l.b16 %v1972
        %v5571 = vunpack.c.h.b16 %v1972
        %v5572 = vunpack.c.l.b16 %v1973
        %v5573 = vunpack.c.h.b16 %v1973
        %v5574 = vunpack.c.l.b16 %v1974
        %v5575 = vunpack.c.h.b16 %v1974
        %v5576 = vunpack.c.l.b16 %v1975
        %v5577 = vunpack.c.h.b16 %v1975
        %v5578 = vunpack.c.l.b16 %v1976
        %v5579 = vunpack.c.h.b16 %v1976
        %v5580 = vunpack.c.l.b16 %v1977
        %v5581 = vunpack.c.h.b16 %v1977
        %v5582 = vunpack.c.l.b16 %v1978
        %v5583 = vunpack.c.h.b16 %v1978
        %v5584 = vunpack.c.l.b16 %v1979
        %v5585 = vunpack.c.h.b16 %v1979
        %v5586 = vunpack.c.l.b16 %v1980
        %v5587 = vunpack.c.h.b16 %v1980
        %v5588 = vunpack.c.l.b16 %v1981
        %v5589 = vunpack.c.h.b16 %v1981
        %v5590 = vunpack.c.l.b16 %v1982
        %v5591 = vunpack.c.h.b16 %v1982
        %v5592 = vunpack.c.l.b16 %v1983
        %v5593 = vunpack.c.h.b16 %v1983
        %v5594 = vunpack.c.l.b16 %v1984
        %v5595 = vunpack.c.h.b16 %v1984
        %v5596 = vunpack.c.l.b16 %v1985
        %v5597 = vunpack.c.h.b16 %v1985
        %v5598 = vunpack.c.l.b16 %v1986
        %v5599 = vunpack.c.h.b16 %v1986
        %v5600 = vunpack.c.l.b16 %v1987
        %v5601 = vunpack.c.h.b16 %v1987
        %v5602 = vunpack.c.l.b16 %v1988
        %v5603 = vunpack.c.h.b16 %v1988
        %v5604 = vunpack.c.l.b16 %v1989
        %v5605 = vunpack.c.h.b16 %v1989
        %v5606 = vunpack.c.l.b16 %v1990
        %v5607 = vunpack.c.h.b16 %v1990
        %v5608 = vunpack.c.l.b16 %v1991
        %v5609 = vunpack.c.h.b16 %v1991
        %v5610 = vunpack.c.l.b16 %v1992
        %v5611 = vunpack.c.h.b16 %v1992
        %v5612 = vunpack.c.l.b16 %v1993
        %v5613 = vunpack.c.h.b16 %v1993
        %v5614 = vunpack.c.l.b16 %v1994
        %v5615 = vunpack.c.h.b16 %v1994
        %v5616 = vunpack.c.l.b16 %v1995
        %v5617 = vunpack.c.h.b16 %v1995
        %v5618 = vunpack.c.l.b16 %v1996
        %v5619 = vunpack.c.h.b16 %v1996
        %v5620 = vunpack.c.l.b16 %v1997
        %v5621 = vunpack.c.h.b16 %v1997
        %v5622 = vunpack.c.l.b16 %v1998
        %v5623 = vunpack.c.h.b16 %v1998
        %v5624 = vunpack.c.l.b16 %v1999
        %v5625 = vunpack.c.h.b16 %v1999
        %v5626 = vunpack.c.l.b16 %v2000
        %v5627 = vunpack.c.h.b16 %v2000
        %v5628 = vunpack.c.l.b16 %v2001
        %v5629 = vunpack.c.h.b16 %v2001
        %v5630 = vunpack.c.l.b16 %v2002
        %v5631 = vunpack.c.h.b16 %v2002
        %v5632 = vunpack.c.l.b16 %v2003
        %v5633 = vunpack.c.h.b16 %v2003
        %v5634 = vunpack.c.l.b16 %v2004
        %v5635 = vunpack.c.h.b16 %v2004
        %v5636 = vunpack.c.l.b16 %v2005
        %v5637 = vunpack.c.h.b16 %v2005
        %v5638 = vunpack.c.l.b16 %v2006
        %v5639 = vunpack.c.h.b16 %v2006
        %v5640 = vunpack.c.l.b16 %v2007
        %v5641 = vunpack.c.h.b16 %v2007
        %v5642 = vunpack.c.l.b16 %v2008
        %v5643 = vunpack.c.h.b16 %v2008
        %v5644 = vunpack.c.l.b16 %v2009
        %v5645 = vunpack.c.h.b16 %v2009
        %v5646 = vunpack.c.l.b16 %v2010
        %v5647 = vunpack.c.h.b16 %v2010
        %v5648 = vunpack.c.l.b16 %v2011
        %v5649 = vunpack.c.h.b16 %v2011
        %v5650 = vunpack.c.l.b16 %v2012
        %v5651 = vunpack.c.h.b16 %v2012
        %v5652 = vunpack.c.l.b16 %v2013
        %v5653 = vunpack.c.h.b16 %v2013
        %v5654 = vunpack.c.l.b16 %v2014
        %v5655 = vunpack.c.h.b16 %v2014
        %v5656 = vunpack.c.l.b16 %v2015
        %v5657 = vunpack.c.h.b16 %v2015
        %v5658 = vunpack.c.l.b16 %v2016
        %v5659 = vunpack.c.h.b16 %v2016
        %v5660 = vunpack.c.l.b16 %v2017
        %v5661 = vunpack.c.h.b16 %v2017
        %v5662 = vunpack.c.l.b16 %v2018
        %v5663 = vunpack.c.h.b16 %v2018
        %v5664 = vunpack.c.l.b16 %v2019
        %v5665 = vunpack.c.h.b16 %v2019
        %v5666 = vunpack.c.l.b16 %v2020
        %v5667 = vunpack.c.h.b16 %v2020
        %v5668 = vunpack.c.l.b16 %v2021
        %v5669 = vunpack.c.h.b16 %v2021
        %v5670 = vunpack.c.l.b16 %v2022
        %v5671 = vunpack.c.h.b16 %v2022
        %v5672 = vunpack.c.l.b16 %v2023
        %v5673 = vunpack.c.h.b16 %v2023
        %v5674 = vunpack.c.l.b16 %v2024
        %v5675 = vunpack.c.h.b16 %v2024
        %v5676 = vunpack.c.l.b16 %v2025
        %v5677 = vunpack.c.h.b16 %v2025
        %v5678 = vunpack.c.l.b16 %v2026
        %v5679 = vunpack.c.h.b16 %v2026
        %v5680 = vunpack.c.l.b16 %v2027
        %v5681 = vunpack.c.h.b16 %v2027
        %v5682 = vunpack.c.l.b16 %v2028
        %v5683 = vunpack.c.h.b16 %v2028
        %v5684 = vunpack.c.l.b16 %v2029
        %v5685 = vunpack.c.h.b16 %v2029
        %v5686 = vunpack.c.l.b16 %v2030
        %v5687 = vunpack.c.h.b16 %v2030
        %v5688 = vunpack.c.l.b16 %v2031
        %v5689 = vunpack.c.h.b16 %v2031
        %v5690 = vunpack.c.l.b16 %v2032
        %v5691 = vunpack.c.h.b16 %v2032
        %v5692 = vunpack.c.l.b16 %v2033
        %v5693 = vunpack.c.h.b16 %v2033
        %v5694 = vunpack.c.l.b16 %v2034
        %v5695 = vunpack.c.h.b16 %v2034
        %v5696 = vunpack.c.l.b16 %v2035
        %v5697 = vunpack.c.h.b16 %v2035
        %v5698 = vunpack.c.l.b16 %v2036
        %v5699 = vunpack.c.h.b16 %v2036
        %v5700 = vunpack.c.l.b16 %v2037
        %v5701 = vunpack.c.h.b16 %v2037
        %v5702 = vunpack.c.l.b16 %v2038
        %v5703 = vunpack.c.h.b16 %v2038
        %v5704 = vunpack.c.l.b16 %v2039
        %v5705 = vunpack.c.h.b16 %v2039
        %v5706 = vunpack.c.l.b16 %v2040
        %v5707 = vunpack.c.h.b16 %v2040
        %v5708 = vunpack.c.l.b16 %v2041
        %v5709 = vunpack.c.h.b16 %v2041
        %v5710 = vunpack.c.l.b16 %v2042
        %v5711 = vunpack.c.h.b16 %v2042
        %v5712 = vunpack.c.l.b16 %v2043
        %v5713 = vunpack.c.h.b16 %v2043
        %v5714 = vunpack.c.l.b16 %v2044
        %v5715 = vunpack.c.h.b16 %v2044
        %v5716 = vunpack.c.l.b16 %v2045
        %v5717 = vunpack.c.h.b16 %v2045
        %v5718 = vunpack.c.l.b16 %v2046
        %v5719 = vunpack.c.h.b16 %v2046
        %v5720 = vunpack.c.l.b16 %v2047
        %v5721 = vunpack.c.h.b16 %v2047
        %v5722 = vunpack.c.l.b16 %v2048
        %v5723 = vunpack.c.h.b16 %v2048
        %v5724 = vunpack.c.l.b16 %v2049
        %v5725 = vunpack.c.h.b16 %v2049
        %v5726 = vunpack.c.l.b16 %v2050
        %v5727 = vunpack.c.h.b16 %v2050
        %v5728 = vunpack.c.l.b16 %v2051
        %v5729 = vunpack.c.h.b16 %v2051
        %v5730 = vunpack.c.l.b16 %v2052
        %v5731 = vunpack.c.h.b16 %v2052
        %v5732 = vunpack.c.l.b16 %v2053
        %v5733 = vunpack.c.h.b16 %v2053
        %v5734 = vunpack.c.l.b16 %v2054
        %v5735 = vunpack.c.h.b16 %v2054
        %v5736 = vunpack.c.l.b16 %v2055
        %v5737 = vunpack.c.h.b16 %v2055
        %v5738 = vunpack.c.l.b16 %v2056
        %v5739 = vunpack.c.h.b16 %v2056
        %v5740 = vunpack.c.l.b16 %v2057
        %v5741 = vunpack.c.h.b16 %v2057
        %v5742 = vunpack.c.l.b16 %v2058
        %v5743 = vunpack.c.h.b16 %v2058
        %v5744 = vunpack.c.l.b16 %v2059
        %v5745 = vunpack.c.h.b16 %v2059
        %v5746 = vunpack.c.l.b16 %v2060
        %v5747 = vunpack.c.h.b16 %v2060
        %v5748 = vunpack.c.l.b16 %v2061
        %v5749 = vunpack.c.h.b16 %v2061
        %v5750 = vunpack.c.l.b16 %v2062
        %v5751 = vunpack.c.h.b16 %v2062
        %v5752 = vunpack.c.l.b16 %v2063
        %v5753 = vunpack.c.h.b16 %v2063
        %v5754 = vunpack.c.l.b16 %v2064
        %v5755 = vunpack.c.h.b16 %v2064
        %v5756 = vunpack.c.l.b16 %v2065
        %v5757 = vunpack.c.h.b16 %v2065
        %v5758 = vunpack.c.l.b16 %v2066
        %v5759 = vunpack.c.h.b16 %v2066
        %v5760 = vunpack.c.l.b16 %v2067
        %v5761 = vunpack.c.h.b16 %v2067
        %v5762 = vunpack.c.l.b16 %v2068
        %v5763 = vunpack.c.h.b16 %v2068
        %v5764 = vunpack.c.l.b16 %v2069
        %v5765 = vunpack.c.h.b16 %v2069
        %v5766 = vunpack.c.l.b16 %v2070
        %v5767 = vunpack.c.h.b16 %v2070
        %v5768 = vunpack.c.l.b16 %v2071
        %v5769 = vunpack.c.h.b16 %v2071
        %v5770 = vunpack.c.l.b16 %v2072
        %v5771 = vunpack.c.h.b16 %v2072
        %v5772 = vunpack.c.l.b16 %v2073
        %v5773 = vunpack.c.h.b16 %v2073
        %v5774 = vunpack.c.l.b16 %v2074
        %v5775 = vunpack.c.h.b16 %v2074
        %v5776 = vunpack.c.l.b16 %v2075
        %v5777 = vunpack.c.h.b16 %v2075
        %v5778 = vunpack.c.l.b16 %v2076
        %v5779 = vunpack.c.h.b16 %v2076
        %v5780 = vunpack.c.l.b16 %v2077
        %v5781 = vunpack.c.h.b16 %v2077
        %v5782 = vunpack.c.l.b16 %v2078
        %v5783 = vunpack.c.h.b16 %v2078
        %v5784 = vunpack.c.l.b16 %v2079
        %v5785 = vunpack.c.h.b16 %v2079
        %v5786 = vunpack.c.l.b16 %v2080
        %v5787 = vunpack.c.h.b16 %v2080
        %v5788 = vunpack.c.l.b16 %v2081
        %v5789 = vunpack.c.h.b16 %v2081
        %v5790 = vunpack.c.l.b16 %v2082
        %v5791 = vunpack.c.h.b16 %v2082
        %v5792 = vunpack.c.l.b16 %v2083
        %v5793 = vunpack.c.h.b16 %v2083
        %v5794 = vunpack.c.l.b16 %v2084
        %v5795 = vunpack.c.h.b16 %v2084
        %v5796 = vunpack.c.l.b16 %v2085
        %v5797 = vunpack.c.h.b16 %v2085
        %v5798 = vunpack.c.l.b16 %v2086
        %v5799 = vunpack.c.h.b16 %v2086
        %v5800 = vunpack.c.l.b16 %v2087
        %v5801 = vunpack.c.h.b16 %v2087
        %v5802 = vunpack.c.l.b16 %v2088
        %v5803 = vunpack.c.h.b16 %v2088
        %v5804 = vunpack.c.l.b16 %v2089
        %v5805 = vunpack.c.h.b16 %v2089
        %v5806 = vunpack.c.l.b16 %v2090
        %v5807 = vunpack.c.h.b16 %v2090
        %v5808 = vunpack.c.l.b16 %v2091
        %v5809 = vunpack.c.h.b16 %v2091
        %v5810 = vunpack.c.l.b16 %v2092
        %v5811 = vunpack.c.h.b16 %v2092
        %v5812 = vunpack.c.l.b16 %v2093
        %v5813 = vunpack.c.h.b16 %v2093
        %v5814 = vunpack.c.l.b16 %v2094
        %v5815 = vunpack.c.h.b16 %v2094
        %v5816 = vunpack.c.l.b16 %v2095
        %v5817 = vunpack.c.h.b16 %v2095
        %v5818 = vunpack.c.l.b16 %v2096
        %v5819 = vunpack.c.h.b16 %v2096
        %v5820 = vunpack.c.l.b16 %v2097
        %v5821 = vunpack.c.h.b16 %v2097
        %v5822 = vunpack.c.l.b16 %v2098
        %v5823 = vunpack.c.h.b16 %v2098
        %v5824 = vunpack.c.l.b16 %v2099
        %v5825 = vunpack.c.h.b16 %v2099
        %v5826 = vunpack.c.l.b16 %v2100
        %v5827 = vunpack.c.h.b16 %v2100
        %v5828 = vunpack.c.l.b16 %v2101
        %v5829 = vunpack.c.h.b16 %v2101
        %v5830 = vunpack.c.l.b16 %v2102
        %v5831 = vunpack.c.h.b16 %v2102
        %v5832 = vunpack.c.l.b16 %v2103
        %v5833 = vunpack.c.h.b16 %v2103
        %v5834 = vunpack.c.l.b16 %v2104
        %v5835 = vunpack.c.h.b16 %v2104
        %v5836 = vunpack.c.l.b16 %v2105
        %v5837 = vunpack.c.h.b16 %v2105
        %v5838 = vunpack.c.l.b16 %v2106
        %v5839 = vunpack.c.h.b16 %v2106
        %v5840 = vunpack.c.l.b16 %v2107
        %v5841 = vunpack.c.h.b16 %v2107
        %v5842 = vunpack.c.l.b16 %v2108
        %v5843 = vunpack.c.h.b16 %v2108
        %v5844 = vunpack.c.l.b16 %v2109
        %v5845 = vunpack.c.h.b16 %v2109
        %v5846 = vunpack.c.l.b16 %v2110
        %v5847 = vunpack.c.h.b16 %v2110
        %v5848 = vunpack.c.l.b16 %v2111
        %v5849 = vunpack.c.h.b16 %v2111
        %v5850 = vunpack.c.l.b16 %v2112
        %v5851 = vunpack.c.h.b16 %v2112
        %v5852 = vunpack.c.l.b16 %v2113
        %v5853 = vunpack.c.h.b16 %v2113
        %v5854 = vunpack.c.l.b16 %v2114
        %v5855 = vunpack.c.h.b16 %v2114
        %v5856 = vunpack.c.l.b16 %v2115
        %v5857 = vunpack.c.h.b16 %v2115
        %v5858 = vunpack.c.l.b16 %v2116
        %v5859 = vunpack.c.h.b16 %v2116
        %v5860 = vunpack.c.l.b16 %v2117
        %v5861 = vunpack.c.h.b16 %v2117
        %v5862 = vunpack.c.l.b16 %v2118
        %v5863 = vunpack.c.h.b16 %v2118
        %v5864 = vunpack.c.l.b16 %v2119
        %v5865 = vunpack.c.h.b16 %v2119
        %v5866 = vunpack.c.l.b16 %v2120
        %v5867 = vunpack.c.h.b16 %v2120
        %v5868 = vunpack.c.l.b16 %v2121
        %v5869 = vunpack.c.h.b16 %v2121
        %v5870 = vunpack.c.l.b16 %v2122
        %v5871 = vunpack.c.h.b16 %v2122
        %v5872 = vunpack.c.l.b16 %v2123
        %v5873 = vunpack.c.h.b16 %v2123
        %v5874 = vunpack.c.l.b16 %v2124
        %v5875 = vunpack.c.h.b16 %v2124
        %v5876 = vunpack.c.l.b16 %v2125
        %v5877 = vunpack.c.h.b16 %v2125
        %v5878 = vunpack.c.l.b16 %v2126
        %v5879 = vunpack.c.h.b16 %v2126
        %v5880 = vunpack.c.l.b16 %v2127
        %v5881 = vunpack.c.h.b16 %v2127
        %v5882 = vunpack.c.l.b16 %v2128
        %v5883 = vunpack.c.h.b16 %v2128
        %v5884 = vunpack.c.l.b16 %v2129
        %v5885 = vunpack.c.h.b16 %v2129
        %v5886 = vunpack.c.l.b16 %v2130
        %v5887 = vunpack.c.h.b16 %v2130
        %v5888 = vunpack.c.l.b16 %v2131
        %v5889 = vunpack.c.h.b16 %v2131
        %v5890 = vunpack.c.l.b16 %v2132
        %v5891 = vunpack.c.h.b16 %v2132
        %v5892 = vunpack.c.l.b16 %v2133
        %v5893 = vunpack.c.h.b16 %v2133
        %v5894 = vunpack.c.l.b16 %v2134
        %v5895 = vunpack.c.h.b16 %v2134
        %v5896 = vunpack.c.l.b16 %v2135
        %v5897 = vunpack.c.h.b16 %v2135
        %v5898 = vunpack.c.l.b16 %v2136
        %v5899 = vunpack.c.h.b16 %v2136
        %v5900 = vunpack.c.l.b16 %v2137
        %v5901 = vunpack.c.h.b16 %v2137
        %v5902 = vunpack.c.l.b16 %v2138
        %v5903 = vunpack.c.h.b16 %v2138
        %v5904 = vunpack.c.l.b16 %v2139
        %v5905 = vunpack.c.h.b16 %v2139
        %v5906 = vunpack.c.l.b16 %v2140
        %v5907 = vunpack.c.h.b16 %v2140
        %v5908 = vunpack.c.l.b16 %v2141
        %v5909 = vunpack.c.h.b16 %v2141
        %v5910 = vunpack.c.l.b16 %v2142
        %v5911 = vunpack.c.h.b16 %v2142
        %v5912 = vunpack.c.l.b16 %v2143
        %v5913 = vunpack.c.h.b16 %v2143
        %v5914 = vunpack.c.l.b16 %v2144
        %v5915 = vunpack.c.h.b16 %v2144
        %v5916 = vunpack.c.l.b16 %v2145
        %v5917 = vunpack.c.h.b16 %v2145
        %v5918 = vunpack.c.l.b16 %v2146
        %v5919 = vunpack.c.h.b16 %v2146
        %v5920 = vunpack.c.l.b16 %v2147
        %v5921 = vunpack.c.h.b16 %v2147
        %v5922 = vunpack.c.l.b16 %v2148
        %v5923 = vunpack.c.h.b16 %v2148
        %v5924 = vunpack.c.l.b16 %v2149
        %v5925 = vunpack.c.h.b16 %v2149
        %v5926 = vunpack.c.l.b16 %v2150
        %v5927 = vunpack.c.h.b16 %v2150
        %v5928 = vunpack.c.l.b16 %v2151
        %v5929 = vunpack.c.h.b16 %v2151
        %v5930 = vunpack.c.l.b16 %v2152
        %v5931 = vunpack.c.h.b16 %v2152
        %v5932 = vunpack.c.l.b16 %v2153
        %v5933 = vunpack.c.h.b16 %v2153
        %v5934 = vunpack.c.l.b16 %v2154
        %v5935 = vunpack.c.h.b16 %v2154
        %v5936 = vunpack.c.l.b16 %v2155
        %v5937 = vunpack.c.h.b16 %v2155
        %v5938 = vunpack.c.l.b16 %v2156
        %v5939 = vunpack.c.h.b16 %v2156
        %v5940 = vunpack.c.l.b16 %v2157
        %v5941 = vunpack.c.h.b16 %v2157
        %v5942 = vunpack.c.l.b16 %v2158
        %v5943 = vunpack.c.h.b16 %v2158
        %v5944 = vunpack.c.l.b16 %v2159
        %v5945 = vunpack.c.h.b16 %v2159
        %v5946 = vunpack.c.l.b16 %v2160
        %v5947 = vunpack.c.h.b16 %v2160
        %v5948 = vunpack.c.l.b16 %v2161
        %v5949 = vunpack.c.h.b16 %v2161
        %v5950 = vunpack.c.l.b16 %v2162
        %v5951 = vunpack.c.h.b16 %v2162
        %v5952 = vunpack.c.l.b16 %v2163
        %v5953 = vunpack.c.h.b16 %v2163
        %v5954 = vunpack.c.l.b16 %v2164
        %v5955 = vunpack.c.h.b16 %v2164
        %v5956 = vunpack.c.l.b16 %v2165
        %v5957 = vunpack.c.h.b16 %v2165
        %v5958 = vunpack.c.l.b16 %v2166
        %v5959 = vunpack.c.h.b16 %v2166
        %v5960 = vunpack.c.l.b16 %v2167
        %v5961 = vunpack.c.h.b16 %v2167
        %v5962 = vunpack.c.l.b16 %v2168
        %v5963 = vunpack.c.h.b16 %v2168
        %v5964 = vunpack.c.l.b16 %v2169
        %v5965 = vunpack.c.h.b16 %v2169
        %v5966 = vunpack.c.l.b16 %v2170
        %v5967 = vunpack.c.h.b16 %v2170
        %v5968 = vunpack.c.l.b16 %v2171
        %v5969 = vunpack.c.h.b16 %v2171
        %v5970 = vunpack.c.l.b16 %v2172
        %v5971 = vunpack.c.h.b16 %v2172
        %v5972 = vunpack.c.l.b16 %v2173
        %v5973 = vunpack.c.h.b16 %v2173
        %v5974 = vunpack.c.l.b16 %v2174
        %v5975 = vunpack.c.h.b16 %v2174
        %v5976 = vunpack.c.l.b16 %v2175
        %v5977 = vunpack.c.h.b16 %v2175
        %v5978 = vunpack.c.l.b16 %v2176
        %v5979 = vunpack.c.h.b16 %v2176
        %v5980 = vunpack.c.l.b16 %v2177
        %v5981 = vunpack.c.h.b16 %v2177
        %v5982 = vunpack.c.l.b16 %v2178
        %v5983 = vunpack.c.h.b16 %v2178
        %v5984 = vunpack.c.l.b16 %v2179
        %v5985 = vunpack.c.h.b16 %v2179
        %v5986 = vunpack.c.l.b16 %v2180
        %v5987 = vunpack.c.h.b16 %v2180
        %v5988 = vunpack.c.l.b16 %v2181
        %v5989 = vunpack.c.h.b16 %v2181
        %v5990 = vunpack.c.l.b16 %v2182
        %v5991 = vunpack.c.h.b16 %v2182
        %v5992 = vunpack.c.l.b16 %v2183
        %v5993 = vunpack.c.h.b16 %v2183
        %v5994 = vunpack.c.l.b16 %v2184
        %v5995 = vunpack.c.h.b16 %v2184
        %v5996 = vunpack.c.l.b16 %v2185
        %v5997 = vunpack.c.h.b16 %v2185
        %v5998 = vunpack.c.l.b16 %v2186
        %v5999 = vunpack.c.h.b16 %v2186
        %v6000 = vunpack.c.l.b16 %v2187
        %v6001 = vunpack.c.h.b16 %v2187
        %v6002 = vunpack.c.l.b16 %v2188
        %v6003 = vunpack.c.h.b16 %v2188
        %v6004 = vunpack.c.l.b16 %v2189
        %v6005 = vunpack.c.h.b16 %v2189
        %v6006 = vunpack.c.l.b16 %v2190
        %v6007 = vunpack.c.h.b16 %v2190
        %v6008 = vunpack.c.l.b16 %v2191
        %v6009 = vunpack.c.h.b16 %v2191
        %v6010 = vunpack.c.l.b16 %v2192
        %v6011 = vunpack.c.h.b16 %v2192
        %v6012 = vunpack.c.l.b16 %v2193
        %v6013 = vunpack.c.h.b16 %v2193
        %v6014 = vunpack.c.l.b16 %v2194
        %v6015 = vunpack.c.h.b16 %v2194
        %v6016 = vunpack.c.l.b16 %v2195
        %v6017 = vunpack.c.h.b16 %v2195
        %v6018 = vunpack.c.l.b16 %v2196
        %v6019 = vunpack.c.h.b16 %v2196
        %v6020 = vunpack.c.l.b16 %v2197
        %v6021 = vunpack.c.h.b16 %v2197
        %v6022 = vunpack.c.l.b16 %v2198
        %v6023 = vunpack.c.h.b16 %v2198
        %v6024 = vunpack.c.l.b16 %v2199
        %v6025 = vunpack.c.h.b16 %v2199
        %v6026 = vunpack.c.l.b16 %v2200
        %v6027 = vunpack.c.h.b16 %v2200
        %v6028 = vunpack.c.l.b16 %v2201
        %v6029 = vunpack.c.h.b16 %v2201
        %v6030 = vunpack.c.l.b16 %v2202
        %v6031 = vunpack.c.h.b16 %v2202
        %v6032 = vunpack.c.l.b16 %v2203
        %v6033 = vunpack.c.h.b16 %v2203
        %v6034 = vunpack.c.l.b16 %v2204
        %v6035 = vunpack.c.h.b16 %v2204
        %v6036 = vunpack.c.l.b16 %v2205
        %v6037 = vunpack.c.h.b16 %v2205
        %v6038 = vunpack.c.l.b16 %v2206
        %v6039 = vunpack.c.h.b16 %v2206
        %v6040 = vunpack.c.l.b16 %v2207
        %v6041 = vunpack.c.h.b16 %v2207
        %v6042 = vunpack.c.l.b16 %v2208
        %v6043 = vunpack.c.h.b16 %v2208
        %v6044 = vunpack.c.l.b16 %v2209
        %v6045 = vunpack.c.h.b16 %v2209
        %v6046 = vunpack.c.l.b16 %v2210
        %v6047 = vunpack.c.h.b16 %v2210
        %v6048 = vunpack.c.l.b16 %v2211
        %v6049 = vunpack.c.h.b16 %v2211
        %v6050 = vunpack.c.l.b16 %v2212
        %v6051 = vunpack.c.h.b16 %v2212
        %v6052 = vunpack.c.l.b16 %v2213
        %v6053 = vunpack.c.h.b16 %v2213
        %v6054 = vunpack.c.l.b16 %v2214
        %v6055 = vunpack.c.h.b16 %v2214
        %v6056 = vunpack.c.l.b16 %v2215
        %v6057 = vunpack.c.h.b16 %v2215
        %v6058 = vunpack.c.l.b16 %v2216
        %v6059 = vunpack.c.h.b16 %v2216
        %v6060 = vunpack.c.l.b16 %v2217
        %v6061 = vunpack.c.h.b16 %v2217
        %v6062 = vunpack.c.l.b16 %v2218
        %v6063 = vunpack.c.h.b16 %v2218
        %v6064 = vunpack.c.l.b16 %v2219
        %v6065 = vunpack.c.h.b16 %v2219
        %v6066 = vunpack.c.l.b16 %v2220
        %v6067 = vunpack.c.h.b16 %v2220
        %v6068 = vunpack.c.l.b16 %v2221
        %v6069 = vunpack.c.h.b16 %v2221
        %v6070 = vunpack.c.l.b16 %v2222
        %v6071 = vunpack.c.h.b16 %v2222
        %v6072 = vunpack.c.l.b16 %v2223
        %v6073 = vunpack.c.h.b16 %v2223
        %v6074 = vunpack.c.l.b16 %v2224
        %v6075 = vunpack.c.h.b16 %v2224
        %v6076 = vunpack.c.l.b16 %v2225
        %v6077 = vunpack.c.h.b16 %v2225
        %v6078 = vunpack.c.l.b16 %v2226
        %v6079 = vunpack.c.h.b16 %v2226
        %v6080 = vunpack.c.l.b16 %v2227
        %v6081 = vunpack.c.h.b16 %v2227
        %v6082 = vunpack.c.l.b16 %v2228
        %v6083 = vunpack.c.h.b16 %v2228
        %v6084 = vunpack.c.l.b16 %v2229
        %v6085 = vunpack.c.h.b16 %v2229
        %v6086 = vunpack.c.l.b16 %v2230
        %v6087 = vunpack.c.h.b16 %v2230
        %v6088 = vunpack.c.l.b16 %v2231
        %v6089 = vunpack.c.h.b16 %v2231
        %v6090 = vunpack.c.l.b16 %v2232
        %v6091 = vunpack.c.h.b16 %v2232
        %v6092 = vunpack.c.l.b16 %v2233
        %v6093 = vunpack.c.h.b16 %v2233
        %v6094 = vunpack.c.l.b16 %v2234
        %v6095 = vunpack.c.h.b16 %v2234
        %v6096 = vunpack.c.l.b16 %v2235
        %v6097 = vunpack.c.h.b16 %v2235
        %v6098 = vunpack.c.l.b16 %v2236
        %v6099 = vunpack.c.h.b16 %v2236
        %v6100 = vunpack.c.l.b16 %v2237
        %v6101 = vunpack.c.h.b16 %v2237
        %v6102 = vunpack.c.l.b16 %v2238
        %v6103 = vunpack.c.h.b16 %v2238
        %v6104 = vunpack.c.l.b16 %v2239
        %v6105 = vunpack.c.h.b16 %v2239
        %v6106 = vunpack.c.l.b16 %v2240
        %v6107 = vunpack.c.h.b16 %v2240
        %v6108 = vunpack.c.l.b16 %v2241
        %v6109 = vunpack.c.h.b16 %v2241
        %v6110 = vunpack.c.l.b16 %v2242
        %v6111 = vunpack.c.h.b16 %v2242
        %v6112 = vunpack.c.l.b16 %v2243
        %v6113 = vunpack.c.h.b16 %v2243
        %v6114 = vunpack.c.l.b16 %v2244
        %v6115 = vunpack.c.h.b16 %v2244
        %v6116 = vunpack.c.l.b16 %v2245
        %v6117 = vunpack.c.h.b16 %v2245
        %v6118 = vunpack.c.l.b16 %v2246
        %v6119 = vunpack.c.h.b16 %v2246
        %v6120 = vunpack.c.l.b16 %v2247
        %v6121 = vunpack.c.h.b16 %v2247
        %v6122 = vunpack.c.l.b16 %v2248
        %v6123 = vunpack.c.h.b16 %v2248
        %v6124 = vunpack.c.l.b16 %v2249
        %v6125 = vunpack.c.h.b16 %v2249
        %v6126 = vunpack.c.l.b16 %v2250
        %v6127 = vunpack.c.h.b16 %v2250
        %v6128 = vunpack.c.l.b16 %v2251
        %v6129 = vunpack.c.h.b16 %v2251
        %v6130 = vunpack.c.l.b16 %v2252
        %v6131 = vunpack.c.h.b16 %v2252
        %v6132 = vunpack.c.l.b16 %v2253
        %v6133 = vunpack.c.h.b16 %v2253
        %v6134 = vunpack.c.l.b16 %v2254
        %v6135 = vunpack.c.h.b16 %v2254
        %v6136 = vunpack.c.l.b16 %v2255
        %v6137 = vunpack.c.h.b16 %v2255
        %v6138 = vunpack.c.l.b16 %v2256
        %v6139 = vunpack.c.h.b16 %v2256
        %v6140 = vunpack.c.l.b16 %v2257
        %v6141 = vunpack.c.h.b16 %v2257
        %v6142 = vunpack.c.l.b16 %v2258
        %v6143 = vunpack.c.h.b16 %v2258
        %v6144 = vunpack.c.l.b16 %v2259
        %v6145 = vunpack.c.h.b16 %v2259
        %v6146 = vunpack.c.l.b16 %v2260
        %v6147 = vunpack.c.h.b16 %v2260
        %v6148 = vunpack.c.l.b16 %v2261
        %v6149 = vunpack.c.h.b16 %v2261
        %v6150 = vunpack.c.l.b16 %v2262
        %v6151 = vunpack.c.h.b16 %v2262
        %v6152 = vunpack.c.l.b16 %v2263
        %v6153 = vunpack.c.h.b16 %v2263
        %v6154 = vunpack.c.l.b16 %v2264
        %v6155 = vunpack.c.h.b16 %v2264
        %v6156 = vunpack.c.l.b16 %v2265
        %v6157 = vunpack.c.h.b16 %v2265
        %v6158 = vunpack.c.l.b16 %v2266
        %v6159 = vunpack.c.h.b16 %v2266
        %v6160 = vunpack.c.l.b16 %v2267
        %v6161 = vunpack.c.h.b16 %v2267
        %v6162 = vunpack.c.l.b16 %v2268
        %v6163 = vunpack.c.h.b16 %v2268
        %v6164 = vunpack.c.l.b16 %v2269
        %v6165 = vunpack.c.h.b16 %v2269
        %v6166 = vunpack.c.l.b16 %v2270
        %v6167 = vunpack.c.h.b16 %v2270
        %v6168 = vunpack.c.l.b16 %v2271
        %v6169 = vunpack.c.h.b16 %v2271
        %v6170 = vunpack.c.l.b16 %v2272
        %v6171 = vunpack.c.h.b16 %v2272
        %v6172 = vunpack.c.l.b16 %v2273
        %v6173 = vunpack.c.h.b16 %v2273
        %v6174 = vunpack.c.l.b16 %v2274
        %v6175 = vunpack.c.h.b16 %v2274
        %v6176 = vunpack.c.l.b16 %v2275
        %v6177 = vunpack.c.h.b16 %v2275
        %v6178 = vunpack.c.l.b16 %v2276
        %v6179 = vunpack.c.h.b16 %v2276
        %v6180 = vunpack.c.l.b16 %v2277
        %v6181 = vunpack.c.h.b16 %v2277
        %v6182 = vunpack.c.l.b16 %v2278
        %v6183 = vunpack.c.h.b16 %v2278
        %v6184 = vunpack.c.l.b16 %v2279
        %v6185 = vunpack.c.h.b16 %v2279
        %v6186 = vunpack.c.l.b16 %v2280
        %v6187 = vunpack.c.h.b16 %v2280
        %v6188 = vunpack.c.l.b16 %v2281
        %v6189 = vunpack.c.h.b16 %v2281
        %v6190 = vunpack.c.l.b16 %v2282
        %v6191 = vunpack.c.h.b16 %v2282
        %v6192 = vunpack.c.l.b16 %v2283
        %v6193 = vunpack.c.h.b16 %v2283
        %v6194 = vunpack.c.l.b16 %v2284
        %v6195 = vunpack.c.h.b16 %v2284
        %v6196 = vunpack.c.l.b16 %v2285
        %v6197 = vunpack.c.h.b16 %v2285
        %v6198 = vunpack.c.l.b16 %v2286
        %v6199 = vunpack.c.h.b16 %v2286
        %v6200 = vunpack.c.l.b16 %v2287
        %v6201 = vunpack.c.h.b16 %v2287
        %v6202 = vunpack.c.l.b16 %v2288
        %v6203 = vunpack.c.h.b16 %v2288
        %v6204 = vunpack.c.l.b16 %v2289
        %v6205 = vunpack.c.h.b16 %v2289
        %v6206 = vunpack.c.l.b16 %v2290
        %v6207 = vunpack.c.h.b16 %v2290
        %v6208 = vunpack.c.l.b16 %v2291
        %v6209 = vunpack.c.h.b16 %v2291
        %v6210 = vunpack.c.l.b16 %v2292
        %v6211 = vunpack.c.h.b16 %v2292
        %v6212 = vunpack.c.l.b16 %v2293
        %v6213 = vunpack.c.h.b16 %v2293
        %v6214 = vunpack.c.l.b16 %v2294
        %v6215 = vunpack.c.h.b16 %v2294
        %v6216 = vunpack.c.l.b16 %v2295
        %v6217 = vunpack.c.h.b16 %v2295
        %v6218 = vunpack.c.l.b16 %v2296
        %v6219 = vunpack.c.h.b16 %v2296
        %v6220 = vunpack.c.l.b16 %v2297
        %v6221 = vunpack.c.h.b16 %v2297
        %v6222 = vunpack.c.l.b16 %v2298
        %v6223 = vunpack.c.h.b16 %v2298
        %v6224 = vunpack.c.l.b16 %v2299
        %v6225 = vunpack.c.h.b16 %v2299
        %v6226 = vunpack.c.l.b16 %v2300
        %v6227 = vunpack.c.h.b16 %v2300
        %v6228 = vunpack.c.l.b16 %v2301
        %v6229 = vunpack.c.h.b16 %v2301
        %v6230 = vunpack.c.l.b16 %v2302
        %v6231 = vunpack.c.h.b16 %v2302
        %v6232 = vunpack.c.l.b16 %v2303
        %v6233 = vunpack.c.h.b16 %v2303
        %v6234 = vunpack.c.l.b16 %v2304
        %v6235 = vunpack.c.h.b16 %v2304
        %v6236 = vunpack.c.l.b16 %v2305
        %v6237 = vunpack.c.h.b16 %v2305
        %v6238 = vunpack.c.l.b16 %v2306
        %v6239 = vunpack.c.h.b16 %v2306
        %v6240 = vunpack.c.l.b16 %v2307
        %v6241 = vunpack.c.h.b16 %v2307
        %v6242 = vunpack.c.l.b16 %v2308
        %v6243 = vunpack.c.h.b16 %v2308
        %v6244 = vunpack.c.l.b16 %v2309
        %v6245 = vunpack.c.h.b16 %v2309
        %v6246 = vunpack.c.l.b16 %v2310
        %v6247 = vunpack.c.h.b16 %v2310
        %v6248 = vunpack.c.l.b16 %v2311
        %v6249 = vunpack.c.h.b16 %v2311
        %v6250 = vunpack.c.l.b16 %v2312
        %v6251 = vunpack.c.h.b16 %v2312
        %v6252 = vunpack.c.l.b16 %v2313
        %v6253 = vunpack.c.h.b16 %v2313
        %v6254 = vunpack.c.l.b16 %v2314
        %v6255 = vunpack.c.h.b16 %v2314
        %v6256 = vunpack.c.l.b16 %v2315
        %v6257 = vunpack.c.h.b16 %v2315
        %v6258 = vunpack.c.l.b16 %v2316
        %v6259 = vunpack.c.h.b16 %v2316
        %v6260 = vunpack.c.l.b16 %v2317
        %v6261 = vunpack.c.h.b16 %v2317
        %v6262 = vunpack.c.l.b16 %v2318
        %v6263 = vunpack.c.h.b16 %v2318
        %v6264 = vunpack.c.l.b16 %v2319
        %v6265 = vunpack.c.h.b16 %v2319
        %v6266 = vunpack.c.l.b16 %v2320
        %v6267 = vunpack.c.h.b16 %v2320
        %v6268 = vunpack.c.l.b16 %v2321
        %v6269 = vunpack.c.h.b16 %v2321
        %v6270 = vunpack.c.l.b16 %v2322
        %v6271 = vunpack.c.h.b16 %v2322
        %v6272 = vunpack.c.l.b16 %v2323
        %v6273 = vunpack.c.h.b16 %v2323
        %v6274 = vunpack.c.l.b16 %v2324
        %v6275 = vunpack.c.h.b16 %v2324
        %v6276 = vunpack.c.l.b16 %v2325
        %v6277 = vunpack.c.h.b16 %v2325
        %v6278 = vunpack.c.l.b16 %v2326
        %v6279 = vunpack.c.h.b16 %v2326
        %v6280 = vunpack.c.l.b16 %v2327
        %v6281 = vunpack.c.h.b16 %v2327
        %v6282 = vunpack.c.l.b16 %v2328
        %v6283 = vunpack.c.h.b16 %v2328
        %v6284 = vunpack.c.l.b16 %v2329
        %v6285 = vunpack.c.h.b16 %v2329
        %v6286 = vunpack.c.l.b16 %v2330
        %v6287 = vunpack.c.h.b16 %v2330
        %v6288 = vunpack.c.l.b16 %v2331
        %v6289 = vunpack.c.h.b16 %v2331
        %v6290 = vunpack.c.l.b16 %v2332
        %v6291 = vunpack.c.h.b16 %v2332
        %v6292 = vunpack.c.l.b16 %v2333
        %v6293 = vunpack.c.h.b16 %v2333
        %v6294 = vunpack.c.l.b16 %v2334
        %v6295 = vunpack.c.h.b16 %v2334
        %v6296 = vunpack.c.l.b16 %v2335
        %v6297 = vunpack.c.h.b16 %v2335
        %v6298 = vunpack.c.l.b16 %v2336
        %v6299 = vunpack.c.h.b16 %v2336
        %v6300 = vunpack.c.l.b16 %v2337
        %v6301 = vunpack.c.h.b16 %v2337
        %v6302 = vunpack.c.l.b16 %v2338
        %v6303 = vunpack.c.h.b16 %v2338
        %v6304 = vunpack.c.l.b16 %v2339
        %v6305 = vunpack.c.h.b16 %v2339
        %v6306 = vunpack.c.l.b16 %v2340
        %v6307 = vunpack.c.h.b16 %v2340
        %v6308 = vunpack.c.l.b16 %v2341
        %v6309 = vunpack.c.h.b16 %v2341
        %v6310 = vunpack.c.l.b16 %v2342
        %v6311 = vunpack.c.h.b16 %v2342
        %v6312 = vunpack.c.l.b16 %v2343
        %v6313 = vunpack.c.h.b16 %v2343
        %v6314 = vunpack.c.l.b16 %v2344
        %v6315 = vunpack.c.h.b16 %v2344
        %v6316 = vunpack.c.l.b16 %v2345
        %v6317 = vunpack.c.h.b16 %v2345
        %v6318 = vunpack.c.l.b16 %v2346
        %v6319 = vunpack.c.h.b16 %v2346
        %v6320 = vunpack.c.l.b16 %v2347
        %v6321 = vunpack.c.h.b16 %v2347
        %v6322 = vunpack.c.l.b16 %v2348
        %v6323 = vunpack.c.h.b16 %v2348
        %v6324 = vunpack.c.l.b16 %v2349
        %v6325 = vunpack.c.h.b16 %v2349
        %v6326 = vunpack.c.l.b16 %v2350
        %v6327 = vunpack.c.h.b16 %v2350
        %v6328 = vunpack.c.l.b16 %v2351
        %v6329 = vunpack.c.h.b16 %v2351
        %v6330 = vunpack.c.l.b16 %v2352
        %v6331 = vunpack.c.h.b16 %v2352
        %v6332 = vunpack.c.l.b16 %v2353
        %v6333 = vunpack.c.h.b16 %v2353
        %v6334 = vunpack.c.l.b16 %v2354
        %v6335 = vunpack.c.h.b16 %v2354
        %v6336 = vunpack.c.l.b16 %v2355
        %v6337 = vunpack.c.h.b16 %v2355
        %v6338 = vunpack.c.l.b16 %v2356
        %v6339 = vunpack.c.h.b16 %v2356
        %v6340 = vunpack.c.l.b16 %v2357
        %v6341 = vunpack.c.h.b16 %v2357
        %v6342 = vunpack.c.l.b16 %v2358
        %v6343 = vunpack.c.h.b16 %v2358
        %v6344 = vunpack.c.l.b16 %v2359
        %v6345 = vunpack.c.h.b16 %v2359
        %v6346 = vunpack.c.l.b16 %v2360
        %v6347 = vunpack.c.h.b16 %v2360
        %v6348 = vunpack.c.l.b16 %v2361
        %v6349 = vunpack.c.h.b16 %v2361
        %v6350 = vunpack.c.l.b16 %v2362
        %v6351 = vunpack.c.h.b16 %v2362
        %v6352 = vunpack.c.l.b16 %v2363
        %v6353 = vunpack.c.h.b16 %v2363
        %v6354 = vunpack.c.l.b16 %v2364
        %v6355 = vunpack.c.h.b16 %v2364
        %v6356 = vunpack.c.l.b16 %v2365
        %v6357 = vunpack.c.h.b16 %v2365
        %v6358 = vunpack.c.l.b16 %v2366
        %v6359 = vunpack.c.h.b16 %v2366
        %v6360 = vunpack.c.l.b16 %v2367
        %v6361 = vunpack.c.h.b16 %v2367
        %v6362 = vunpack.c.l.b16 %v2368
        %v6363 = vunpack.c.h.b16 %v2368
        %v6364 = vunpack.c.l.b16 %v2369
        %v6365 = vunpack.c.h.b16 %v2369
        %v6366 = vunpack.c.l.b16 %v2370
        %v6367 = vunpack.c.h.b16 %v2370
        %v6368 = vunpack.c.l.b16 %v2371
        %v6369 = vunpack.c.h.b16 %v2371
        %v6370 = vunpack.c.l.b16 %v2372
        %v6371 = vunpack.c.h.b16 %v2372
        %v6372 = vunpack.c.l.b16 %v2373
        %v6373 = vunpack.c.h.b16 %v2373
        %v6374 = vunpack.c.l.b16 %v2374
        %v6375 = vunpack.c.h.b16 %v2374
        %v6376 = vunpack.c.l.b16 %v2375
        %v6377 = vunpack.c.h.b16 %v2375
        %v6378 = vunpack.c.l.b16 %v2376
        %v6379 = vunpack.c.h.b16 %v2376
        %v6380 = vunpack.c.l.b16 %v2377
        %v6381 = vunpack.c.h.b16 %v2377
        %v6382 = vunpack.c.l.b16 %v2378
        %v6383 = vunpack.c.h.b16 %v2378
        %v6384 = vunpack.c.l.b16 %v2379
        %v6385 = vunpack.c.h.b16 %v2379
        %v6386 = vunpack.c.l.b16 %v2380
        %v6387 = vunpack.c.h.b16 %v2380
        %v6388 = vunpack.c.l.b16 %v2381
        %v6389 = vunpack.c.h.b16 %v2381
        %v6390 = vunpack.c.l.b16 %v2382
        %v6391 = vunpack.c.h.b16 %v2382
        %v6392 = vunpack.c.l.b16 %v2383
        %v6393 = vunpack.c.h.b16 %v2383
        %v6394 = vunpack.c.l.b16 %v2384
        %v6395 = vunpack.c.h.b16 %v2384
        %v6396 = vunpack.c.l.b16 %v2385
        %v6397 = vunpack.c.h.b16 %v2385
        %v6398 = vunpack.c.l.b16 %v2386
        %v6399 = vunpack.c.h.b16 %v2386
        %v6400 = vunpack.c.l.b16 %v2387
        %v6401 = vunpack.c.h.b16 %v2387
        %v6402 = vunpack.c.l.b16 %v2388
        %v6403 = vunpack.c.h.b16 %v2388
        %v6404 = vunpack.c.l.b16 %v2389
        %v6405 = vunpack.c.h.b16 %v2389
        %v6406 = vunpack.c.l.b16 %v2390
        %v6407 = vunpack.c.h.b16 %v2390
        %v6408 = vunpack.c.l.b16 %v2391
        %v6409 = vunpack.c.h.b16 %v2391
        %v6410 = vunpack.c.l.b16 %v2392
        %v6411 = vunpack.c.h.b16 %v2392
        %v6412 = vunpack.c.l.b16 %v2393
        %v6413 = vunpack.c.h.b16 %v2393
        %v6414 = vunpack.c.l.b16 %v2394
        %v6415 = vunpack.c.h.b16 %v2394
        %v6416 = vunpack.c.l.b16 %v2395
        %v6417 = vunpack.c.h.b16 %v2395
        %v6418 = vunpack.c.l.b16 %v2396
        %v6419 = vunpack.c.h.b16 %v2396
        %v6420 = vunpack.c.l.b16 %v2397
        %v6421 = vunpack.c.h.b16 %v2397
        %v6422 = vunpack.c.l.b16 %v2398
        %v6423 = vunpack.c.h.b16 %v2398
        %v6424 = vunpack.c.l.b16 %v2399
        %v6425 = vunpack.c.h.b16 %v2399
        %v6426 = vunpack.c.l.b16 %v2400
        %v6427 = vunpack.c.h.b16 %v2400
        %v6428 = vunpack.c.l.b16 %v2401
        %v6429 = vunpack.c.h.b16 %v2401
        %v6430 = vunpack.c.l.b16 %v2402
        %v6431 = vunpack.c.h.b16 %v2402
        %v6432 = vunpack.c.l.b16 %v2403
        %v6433 = vunpack.c.h.b16 %v2403
        %v6434 = vunpack.c.l.b16 %v2404
        %v6435 = vunpack.c.h.b16 %v2404
        %v6436 = vunpack.c.l.b16 %v2405
        %v6437 = vunpack.c.h.b16 %v2405
        %v6438 = vunpack.c.l.b16 %v2406
        %v6439 = vunpack.c.h.b16 %v2406
        %v6440 = vunpack.c.l.b16 %v2407
        %v6441 = vunpack.c.h.b16 %v2407
        %v6442 = vunpack.c.l.b16 %v2408
        %v6443 = vunpack.c.h.b16 %v2408
        %v6444 = vunpack.c.l.b16 %v2409
        %v6445 = vunpack.c.h.b16 %v2409
        %v6446 = vunpack.c.l.b16 %v2410
        %v6447 = vunpack.c.h.b16 %v2410
        %v6448 = vunpack.c.l.b16 %v2411
        %v6449 = vunpack.c.h.b16 %v2411
        %v6450 = vunpack.c.l.b16 %v2412
        %v6451 = vunpack.c.h.b16 %v2412
        %v6452 = vunpack.c.l.b16 %v2413
        %v6453 = vunpack.c.h.b16 %v2413
        %v6454 = vunpack.c.l.b16 %v2414
        %v6455 = vunpack.c.h.b16 %v2414
        %v6456 = vunpack.c.l.b16 %v2415
        %v6457 = vunpack.c.h.b16 %v2415
        %v6458 = vunpack.c.l.b16 %v2416
        %v6459 = vunpack.c.h.b16 %v2416
        %v6460 = vunpack.c.l.b16 %v2417
        %v6461 = vunpack.c.h.b16 %v2417
        %v6462 = vunpack.c.l.b16 %v2418
        %v6463 = vunpack.c.h.b16 %v2418
        %v6464 = vunpack.c.l.b16 %v2419
        %v6465 = vunpack.c.h.b16 %v2419
        %v6466 = vunpack.c.l.b16 %v2420
        %v6467 = vunpack.c.h.b16 %v2420
        %v6468 = vunpack.c.l.b16 %v2421
        %v6469 = vunpack.c.h.b16 %v2421
        %v6470 = vunpack.c.l.b16 %v2422
        %v6471 = vunpack.c.h.b16 %v2422
        %v6472 = vunpack.c.l.b16 %v2423
        %v6473 = vunpack.c.h.b16 %v2423
        %v6474 = vunpack.c.l.b16 %v2424
        %v6475 = vunpack.c.h.b16 %v2424
        %v6476 = vunpack.c.l.b16 %v2425
        %v6477 = vunpack.c.h.b16 %v2425
        %v6478 = vunpack.c.l.b16 %v2426
        %v6479 = vunpack.c.h.b16 %v2426
        %v6480 = vunpack.c.l.b16 %v2427
        %v6481 = vunpack.c.h.b16 %v2427
        %v6482 = vunpack.c.l.b16 %v2428
        %v6483 = vunpack.c.h.b16 %v2428
        %v6484 = vunpack.c.l.b16 %v2429
        %v6485 = vunpack.c.h.b16 %v2429
        %v6486 = vunpack.c.l.b16 %v2430
        %v6487 = vunpack.c.h.b16 %v2430
        %v6488 = vunpack.c.l.b16 %v2431
        %v6489 = vunpack.c.h.b16 %v2431
        %v6490 = vunpack.c.l.b16 %v2432
        %v6491 = vunpack.c.h.b16 %v2432
        %v6492 = vunpack.c.l.b16 %v2433
        %v6493 = vunpack.c.h.b16 %v2433
        %v6494 = vunpack.c.l.b16 %v2434
        %v6495 = vunpack.c.h.b16 %v2434
        %v6496 = vunpack.c.l.b16 %v2435
        %v6497 = vunpack.c.h.b16 %v2435
        %v6498 = vunpack.c.l.b16 %v2436
        %v6499 = vunpack.c.h.b16 %v2436
        %v6500 = vunpack.c.l.b16 %v2437
        %v6501 = vunpack.c.h.b16 %v2437
        %v6502 = vunpack.c.l.b16 %v2438
        %v6503 = vunpack.c.h.b16 %v2438
        %v6504 = vunpack.c.l.b16 %v2439
        %v6505 = vunpack.c.h.b16 %v2439
        %v6506 = vunpack.c.l.b16 %v2440
        %v6507 = vunpack.c.h.b16 %v2440
        %v6508 = vunpack.c.l.b16 %v2441
        %v6509 = vunpack.c.h.b16 %v2441
        %v6510 = vunpack.c.l.b16 %v2442
        %v6511 = vunpack.c.h.b16 %v2442
        %v6512 = vunpack.c.l.b16 %v2443
        %v6513 = vunpack.c.h.b16 %v2443
        %v6514 = vunpack.c.l.b16 %v2444
        %v6515 = vunpack.c.h.b16 %v2444
        %v6516 = vunpack.c.l.b16 %v2445
        %v6517 = vunpack.c.h.b16 %v2445
        %v6518 = vunpack.c.l.b16 %v2446
        %v6519 = vunpack.c.h.b16 %v2446
        %v6520 = vunpack.c.l.b16 %v2447
        %v6521 = vunpack.c.h.b16 %v2447
        %v6522 = vunpack.c.l.b16 %v2448
        %v6523 = vunpack.c.h.b16 %v2448
        %v6524 = vunpack.c.l.b16 %v2449
        %v6525 = vunpack.c.h.b16 %v2449
        %v6526 = vunpack.c.l.b16 %v2450
        %v6527 = vunpack.c.h.b16 %v2450
        %v6528 = vunpack.c.l.b16 %v2451
        %v6529 = vunpack.c.h.b16 %v2451
        %v6530 = vunpack.c.l.b16 %v2452
        %v6531 = vunpack.c.h.b16 %v2452
        %v6532 = vunpack.c.l.b16 %v2453
        %v6533 = vunpack.c.h.b16 %v2453
        %v6534 = vunpack.c.l.b16 %v2454
        %v6535 = vunpack.c.h.b16 %v2454
        %v6536 = vunpack.c.l.b16 %v2455
        %v6537 = vunpack.c.h.b16 %v2455
        %v6538 = vunpack.c.l.b16 %v2456
        %v6539 = vunpack.c.h.b16 %v2456
        %v6540 = vunpack.c.l.b16 %v2457
        %v6541 = vunpack.c.h.b16 %v2457
        %v6542 = vunpack.c.l.b16 %v2458
        %v6543 = vunpack.c.h.b16 %v2458
        %v6544 = vunpack.c.l.b16 %v2459
        %v6545 = vunpack.c.h.b16 %v2459
        %v6546 = vunpack.c.l.b16 %v2460
        %v6547 = vunpack.c.h.b16 %v2460
        %v6548 = vunpack.c.l.b16 %v2461
        %v6549 = vunpack.c.h.b16 %v2461
        %v6550 = vunpack.c.l.b16 %v2462
        %v6551 = vunpack.c.h.b16 %v2462
        %v6552 = vunpack.c.l.b16 %v2463
        %v6553 = vunpack.c.h.b16 %v2463
        %v6554 = vunpack.c.l.b16 %v2464
        %v6555 = vunpack.c.h.b16 %v2464
        %v6556 = vunpack.c.l.b16 %v2465
        %v6557 = vunpack.c.h.b16 %v2465
        %v6558 = vunpack.c.l.b16 %v2466
        %v6559 = vunpack.c.h.b16 %v2466
        %v6560 = vunpack.c.l.b16 %v2467
        %v6561 = vunpack.c.h.b16 %v2467
        %v6562 = vunpack.c.l.b16 %v2468
        %v6563 = vunpack.c.h.b16 %v2468
        %v6564 = vunpack.c.l.b16 %v2469
        %v6565 = vunpack.c.h.b16 %v2469
        %v6566 = vunpack.c.l.b16 %v2470
        %v6567 = vunpack.c.h.b16 %v2470
        %v6568 = vunpack.c.l.b16 %v2471
        %v6569 = vunpack.c.h.b16 %v2471
        %v6570 = vunpack.c.l.b16 %v2472
        %v6571 = vunpack.c.h.b16 %v2472
        %v6572 = vunpack.c.l.b16 %v2473
        %v6573 = vunpack.c.h.b16 %v2473
        %v6574 = vunpack.c.l.b16 %v2474
        %v6575 = vunpack.c.h.b16 %v2474
        %v6576 = vunpack.c.l.b16 %v2475
        %v6577 = vunpack.c.h.b16 %v2475
        %v6578 = vunpack.c.l.b16 %v2476
        %v6579 = vunpack.c.h.b16 %v2476
        %v6580 = vunpack.c.l.b16 %v2477
        %v6581 = vunpack.c.h.b16 %v2477
        %v6582 = vunpack.c.l.b16 %v2478
        %v6583 = vunpack.c.h.b16 %v2478
        %v6584 = vunpack.c.l.b16 %v2479
        %v6585 = vunpack.c.h.b16 %v2479
        %v6586 = vunpack.c.l.b16 %v2480
        %v6587 = vunpack.c.h.b16 %v2480
        %v6588 = vunpack.c.l.b16 %v2481
        %v6589 = vunpack.c.h.b16 %v2481
        %v6590 = vunpack.c.l.b16 %v2482
        %v6591 = vunpack.c.h.b16 %v2482
        %v6592 = vunpack.c.l.b16 %v2483
        %v6593 = vunpack.c.h.b16 %v2483
        %v6594 = vunpack.c.l.b16 %v2484
        %v6595 = vunpack.c.h.b16 %v2484
        %v6596 = vunpack.c.l.b16 %v2485
        %v6597 = vunpack.c.h.b16 %v2485
        %v6598 = vunpack.c.l.b16 %v2486
        %v6599 = vunpack.c.h.b16 %v2486
        %v6600 = vunpack.c.l.b16 %v2487
        %v6601 = vunpack.c.h.b16 %v2487
        %v6602 = vunpack.c.l.b16 %v2488
        %v6603 = vunpack.c.h.b16 %v2488
        %v6604 = vunpack.c.l.b16 %v2489
        %v6605 = vunpack.c.h.b16 %v2489
        %v6606 = vunpack.c.l.b16 %v2490
        %v6607 = vunpack.c.h.b16 %v2490
        %v6608 = vunpack.c.l.b16 %v2491
        %v6609 = vunpack.c.h.b16 %v2491
        %v6610 = vunpack.c.l.b16 %v2492
        %v6611 = vunpack.c.h.b16 %v2492
        %v6612 = vunpack.c.l.b16 %v2493
        %v6613 = vunpack.c.h.b16 %v2493
        %v6614 = vunpack.c.l.b16 %v2494
        %v6615 = vunpack.c.h.b16 %v2494
        %v6616 = vunpack.c.l.b16 %v2495
        %v6617 = vunpack.c.h.b16 %v2495
        %v6618 = vunpack.c.l.b16 %v2496
        %v6619 = vunpack.c.h.b16 %v2496
        %v6620 = vunpack.c.l.b16 %v2497
        %v6621 = vunpack.c.h.b16 %v2497
        %v6622 = vunpack.c.l.b16 %v2498
        %v6623 = vunpack.c.h.b16 %v2498
        %v6624 = vunpack.c.l.b16 %v2499
        %v6625 = vunpack.c.h.b16 %v2499
        %v6626 = vunpack.c.l.b16 %v2500
        %v6627 = vunpack.c.h.b16 %v2500
        %v6628 = vunpack.c.l.b16 %v2501
        %v6629 = vunpack.c.h.b16 %v2501
        %v6630 = vunpack.c.l.b16 %v2502
        %v6631 = vunpack.c.h.b16 %v2502
        %v6632 = vunpack.c.l.b16 %v2503
        %v6633 = vunpack.c.h.b16 %v2503
        %v6634 = vunpack.c.l.b16 %v2504
        %v6635 = vunpack.c.h.b16 %v2504
        %v6636 = vunpack.c.l.b16 %v2505
        %v6637 = vunpack.c.h.b16 %v2505
        %v6638 = vunpack.c.l.b16 %v2506
        %v6639 = vunpack.c.h.b16 %v2506
        %v6640 = vunpack.c.l.b16 %v2507
        %v6641 = vunpack.c.h.b16 %v2507
        %v6642 = vunpack.c.l.b16 %v2508
        %v6643 = vunpack.c.h.b16 %v2508
        %v6644 = vunpack.c.l.b16 %v2509
        %v6645 = vunpack.c.h.b16 %v2509
        %v6646 = vunpack.c.l.b16 %v2510
        %v6647 = vunpack.c.h.b16 %v2510
        %v6648 = vunpack.c.l.b16 %v2511
        %v6649 = vunpack.c.h.b16 %v2511
        %v6650 = vunpack.c.l.b16 %v2512
        %v6651 = vunpack.c.h.b16 %v2512
        %v6652 = vunpack.c.l.b16 %v2513
        %v6653 = vunpack.c.h.b16 %v2513
        %v6654 = vunpack.c.l.b16 %v2514
        %v6655 = vunpack.c.h.b16 %v2514
        %v6656 = vunpack.c.l.b16 %v2515
        %v6657 = vunpack.c.h.b16 %v2515
        %v6658 = vunpack.c.l.b16 %v2516
        %v6659 = vunpack.c.h.b16 %v2516
        %v6660 = vunpack.c.l.b16 %v2517
        %v6661 = vunpack.c.h.b16 %v2517
        %v6662 = vunpack.c.l.b16 %v2518
        %v6663 = vunpack.c.h.b16 %v2518
        %v6664 = vunpack.c.l.b16 %v2519
        %v6665 = vunpack.c.h.b16 %v2519
        %v6666 = vunpack.c.l.b16 %v2520
        %v6667 = vunpack.c.h.b16 %v2520
        %v6668 = vunpack.c.l.b16 %v2521
        %v6669 = vunpack.c.h.b16 %v2521
        %v6670 = vunpack.c.l.b16 %v2522
        %v6671 = vunpack.c.h.b16 %v2522
        %v6672 = vunpack.c.l.b16 %v2523
        %v6673 = vunpack.c.h.b16 %v2523
        %v6674 = vunpack.c.l.b16 %v2524
        %v6675 = vunpack.c.h.b16 %v2524
        %v6676 = vunpack.c.l.b16 %v2525
        %v6677 = vunpack.c.h.b16 %v2525
        %v6678 = vunpack.c.l.b16 %v2526
        %v6679 = vunpack.c.h.b16 %v2526
        %v6680 = vunpack.c.l.b16 %v2527
        %v6681 = vunpack.c.h.b16 %v2527
        %v6682 = vunpack.c.l.b16 %v2528
        %v6683 = vunpack.c.h.b16 %v2528
        %v6684 = vunpack.c.l.b16 %v2529
        %v6685 = vunpack.c.h.b16 %v2529
        %v6686 = vunpack.c.l.b16 %v2530
        %v6687 = vunpack.c.h.b16 %v2530
        %v6688 = vunpack.c.l.b16 %v2531
        %v6689 = vunpack.c.h.b16 %v2531
        %v6690 = vunpack.c.l.b16 %v2532
        %v6691 = vunpack.c.h.b16 %v2532
        %v6692 = vunpack.c.l.b16 %v2533
        %v6693 = vunpack.c.h.b16 %v2533
        %v6694 = vunpack.c.l.b16 %v2534
        %v6695 = vunpack.c.h.b16 %v2534
        %v6696 = vunpack.c.l.b16 %v2535
        %v6697 = vunpack.c.h.b16 %v2535
        %v6698 = vunpack.c.l.b16 %v2536
        %v6699 = vunpack.c.h.b16 %v2536
        %v6700 = vunpack.c.l.b16 %v2537
        %v6701 = vunpack.c.h.b16 %v2537
        %v6702 = vunpack.c.l.b16 %v2538
        %v6703 = vunpack.c.h.b16 %v2538
        %v6704 = vunpack.c.l.b16 %v2539
        %v6705 = vunpack.c.h.b16 %v2539
        %v6706 = vunpack.c.l.b16 %v2540
        %v6707 = vunpack.c.h.b16 %v2540
        %v6708 = vunpack.c.l.b16 %v2541
        %v6709 = vunpack.c.h.b16 %v2541
        %v6710 = vunpack.c.l.b16 %v2542
        %v6711 = vunpack.c.h.b16 %v2542
        %v6712 = vunpack.c.l.b16 %v2543
        %v6713 = vunpack.c.h.b16 %v2543
        %v6714 = vunpack.c.l.b16 %v2544
        %v6715 = vunpack.c.h.b16 %v2544
        %v6716 = vunpack.c.l.b16 %v2545
        %v6717 = vunpack.c.h.b16 %v2545
        %v6718 = vunpack.c.l.b16 %v2546
        %v6719 = vunpack.c.h.b16 %v2546
        %v6720 = vunpack.c.l.b16 %v2547
        %v6721 = vunpack.c.h.b16 %v2547
        %v6722 = vunpack.c.l.b16 %v2548
        %v6723 = vunpack.c.h.b16 %v2548
        %v6724 = vunpack.c.l.b16 %v2549
        %v6725 = vunpack.c.h.b16 %v2549
        %v6726 = vunpack.c.l.b16 %v2550
        %v6727 = vunpack.c.h.b16 %v2550
        %v6728 = vunpack.c.l.b16 %v2551
        %v6729 = vunpack.c.h.b16 %v2551
        %v6730 = vunpack.c.l.b16 %v2552
        %v6731 = vunpack.c.h.b16 %v2552
        %v6732 = vunpack.c.l.b16 %v2553
        %v6733 = vunpack.c.h.b16 %v2553
        %v6734 = vunpack.c.l.b16 %v2554
        %v6735 = vunpack.c.h.b16 %v2554
        %v6736 = vunpack.c.l.b16 %v2555
        %v6737 = vunpack.c.h.b16 %v2555
        %v6738 = vunpack.c.l.b16 %v2556
        %v6739 = vunpack.c.h.b16 %v2556
        %v6740 = vunpack.c.l.b16 %v2557
        %v6741 = vunpack.c.h.b16 %v2557
        %v6742 = vunpack.c.l.b16 %v2558
        %v6743 = vunpack.c.h.b16 %v2558
        %v6744 = vunpack.c.l.b16 %v2559
        %v6745 = vunpack.c.h.b16 %v2559
        %v6746 = vunpack.c.l.b16 %v2560
        %v6747 = vunpack.c.h.b16 %v2560
        %v6748 = vunpack.c.l.b16 %v2561
        %v6749 = vunpack.c.h.b16 %v2561
        %v6750 = vunpack.c.l.b16 %v2562
        %v6751 = vunpack.c.h.b16 %v2562
        %v6752 = vunpack.c.l.b16 %v2563
        %v6753 = vunpack.c.h.b16 %v2563
        %v6754 = vunpack.c.l.b16 %v2564
        %v6755 = vunpack.c.h.b16 %v2564
        %v6756 = vunpack.c.l.b16 %v2565
        %v6757 = vunpack.c.h.b16 %v2565
        %v6758 = vunpack.c.l.b16 %v2566
        %v6759 = vunpack.c.h.b16 %v2566
        %v6760 = vunpack.c.l.b16 %v2567
        %v6761 = vunpack.c.h.b16 %v2567
        %v6762 = vunpack.c.l.b16 %v2568
        %v6763 = vunpack.c.h.b16 %v2568
        %v6764 = vunpack.c.l.b16 %v2569
        %v6765 = vunpack.c.h.b16 %v2569
        %v6766 = vunpack.c.l.b16 %v2570
        %v6767 = vunpack.c.h.b16 %v2570
        %v6768 = vunpack.c.l.b16 %v2571
        %v6769 = vunpack.c.h.b16 %v2571
        %v6770 = vunpack.c.l.b16 %v2572
        %v6771 = vunpack.c.h.b16 %v2572
        %v6772 = vunpack.c.l.b16 %v2573
        %v6773 = vunpack.c.h.b16 %v2573
        %v6774 = vunpack.c.l.b16 %v2574
        %v6775 = vunpack.c.h.b16 %v2574
        %v6776 = vunpack.c.l.b16 %v2575
        %v6777 = vunpack.c.h.b16 %v2575
        %v6778 = vunpack.c.l.b16 %v2576
        %v6779 = vunpack.c.h.b16 %v2576
        %v6780 = vunpack.c.l.b16 %v2577
        %v6781 = vunpack.c.h.b16 %v2577
        %v6782 = vunpack.c.l.b16 %v2578
        %v6783 = vunpack.c.h.b16 %v2578
        %v6784 = vunpack.c.l.b16 %v2579
        %v6785 = vunpack.c.h.b16 %v2579
        %v6786 = vunpack.c.l.b16 %v2580
        %v6787 = vunpack.c.h.b16 %v2580
        %v6788 = vunpack.c.l.b16 %v2581
        %v6789 = vunpack.c.h.b16 %v2581
        %v6790 = vunpack.c.l.b16 %v2582
        %v6791 = vunpack.c.h.b16 %v2582
        %v6792 = vunpack.c.l.b16 %v2583
        %v6793 = vunpack.c.h.b16 %v2583
        %v6794 = vunpack.c.l.b16 %v2584
        %v6795 = vunpack.c.h.b16 %v2584
        %v6796 = vunpack.c.l.b16 %v2585
        %v6797 = vunpack.c.h.b16 %v2585
        %v6798 = vunpack.c.l.b16 %v2586
        %v6799 = vunpack.c.h.b16 %v2586
        %v6800 = vunpack.c.l.b16 %v2587
        %v6801 = vunpack.c.h.b16 %v2587
        %v6802 = vunpack.c.l.b16 %v2588
        %v6803 = vunpack.c.h.b16 %v2588
        %v6804 = vunpack.c.l.b16 %v2589
        %v6805 = vunpack.c.h.b16 %v2589
        %v6806 = vunpack.c.l.b16 %v2590
        %v6807 = vunpack.c.h.b16 %v2590
        %v6808 = vunpack.c.l.b16 %v2591
        %v6809 = vunpack.c.h.b16 %v2591
        %v6810 = vunpack.c.l.b16 %v2592
        %v6811 = vunpack.c.h.b16 %v2592
        %v6812 = vunpack.c.l.b16 %v2593
        %v6813 = vunpack.c.h.b16 %v2593
        %v6814 = vunpack.c.l.b16 %v2594
        %v6815 = vunpack.c.h.b16 %v2594
        %v6816 = vunpack.c.l.b16 %v2595
        %v6817 = vunpack.c.h.b16 %v2595
        %v6818 = vunpack.c.l.b16 %v2596
        %v6819 = vunpack.c.h.b16 %v2596
        %v6820 = vunpack.c.l.b16 %v2597
        %v6821 = vunpack.c.h.b16 %v2597
        %v6822 = vunpack.c.l.b16 %v2598
        %v6823 = vunpack.c.h.b16 %v2598
        %v6824 = vunpack.c.l.b16 %v2599
        %v6825 = vunpack.c.h.b16 %v2599
        %v6826 = vunpack.c.l.b16 %v2600
        %v6827 = vunpack.c.h.b16 %v2600
        %v6828 = vunpack.c.l.b16 %v2601
        %v6829 = vunpack.c.h.b16 %v2601
        %v6830 = vunpack.c.l.b16 %v2602
        %v6831 = vunpack.c.h.b16 %v2602
        %v6832 = vunpack.c.l.b16 %v2603
        %v6833 = vunpack.c.h.b16 %v2603
        %v6834 = vunpack.c.l.b16 %v2604
        %v6835 = vunpack.c.h.b16 %v2604
        %v6836 = vunpack.c.l.b16 %v2605
        %v6837 = vunpack.c.h.b16 %v2605
        %v6838 = vunpack.c.l.b16 %v2606
        %v6839 = vunpack.c.h.b16 %v2606
        %v6840 = vunpack.c.l.b16 %v2607
        %v6841 = vunpack.c.h.b16 %v2607
        %v6842 = vunpack.c.l.b16 %v2608
        %v6843 = vunpack.c.h.b16 %v2608
        %v6844 = vunpack.c.l.b16 %v2609
        %v6845 = vunpack.c.h.b16 %v2609
        %v6846 = vunpack.c.l.b16 %v2610
        %v6847 = vunpack.c.h.b16 %v2610
        %v6848 = vunpack.c.l.b16 %v2611
        %v6849 = vunpack.c.h.b16 %v2611
        %v6850 = vunpack.c.l.b16 %v2612
        %v6851 = vunpack.c.h.b16 %v2612
        %v6852 = vunpack.c.l.b16 %v2613
        %v6853 = vunpack.c.h.b16 %v2613
        %v6854 = vunpack.c.l.b16 %v2614
        %v6855 = vunpack.c.h.b16 %v2614
        %v6856 = vunpack.c.l.b16 %v2615
        %v6857 = vunpack.c.h.b16 %v2615
        %v6858 = vunpack.c.l.b16 %v2616
        %v6859 = vunpack.c.h.b16 %v2616
        %v6860 = vunpack.c.l.b16 %v2617
        %v6861 = vunpack.c.h.b16 %v2617
        %v6862 = vunpack.c.l.b16 %v2618
        %v6863 = vunpack.c.h.b16 %v2618
        %v6864 = vunpack.c.l.b16 %v2619
        %v6865 = vunpack.c.h.b16 %v2619
        %v6866 = vunpack.c.l.b16 %v2620
        %v6867 = vunpack.c.h.b16 %v2620
        %v6868 = vunpack.c.l.b16 %v2621
        %v6869 = vunpack.c.h.b16 %v2621
        %v6870 = vunpack.c.l.b16 %v2622
        %v6871 = vunpack.c.h.b16 %v2622
        %v6872 = vunpack.c.l.b16 %v2623
        %v6873 = vunpack.c.h.b16 %v2623
        %v6874 = vunpack.c.l.b16 %v2624
        %v6875 = vunpack.c.h.b16 %v2624
        %v6876 = vunpack.c.l.b16 %v2625
        %v6877 = vunpack.c.h.b16 %v2625
        %v6878 = vunpack.c.l.b16 %v2626
        %v6879 = vunpack.c.h.b16 %v2626
        %v6880 = vunpack.c.l.b16 %v2627
        %v6881 = vunpack.c.h.b16 %v2627
        %v6882 = vunpack.c.l.b16 %v2628
        %v6883 = vunpack.c.h.b16 %v2628
        %v6884 = vunpack.c.l.b16 %v2629
        %v6885 = vunpack.c.h.b16 %v2629
        %v6886 = vunpack.c.l.b16 %v2630
        %v6887 = vunpack.c.h.b16 %v2630
        %v6888 = vunpack.c.l.b16 %v2631
        %v6889 = vunpack.c.h.b16 %v2631
        %v6890 = vunpack.c.l.b16 %v2632
        %v6891 = vunpack.c.h.b16 %v2632
        %v6892 = vunpack.c.l.b16 %v2633
        %v6893 = vunpack.c.h.b16 %v2633
        %v6894 = vunpack.c.l.b16 %v2634
        %v6895 = vunpack.c.h.b16 %v2634
        %v6896 = vunpack.c.l.b16 %v2635
        %v6897 = vunpack.c.h.b16 %v2635
        %v6898 = vunpack.c.l.b16 %v2636
        %v6899 = vunpack.c.h.b16 %v2636
        %v6900 = vunpack.c.l.b16 %v2637
        %v6901 = vunpack.c.h.b16 %v2637
        %v6902 = vunpack.c.l.b16 %v2638
        %v6903 = vunpack.c.h.b16 %v2638
        %v6904 = vunpack.c.l.b16 %v2639
        %v6905 = vunpack.c.h.b16 %v2639
        %v6906 = vunpack.c.l.b16 %v2640
        %v6907 = vunpack.c.h.b16 %v2640
        %v6908 = vunpack.c.l.b16 %v2641
        %v6909 = vunpack.c.h.b16 %v2641
        %v6910 = vunpack.c.l.b16 %v2642
        %v6911 = vunpack.c.h.b16 %v2642
        %v6912 = vunpack.c.l.b16 %v2643
        %v6913 = vunpack.c.h.b16 %v2643
        %v6914 = vunpack.c.l.b16 %v2644
        %v6915 = vunpack.c.h.b16 %v2644
        %v6916 = vunpack.c.l.b16 %v2645
        %v6917 = vunpack.c.h.b16 %v2645
        %v6918 = vunpack.c.l.b16 %v2646
        %v6919 = vunpack.c.h.b16 %v2646
        %v6920 = vunpack.c.l.b16 %v2647
        %v6921 = vunpack.c.h.b16 %v2647
        %v6922 = vunpack.c.l.b16 %v2648
        %v6923 = vunpack.c.h.b16 %v2648
        %v6924 = vunpack.c.l.b16 %v2649
        %v6925 = vunpack.c.h.b16 %v2649
        %v6926 = vunpack.c.l.b16 %v2650
        %v6927 = vunpack.c.h.b16 %v2650
        %v6928 = vunpack.c.l.b16 %v2651
        %v6929 = vunpack.c.h.b16 %v2651
        %v6930 = vunpack.c.l.b16 %v2652
        %v6931 = vunpack.c.h.b16 %v2652
        %v6932 = vunpack.c.l.b16 %v2653
        %v6933 = vunpack.c.h.b16 %v2653
        %v6934 = vunpack.c.l.b16 %v2654
        %v6935 = vunpack.c.h.b16 %v2654
        %v6936 = vunpack.c.l.b16 %v2655
        %v6937 = vunpack.c.h.b16 %v2655
        %v6938 = vunpack.c.l.b16 %v2656
        %v6939 = vunpack.c.h.b16 %v2656
        %v6940 = vunpack.c.l.b16 %v2657
        %v6941 = vunpack.c.h.b16 %v2657
        %v6942 = vunpack.c.l.b16 %v2658
        %v6943 = vunpack.c.h.b16 %v2658
        %v6944 = vunpack.c.l.b16 %v2659
        %v6945 = vunpack.c.h.b16 %v2659
        %v6946 = vunpack.c.l.b16 %v2660
        %v6947 = vunpack.c.h.b16 %v2660
        %v6948 = vunpack.c.l.b16 %v2661
        %v6949 = vunpack.c.h.b16 %v2661
        %v6950 = vunpack.c.l.b16 %v2662
        %v6951 = vunpack.c.h.b16 %v2662
        %v6952 = vunpack.c.l.b16 %v2663
        %v6953 = vunpack.c.h.b16 %v2663
        %v6954 = vunpack.c.l.b16 %v2664
        %v6955 = vunpack.c.h.b16 %v2664
        %v6956 = vunpack.c.l.b16 %v2665
        %v6957 = vunpack.c.h.b16 %v2665
        %v6958 = vunpack.c.l.b16 %v2666
        %v6959 = vunpack.c.h.b16 %v2666
        %v6960 = vunpack.c.l.b16 %v2667
        %v6961 = vunpack.c.h.b16 %v2667
        %v6962 = vunpack.c.l.b16 %v2668
        %v6963 = vunpack.c.h.b16 %v2668
        %v6964 = vunpack.c.l.b16 %v2669
        %v6965 = vunpack.c.h.b16 %v2669
        %v6966 = vunpack.c.l.b16 %v2670
        %v6967 = vunpack.c.h.b16 %v2670
        %v6968 = vunpack.c.l.b16 %v2671
        %v6969 = vunpack.c.h.b16 %v2671
        %v6970 = vunpack.c.l.b16 %v2672
        %v6971 = vunpack.c.h.b16 %v2672
        %v6972 = vunpack.c.l.b16 %v2673
        %v6973 = vunpack.c.h.b16 %v2673
        %v6974 = vunpack.c.l.b16 %v2674
        %v6975 = vunpack.c.h.b16 %v2674
        %v6976 = vunpack.c.l.b16 %v2675
        %v6977 = vunpack.c.h.b16 %v2675
        %v6978 = vunpack.c.l.b16 %v2676
        %v6979 = vunpack.c.h.b16 %v2676
        %v6980 = vunpack.c.l.b16 %v2677
        %v6981 = vunpack.c.h.b16 %v2677
        %v6982 = vunpack.c.l.b16 %v2678
        %v6983 = vunpack.c.h.b16 %v2678
        %v6984 = vunpack.c.l.b16 %v2679
        %v6985 = vunpack.c.h.b16 %v2679
        %v6986 = vunpack.c.l.b16 %v2680
        %v6987 = vunpack.c.h.b16 %v2680
        %v6988 = vunpack.c.l.b16 %v2681
        %v6989 = vunpack.c.h.b16 %v2681
        %v6990 = vunpack.c.l.b16 %v2682
        %v6991 = vunpack.c.h.b16 %v2682
        %v6992 = vunpack.c.l.b16 %v2683
        %v6993 = vunpack.c.h.b16 %v2683
        %v6994 = vunpack.c.l.b16 %v2684
        %v6995 = vunpack.c.h.b16 %v2684
        %v6996 = vunpack.c.l.b16 %v2685
        %v6997 = vunpack.c.h.b16 %v2685
        %v6998 = vunpack.c.l.b16 %v2686
        %v6999 = vunpack.c.h.b16 %v2686
        %v7000 = vunpack.c.l.b16 %v2687
        %v7001 = vunpack.c.h.b16 %v2687
        %v7002 = vunpack.c.l.b16 %v2688
        %v7003 = vunpack.c.h.b16 %v2688
        %v7004 = vunpack.c.l.b16 %v2689
        %v7005 = vunpack.c.h.b16 %v2689
        %v7006 = vunpack.c.l.b16 %v2690
        %v7007 = vunpack.c.h.b16 %v2690
        %v7008 = vunpack.c.l.b16 %v2691
        %v7009 = vunpack.c.h.b16 %v2691
        %v7010 = vunpack.c.l.b16 %v2692
        %v7011 = vunpack.c.h.b16 %v2692
        %v7012 = vunpack.c.l.b16 %v2693
        %v7013 = vunpack.c.h.b16 %v2693
        %v7014 = vunpack.c.l.b16 %v2694
        %v7015 = vunpack.c.h.b16 %v2694
        %v7016 = vunpack.c.l.b16 %v2695
        %v7017 = vunpack.c.h.b16 %v2695
        %v7018 = vunpack.c.l.b16 %v2696
        %v7019 = vunpack.c.h.b16 %v2696
        %v7020 = vunpack.c.l.b16 %v2697
        %v7021 = vunpack.c.h.b16 %v2697
        %v7022 = vunpack.c.l.b16 %v2698
        %v7023 = vunpack.c.h.b16 %v2698
        %v7024 = vunpack.c.l.b16 %v2699
        %v7025 = vunpack.c.h.b16 %v2699
        %v7026 = vunpack.c.l.b16 %v2700
        %v7027 = vunpack.c.h.b16 %v2700
        %v7028 = vunpack.c.l.b16 %v2701
        %v7029 = vunpack.c.h.b16 %v2701
        %v7030 = vunpack.c.l.b16 %v2702
        %v7031 = vunpack.c.h.b16 %v2702
        %v7032 = vunpack.c.l.b16 %v2703
        %v7033 = vunpack.c.h.b16 %v2703
        %v7034 = vunpack.c.l.b16 %v2704
        %v7035 = vunpack.c.h.b16 %v2704
        %v7036 = vunpack.c.l.b16 %v2705
        %v7037 = vunpack.c.h.b16 %v2705
        %v7038 = vunpack.c.l.b16 %v2706
        %v7039 = vunpack.c.h.b16 %v2706
        %v7040 = vunpack.c.l.b16 %v2707
        %v7041 = vunpack.c.h.b16 %v2707
        %v7042 = vunpack.c.l.b16 %v2708
        %v7043 = vunpack.c.h.b16 %v2708
        %v7044 = vunpack.c.l.b16 %v2709
        %v7045 = vunpack.c.h.b16 %v2709
        %v7046 = vunpack.c.l.b16 %v2710
        %v7047 = vunpack.c.h.b16 %v2710
        %v7048 = vunpack.c.l.b16 %v2711
        %v7049 = vunpack.c.h.b16 %v2711
        %v7050 = vunpack.c.l.b16 %v2712
        %v7051 = vunpack.c.h.b16 %v2712
        %v7052 = vunpack.c.l.b16 %v2713
        %v7053 = vunpack.c.h.b16 %v2713
        %v7054 = vunpack.c.l.b16 %v2714
        %v7055 = vunpack.c.h.b16 %v2714
        %v7056 = vunpack.c.l.b16 %v2715
        %v7057 = vunpack.c.h.b16 %v2715
        %v7058 = vunpack.c.l.b16 %v2716
        %v7059 = vunpack.c.h.b16 %v2716
        %v7060 = vunpack.c.l.b16 %v2717
        %v7061 = vunpack.c.h.b16 %v2717
        %v7062 = vunpack.c.l.b16 %v2718
        %v7063 = vunpack.c.h.b16 %v2718
        %v7064 = vunpack.c.l.b16 %v2719
        %v7065 = vunpack.c.h.b16 %v2719
        %v7066 = vunpack.c.l.b16 %v2720
        %v7067 = vunpack.c.h.b16 %v2720
        %v7068 = vunpack.c.l.b16 %v2721
        %v7069 = vunpack.c.h.b16 %v2721
        %v7070 = vunpack.c.l.b16 %v2722
        %v7071 = vunpack.c.h.b16 %v2722
        %v7072 = vunpack.c.l.b16 %v2723
        %v7073 = vunpack.c.h.b16 %v2723
        %v7074 = vunpack.c.l.b16 %v2724
        %v7075 = vunpack.c.h.b16 %v2724
        %v7076 = vunpack.c.l.b16 %v2725
        %v7077 = vunpack.c.h.b16 %v2725
        %v7078 = vunpack.c.l.b16 %v2726
        %v7079 = vunpack.c.h.b16 %v2726
        %v7080 = vunpack.c.l.b16 %v2727
        %v7081 = vunpack.c.h.b16 %v2727
        %v7082 = vunpack.c.l.b16 %v2728
        %v7083 = vunpack.c.h.b16 %v2728
        %v7084 = vunpack.c.l.b16 %v2729
        %v7085 = vunpack.c.h.b16 %v2729
        %v7086 = vunpack.c.l.b16 %v2730
        %v7087 = vunpack.c.h.b16 %v2730
        %v7088 = vunpack.c.l.b16 %v2731
        %v7089 = vunpack.c.h.b16 %v2731
        %v7090 = vunpack.c.l.b16 %v2732
        %v7091 = vunpack.c.h.b16 %v2732
        %v7092 = vunpack.c.l.b16 %v2733
        %v7093 = vunpack.c.h.b16 %v2733
        %v7094 = vunpack.c.l.b16 %v2734
        %v7095 = vunpack.c.h.b16 %v2734
        %v7096 = vunpack.c.l.b16 %v2735
        %v7097 = vunpack.c.h.b16 %v2735
        %v7098 = vunpack.c.l.b16 %v2736
        %v7099 = vunpack.c.h.b16 %v2736
        %v7100 = vunpack.c.l.b16 %v2737
        %v7101 = vunpack.c.h.b16 %v2737
        %v7102 = vunpack.c.l.b16 %v2738
        %v7103 = vunpack.c.h.b16 %v2738
        %v7104 = vunpack.c.l.b16 %v2739
        %v7105 = vunpack.c.h.b16 %v2739
        %v7106 = vunpack.c.l.b16 %v2740
        %v7107 = vunpack.c.h.b16 %v2740
        %v7108 = vunpack.c.l.b16 %v2741
        %v7109 = vunpack.c.h.b16 %v2741
        %v7110 = vunpack.c.l.b16 %v2742
        %v7111 = vunpack.c.h.b16 %v2742
        %v7112 = vunpack.c.l.b16 %v2743
        %v7113 = vunpack.c.h.b16 %v2743
        %v7114 = vunpack.c.l.b16 %v2744
        %v7115 = vunpack.c.h.b16 %v2744
        %v7116 = vunpack.c.l.b16 %v2745
        %v7117 = vunpack.c.h.b16 %v2745
        %v7118 = vunpack.c.l.b16 %v2746
        %v7119 = vunpack.c.h.b16 %v2746
        %v7120 = vunpack.c.l.b16 %v2747
        %v7121 = vunpack.c.h.b16 %v2747
        %v7122 = vunpack.c.l.b16 %v2748
        %v7123 = vunpack.c.h.b16 %v2748
        %v7124 = vunpack.c.l.b16 %v2749
        %v7125 = vunpack.c.h.b16 %v2749
        %v7126 = vunpack.c.l.b16 %v2750
        %v7127 = vunpack.c.h.b16 %v2750
        %v7128 = vunpack.c.l.b16 %v2751
        %v7129 = vunpack.c.h.b16 %v2751
        %v7130 = vunpack.c.l.b16 %v2752
        %v7131 = vunpack.c.h.b16 %v2752
        %v7132 = vunpack.c.l.b16 %v2753
        %v7133 = vunpack.c.h.b16 %v2753
        %v7134 = vunpack.c.l.b16 %v2754
        %v7135 = vunpack.c.h.b16 %v2754
        %v7136 = vunpack.c.l.b16 %v2755
        %v7137 = vunpack.c.h.b16 %v2755
        %v7138 = vunpack.c.l.b16 %v2756
        %v7139 = vunpack.c.h.b16 %v2756
        %v7140 = vunpack.c.l.b16 %v2757
        %v7141 = vunpack.c.h.b16 %v2757
        %v7142 = vunpack.c.l.b16 %v2758
        %v7143 = vunpack.c.h.b16 %v2758
        %v7144 = vunpack.c.l.b16 %v2759
        %v7145 = vunpack.c.h.b16 %v2759
        %v7146 = vunpack.c.l.b16 %v2760
        %v7147 = vunpack.c.h.b16 %v2760
        %v7148 = vunpack.c.l.b16 %v2761
        %v7149 = vunpack.c.h.b16 %v2761
        %v7150 = vunpack.c.l.b16 %v2762
        %v7151 = vunpack.c.h.b16 %v2762
        %v7152 = vunpack.c.l.b16 %v2763
        %v7153 = vunpack.c.h.b16 %v2763
        %v7154 = vunpack.c.l.b16 %v2764
        %v7155 = vunpack.c.h.b16 %v2764
        %v7156 = vunpack.c.l.b16 %v2765
        %v7157 = vunpack.c.h.b16 %v2765
        %v7158 = vunpack.c.l.b16 %v2766
        %v7159 = vunpack.c.h.b16 %v2766
        %v7160 = vunpack.c.l.b16 %v2767
        %v7161 = vunpack.c.h.b16 %v2767
        %v7162 = vunpack.c.l.b16 %v2768
        %v7163 = vunpack.c.h.b16 %v2768
        %v7164 = vunpack.c.l.b16 %v2769
        %v7165 = vunpack.c.h.b16 %v2769
        %v7166 = vunpack.c.l.b16 %v2770
        %v7167 = vunpack.c.h.b16 %v2770
        %v7168 = vunpack.c.l.b16 %v2771
        %v7169 = vunpack.c.h.b16 %v2771
        %v7170 = vunpack.c.l.b16 %v2772
        %v7171 = vunpack.c.h.b16 %v2772
        %v7172 = vunpack.c.l.b16 %v2773
        %v7173 = vunpack.c.h.b16 %v2773
        %v7174 = vunpack.c.l.b16 %v2774
        %v7175 = vunpack.c.h.b16 %v2774
        %v7176 = vunpack.c.l.b16 %v2775
        %v7177 = vunpack.c.h.b16 %v2775
        %v7178 = vunpack.c.l.b16 %v2776
        %v7179 = vunpack.c.h.b16 %v2776
        %v7180 = vunpack.c.l.b16 %v2777
        %v7181 = vunpack.c.h.b16 %v2777
        %v7182 = vunpack.c.l.b16 %v2778
        %v7183 = vunpack.c.h.b16 %v2778
        %v7184 = vunpack.c.l.b16 %v2779
        %v7185 = vunpack.c.h.b16 %v2779
        %v7186 = vunpack.c.l.b16 %v2780
        %v7187 = vunpack.c.h.b16 %v2780
        %v7188 = vunpack.c.l.b16 %v2781
        %v7189 = vunpack.c.h.b16 %v2781
        %v7190 = vunpack.c.l.b16 %v2782
        %v7191 = vunpack.c.h.b16 %v2782
        %v7192 = vunpack.c.l.b16 %v2783
        %v7193 = vunpack.c.h.b16 %v2783
        %v7194 = vunpack.c.l.b16 %v2784
        %v7195 = vunpack.c.h.b16 %v2784
        %v7196 = vunpack.c.l.b16 %v2785
        %v7197 = vunpack.c.h.b16 %v2785
        %v7198 = vunpack.c.l.b16 %v2786
        %v7199 = vunpack.c.h.b16 %v2786
        %v7200 = vunpack.c.l.b16 %v2787
        %v7201 = vunpack.c.h.b16 %v2787
        %v7202 = vunpack.c.l.b16 %v2788
        %v7203 = vunpack.c.h.b16 %v2788
        %v7204 = vunpack.c.l.b16 %v2789
        %v7205 = vunpack.c.h.b16 %v2789
        %v7206 = vunpack.c.l.b16 %v2790
        %v7207 = vunpack.c.h.b16 %v2790
        %v7208 = vunpack.c.l.b16 %v2791
        %v7209 = vunpack.c.h.b16 %v2791
        %v7210 = vunpack.c.l.b16 %v2792
        %v7211 = vunpack.c.h.b16 %v2792
        %v7212 = vunpack.c.l.b16 %v2793
        %v7213 = vunpack.c.h.b16 %v2793
        %v7214 = vunpack.c.l.b16 %v2794
        %v7215 = vunpack.c.h.b16 %v2794
        %v7216 = vunpack.c.l.b16 %v2795
        %v7217 = vunpack.c.h.b16 %v2795
        %v7218 = vunpack.c.l.b16 %v2796
        %v7219 = vunpack.c.h.b16 %v2796
        %v7220 = vunpack.c.l.b16 %v2797
        %v7221 = vunpack.c.h.b16 %v2797
        %v7222 = vunpack.c.l.b16 %v2798
        %v7223 = vunpack.c.h.b16 %v2798
        %v7224 = vunpack.c.l.b16 %v2799
        %v7225 = vunpack.c.h.b16 %v2799
        %v7226 = vunpack.c.l.b16 %v2800
        %v7227 = vunpack.c.h.b16 %v2800
        %v7228 = vunpack.c.l.b16 %v2801
        %v7229 = vunpack.c.h.b16 %v2801
        %v7230 = vunpack.c.l.b16 %v2802
        %v7231 = vunpack.c.h.b16 %v2802
        %v7232 = vunpack.c.l.b16 %v2803
        %v7233 = vunpack.c.h.b16 %v2803
        %v7234 = vunpack.c.l.b16 %v2804
        %v7235 = vunpack.c.h.b16 %v2804
        %v7236 = vunpack.c.l.b16 %v2805
        %v7237 = vunpack.c.h.b16 %v2805
        %v7238 = vunpack.c.l.b16 %v2806
        %v7239 = vunpack.c.h.b16 %v2806
        %v7240 = vunpack.c.l.b16 %v2807
        %v7241 = vunpack.c.h.b16 %v2807
        %v7242 = vunpack.c.l.b16 %v2808
        %v7243 = vunpack.c.h.b16 %v2808
        %v7244 = vunpack.c.l.b16 %v2809
        %v7245 = vunpack.c.h.b16 %v2809
        %v7246 = vunpack.c.l.b16 %v2810
        %v7247 = vunpack.c.h.b16 %v2810
        %v7248 = vunpack.c.l.b16 %v2811
        %v7249 = vunpack.c.h.b16 %v2811
        %v7250 = vunpack.c.l.b16 %v2812
        %v7251 = vunpack.c.h.b16 %v2812
        %v7252 = vunpack.c.l.b16 %v2813
        %v7253 = vunpack.c.h.b16 %v2813
        %v7254 = vunpack.c.l.b16 %v2814
        %v7255 = vunpack.c.h.b16 %v2814
        %v7256 = vunpack.c.l.b16 %v2815
        %v7257 = vunpack.c.h.b16 %v2815
        %v7258 = vunpack.c.l.b16 %v2816
        %v7259 = vunpack.c.h.b16 %v2816
        %v7260 = vunpack.c.l.b16 %v2817
        %v7261 = vunpack.c.h.b16 %v2817
        %v7262 = vunpack.c.l.b16 %v2818
        %v7263 = vunpack.c.h.b16 %v2818
        %v7264 = vunpack.c.l.b16 %v2819
        %v7265 = vunpack.c.h.b16 %v2819
        %v7266 = vunpack.c.l.b16 %v2820
        %v7267 = vunpack.c.h.b16 %v2820
        %v7268 = vunpack.c.l.b16 %v2821
        %v7269 = vunpack.c.h.b16 %v2821
        %v7270 = vunpack.c.l.b16 %v2822
        %v7271 = vunpack.c.h.b16 %v2822
        %v7272 = vunpack.c.l.b16 %v2823
        %v7273 = vunpack.c.h.b16 %v2823
        %v7274 = vunpack.c.l.b16 %v2824
        %v7275 = vunpack.c.h.b16 %v2824
        %v7276 = vunpack.c.l.b16 %v2825
        %v7277 = vunpack.c.h.b16 %v2825
        %v7278 = vunpack.c.l.b16 %v2826
        %v7279 = vunpack.c.h.b16 %v2826
        %v7280 = vunpack.c.l.b16 %v2827
        %v7281 = vunpack.c.h.b16 %v2827
        %v7282 = vunpack.c.l.b16 %v2828
        %v7283 = vunpack.c.h.b16 %v2828
        %v7284 = vunpack.c.l.b16 %v2829
        %v7285 = vunpack.c.h.b16 %v2829
        %v7286 = vpack.c.b16 %v4514, %v4470
        %v7287 = vpack.c.b16 %v4515, %v4471
        %v7288 = vpack.c.b16 %v4516, %v4472
        %v7289 = vpack.c.b16 %v4517, %v4473
        %v7290 = vpack.c.b16 %v4518, %v4474
        %v7291 = vpack.c.b16 %v4519, %v4475
        %v7292 = vpack.c.b16 %v4520, %v4476
        %v7293 = vpack.c.b16 %v4521, %v4477
        %v7294 = vpack.c.b16 %v4522, %v4478
        %v7295 = vpack.c.b16 %v4523, %v4479
        %v7296 = vpack.c.b16 %v4524, %v4480
        %v7297 = vpack.c.b16 %v4525, %v4481
        %v7298 = vpack.c.b16 %v4526, %v4482
        %v7299 = vpack.c.b16 %v4527, %v4483
        %v7300 = vpack.c.b16 %v4528, %v4484
        %v7301 = vpack.c.b16 %v4529, %v4485
        %v7302 = vpack.c.b16 %v4530, %v4486
        %v7303 = vpack.c.b16 %v4531, %v4487
        %v7304 = vpack.c.b16 %v4532, %v4488
        %v7305 = vpack.c.b16 %v4533, %v4489
        %v7306 = vpack.c.b16 %v4534, %v4490
        %v7307 = vpack.c.b16 %v4535, %v4491
        %v7308 = vpack.c.b16 %v4536, %v4492
        %v7309 = vpack.c.b16 %v4537, %v4493
        %v7310 = vpack.c.b16 %v4538, %v4494
        %v7311 = vpack.c.b16 %v4539, %v4495
        %v7312 = vpack.c.b16 %v4540, %v4496
        %v7313 = vpack.c.b16 %v4541, %v4497
        %v7314 = vpack.c.b16 %v4542, %v4498
        %v7315 = vpack.c.b16 %v4543, %v4499
        %v7316 = vpack.c.b16 %v4544, %v4500
        %v7317 = vpack.c.b16 %v4545, %v4501
        %v7318 = vpack.c.b16 %v4546, %v4502
        %v7319 = vpack.c.b16 %v4547, %v4503
        %v7320 = vpack.c.b16 %v4548, %v4504
        %v7321 = vpack.c.b16 %v4549, %v4505
        %v7322 = vpack.c.b16 %v4550, %v4506
        %v7323 = vpack.c.b16 %v4551, %v4507
        %v7324 = vpack.c.b16 %v4552, %v4508
        %v7325 = vpack.c.b16 %v4553, %v4509
        %v7326 = vpack.c.b16 %v4554, %v4510
        %v7327 = vpack.c.b16 %v4555, %v4511
        %v7328 = vpack.c.b16 %v4556, %v4512
        %v7329 = vpack.c.b16 %v4557, %v4513
        %v7330 = vpack.c.b16 %v4602, %v4558
        %v7331 = vpack.c.b16 %v4603, %v4559
        %v7332 = vpack.c.b16 %v4604, %v4560
        %v7333 = vpack.c.b16 %v4605, %v4561
        %v7334 = vpack.c.b16 %v4606, %v4562
        %v7335 = vpack.c.b16 %v4607, %v4563
        %v7336 = vpack.c.b16 %v4608, %v4564
        %v7337 = vpack.c.b16 %v4609, %v4565
        %v7338 = vpack.c.b16 %v4610, %v4566
        %v7339 = vpack.c.b16 %v4611, %v4567
        %v7340 = vpack.c.b16 %v4612, %v4568
        %v7341 = vpack.c.b16 %v4613, %v4569
        %v7342 = vpack.c.b16 %v4614, %v4570
        %v7343 = vpack.c.b16 %v4615, %v4571
        %v7344 = vpack.c.b16 %v4616, %v4572
        %v7345 = vpack.c.b16 %v4617, %v4573
        %v7346 = vpack.c.b16 %v4618, %v4574
        %v7347 = vpack.c.b16 %v4619, %v4575
        %v7348 = vpack.c.b16 %v4620, %v4576
        %v7349 = vpack.c.b16 %v4621, %v4577
        %v7350 = vpack.c.b16 %v4622, %v4578
        %v7351 = vpack.c.b16 %v4623, %v4579
        %v7352 = vpack.c.b16 %v4624, %v4580
        %v7353 = vpack.c.b16 %v4625, %v4581
        %v7354 = vpack.c.b16 %v4626, %v4582
        %v7355 = vpack.c.b16 %v4627, %v4583
        %v7356 = vpack.c.b16 %v4628, %v4584
        %v7357 = vpack.c.b16 %v4629, %v4585
        %v7358 = vpack.c.b16 %v4630, %v4586
        %v7359 = vpack.c.b16 %v4631, %v4587
        %v7360 = vpack.c.b16 %v4632, %v4588
        %v7361 = vpack.c.b16 %v4633, %v4589
        %v7362 = vpack.c.b16 %v4634, %v4590
        %v7363 = vpack.c.b16 %v4635, %v4591
        %v7364 = vpack.c.b16 %v4636, %v4592
        %v7365 = vpack.c.b16 %v4637, %v4593
        %v7366 = vpack.c.b16 %v4638, %v4594
        %v7367 = vpack.c.b16 %v4639, %v4595
        %v7368 = vpack.c.b16 %v4640, %v4596
        %v7369 = vpack.c.b16 %v4641, %v4597
        %v7370 = vpack.c.b16 %v4642, %v4598
        %v7371 = vpack.c.b16 %v4643, %v4599
        %v7372 = vpack.c.b16 %v4644, %v4600
        %v7373 = vpack.c.b16 %v4645, %v4601
        %v7374 = vpack.c.b16 %v4690, %v4646
        %v7375 = vpack.c.b16 %v4691, %v4647
        %v7376 = vpack.c.b16 %v4692, %v4648
        %v7377 = vpack.c.b16 %v4693, %v4649
        %v7378 = vpack.c.b16 %v4694, %v4650
        %v7379 = vpack.c.b16 %v4695, %v4651
        %v7380 = vpack.c.b16 %v4696, %v4652
        %v7381 = vpack.c.b16 %v4697, %v4653
        %v7382 = vpack.c.b16 %v4698, %v4654
        %v7383 = vpack.c.b16 %v4699, %v4655
        %v7384 = vpack.c.b16 %v4700, %v4656
        %v7385 = vpack.c.b16 %v4701, %v4657
        %v7386 = vpack.c.b16 %v4702, %v4658
        %v7387 = vpack.c.b16 %v4703, %v4659
        %v7388 = vpack.c.b16 %v4704, %v4660
        %v7389 = vpack.c.b16 %v4705, %v4661
        %v7390 = vpack.c.b16 %v4706, %v4662
        %v7391 = vpack.c.b16 %v4707, %v4663
        %v7392 = vpack.c.b16 %v4708, %v4664
        %v7393 = vpack.c.b16 %v4709, %v4665
        %v7394 = vpack.c.b16 %v4710, %v4666
        %v7395 = vpack.c.b16 %v4711, %v4667
        %v7396 = vpack.c.b16 %v4712, %v4668
        %v7397 = vpack.c.b16 %v4713, %v4669
        %v7398 = vpack.c.b16 %v4714, %v4670
        %v7399 = vpack.c.b16 %v4715, %v4671
        %v7400 = vpack.c.b16 %v4716, %v4672
        %v7401 = vpack.c.b16 %v4717, %v4673
        %v7402 = vpack.c.b16 %v4718, %v4674
        %v7403 = vpack.c.b16 %v4719, %v4675
        %v7404 = vpack.c.b16 %v4720, %v4676
        %v7405 = vpack.c.b16 %v4721, %v4677
        %v7406 = vpack.c.b16 %v4722, %v4678
        %v7407 = vpack.c.b16 %v4723, %v4679
        %v7408 = vpack.c.b16 %v4724, %v4680
        %v7409 = vpack.c.b16 %v4725, %v4681
        %v7410 = vpack.c.b16 %v4726, %v4682
        %v7411 = vpack.c.b16 %v4727, %v4683
        %v7412 = vpack.c.b16 %v4728, %v4684
        %v7413 = vpack.c.b16 %v4729, %v4685
        %v7414 = vpack.c.b16 %v4730, %v4686
        %v7415 = vpack.c.b16 %v4731, %v4687
        %v7416 = vpack.c.b16 %v4732, %v4688
        %v7417 = vpack.c.b16 %v4733, %v4689
        %v7418 = vpack.c.b16 %v4778, %v4734
        %v7419 = vpack.c.b16 %v4779, %v4735
        %v7420 = vpack.c.b16 %v4780, %v4736
        %v7421 = vpack.c.b16 %v4781, %v4737
        %v7422 = vpack.c.b16 %v4782, %v4738
        %v7423 = vpack.c.b16 %v4783, %v4739
        %v7424 = vpack.c.b16 %v4784, %v4740
        %v7425 = vpack.c.b16 %v4785, %v4741
        %v7426 = vpack.c.b16 %v4786, %v4742
        %v7427 = vpack.c.b16 %v4787, %v4743
        %v7428 = vpack.c.b16 %v4788, %v4744
        %v7429 = vpack.c.b16 %v4789, %v4745
        %v7430 = vpack.c.b16 %v4790, %v4746
        %v7431 = vpack.c.b16 %v4791, %v4747
        %v7432 = vpack.c.b16 %v4792, %v4748
        %v7433 = vpack.c.b16 %v4793, %v4749
        %v7434 = vpack.c.b16 %v4794, %v4750
        %v7435 = vpack.c.b16 %v4795, %v4751
        %v7436 = vpack.c.b16 %v4796, %v4752
        %v7437 = vpack.c.b16 %v4797, %v4753
        %v7438 = vpack.c.b16 %v4798, %v4754
        %v7439 = vpack.c.b16 %v4799, %v4755
        %v7440 = vpack.c.b16 %v4800, %v4756
        %v7441 = vpack.c.b16 %v4801, %v4757
        %v7442 = vpack.c.b16 %v4802, %v4758
        %v7443 = vpack.c.b16 %v4803, %v4759
        %v7444 = vpack.c.b16 %v4804, %v4760
        %v7445 = vpack.c.b16 %v4805, %v4761
        %v7446 = vpack.c.b16 %v4806, %v4762
        %v7447 = vpack.c.b16 %v4807, %v4763
        %v7448 = vpack.c.b16 %v4808, %v4764
        %v7449 = vpack.c.b16 %v4809, %v4765
        %v7450 = vpack.c.b16 %v4810, %v4766
        %v7451 = vpack.c.b16 %v4811, %v4767
        %v7452 = vpack.c.b16 %v4812, %v4768
        %v7453 = vpack.c.b16 %v4813, %v4769
        %v7454 = vpack.c.b16 %v4814, %v4770
        %v7455 = vpack.c.b16 %v4815, %v4771
        %v7456 = vpack.c.b16 %v4816, %v4772
        %v7457 = vpack.c.b16 %v4817, %v4773
        %v7458 = vpack.c.b16 %v4818, %v4774
        %v7459 = vpack.c.b16 %v4819, %v4775
        %v7460 = vpack.c.b16 %v4820, %v4776
        %v7461 = vpack.c.b16 %v4821, %v4777
        %v7462 = vpack.c.b16 %v4866, %v4822
        %v7463 = vpack.c.b16 %v4867, %v4823
        %v7464 = vpack.c.b16 %v4868, %v4824
        %v7465 = vpack.c.b16 %v4869, %v4825
        %v7466 = vpack.c.b16 %v4870, %v4826
        %v7467 = vpack.c.b16 %v4871, %v4827
        %v7468 = vpack.c.b16 %v4872, %v4828
        %v7469 = vpack.c.b16 %v4873, %v4829
        %v7470 = vpack.c.b16 %v4874, %v4830
        %v7471 = vpack.c.b16 %v4875, %v4831
        %v7472 = vpack.c.b16 %v4876, %v4832
        %v7473 = vpack.c.b16 %v4877, %v4833
        %v7474 = vpack.c.b16 %v4878, %v4834
        %v7475 = vpack.c.b16 %v4879, %v4835
        %v7476 = vpack.c.b16 %v4880, %v4836
        %v7477 = vpack.c.b16 %v4881, %v4837
        %v7478 = vpack.c.b16 %v4882, %v4838
        %v7479 = vpack.c.b16 %v4883, %v4839
        %v7480 = vpack.c.b16 %v4884, %v4840
        %v7481 = vpack.c.b16 %v4885, %v4841
        %v7482 = vpack.c.b16 %v4886, %v4842
        %v7483 = vpack.c.b16 %v4887, %v4843
        %v7484 = vpack.c.b16 %v4888, %v4844
        %v7485 = vpack.c.b16 %v4889, %v4845
        %v7486 = vpack.c.b16 %v4890, %v4846
        %v7487 = vpack.c.b16 %v4891, %v4847
        %v7488 = vpack.c.b16 %v4892, %v4848
        %v7489 = vpack.c.b16 %v4893, %v4849
        %v7490 = vpack.c.b16 %v4894, %v4850
        %v7491 = vpack.c.b16 %v4895, %v4851
        %v7492 = vpack.c.b16 %v4896, %v4852
        %v7493 = vpack.c.b16 %v4897, %v4853
        %v7494 = vpack.c.b16 %v4898, %v4854
        %v7495 = vpack.c.b16 %v4899, %v4855
        %v7496 = vpack.c.b16 %v4900, %v4856
        %v7497 = vpack.c.b16 %v4901, %v4857
        %v7498 = vpack.c.b16 %v4902, %v4858
        %v7499 = vpack.c.b16 %v4903, %v4859
        %v7500 = vpack.c.b16 %v4904, %v4860
        %v7501 = vpack.c.b16 %v4905, %v4861
        %v7502 = vpack.c.b16 %v4906, %v4862
        %v7503 = vpack.c.b16 %v4907, %v4863
        %v7504 = vpack.c.b16 %v4908, %v4864
        %v7505 = vpack.c.b16 %v4909, %v4865
        %v7506 = vpack.c.b16 %v4954, %v4910
        %v7507 = vpack.c.b16 %v4955, %v4911
        %v7508 = vpack.c.b16 %v4956, %v4912
        %v7509 = vpack.c.b16 %v4957, %v4913
        %v7510 = vpack.c.b16 %v4958, %v4914
        %v7511 = vpack.c.b16 %v4959, %v4915
        %v7512 = vpack.c.b16 %v4960, %v4916
        %v7513 = vpack.c.b16 %v4961, %v4917
        %v7514 = vpack.c.b16 %v4962, %v4918
        %v7515 = vpack.c.b16 %v4963, %v4919
        %v7516 = vpack.c.b16 %v4964, %v4920
        %v7517 = vpack.c.b16 %v4965, %v4921
        %v7518 = vpack.c.b16 %v4966, %v4922
        %v7519 = vpack.c.b16 %v4967, %v4923
        %v7520 = vpack.c.b16 %v4968, %v4924
        %v7521 = vpack.c.b16 %v4969, %v4925
        %v7522 = vpack.c.b16 %v4970, %v4926
        %v7523 = vpack.c.b16 %v4971, %v4927
        %v7524 = vpack.c.b16 %v4972, %v4928
        %v7525 = vpack.c.b16 %v4973, %v4929
        %v7526 = vpack.c.b16 %v4974, %v4930
        %v7527 = vpack.c.b16 %v4975, %v4931
        %v7528 = vpack.c.b16 %v4976, %v4932
        %v7529 = vpack.c.b16 %v4977, %v4933
        %v7530 = vpack.c.b16 %v4978, %v4934
        %v7531 = vpack.c.b16 %v4979, %v4935
        %v7532 = vpack.c.b16 %v4980, %v4936
        %v7533 = vpack.c.b16 %v4981, %v4937
        %v7534 = vpack.c.b16 %v4982, %v4938
        %v7535 = vpack.c.b16 %v4983, %v4939
        %v7536 = vpack.c.b16 %v4984, %v4940
        %v7537 = vpack.c.b16 %v4985, %v4941
        %v7538 = vpack.c.b16 %v4986, %v4942
        %v7539 = vpack.c.b16 %v4987, %v4943
        %v7540 = vpack.c.b16 %v4988, %v4944
        %v7541 = vpack.c.b16 %v4989, %v4945
        %v7542 = vpack.c.b16 %v4990, %v4946
        %v7543 = vpack.c.b16 %v4991, %v4947
        %v7544 = vpack.c.b16 %v4992, %v4948
        %v7545 = vpack.c.b16 %v4993, %v4949
        %v7546 = vpack.c.b16 %v4994, %v4950
        %v7547 = vpack.c.b16 %v4995, %v4951
        %v7548 = vpack.c.b16 %v4996, %v4952
        %v7549 = vpack.c.b16 %v4997, %v4953
        %v7550 = vpack.c.b16 %v5042, %v4998
        %v7551 = vpack.c.b16 %v5043, %v4999
        %v7552 = vpack.c.b16 %v5044, %v5000
        %v7553 = vpack.c.b16 %v5045, %v5001
        %v7554 = vpack.c.b16 %v5046, %v5002
        %v7555 = vpack.c.b16 %v5047, %v5003
        %v7556 = vpack.c.b16 %v5048, %v5004
        %v7557 = vpack.c.b16 %v5049, %v5005
        %v7558 = vpack.c.b16 %v5050, %v5006
        %v7559 = vpack.c.b16 %v5051, %v5007
        %v7560 = vpack.c.b16 %v5052, %v5008
        %v7561 = vpack.c.b16 %v5053, %v5009
        %v7562 = vpack.c.b16 %v5054, %v5010
        %v7563 = vpack.c.b16 %v5055, %v5011
        %v7564 = vpack.c.b16 %v5056, %v5012
        %v7565 = vpack.c.b16 %v5057, %v5013
        %v7566 = vpack.c.b16 %v5058, %v5014
        %v7567 = vpack.c.b16 %v5059, %v5015
        %v7568 = vpack.c.b16 %v5060, %v5016
        %v7569 = vpack.c.b16 %v5061, %v5017
        %v7570 = vpack.c.b16 %v5062, %v5018
        %v7571 = vpack.c.b16 %v5063, %v5019
        %v7572 = vpack.c.b16 %v5064, %v5020
        %v7573 = vpack.c.b16 %v5065, %v5021
        %v7574 = vpack.c.b16 %v5066, %v5022
        %v7575 = vpack.c.b16 %v5067, %v5023
        %v7576 = vpack.c.b16 %v5068, %v5024
        %v7577 = vpack.c.b16 %v5069, %v5025
        %v7578 = vpack.c.b16 %v5070, %v5026
        %v7579 = vpack.c.b16 %v5071, %v5027
        %v7580 = vpack.c.b16 %v5072, %v5028
        %v7581 = vpack.c.b16 %v5073, %v5029
        %v7582 = vpack.c.b16 %v5074, %v5030
        %v7583 = vpack.c.b16 %v5075, %v5031
        %v7584 = vpack.c.b16 %v5076, %v5032
        %v7585 = vpack.c.b16 %v5077, %v5033
        %v7586 = vpack.c.b16 %v5078, %v5034
        %v7587 = vpack.c.b16 %v5079, %v5035
        %v7588 = vpack.c.b16 %v5080, %v5036
        %v7589 = vpack.c.b16 %v5081, %v5037
        %v7590 = vpack.c.b16 %v5082, %v5038
        %v7591 = vpack.c.b16 %v5083, %v5039
        %v7592 = vpack.c.b16 %v5084, %v5040
        %v7593 = vpack.c.b16 %v5085, %v5041
        %v7594 = vpack.c.b16 %v5130, %v5086
        %v7595 = vpack.c.b16 %v5131, %v5087
        %v7596 = vpack.c.b16 %v5132, %v5088
        %v7597 = vpack.c.b16 %v5133, %v5089
        %v7598 = vpack.c.b16 %v5134, %v5090
        %v7599 = vpack.c.b16 %v5135, %v5091
        %v7600 = vpack.c.b16 %v5136, %v5092
        %v7601 = vpack.c.b16 %v5137, %v5093
        %v7602 = vpack.c.b16 %v5138, %v5094
        %v7603 = vpack.c.b16 %v5139, %v5095
        %v7604 = vpack.c.b16 %v5140, %v5096
        %v7605 = vpack.c.b16 %v5141, %v5097
        %v7606 = vpack.c.b16 %v5142, %v5098
        %v7607 = vpack.c.b16 %v5143, %v5099
        %v7608 = vpack.c.b16 %v5144, %v5100
        %v7609 = vpack.c.b16 %v5145, %v5101
        %v7610 = vpack.c.b16 %v5146, %v5102
        %v7611 = vpack.c.b16 %v5147, %v5103
        %v7612 = vpack.c.b16 %v5148, %v5104
        %v7613 = vpack.c.b16 %v5149, %v5105
        %v7614 = vpack.c.b16 %v5150, %v5106
        %v7615 = vpack.c.b16 %v5151, %v5107
        %v7616 = vpack.c.b16 %v5152, %v5108
        %v7617 = vpack.c.b16 %v5153, %v5109
        %v7618 = vpack.c.b16 %v5154, %v5110
        %v7619 = vpack.c.b16 %v5155, %v5111
        %v7620 = vpack.c.b16 %v5156, %v5112
        %v7621 = vpack.c.b16 %v5157, %v5113
        %v7622 = vpack.c.b16 %v5158, %v5114
        %v7623 = vpack.c.b16 %v5159, %v5115
        %v7624 = vpack.c.b16 %v5160, %v5116
        %v7625 = vpack.c.b16 %v5161, %v5117
        %v7626 = vpack.c.b16 %v5162, %v5118
        %v7627 = vpack.c.b16 %v5163, %v5119
        %v7628 = vpack.c.b16 %v5164, %v5120
        %v7629 = vpack.c.b16 %v5165, %v5121
        %v7630 = vpack.c.b16 %v5166, %v5122
        %v7631 = vpack.c.b16 %v5167, %v5123
        %v7632 = vpack.c.b16 %v5168, %v5124
        %v7633 = vpack.c.b16 %v5169, %v5125
        %v7634 = vpack.c.b16 %v5170, %v5126
        %v7635 = vpack.c.b16 %v5171, %v5127
        %v7636 = vpack.c.b16 %v5172, %v5128
        %v7637 = vpack.c.b16 %v5173, %v5129
        %v7638 = vpack.c.b16 %v5218, %v5174
        %v7639 = vpack.c.b16 %v5219, %v5175
        %v7640 = vpack.c.b16 %v5220, %v5176
        %v7641 = vpack.c.b16 %v5221, %v5177
        %v7642 = vpack.c.b16 %v5222, %v5178
        %v7643 = vpack.c.b16 %v5223, %v5179
        %v7644 = vpack.c.b16 %v5224, %v5180
        %v7645 = vpack.c.b16 %v5225, %v5181
        %v7646 = vpack.c.b16 %v5226, %v5182
        %v7647 = vpack.c.b16 %v5227, %v5183
        %v7648 = vpack.c.b16 %v5228, %v5184
        %v7649 = vpack.c.b16 %v5229, %v5185
        %v7650 = vpack.c.b16 %v5230, %v5186
        %v7651 = vpack.c.b16 %v5231, %v5187
        %v7652 = vpack.c.b16 %v5232, %v5188
        %v7653 = vpack.c.b16 %v5233, %v5189
        %v7654 = vpack.c.b16 %v5234, %v5190
        %v7655 = vpack.c.b16 %v5235, %v5191
        %v7656 = vpack.c.b16 %v5236, %v5192
        %v7657 = vpack.c.b16 %v5237, %v5193
        %v7658 = vpack.c.b16 %v5238, %v5194
        %v7659 = vpack.c.b16 %v5239, %v5195
        %v7660 = vpack.c.b16 %v5240, %v5196
        %v7661 = vpack.c.b16 %v5241, %v5197
        %v7662 = vpack.c.b16 %v5242, %v5198
        %v7663 = vpack.c.b16 %v5243, %v5199
        %v7664 = vpack.c.b16 %v5244, %v5200
        %v7665 = vpack.c.b16 %v5245, %v5201
        %v7666 = vpack.c.b16 %v5246, %v5202
        %v7667 = vpack.c.b16 %v5247, %v5203
        %v7668 = vpack.c.b16 %v5248, %v5204
        %v7669 = vpack.c.b16 %v5249, %v5205
        %v7670 = vpack.c.b16 %v5250, %v5206
        %v7671 = vpack.c.b16 %v5251, %v5207
        %v7672 = vpack.c.b16 %v5252, %v5208
        %v7673 = vpack.c.b16 %v5253, %v5209
        %v7674 = vpack.c.b16 %v5254, %v5210
        %v7675 = vpack.c.b16 %v5255, %v5211
        %v7676 = vpack.c.b16 %v5256, %v5212
        %v7677 = vpack.c.b16 %v5257, %v5213
        %v7678 = vpack.c.b16 %v5258, %v5214
        %v7679 = vpack.c.b16 %v5259, %v5215
        %v7680 = vpack.c.b16 %v5260, %v5216
        %v7681 = vpack.c.b16 %v5261, %v5217
        %v7682 = vpack.c.b16 %v5306, %v5262
        %v7683 = vpack.c.b16 %v5307, %v5263
        %v7684 = vpack.c.b16 %v5308, %v5264
        %v7685 = vpack.c.b16 %v5309, %v5265
        %v7686 = vpack.c.b16 %v5310, %v5266
        %v7687 = vpack.c.b16 %v5311, %v5267
        %v7688 = vpack.c.b16 %v5312, %v5268
        %v7689 = vpack.c.b16 %v5313, %v5269
        %v7690 = vpack.c.b16 %v5314, %v5270
        %v7691 = vpack.c.b16 %v5315, %v5271
        %v7692 = vpack.c.b16 %v5316, %v5272
        %v7693 = vpack.c.b16 %v5317, %v5273
        %v7694 = vpack.c.b16 %v5318, %v5274
        %v7695 = vpack.c.b16 %v5319, %v5275
        %v7696 = vpack.c.b16 %v5320, %v5276
        %v7697 = vpack.c.b16 %v5321, %v5277
        %v7698 = vpack.c.b16 %v5322, %v5278
        %v7699 = vpack.c.b16 %v5323, %v5279
        %v7700 = vpack.c.b16 %v5324, %v5280
        %v7701 = vpack.c.b16 %v5325, %v5281
        %v7702 = vpack.c.b16 %v5326, %v5282
        %v7703 = vpack.c.b16 %v5327, %v5283
        %v7704 = vpack.c.b16 %v5328, %v5284
        %v7705 = vpack.c.b16 %v5329, %v5285
        %v7706 = vpack.c.b16 %v5330, %v5286
        %v7707 = vpack.c.b16 %v5331, %v5287
        %v7708 = vpack.c.b16 %v5332, %v5288
        %v7709 = vpack.c.b16 %v5333, %v5289
        %v7710 = vpack.c.b16 %v5334, %v5290
        %v7711 = vpack.c.b16 %v5335, %v5291
        %v7712 = vpack.c.b16 %v5336, %v5292
        %v7713 = vpack.c.b16 %v5337, %v5293
        %v7714 = vpack.c.b16 %v5338, %v5294
        %v7715 = vpack.c.b16 %v5339, %v5295
        %v7716 = vpack.c.b16 %v5340, %v5296
        %v7717 = vpack.c.b16 %v5341, %v5297
        %v7718 = vpack.c.b16 %v5342, %v5298
        %v7719 = vpack.c.b16 %v5343, %v5299
        %v7720 = vpack.c.b16 %v5344, %v5300
        %v7721 = vpack.c.b16 %v5345, %v5301
        %v7722 = vpack.c.b16 %v5346, %v5302
        %v7723 = vpack.c.b16 %v5347, %v5303
        %v7724 = vpack.c.b16 %v5348, %v5304
        %v7725 = vpack.c.b16 %v5349, %v5305
        %v7726 = vpack.c.b16 %v5394, %v5350
        %v7727 = vpack.c.b16 %v5395, %v5351
        %v7728 = vpack.c.b16 %v5396, %v5352
        %v7729 = vpack.c.b16 %v5397, %v5353
        %v7730 = vpack.c.b16 %v5398, %v5354
        %v7731 = vpack.c.b16 %v5399, %v5355
        %v7732 = vpack.c.b16 %v5400, %v5356
        %v7733 = vpack.c.b16 %v5401, %v5357
        %v7734 = vpack.c.b16 %v5402, %v5358
        %v7735 = vpack.c.b16 %v5403, %v5359
        %v7736 = vpack.c.b16 %v5404, %v5360
        %v7737 = vpack.c.b16 %v5405, %v5361
        %v7738 = vpack.c.b16 %v5406, %v5362
        %v7739 = vpack.c.b16 %v5407, %v5363
        %v7740 = vpack.c.b16 %v5408, %v5364
        %v7741 = vpack.c.b16 %v5409, %v5365
        %v7742 = vpack.c.b16 %v5410, %v5366
        %v7743 = vpack.c.b16 %v5411, %v5367
        %v7744 = vpack.c.b16 %v5412, %v5368
        %v7745 = vpack.c.b16 %v5413, %v5369
        %v7746 = vpack.c.b16 %v5414, %v5370
        %v7747 = vpack.c.b16 %v5415, %v5371
        %v7748 = vpack.c.b16 %v5416, %v5372
        %v7749 = vpack.c.b16 %v5417, %v5373
        %v7750 = vpack.c.b16 %v5418, %v5374
        %v7751 = vpack.c.b16 %v5419, %v5375
        %v7752 = vpack.c.b16 %v5420, %v5376
        %v7753 = vpack.c.b16 %v5421, %v5377
        %v7754 = vpack.c.b16 %v5422, %v5378
        %v7755 = vpack.c.b16 %v5423, %v5379
        %v7756 = vpack.c.b16 %v5424, %v5380
        %v7757 = vpack.c.b16 %v5425, %v5381
        %v7758 = vpack.c.b16 %v5426, %v5382
        %v7759 = vpack.c.b16 %v5427, %v5383
        %v7760 = vpack.c.b16 %v5428, %v5384
        %v7761 = vpack.c.b16 %v5429, %v5385
        %v7762 = vpack.c.b16 %v5430, %v5386
        %v7763 = vpack.c.b16 %v5431, %v5387
        %v7764 = vpack.c.b16 %v5432, %v5388
        %v7765 = vpack.c.b16 %v5433, %v5389
        %v7766 = vpack.c.b16 %v5434, %v5390
        %v7767 = vpack.c.b16 %v5435, %v5391
        %v7768 = vpack.c.b16 %v5436, %v5392
        %v7769 = vpack.c.b16 %v5437, %v5393
        %v7770 = vpack.c.b16 %v5482, %v5438
        %v7771 = vpack.c.b16 %v5483, %v5439
        %v7772 = vpack.c.b16 %v5484, %v5440
        %v7773 = vpack.c.b16 %v5485, %v5441
        %v7774 = vpack.c.b16 %v5486, %v5442
        %v7775 = vpack.c.b16 %v5487, %v5443
        %v7776 = vpack.c.b16 %v5488, %v5444
        %v7777 = vpack.c.b16 %v5489, %v5445
        %v7778 = vpack.c.b16 %v5490, %v5446
        %v7779 = vpack.c.b16 %v5491, %v5447
        %v7780 = vpack.c.b16 %v5492, %v5448
        %v7781 = vpack.c.b16 %v5493, %v5449
        %v7782 = vpack.c.b16 %v5494, %v5450
        %v7783 = vpack.c.b16 %v5495, %v5451
        %v7784 = vpack.c.b16 %v5496, %v5452
        %v7785 = vpack.c.b16 %v5497, %v5453
        %v7786 = vpack.c.b16 %v5498, %v5454
        %v7787 = vpack.c.b16 %v5499, %v5455
        %v7788 = vpack.c.b16 %v5500, %v5456
        %v7789 = vpack.c.b16 %v5501, %v5457
        %v7790 = vpack.c.b16 %v5502, %v5458
        %v7791 = vpack.c.b16 %v5503, %v5459
        %v7792 = vpack.c.b16 %v5504, %v5460
        %v7793 = vpack.c.b16 %v5505, %v5461
        %v7794 = vpack.c.b16 %v5506, %v5462
        %v7795 = vpack.c.b16 %v5507, %v5463
        %v7796 = vpack.c.b16 %v5508, %v5464
        %v7797 = vpack.c.b16 %v5509, %v5465
        %v7798 = vpack.c.b16 %v5510, %v5466
        %v7799 = vpack.c.b16 %v5511, %v5467
        %v7800 = vpack.c.b16 %v5512, %v5468
        %v7801 = vpack.c.b16 %v5513, %v5469
        %v7802 = vpack.c.b16 %v5514, %v5470
        %v7803 = vpack.c.b16 %v5515, %v5471
        %v7804 = vpack.c.b16 %v5516, %v5472
        %v7805 = vpack.c.b16 %v5517, %v5473
        %v7806 = vpack.c.b16 %v5518, %v5474
        %v7807 = vpack.c.b16 %v5519, %v5475
        %v7808 = vpack.c.b16 %v5520, %v5476
        %v7809 = vpack.c.b16 %v5521, %v5477
        %v7810 = vpack.c.b16 %v5522, %v5478
        %v7811 = vpack.c.b16 %v5523, %v5479
        %v7812 = vpack.c.b16 %v5524, %v5480
        %v7813 = vpack.c.b16 %v5525, %v5481
        %v7814 = vpack.c.b16 %v5570, %v5526
        %v7815 = vpack.c.b16 %v5571, %v5527
        %v7816 = vpack.c.b16 %v5572, %v5528
        %v7817 = vpack.c.b16 %v5573, %v5529
        %v7818 = vpack.c.b16 %v5574, %v5530
        %v7819 = vpack.c.b16 %v5575, %v5531
        %v7820 = vpack.c.b16 %v5576, %v5532
        %v7821 = vpack.c.b16 %v5577, %v5533
        %v7822 = vpack.c.b16 %v5578, %v5534
        %v7823 = vpack.c.b16 %v5579, %v5535
        %v7824 = vpack.c.b16 %v5580, %v5536
        %v7825 = vpack.c.b16 %v5581, %v5537
        %v7826 = vpack.c.b16 %v5582, %v5538
        %v7827 = vpack.c.b16 %v5583, %v5539
        %v7828 = vpack.c.b16 %v5584, %v5540
        %v7829 = vpack.c.b16 %v5585, %v5541
        %v7830 = vpack.c.b16 %v5586, %v5542
        %v7831 = vpack.c.b16 %v5587, %v5543
        %v7832 = vpack.c.b16 %v5588, %v5544
        %v7833 = vpack.c.b16 %v5589, %v5545
        %v7834 = vpack.c.b16 %v5590, %v5546
        %v7835 = vpack.c.b16 %v5591, %v5547
        %v7836 = vpack.c.b16 %v5592, %v5548
        %v7837 = vpack.c.b16 %v5593, %v5549
        %v7838 = vpack.c.b16 %v5594, %v5550
        %v7839 = vpack.c.b16 %v5595, %v5551
        %v7840 = vpack.c.b16 %v5596, %v5552
        %v7841 = vpack.c.b16 %v5597, %v5553
        %v7842 = vpack.c.b16 %v5598, %v5554
        %v7843 = vpack.c.b16 %v5599, %v5555
        %v7844 = vpack.c.b16 %v5600, %v5556
        %v7845 = vpack.c.b16 %v5601, %v5557
        %v7846 = vpack.c.b16 %v5602, %v5558
        %v7847 = vpack.c.b16 %v5603, %v5559
        %v7848 = vpack.c.b16 %v5604, %v5560
        %v7849 = vpack.c.b16 %v5605, %v5561
        %v7850 = vpack.c.b16 %v5606, %v5562
        %v7851 = vpack.c.b16 %v5607, %v5563
        %v7852 = vpack.c.b16 %v5608, %v5564
        %v7853 = vpack.c.b16 %v5609, %v5565
        %v7854 = vpack.c.b16 %v5610, %v5566
        %v7855 = vpack.c.b16 %v5611, %v5567
        %v7856 = vpack.c.b16 %v5612, %v5568
        %v7857 = vpack.c.b16 %v5613, %v5569
        %v7858 = vpack.c.b16 %v5658, %v5614
        %v7859 = vpack.c.b16 %v5659, %v5615
        %v7860 = vpack.c.b16 %v5660, %v5616
        %v7861 = vpack.c.b16 %v5661, %v5617
        %v7862 = vpack.c.b16 %v5662, %v5618
        %v7863 = vpack.c.b16 %v5663, %v5619
        %v7864 = vpack.c.b16 %v5664, %v5620
        %v7865 = vpack.c.b16 %v5665, %v5621
        %v7866 = vpack.c.b16 %v5666, %v5622
        %v7867 = vpack.c.b16 %v5667, %v5623
        %v7868 = vpack.c.b16 %v5668, %v5624
        %v7869 = vpack.c.b16 %v5669, %v5625
        %v7870 = vpack.c.b16 %v5670, %v5626
        %v7871 = vpack.c.b16 %v5671, %v5627
        %v7872 = vpack.c.b16 %v5672, %v5628
        %v7873 = vpack.c.b16 %v5673, %v5629
        %v7874 = vpack.c.b16 %v5674, %v5630
        %v7875 = vpack.c.b16 %v5675, %v5631
        %v7876 = vpack.c.b16 %v5676, %v5632
        %v7877 = vpack.c.b16 %v5677, %v5633
        %v7878 = vpack.c.b16 %v5678, %v5634
        %v7879 = vpack.c.b16 %v5679, %v5635
        %v7880 = vpack.c.b16 %v5680, %v5636
        %v7881 = vpack.c.b16 %v5681, %v5637
        %v7882 = vpack.c.b16 %v5682, %v5638
        %v7883 = vpack.c.b16 %v5683, %v5639
        %v7884 = vpack.c.b16 %v5684, %v5640
        %v7885 = vpack.c.b16 %v5685, %v5641
        %v7886 = vpack.c.b16 %v5686, %v5642
        %v7887 = vpack.c.b16 %v5687, %v5643
        %v7888 = vpack.c.b16 %v5688, %v5644
        %v7889 = vpack.c.b16 %v5689, %v5645
        %v7890 = vpack.c.b16 %v5690, %v5646
        %v7891 = vpack.c.b16 %v5691, %v5647
        %v7892 = vpack.c.b16 %v5692, %v5648
        %v7893 = vpack.c.b16 %v5693, %v5649
        %v7894 = vpack.c.b16 %v5694, %v5650
        %v7895 = vpack.c.b16 %v5695, %v5651
        %v7896 = vpack.c.b16 %v5696, %v5652
        %v7897 = vpack.c.b16 %v5697, %v5653
        %v7898 = vpack.c.b16 %v5698, %v5654
        %v7899 = vpack.c.b16 %v5699, %v5655
        %v7900 = vpack.c.b16 %v5700, %v5656
        %v7901 = vpack.c.b16 %v5701, %v5657
        %v7902 = vpack.c.b16 %v5746, %v5702
        %v7903 = vpack.c.b16 %v5747, %v5703
        %v7904 = vpack.c.b16 %v5748, %v5704
        %v7905 = vpack.c.b16 %v5749, %v5705
        %v7906 = vpack.c.b16 %v5750, %v5706
        %v7907 = vpack.c.b16 %v5751, %v5707
        %v7908 = vpack.c.b16 %v5752, %v5708
        %v7909 = vpack.c.b16 %v5753, %v5709
        %v7910 = vpack.c.b16 %v5754, %v5710
        %v7911 = vpack.c.b16 %v5755, %v5711
        %v7912 = vpack.c.b16 %v5756, %v5712
        %v7913 = vpack.c.b16 %v5757, %v5713
        %v7914 = vpack.c.b16 %v5758, %v5714
        %v7915 = vpack.c.b16 %v5759, %v5715
        %v7916 = vpack.c.b16 %v5760, %v5716
        %v7917 = vpack.c.b16 %v5761, %v5717
        %v7918 = vpack.c.b16 %v5762, %v5718
        %v7919 = vpack.c.b16 %v5763, %v5719
        %v7920 = vpack.c.b16 %v5764, %v5720
        %v7921 = vpack.c.b16 %v5765, %v5721
        %v7922 = vpack.c.b16 %v5766, %v5722
        %v7923 = vpack.c.b16 %v5767, %v5723
        %v7924 = vpack.c.b16 %v5768, %v5724
        %v7925 = vpack.c.b16 %v5769, %v5725
        %v7926 = vpack.c.b16 %v5770, %v5726
        %v7927 = vpack.c.b16 %v5771, %v5727
        %v7928 = vpack.c.b16 %v5772, %v5728
        %v7929 = vpack.c.b16 %v5773, %v5729
        %v7930 = vpack.c.b16 %v5774, %v5730
        %v7931 = vpack.c.b16 %v5775, %v5731
        %v7932 = vpack.c.b16 %v5776, %v5732
        %v7933 = vpack.c.b16 %v5777, %v5733
        %v7934 = vpack.c.b16 %v5778, %v5734
        %v7935 = vpack.c.b16 %v5779, %v5735
        %v7936 = vpack.c.b16 %v5780, %v5736
        %v7937 = vpack.c.b16 %v5781, %v5737
        %v7938 = vpack.c.b16 %v5782, %v5738
        %v7939 = vpack.c.b16 %v5783, %v5739
        %v7940 = vpack.c.b16 %v5784, %v5740
        %v7941 = vpack.c.b16 %v5785, %v5741
        %v7942 = vpack.c.b16 %v5786, %v5742
        %v7943 = vpack.c.b16 %v5787, %v5743
        %v7944 = vpack.c.b16 %v5788, %v5744
        %v7945 = vpack.c.b16 %v5789, %v5745
        %v7946 = vpack.c.b16 %v5834, %v5790
        %v7947 = vpack.c.b16 %v5835, %v5791
        %v7948 = vpack.c.b16 %v5836, %v5792
        %v7949 = vpack.c.b16 %v5837, %v5793
        %v7950 = vpack.c.b16 %v5838, %v5794
        %v7951 = vpack.c.b16 %v5839, %v5795
        %v7952 = vpack.c.b16 %v5840, %v5796
        %v7953 = vpack.c.b16 %v5841, %v5797
        %v7954 = vpack.c.b16 %v5842, %v5798
        %v7955 = vpack.c.b16 %v5843, %v5799
        %v7956 = vpack.c.b16 %v5844, %v5800
        %v7957 = vpack.c.b16 %v5845, %v5801
        %v7958 = vpack.c.b16 %v5846, %v5802
        %v7959 = vpack.c.b16 %v5847, %v5803
        %v7960 = vpack.c.b16 %v5848, %v5804
        %v7961 = vpack.c.b16 %v5849, %v5805
        %v7962 = vpack.c.b16 %v5850, %v5806
        %v7963 = vpack.c.b16 %v5851, %v5807
        %v7964 = vpack.c.b16 %v5852, %v5808
        %v7965 = vpack.c.b16 %v5853, %v5809
        %v7966 = vpack.c.b16 %v5854, %v5810
        %v7967 = vpack.c.b16 %v5855, %v5811
        %v7968 = vpack.c.b16 %v5856, %v5812
        %v7969 = vpack.c.b16 %v5857, %v5813
        %v7970 = vpack.c.b16 %v5858, %v5814
        %v7971 = vpack.c.b16 %v5859, %v5815
        %v7972 = vpack.c.b16 %v5860, %v5816
        %v7973 = vpack.c.b16 %v5861, %v5817
        %v7974 = vpack.c.b16 %v5862, %v5818
        %v7975 = vpack.c.b16 %v5863, %v5819
        %v7976 = vpack.c.b16 %v5864, %v5820
        %v7977 = vpack.c.b16 %v5865, %v5821
        %v7978 = vpack.c.b16 %v5866, %v5822
        %v7979 = vpack.c.b16 %v5867, %v5823
        %v7980 = vpack.c.b16 %v5868, %v5824
        %v7981 = vpack.c.b16 %v5869, %v5825
        %v7982 = vpack.c.b16 %v5870, %v5826
        %v7983 = vpack.c.b16 %v5871, %v5827
        %v7984 = vpack.c.b16 %v5872, %v5828
        %v7985 = vpack.c.b16 %v5873, %v5829
        %v7986 = vpack.c.b16 %v5874, %v5830
        %v7987 = vpack.c.b16 %v5875, %v5831
        %v7988 = vpack.c.b16 %v5876, %v5832
        %v7989 = vpack.c.b16 %v5877, %v5833
        %v7990 = vpack.c.b16 %v5922, %v5878
        %v7991 = vpack.c.b16 %v5923, %v5879
        %v7992 = vpack.c.b16 %v5924, %v5880
        %v7993 = vpack.c.b16 %v5925, %v5881
        %v7994 = vpack.c.b16 %v5926, %v5882
        %v7995 = vpack.c.b16 %v5927, %v5883
        %v7996 = vpack.c.b16 %v5928, %v5884
        %v7997 = vpack.c.b16 %v5929, %v5885
        %v7998 = vpack.c.b16 %v5930, %v5886
        %v7999 = vpack.c.b16 %v5931, %v5887
        %v8000 = vpack.c.b16 %v5932, %v5888
        %v8001 = vpack.c.b16 %v5933, %v5889
        %v8002 = vpack.c.b16 %v5934, %v5890
        %v8003 = vpack.c.b16 %v5935, %v5891
        %v8004 = vpack.c.b16 %v5936, %v5892
        %v8005 = vpack.c.b16 %v5937, %v5893
        %v8006 = vpack.c.b16 %v5938, %v5894
        %v8007 = vpack.c.b16 %v5939, %v5895
        %v8008 = vpack.c.b16 %v5940, %v5896
        %v8009 = vpack.c.b16 %v5941, %v5897
        %v8010 = vpack.c.b16 %v5942, %v5898
        %v8011 = vpack.c.b16 %v5943, %v5899
        %v8012 = vpack.c.b16 %v5944, %v5900
        %v8013 = vpack.c.b16 %v5945, %v5901
        %v8014 = vpack.c.b16 %v5946, %v5902
        %v8015 = vpack.c.b16 %v5947, %v5903
        %v8016 = vpack.c.b16 %v5948, %v5904
        %v8017 = vpack.c.b16 %v5949, %v5905
        %v8018 = vpack.c.b16 %v5950, %v5906
        %v8019 = vpack.c.b16 %v5951, %v5907
        %v8020 = vpack.c.b16 %v5952, %v5908
        %v8021 = vpack.c.b16 %v5953, %v5909
        %v8022 = vpack.c.b16 %v5954, %v5910
        %v8023 = vpack.c.b16 %v5955, %v5911
        %v8024 = vpack.c.b16 %v5956, %v5912
        %v8025 = vpack.c.b16 %v5957, %v5913
        %v8026 = vpack.c.b16 %v5958, %v5914
        %v8027 = vpack.c.b16 %v5959, %v5915
        %v8028 = vpack.c.b16 %v5960, %v5916
        %v8029 = vpack.c.b16 %v5961, %v5917
        %v8030 = vpack.c.b16 %v5962, %v5918
        %v8031 = vpack.c.b16 %v5963, %v5919
        %v8032 = vpack.c.b16 %v5964, %v5920
        %v8033 = vpack.c.b16 %v5965, %v5921
        %v8034 = vpack.c.b16 %v6010, %v5966
        %v8035 = vpack.c.b16 %v6011, %v5967
        %v8036 = vpack.c.b16 %v6012, %v5968
        %v8037 = vpack.c.b16 %v6013, %v5969
        %v8038 = vpack.c.b16 %v6014, %v5970
        %v8039 = vpack.c.b16 %v6015, %v5971
        %v8040 = vpack.c.b16 %v6016, %v5972
        %v8041 = vpack.c.b16 %v6017, %v5973
        %v8042 = vpack.c.b16 %v6018, %v5974
        %v8043 = vpack.c.b16 %v6019, %v5975
        %v8044 = vpack.c.b16 %v6020, %v5976
        %v8045 = vpack.c.b16 %v6021, %v5977
        %v8046 = vpack.c.b16 %v6022, %v5978
        %v8047 = vpack.c.b16 %v6023, %v5979
        %v8048 = vpack.c.b16 %v6024, %v5980
        %v8049 = vpack.c.b16 %v6025, %v5981
        %v8050 = vpack.c.b16 %v6026, %v5982
        %v8051 = vpack.c.b16 %v6027, %v5983
        %v8052 = vpack.c.b16 %v6028, %v5984
        %v8053 = vpack.c.b16 %v6029, %v5985
        %v8054 = vpack.c.b16 %v6030, %v5986
        %v8055 = vpack.c.b16 %v6031, %v5987
        %v8056 = vpack.c.b16 %v6032, %v5988
        %v8057 = vpack.c.b16 %v6033, %v5989
        %v8058 = vpack.c.b16 %v6034, %v5990
        %v8059 = vpack.c.b16 %v6035, %v5991
        %v8060 = vpack.c.b16 %v6036, %v5992
        %v8061 = vpack.c.b16 %v6037, %v5993
        %v8062 = vpack.c.b16 %v6038, %v5994
        %v8063 = vpack.c.b16 %v6039, %v5995
        %v8064 = vpack.c.b16 %v6040, %v5996
        %v8065 = vpack.c.b16 %v6041, %v5997
        %v8066 = vpack.c.b16 %v6042, %v5998
        %v8067 = vpack.c.b16 %v6043, %v5999
        %v8068 = vpack.c.b16 %v6044, %v6000
        %v8069 = vpack.c.b16 %v6045, %v6001
        %v8070 = vpack.c.b16 %v6046, %v6002
        %v8071 = vpack.c.b16 %v6047, %v6003
        %v8072 = vpack.c.b16 %v6048, %v6004
        %v8073 = vpack.c.b16 %v6049, %v6005
        %v8074 = vpack.c.b16 %v6050, %v6006
        %v8075 = vpack.c.b16 %v6051, %v6007
        %v8076 = vpack.c.b16 %v6052, %v6008
        %v8077 = vpack.c.b16 %v6053, %v6009
        %v8078 = vpack.c.b16 %v6098, %v6054
        %v8079 = vpack.c.b16 %v6099, %v6055
        %v8080 = vpack.c.b16 %v6100, %v6056
        %v8081 = vpack.c.b16 %v6101, %v6057
        %v8082 = vpack.c.b16 %v6102, %v6058
        %v8083 = vpack.c.b16 %v6103, %v6059
        %v8084 = vpack.c.b16 %v6104, %v6060
        %v8085 = vpack.c.b16 %v6105, %v6061
        %v8086 = vpack.c.b16 %v6106, %v6062
        %v8087 = vpack.c.b16 %v6107, %v6063
        %v8088 = vpack.c.b16 %v6108, %v6064
        %v8089 = vpack.c.b16 %v6109, %v6065
        %v8090 = vpack.c.b16 %v6110, %v6066
        %v8091 = vpack.c.b16 %v6111, %v6067
        %v8092 = vpack.c.b16 %v6112, %v6068
        %v8093 = vpack.c.b16 %v6113, %v6069
        %v8094 = vpack.c.b16 %v6114, %v6070
        %v8095 = vpack.c.b16 %v6115, %v6071
        %v8096 = vpack.c.b16 %v6116, %v6072
        %v8097 = vpack.c.b16 %v6117, %v6073
        %v8098 = vpack.c.b16 %v6118, %v6074
        %v8099 = vpack.c.b16 %v6119, %v6075
        %v8100 = vpack.c.b16 %v6120, %v6076
        %v8101 = vpack.c.b16 %v6121, %v6077
        %v8102 = vpack.c.b16 %v6122, %v6078
        %v8103 = vpack.c.b16 %v6123, %v6079
        %v8104 = vpack.c.b16 %v6124, %v6080
        %v8105 = vpack.c.b16 %v6125, %v6081
        %v8106 = vpack.c.b16 %v6126, %v6082
        %v8107 = vpack.c.b16 %v6127, %v6083
        %v8108 = vpack.c.b16 %v6128, %v6084
        %v8109 = vpack.c.b16 %v6129, %v6085
        %v8110 = vpack.c.b16 %v6130, %v6086
        %v8111 = vpack.c.b16 %v6131, %v6087
        %v8112 = vpack.c.b16 %v6132, %v6088
        %v8113 = vpack.c.b16 %v6133, %v6089
        %v8114 = vpack.c.b16 %v6134, %v6090
        %v8115 = vpack.c.b16 %v6135, %v6091
        %v8116 = vpack.c.b16 %v6136, %v6092
        %v8117 = vpack.c.b16 %v6137, %v6093
        %v8118 = vpack.c.b16 %v6138, %v6094
        %v8119 = vpack.c.b16 %v6139, %v6095
        %v8120 = vpack.c.b16 %v6140, %v6096
        %v8121 = vpack.c.b16 %v6141, %v6097
        %v8122 = vpack.c.b16 %v6186, %v6142
        %v8123 = vpack.c.b16 %v6187, %v6143
        %v8124 = vpack.c.b16 %v6188, %v6144
        %v8125 = vpack.c.b16 %v6189, %v6145
        %v8126 = vpack.c.b16 %v6190, %v6146
        %v8127 = vpack.c.b16 %v6191, %v6147
        %v8128 = vpack.c.b16 %v6192, %v6148
        %v8129 = vpack.c.b16 %v6193, %v6149
        %v8130 = vpack.c.b16 %v6194, %v6150
        %v8131 = vpack.c.b16 %v6195, %v6151
        %v8132 = vpack.c.b16 %v6196, %v6152
        %v8133 = vpack.c.b16 %v6197, %v6153
        %v8134 = vpack.c.b16 %v6198, %v6154
        %v8135 = vpack.c.b16 %v6199, %v6155
        %v8136 = vpack.c.b16 %v6200, %v6156
        %v8137 = vpack.c.b16 %v6201, %v6157
        %v8138 = vpack.c.b16 %v6202, %v6158
        %v8139 = vpack.c.b16 %v6203, %v6159
        %v8140 = vpack.c.b16 %v6204, %v6160
        %v8141 = vpack.c.b16 %v6205, %v6161
        %v8142 = vpack.c.b16 %v6206, %v6162
        %v8143 = vpack.c.b16 %v6207, %v6163
        %v8144 = vpack.c.b16 %v6208, %v6164
        %v8145 = vpack.c.b16 %v6209, %v6165
        %v8146 = vpack.c.b16 %v6210, %v6166
        %v8147 = vpack.c.b16 %v6211, %v6167
        %v8148 = vpack.c.b16 %v6212, %v6168
        %v8149 = vpack.c.b16 %v6213, %v6169
        %v8150 = vpack.c.b16 %v6214, %v6170
        %v8151 = vpack.c.b16 %v6215, %v6171
        %v8152 = vpack.c.b16 %v6216, %v6172
        %v8153 = vpack.c.b16 %v6217, %v6173
        %v8154 = vpack.c.b16 %v6218, %v6174
        %v8155 = vpack.c.b16 %v6219, %v6175
        %v8156 = vpack.c.b16 %v6220, %v6176
        %v8157 = vpack.c.b16 %v6221, %v6177
        %v8158 = vpack.c.b16 %v6222, %v6178
        %v8159 = vpack.c.b16 %v6223, %v6179
        %v8160 = vpack.c.b16 %v6224, %v6180
        %v8161 = vpack.c.b16 %v6225, %v6181
        %v8162 = vpack.c.b16 %v6226, %v6182
        %v8163 = vpack.c.b16 %v6227, %v6183
        %v8164 = vpack.c.b16 %v6228, %v6184
        %v8165 = vpack.c.b16 %v6229, %v6185
        %v8166 = vpack.c.b16 %v6274, %v6230
        %v8167 = vpack.c.b16 %v6275, %v6231
        %v8168 = vpack.c.b16 %v6276, %v6232
        %v8169 = vpack.c.b16 %v6277, %v6233
        %v8170 = vpack.c.b16 %v6278, %v6234
        %v8171 = vpack.c.b16 %v6279, %v6235
        %v8172 = vpack.c.b16 %v6280, %v6236
        %v8173 = vpack.c.b16 %v6281, %v6237
        %v8174 = vpack.c.b16 %v6282, %v6238
        %v8175 = vpack.c.b16 %v6283, %v6239
        %v8176 = vpack.c.b16 %v6284, %v6240
        %v8177 = vpack.c.b16 %v6285, %v6241
        %v8178 = vpack.c.b16 %v6286, %v6242
        %v8179 = vpack.c.b16 %v6287, %v6243
        %v8180 = vpack.c.b16 %v6288, %v6244
        %v8181 = vpack.c.b16 %v6289, %v6245
        %v8182 = vpack.c.b16 %v6290, %v6246
        %v8183 = vpack.c.b16 %v6291, %v6247
        %v8184 = vpack.c.b16 %v6292, %v6248
        %v8185 = vpack.c.b16 %v6293, %v6249
        %v8186 = vpack.c.b16 %v6294, %v6250
        %v8187 = vpack.c.b16 %v6295, %v6251
        %v8188 = vpack.c.b16 %v6296, %v6252
        %v8189 = vpack.c.b16 %v6297, %v6253
        %v8190 = vpack.c.b16 %v6298, %v6254
        %v8191 = vpack.c.b16 %v6299, %v6255
        %v8192 = vpack.c.b16 %v6300, %v6256
        %v8193 = vpack.c.b16 %v6301, %v6257
        %v8194 = vpack.c.b16 %v6302, %v6258
        %v8195 = vpack.c.b16 %v6303, %v6259
        %v8196 = vpack.c.b16 %v6304, %v6260
        %v8197 = vpack.c.b16 %v6305, %v6261
        %v8198 = vpack.c.b16 %v6306, %v6262
        %v8199 = vpack.c.b16 %v6307, %v6263
        %v8200 = vpack.c.b16 %v6308, %v6264
        %v8201 = vpack.c.b16 %v6309, %v6265
        %v8202 = vpack.c.b16 %v6310, %v6266
        %v8203 = vpack.c.b16 %v6311, %v6267
        %v8204 = vpack.c.b16 %v6312, %v6268
        %v8205 = vpack.c.b16 %v6313, %v6269
        %v8206 = vpack.c.b16 %v6314, %v6270
        %v8207 = vpack.c.b16 %v6315, %v6271
        %v8208 = vpack.c.b16 %v6316, %v6272
        %v8209 = vpack.c.b16 %v6317, %v6273
        %v8210 = vpack.c.b16 %v6362, %v6318
        %v8211 = vpack.c.b16 %v6363, %v6319
        %v8212 = vpack.c.b16 %v6364, %v6320
        %v8213 = vpack.c.b16 %v6365, %v6321
        %v8214 = vpack.c.b16 %v6366, %v6322
        %v8215 = vpack.c.b16 %v6367, %v6323
        %v8216 = vpack.c.b16 %v6368, %v6324
        %v8217 = vpack.c.b16 %v6369, %v6325
        %v8218 = vpack.c.b16 %v6370, %v6326
        %v8219 = vpack.c.b16 %v6371, %v6327
        %v8220 = vpack.c.b16 %v6372, %v6328
        %v8221 = vpack.c.b16 %v6373, %v6329
        %v8222 = vpack.c.b16 %v6374, %v6330
        %v8223 = vpack.c.b16 %v6375, %v6331
        %v8224 = vpack.c.b16 %v6376, %v6332
        %v8225 = vpack.c.b16 %v6377, %v6333
        %v8226 = vpack.c.b16 %v6378, %v6334
        %v8227 = vpack.c.b16 %v6379, %v6335
        %v8228 = vpack.c.b16 %v6380, %v6336
        %v8229 = vpack.c.b16 %v6381, %v6337
        %v8230 = vpack.c.b16 %v6382, %v6338
        %v8231 = vpack.c.b16 %v6383, %v6339
        %v8232 = vpack.c.b16 %v6384, %v6340
        %v8233 = vpack.c.b16 %v6385, %v6341
        %v8234 = vpack.c.b16 %v6386, %v6342
        %v8235 = vpack.c.b16 %v6387, %v6343
        %v8236 = vpack.c.b16 %v6388, %v6344
        %v8237 = vpack.c.b16 %v6389, %v6345
        %v8238 = vpack.c.b16 %v6390, %v6346
        %v8239 = vpack.c.b16 %v6391, %v6347
        %v8240 = vpack.c.b16 %v6392, %v6348
        %v8241 = vpack.c.b16 %v6393, %v6349
        %v8242 = vpack.c.b16 %v6394, %v6350
        %v8243 = vpack.c.b16 %v6395, %v6351
        %v8244 = vpack.c.b16 %v6396, %v6352
        %v8245 = vpack.c.b16 %v6397, %v6353
        %v8246 = vpack.c.b16 %v6398, %v6354
        %v8247 = vpack.c.b16 %v6399, %v6355
        %v8248 = vpack.c.b16 %v6400, %v6356
        %v8249 = vpack.c.b16 %v6401, %v6357
        %v8250 = vpack.c.b16 %v6402, %v6358
        %v8251 = vpack.c.b16 %v6403, %v6359
        %v8252 = vpack.c.b16 %v6404, %v6360
        %v8253 = vpack.c.b16 %v6405, %v6361
        %v8254 = vpack.c.b16 %v6450, %v6406
        %v8255 = vpack.c.b16 %v6451, %v6407
        %v8256 = vpack.c.b16 %v6452, %v6408
        %v8257 = vpack.c.b16 %v6453, %v6409
        %v8258 = vpack.c.b16 %v6454, %v6410
        %v8259 = vpack.c.b16 %v6455, %v6411
        %v8260 = vpack.c.b16 %v6456, %v6412
        %v8261 = vpack.c.b16 %v6457, %v6413
        %v8262 = vpack.c.b16 %v6458, %v6414
        %v8263 = vpack.c.b16 %v6459, %v6415
        %v8264 = vpack.c.b16 %v6460, %v6416
        %v8265 = vpack.c.b16 %v6461, %v6417
        %v8266 = vpack.c.b16 %v6462, %v6418
        %v8267 = vpack.c.b16 %v6463, %v6419
        %v8268 = vpack.c.b16 %v6464, %v6420
        %v8269 = vpack.c.b16 %v6465, %v6421
        %v8270 = vpack.c.b16 %v6466, %v6422
        %v8271 = vpack.c.b16 %v6467, %v6423
        %v8272 = vpack.c.b16 %v6468, %v6424
        %v8273 = vpack.c.b16 %v6469, %v6425
        %v8274 = vpack.c.b16 %v6470, %v6426
        %v8275 = vpack.c.b16 %v6471, %v6427
        %v8276 = vpack.c.b16 %v6472, %v6428
        %v8277 = vpack.c.b16 %v6473, %v6429
        %v8278 = vpack.c.b16 %v6474, %v6430
        %v8279 = vpack.c.b16 %v6475, %v6431
        %v8280 = vpack.c.b16 %v6476, %v6432
        %v8281 = vpack.c.b16 %v6477, %v6433
        %v8282 = vpack.c.b16 %v6478, %v6434
        %v8283 = vpack.c.b16 %v6479, %v6435
        %v8284 = vpack.c.b16 %v6480, %v6436
        %v8285 = vpack.c.b16 %v6481, %v6437
        %v8286 = vpack.c.b16 %v6482, %v6438
        %v8287 = vpack.c.b16 %v6483, %v6439
        %v8288 = vpack.c.b16 %v6484, %v6440
        %v8289 = vpack.c.b16 %v6485, %v6441
        %v8290 = vpack.c.b16 %v6486, %v6442
        %v8291 = vpack.c.b16 %v6487, %v6443
        %v8292 = vpack.c.b16 %v6488, %v6444
        %v8293 = vpack.c.b16 %v6489, %v6445
        %v8294 = vpack.c.b16 %v6490, %v6446
        %v8295 = vpack.c.b16 %v6491, %v6447
        %v8296 = vpack.c.b16 %v6492, %v6448
        %v8297 = vpack.c.b16 %v6493, %v6449
        %v8298 = vpack.c.b16 %v6538, %v6494
        %v8299 = vpack.c.b16 %v6539, %v6495
        %v8300 = vpack.c.b16 %v6540, %v6496
        %v8301 = vpack.c.b16 %v6541, %v6497
        %v8302 = vpack.c.b16 %v6542, %v6498
        %v8303 = vpack.c.b16 %v6543, %v6499
        %v8304 = vpack.c.b16 %v6544, %v6500
        %v8305 = vpack.c.b16 %v6545, %v6501
        %v8306 = vpack.c.b16 %v6546, %v6502
        %v8307 = vpack.c.b16 %v6547, %v6503
        %v8308 = vpack.c.b16 %v6548, %v6504
        %v8309 = vpack.c.b16 %v6549, %v6505
        %v8310 = vpack.c.b16 %v6550, %v6506
        %v8311 = vpack.c.b16 %v6551, %v6507
        %v8312 = vpack.c.b16 %v6552, %v6508
        %v8313 = vpack.c.b16 %v6553, %v6509
        %v8314 = vpack.c.b16 %v6554, %v6510
        %v8315 = vpack.c.b16 %v6555, %v6511
        %v8316 = vpack.c.b16 %v6556, %v6512
        %v8317 = vpack.c.b16 %v6557, %v6513
        %v8318 = vpack.c.b16 %v6558, %v6514
        %v8319 = vpack.c.b16 %v6559, %v6515
        %v8320 = vpack.c.b16 %v6560, %v6516
        %v8321 = vpack.c.b16 %v6561, %v6517
        %v8322 = vpack.c.b16 %v6562, %v6518
        %v8323 = vpack.c.b16 %v6563, %v6519
        %v8324 = vpack.c.b16 %v6564, %v6520
        %v8325 = vpack.c.b16 %v6565, %v6521
        %v8326 = vpack.c.b16 %v6566, %v6522
        %v8327 = vpack.c.b16 %v6567, %v6523
        %v8328 = vpack.c.b16 %v6568, %v6524
        %v8329 = vpack.c.b16 %v6569, %v6525
        %v8330 = vpack.c.b16 %v6570, %v6526
        %v8331 = vpack.c.b16 %v6571, %v6527
        %v8332 = vpack.c.b16 %v6572, %v6528
        %v8333 = vpack.c.b16 %v6573, %v6529
        %v8334 = vpack.c.b16 %v6574, %v6530
        %v8335 = vpack.c.b16 %v6575, %v6531
        %v8336 = vpack.c.b16 %v6576, %v6532
        %v8337 = vpack.c.b16 %v6577, %v6533
        %v8338 = vpack.c.b16 %v6578, %v6534
        %v8339 = vpack.c.b16 %v6579, %v6535
        %v8340 = vpack.c.b16 %v6580, %v6536
        %v8341 = vpack.c.b16 %v6581, %v6537
        %v8342 = vpack.c.b16 %v6626, %v6582
        %v8343 = vpack.c.b16 %v6627, %v6583
        %v8344 = vpack.c.b16 %v6628, %v6584
        %v8345 = vpack.c.b16 %v6629, %v6585
        %v8346 = vpack.c.b16 %v6630, %v6586
        %v8347 = vpack.c.b16 %v6631, %v6587
        %v8348 = vpack.c.b16 %v6632, %v6588
        %v8349 = vpack.c.b16 %v6633, %v6589
        %v8350 = vpack.c.b16 %v6634, %v6590
        %v8351 = vpack.c.b16 %v6635, %v6591
        %v8352 = vpack.c.b16 %v6636, %v6592
        %v8353 = vpack.c.b16 %v6637, %v6593
        %v8354 = vpack.c.b16 %v6638, %v6594
        %v8355 = vpack.c.b16 %v6639, %v6595
        %v8356 = vpack.c.b16 %v6640, %v6596
        %v8357 = vpack.c.b16 %v6641, %v6597
        %v8358 = vpack.c.b16 %v6642, %v6598
        %v8359 = vpack.c.b16 %v6643, %v6599
        %v8360 = vpack.c.b16 %v6644, %v6600
        %v8361 = vpack.c.b16 %v6645, %v6601
        %v8362 = vpack.c.b16 %v6646, %v6602
        %v8363 = vpack.c.b16 %v6647, %v6603
        %v8364 = vpack.c.b16 %v6648, %v6604
        %v8365 = vpack.c.b16 %v6649, %v6605
        %v8366 = vpack.c.b16 %v6650, %v6606
        %v8367 = vpack.c.b16 %v6651, %v6607
        %v8368 = vpack.c.b16 %v6652, %v6608
        %v8369 = vpack.c.b16 %v6653, %v6609
        %v8370 = vpack.c.b16 %v6654, %v6610
        %v8371 = vpack.c.b16 %v6655, %v6611
        %v8372 = vpack.c.b16 %v6656, %v6612
        %v8373 = vpack.c.b16 %v6657, %v6613
        %v8374 = vpack.c.b16 %v6658, %v6614
        %v8375 = vpack.c.b16 %v6659, %v6615
        %v8376 = vpack.c.b16 %v6660, %v6616
        %v8377 = vpack.c.b16 %v6661, %v6617
        %v8378 = vpack.c.b16 %v6662, %v6618
        %v8379 = vpack.c.b16 %v6663, %v6619
        %v8380 = vpack.c.b16 %v6664, %v6620
        %v8381 = vpack.c.b16 %v6665, %v6621
        %v8382 = vpack.c.b16 %v6666, %v6622
        %v8383 = vpack.c.b16 %v6667, %v6623
        %v8384 = vpack.c.b16 %v6668, %v6624
        %v8385 = vpack.c.b16 %v6669, %v6625
        %v8386 = vpack.c.b16 %v6714, %v6670
        %v8387 = vpack.c.b16 %v6715, %v6671
        %v8388 = vpack.c.b16 %v6716, %v6672
        %v8389 = vpack.c.b16 %v6717, %v6673
        %v8390 = vpack.c.b16 %v6718, %v6674
        %v8391 = vpack.c.b16 %v6719, %v6675
        %v8392 = vpack.c.b16 %v6720, %v6676
        %v8393 = vpack.c.b16 %v6721, %v6677
        %v8394 = vpack.c.b16 %v6722, %v6678
        %v8395 = vpack.c.b16 %v6723, %v6679
        %v8396 = vpack.c.b16 %v6724, %v6680
        %v8397 = vpack.c.b16 %v6725, %v6681
        %v8398 = vpack.c.b16 %v6726, %v6682
        %v8399 = vpack.c.b16 %v6727, %v6683
        %v8400 = vpack.c.b16 %v6728, %v6684
        %v8401 = vpack.c.b16 %v6729, %v6685
        %v8402 = vpack.c.b16 %v6730, %v6686
        %v8403 = vpack.c.b16 %v6731, %v6687
        %v8404 = vpack.c.b16 %v6732, %v6688
        %v8405 = vpack.c.b16 %v6733, %v6689
        %v8406 = vpack.c.b16 %v6734, %v6690
        %v8407 = vpack.c.b16 %v6735, %v6691
        %v8408 = vpack.c.b16 %v6736, %v6692
        %v8409 = vpack.c.b16 %v6737, %v6693
        %v8410 = vpack.c.b16 %v6738, %v6694
        %v8411 = vpack.c.b16 %v6739, %v6695
        %v8412 = vpack.c.b16 %v6740, %v6696
        %v8413 = vpack.c.b16 %v6741, %v6697
        %v8414 = vpack.c.b16 %v6742, %v6698
        %v8415 = vpack.c.b16 %v6743, %v6699
        %v8416 = vpack.c.b16 %v6744, %v6700
        %v8417 = vpack.c.b16 %v6745, %v6701
        %v8418 = vpack.c.b16 %v6746, %v6702
        %v8419 = vpack.c.b16 %v6747, %v6703
        %v8420 = vpack.c.b16 %v6748, %v6704
        %v8421 = vpack.c.b16 %v6749, %v6705
        %v8422 = vpack.c.b16 %v6750, %v6706
        %v8423 = vpack.c.b16 %v6751, %v6707
        %v8424 = vpack.c.b16 %v6752, %v6708
        %v8425 = vpack.c.b16 %v6753, %v6709
        %v8426 = vpack.c.b16 %v6754, %v6710
        %v8427 = vpack.c.b16 %v6755, %v6711
        %v8428 = vpack.c.b16 %v6756, %v6712
        %v8429 = vpack.c.b16 %v6757, %v6713
        %v8430 = vpack.c.b16 %v6802, %v6758
        %v8431 = vpack.c.b16 %v6803, %v6759
        %v8432 = vpack.c.b16 %v6804, %v6760
        %v8433 = vpack.c.b16 %v6805, %v6761
        %v8434 = vpack.c.b16 %v6806, %v6762
        %v8435 = vpack.c.b16 %v6807, %v6763
        %v8436 = vpack.c.b16 %v6808, %v6764
        %v8437 = vpack.c.b16 %v6809, %v6765
        %v8438 = vpack.c.b16 %v6810, %v6766
        %v8439 = vpack.c.b16 %v6811, %v6767
        %v8440 = vpack.c.b16 %v6812, %v6768
        %v8441 = vpack.c.b16 %v6813, %v6769
        %v8442 = vpack.c.b16 %v6814, %v6770
        %v8443 = vpack.c.b16 %v6815, %v6771
        %v8444 = vpack.c.b16 %v6816, %v6772
        %v8445 = vpack.c.b16 %v6817, %v6773
        %v8446 = vpack.c.b16 %v6818, %v6774
        %v8447 = vpack.c.b16 %v6819, %v6775
        %v8448 = vpack.c.b16 %v6820, %v6776
        %v8449 = vpack.c.b16 %v6821, %v6777
        %v8450 = vpack.c.b16 %v6822, %v6778
        %v8451 = vpack.c.b16 %v6823, %v6779
        %v8452 = vpack.c.b16 %v6824, %v6780
        %v8453 = vpack.c.b16 %v6825, %v6781
        %v8454 = vpack.c.b16 %v6826, %v6782
        %v8455 = vpack.c.b16 %v6827, %v6783
        %v8456 = vpack.c.b16 %v6828, %v6784
        %v8457 = vpack.c.b16 %v6829, %v6785
        %v8458 = vpack.c.b16 %v6830, %v6786
        %v8459 = vpack.c.b16 %v6831, %v6787
        %v8460 = vpack.c.b16 %v6832, %v6788
        %v8461 = vpack.c.b16 %v6833, %v6789
        %v8462 = vpack.c.b16 %v6834, %v6790
        %v8463 = vpack.c.b16 %v6835, %v6791
        %v8464 = vpack.c.b16 %v6836, %v6792
        %v8465 = vpack.c.b16 %v6837, %v6793
        %v8466 = vpack.c.b16 %v6838, %v6794
        %v8467 = vpack.c.b16 %v6839, %v6795
        %v8468 = vpack.c.b16 %v6840, %v6796
        %v8469 = vpack.c.b16 %v6841, %v6797
        %v8470 = vpack.c.b16 %v6842, %v6798
        %v8471 = vpack.c.b16 %v6843, %v6799
        %v8472 = vpack.c.b16 %v6844, %v6800
        %v8473 = vpack.c.b16 %v6845, %v6801
        %v8474 = vpack.c.b16 %v6890, %v6846
        %v8475 = vpack.c.b16 %v6891, %v6847
        %v8476 = vpack.c.b16 %v6892, %v6848
        %v8477 = vpack.c.b16 %v6893, %v6849
        %v8478 = vpack.c.b16 %v6894, %v6850
        %v8479 = vpack.c.b16 %v6895, %v6851
        %v8480 = vpack.c.b16 %v6896, %v6852
        %v8481 = vpack.c.b16 %v6897, %v6853
        %v8482 = vpack.c.b16 %v6898, %v6854
        %v8483 = vpack.c.b16 %v6899, %v6855
        %v8484 = vpack.c.b16 %v6900, %v6856
        %v8485 = vpack.c.b16 %v6901, %v6857
        %v8486 = vpack.c.b16 %v6902, %v6858
        %v8487 = vpack.c.b16 %v6903, %v6859
        %v8488 = vpack.c.b16 %v6904, %v6860
        %v8489 = vpack.c.b16 %v6905, %v6861
        %v8490 = vpack.c.b16 %v6906, %v6862
        %v8491 = vpack.c.b16 %v6907, %v6863
        %v8492 = vpack.c.b16 %v6908, %v6864
        %v8493 = vpack.c.b16 %v6909, %v6865
        %v8494 = vpack.c.b16 %v6910, %v6866
        %v8495 = vpack.c.b16 %v6911, %v6867
        %v8496 = vpack.c.b16 %v6912, %v6868
        %v8497 = vpack.c.b16 %v6913, %v6869
        %v8498 = vpack.c.b16 %v6914, %v6870
        %v8499 = vpack.c.b16 %v6915, %v6871
        %v8500 = vpack.c.b16 %v6916, %v6872
        %v8501 = vpack.c.b16 %v6917, %v6873
        %v8502 = vpack.c.b16 %v6918, %v6874
        %v8503 = vpack.c.b16 %v6919, %v6875
        %v8504 = vpack.c.b16 %v6920, %v6876
        %v8505 = vpack.c.b16 %v6921, %v6877
        %v8506 = vpack.c.b16 %v6922, %v6878
        %v8507 = vpack.c.b16 %v6923, %v6879
        %v8508 = vpack.c.b16 %v6924, %v6880
        %v8509 = vpack.c.b16 %v6925, %v6881
        %v8510 = vpack.c.b16 %v6926, %v6882
        %v8511 = vpack.c.b16 %v6927, %v6883
        %v8512 = vpack.c.b16 %v6928, %v6884
        %v8513 = vpack.c.b16 %v6929, %v6885
        %v8514 = vpack.c.b16 %v6930, %v6886
        %v8515 = vpack.c.b16 %v6931, %v6887
        %v8516 = vpack.c.b16 %v6932, %v6888
        %v8517 = vpack.c.b16 %v6933, %v6889
        %v8518 = vpack.c.b16 %v6978, %v6934
        %v8519 = vpack.c.b16 %v6979, %v6935
        %v8520 = vpack.c.b16 %v6980, %v6936
        %v8521 = vpack.c.b16 %v6981, %v6937
        %v8522 = vpack.c.b16 %v6982, %v6938
        %v8523 = vpack.c.b16 %v6983, %v6939
        %v8524 = vpack.c.b16 %v6984, %v6940
        %v8525 = vpack.c.b16 %v6985, %v6941
        %v8526 = vpack.c.b16 %v6986, %v6942
        %v8527 = vpack.c.b16 %v6987, %v6943
        %v8528 = vpack.c.b16 %v6988, %v6944
        %v8529 = vpack.c.b16 %v6989, %v6945
        %v8530 = vpack.c.b16 %v6990, %v6946
        %v8531 = vpack.c.b16 %v6991, %v6947
        %v8532 = vpack.c.b16 %v6992, %v6948
        %v8533 = vpack.c.b16 %v6993, %v6949
        %v8534 = vpack.c.b16 %v6994, %v6950
        %v8535 = vpack.c.b16 %v6995, %v6951
        %v8536 = vpack.c.b16 %v6996, %v6952
        %v8537 = vpack.c.b16 %v6997, %v6953
        %v8538 = vpack.c.b16 %v6998, %v6954
        %v8539 = vpack.c.b16 %v6999, %v6955
        %v8540 = vpack.c.b16 %v7000, %v6956
        %v8541 = vpack.c.b16 %v7001, %v6957
        %v8542 = vpack.c.b16 %v7002, %v6958
        %v8543 = vpack.c.b16 %v7003, %v6959
        %v8544 = vpack.c.b16 %v7004, %v6960
        %v8545 = vpack.c.b16 %v7005, %v6961
        %v8546 = vpack.c.b16 %v7006, %v6962
        %v8547 = vpack.c.b16 %v7007, %v6963
        %v8548 = vpack.c.b16 %v7008, %v6964
        %v8549 = vpack.c.b16 %v7009, %v6965
        %v8550 = vpack.c.b16 %v7010, %v6966
        %v8551 = vpack.c.b16 %v7011, %v6967
        %v8552 = vpack.c.b16 %v7012, %v6968
        %v8553 = vpack.c.b16 %v7013, %v6969
        %v8554 = vpack.c.b16 %v7014, %v6970
        %v8555 = vpack.c.b16 %v7015, %v6971
        %v8556 = vpack.c.b16 %v7016, %v6972
        %v8557 = vpack.c.b16 %v7017, %v6973
        %v8558 = vpack.c.b16 %v7018, %v6974
        %v8559 = vpack.c.b16 %v7019, %v6975
        %v8560 = vpack.c.b16 %v7020, %v6976
        %v8561 = vpack.c.b16 %v7021, %v6977
        %v8562 = vpack.c.b16 %v7066, %v7022
        %v8563 = vpack.c.b16 %v7067, %v7023
        %v8564 = vpack.c.b16 %v7068, %v7024
        %v8565 = vpack.c.b16 %v7069, %v7025
        %v8566 = vpack.c.b16 %v7070, %v7026
        %v8567 = vpack.c.b16 %v7071, %v7027
        %v8568 = vpack.c.b16 %v7072, %v7028
        %v8569 = vpack.c.b16 %v7073, %v7029
        %v8570 = vpack.c.b16 %v7074, %v7030
        %v8571 = vpack.c.b16 %v7075, %v7031
        %v8572 = vpack.c.b16 %v7076, %v7032
        %v8573 = vpack.c.b16 %v7077, %v7033
        %v8574 = vpack.c.b16 %v7078, %v7034
        %v8575 = vpack.c.b16 %v7079, %v7035
        %v8576 = vpack.c.b16 %v7080, %v7036
        %v8577 = vpack.c.b16 %v7081, %v7037
        %v8578 = vpack.c.b16 %v7082, %v7038
        %v8579 = vpack.c.b16 %v7083, %v7039
        %v8580 = vpack.c.b16 %v7084, %v7040
        %v8581 = vpack.c.b16 %v7085, %v7041
        %v8582 = vpack.c.b16 %v7086, %v7042
        %v8583 = vpack.c.b16 %v7087, %v7043
        %v8584 = vpack.c.b16 %v7088, %v7044
        %v8585 = vpack.c.b16 %v7089, %v7045
        %v8586 = vpack.c.b16 %v7090, %v7046
        %v8587 = vpack.c.b16 %v7091, %v7047
        %v8588 = vpack.c.b16 %v7092, %v7048
        %v8589 = vpack.c.b16 %v7093, %v7049
        %v8590 = vpack.c.b16 %v7094, %v7050
        %v8591 = vpack.c.b16 %v7095, %v7051
        %v8592 = vpack.c.b16 %v7096, %v7052
        %v8593 = vpack.c.b16 %v7097, %v7053
        %v8594 = vpack.c.b16 %v7098, %v7054
        %v8595 = vpack.c.b16 %v7099, %v7055
        %v8596 = vpack.c.b16 %v7100, %v7056
        %v8597 = vpack.c.b16 %v7101, %v7057
        %v8598 = vpack.c.b16 %v7102, %v7058
        %v8599 = vpack.c.b16 %v7103, %v7059
        %v8600 = vpack.c.b16 %v7104, %v7060
        %v8601 = vpack.c.b16 %v7105, %v7061
        %v8602 = vpack.c.b16 %v7106, %v7062
        %v8603 = vpack.c.b16 %v7107, %v7063
        %v8604 = vpack.c.b16 %v7108, %v7064
        %v8605 = vpack.c.b16 %v7109, %v7065
        %v8606 = vpack.c.b16 %v7154, %v7110
        %v8607 = vpack.c.b16 %v7155, %v7111
        %v8608 = vpack.c.b16 %v7156, %v7112
        %v8609 = vpack.c.b16 %v7157, %v7113
        %v8610 = vpack.c.b16 %v7158, %v7114
        %v8611 = vpack.c.b16 %v7159, %v7115
        %v8612 = vpack.c.b16 %v7160, %v7116
        %v8613 = vpack.c.b16 %v7161, %v7117
        %v8614 = vpack.c.b16 %v7162, %v7118
        %v8615 = vpack.c.b16 %v7163, %v7119
        %v8616 = vpack.c.b16 %v7164, %v7120
        %v8617 = vpack.c.b16 %v7165, %v7121
        %v8618 = vpack.c.b16 %v7166, %v7122
        %v8619 = vpack.c.b16 %v7167, %v7123
        %v8620 = vpack.c.b16 %v7168, %v7124
        %v8621 = vpack.c.b16 %v7169, %v7125
        %v8622 = vpack.c.b16 %v7170, %v7126
        %v8623 = vpack.c.b16 %v7171, %v7127
        %v8624 = vpack.c.b16 %v7172, %v7128
        %v8625 = vpack.c.b16 %v7173, %v7129
        %v8626 = vpack.c.b16 %v7174, %v7130
        %v8627 = vpack.c.b16 %v7175, %v7131
        %v8628 = vpack.c.b16 %v7176, %v7132
        %v8629 = vpack.c.b16 %v7177, %v7133
        %v8630 = vpack.c.b16 %v7178, %v7134
        %v8631 = vpack.c.b16 %v7179, %v7135
        %v8632 = vpack.c.b16 %v7180, %v7136
        %v8633 = vpack.c.b16 %v7181, %v7137
        %v8634 = vpack.c.b16 %v7182, %v7138
        %v8635 = vpack.c.b16 %v7183, %v7139
        %v8636 = vpack.c.b16 %v7184, %v7140
        %v8637 = vpack.c.b16 %v7185, %v7141
        %v8638 = vpack.c.b16 %v7186, %v7142
        %v8639 = vpack.c.b16 %v7187, %v7143
        %v8640 = vpack.c.b16 %v7188, %v7144
        %v8641 = vpack.c.b16 %v7189, %v7145
        %v8642 = vpack.c.b16 %v7190, %v7146
        %v8643 = vpack.c.b16 %v7191, %v7147
        %v8644 = vpack.c.b16 %v7192, %v7148
        %v8645 = vpack.c.b16 %v7193, %v7149
        %v8646 = vpack.c.b16 %v7194, %v7150
        %v8647 = vpack.c.b16 %v7195, %v7151
        %v8648 = vpack.c.b16 %v7196, %v7152
        %v8649 = vpack.c.b16 %v7197, %v7153
        %v8650 = vpack.c.b16 %v7242, %v7198
        %v8651 = vpack.c.b16 %v7243, %v7199
        %v8652 = vpack.c.b16 %v7244, %v7200
        %v8653 = vpack.c.b16 %v7245, %v7201
        %v8654 = vpack.c.b16 %v7246, %v7202
        %v8655 = vpack.c.b16 %v7247, %v7203
        %v8656 = vpack.c.b16 %v7248, %v7204
        %v8657 = vpack.c.b16 %v7249, %v7205
        %v8658 = vpack.c.b16 %v7250, %v7206
        %v8659 = vpack.c.b16 %v7251, %v7207
        %v8660 = vpack.c.b16 %v7252, %v7208
        %v8661 = vpack.c.b16 %v7253, %v7209
        %v8662 = vpack.c.b16 %v7254, %v7210
        %v8663 = vpack.c.b16 %v7255, %v7211
        %v8664 = vpack.c.b16 %v7256, %v7212
        %v8665 = vpack.c.b16 %v7257, %v7213
        %v8666 = vpack.c.b16 %v7258, %v7214
        %v8667 = vpack.c.b16 %v7259, %v7215
        %v8668 = vpack.c.b16 %v7260, %v7216
        %v8669 = vpack.c.b16 %v7261, %v7217
        %v8670 = vpack.c.b16 %v7262, %v7218
        %v8671 = vpack.c.b16 %v7263, %v7219
        %v8672 = vpack.c.b16 %v7264, %v7220
        %v8673 = vpack.c.b16 %v7265, %v7221
        %v8674 = vpack.c.b16 %v7266, %v7222
        %v8675 = vpack.c.b16 %v7267, %v7223
        %v8676 = vpack.c.b16 %v7268, %v7224
        %v8677 = vpack.c.b16 %v7269, %v7225
        %v8678 = vpack.c.b16 %v7270, %v7226
        %v8679 = vpack.c.b16 %v7271, %v7227
        %v8680 = vpack.c.b16 %v7272, %v7228
        %v8681 = vpack.c.b16 %v7273, %v7229
        %v8682 = vpack.c.b16 %v7274, %v7230
        %v8683 = vpack.c.b16 %v7275, %v7231
        %v8684 = vpack.c.b16 %v7276, %v7232
        %v8685 = vpack.c.b16 %v7277, %v7233
        %v8686 = vpack.c.b16 %v7278, %v7234
        %v8687 = vpack.c.b16 %v7279, %v7235
        %v8688 = vpack.c.b16 %v7280, %v7236
        %v8689 = vpack.c.b16 %v7281, %v7237
        %v8690 = vpack.c.b16 %v7282, %v7238
        %v8691 = vpack.c.b16 %v7283, %v7239
        %v8692 = vpack.c.b16 %v7284, %v7240
        %v8693 = vpack.c.b16 %v7285, %v7241
        %10102 = vmatprep.subr.bf16.mxu0 %v7595
        %10103 = vmatpush1.bf16.msra.mxu0 %v7594
        %10104 = vmatprep.subr.bf16.mxu0 %v7551
        %10105 = vmatpush1.bf16.msra.mxu0 %v7550
        %10106 = vmatprep.subr.bf16.mxu0 %v7507
        %10107 = vmatpush1.bf16.msra.mxu0 %v7506
        %10108 = vmatprep.subr.bf16.mxu0 %v7463
        %10109 = vmatpush1.bf16.msra.mxu0 %v7462
        %10110 = vmatprep.subr.bf16.mxu0 %v7419
        %10111 = vmatpush1.bf16.msra.mxu0 %v7418
        %10112 = vmatprep.subr.bf16.mxu0 %v7375
        %10113 = vmatpush1.bf16.msra.mxu0 %v7374
        %10114 = vmatprep.subr.bf16.mxu0 %v7331
        %10115 = vmatpush1.bf16.msra.mxu0 %v7330
        %10116 = vmatprep.subr.bf16.mxu0 %v7287
        %10117 = vmatpush1.bf16.msra.mxu0 %v7286
        %10118 = vmatprep.subr.bf16.mxu0 %v7947
        %10119 = vmatpush2.bf16.msra.mxu0 %v7946
        %10120 = vmatprep.subr.bf16.mxu0 %v7903
        %10121 = vmatpush2.bf16.msra.mxu0 %v7902
        %10122 = vmatprep.subr.bf16.mxu0 %v7859
        %10123 = vmatpush2.bf16.msra.mxu0 %v7858
        %10124 = vmatprep.subr.bf16.mxu0 %v7815
        %10125 = vmatpush2.bf16.msra.mxu0 %v7814
        %10126 = vmatprep.subr.bf16.mxu0 %v7771
        %10127 = vmatpush2.bf16.msra.mxu0 %v7770
        %10128 = vmatprep.subr.bf16.mxu0 %v7727
        %10129 = vmatpush2.bf16.msra.mxu0 %v7726
        %10130 = vmatprep.subr.bf16.mxu0 %v7683
        %10131 = vmatpush2.bf16.msra.mxu0 %v7682
        %10132 = vmatprep.subr.bf16.mxu0 %v7639
        %10133 = vmatpush2.bf16.msra.mxu0 %v7638
        %10134 = vmatprep.mubr.bf16.mxu0 %v1419
        %10135 = vmatmul.mubr.bf16.gmra.mxu0 %v1418
        %v10136 = vpop.f32.mrf.mxu0
        %v10137 = vadd.f32 %v2845, %v10136
        %v10138 = vpop.f32.mrf.mxu0
        %v10139 = vadd.f32 %v2849, %v10138
        %v10140 = vpop.f32.mrf.mxu0
        %v10141 = vpop.f32.mrf.mxu0
        %10142 = vdwg.mxu0
        %10143 = vmatprep.subr.bf16.mxu0 %v8299
        %10144 = vmatpush1.bf16.msra.mxu0 %v8298
        %10145 = vmatprep.subr.bf16.mxu0 %v8255
        %10146 = vmatpush1.bf16.msra.mxu0 %v8254
        %10147 = vmatprep.subr.bf16.mxu0 %v8211
        %10148 = vmatpush1.bf16.msra.mxu0 %v8210
        %10149 = vmatprep.subr.bf16.mxu0 %v8167
        %10150 = vmatpush1.bf16.msra.mxu0 %v8166
        %10151 = vmatprep.subr.bf16.mxu0 %v8123
        %10152 = vmatpush1.bf16.msra.mxu0 %v8122
        %10153 = vmatprep.subr.bf16.mxu0 %v8079
        %10154 = vmatpush1.bf16.msra.mxu0 %v8078
        %10155 = vmatprep.subr.bf16.mxu0 %v8035
        %10156 = vmatpush1.bf16.msra.mxu0 %v8034
        %10157 = vmatprep.subr.bf16.mxu0 %v7991
        %10158 = vmatpush1.bf16.msra.mxu0 %v7990
        %10159 = vmatprep.subr.bf16.mxu0 %v8651
        %10160 = vmatpush2.bf16.msra.mxu0 %v8650
        %10161 = vmatprep.subr.bf16.mxu0 %v8607
        %10162 = vmatpush2.bf16.msra.mxu0 %v8606
        %10163 = vmatprep.subr.bf16.mxu0 %v8563
        %10164 = vmatpush2.bf16.msra.mxu0 %v8562
        %10165 = vmatprep.subr.bf16.mxu0 %v8519
        %10166 = vmatpush2.bf16.msra.mxu0 %v8518
        %10167 = vmatprep.subr.bf16.mxu0 %v8475
        %10168 = vmatpush2.bf16.msra.mxu0 %v8474
        %10169 = vmatprep.subr.bf16.mxu0 %v8431
        %10170 = vmatpush2.bf16.msra.mxu0 %v8430
        %10171 = vmatprep.subr.bf16.mxu0 %v8387
        %10172 = vmatpush2.bf16.msra.mxu0 %v8386
        %10173 = vmatprep.subr.bf16.mxu0 %v8343
        %10174 = vmatpush2.bf16.msra.mxu0 %v8342
        %10175 = vmatprep.mubr.bf16.mxu0 %v1421
        %10176 = vmatmul.mubr.bf16.gmra.mxu0 %v1420
        %v10177 = vpop.f32.mrf.mxu0
        %v10178 = vadd.f32 %v10137, %v10177
        %v10179 = vpop.f32.mrf.mxu0
        %v10180 = vadd.f32 %v10139, %v10179
        %v10181 = vpop.f32.mrf.mxu0
        %v10182 = vpop.f32.mrf.mxu0
        %10183 = vdwg.mxu0
        %10184 = vmatprep.subr.bf16.mxu0 %v7597
        %10185 = vmatpush1.bf16.msra.mxu0 %v7596
        %10186 = vmatprep.subr.bf16.mxu0 %v7553
        %10187 = vmatpush1.bf16.msra.mxu0 %v7552
        %10188 = vmatprep.subr.bf16.mxu0 %v7509
        %10189 = vmatpush1.bf16.msra.mxu0 %v7508
        %10190 = vmatprep.subr.bf16.mxu0 %v7465
        %10191 = vmatpush1.bf16.msra.mxu0 %v7464
        %10192 = vmatprep.subr.bf16.mxu0 %v7421
        %10193 = vmatpush1.bf16.msra.mxu0 %v7420
        %10194 = vmatprep.subr.bf16.mxu0 %v7377
        %10195 = vmatpush1.bf16.msra.mxu0 %v7376
        %10196 = vmatprep.subr.bf16.mxu0 %v7333
        %10197 = vmatpush1.bf16.msra.mxu0 %v7332
        %10198 = vmatprep.subr.bf16.mxu0 %v7289
        %10199 = vmatpush1.bf16.msra.mxu0 %v7288
        %10200 = vmatprep.subr.bf16.mxu0 %v7949
        %10201 = vmatpush2.bf16.msra.mxu0 %v7948
        %10202 = vmatprep.subr.bf16.mxu0 %v7905
        %10203 = vmatpush2.bf16.msra.mxu0 %v7904
        %10204 = vmatprep.subr.bf16.mxu0 %v7861
        %10205 = vmatpush2.bf16.msra.mxu0 %v7860
        %10206 = vmatprep.subr.bf16.mxu0 %v7817
        %10207 = vmatpush2.bf16.msra.mxu0 %v7816
        %10208 = vmatprep.subr.bf16.mxu0 %v7773
        %10209 = vmatpush2.bf16.msra.mxu0 %v7772
        %10210 = vmatprep.subr.bf16.mxu0 %v7729
        %10211 = vmatpush2.bf16.msra.mxu0 %v7728
        %10212 = vmatprep.subr.bf16.mxu0 %v7685
        %10213 = vmatpush2.bf16.msra.mxu0 %v7684
        %10214 = vmatprep.subr.bf16.mxu0 %v7641
        %10215 = vmatpush2.bf16.msra.mxu0 %v7640
        %10216 = vmatprep.mubr.bf16.mxu0 %v1419
        %10217 = vmatmul.mubr.bf16.gmra.mxu0 %v1418
        %v10218 = vpop.f32.mrf.mxu0
        %v10219 = vadd.f32 %v2853, %v10218
        %v10220 = vpop.f32.mrf.mxu0
        %v10221 = vadd.f32 %v2857, %v10220
        %v10222 = vpop.f32.mrf.mxu0
        %v10223 = vpop.f32.mrf.mxu0
        %10224 = vdwg.mxu0
        %10225 = vmatprep.subr.bf16.mxu0 %v8301
        %10226 = vmatpush1.bf16.msra.mxu0 %v8300
        %10227 = vmatprep.subr.bf16.mxu0 %v8257
        %10228 = vmatpush1.bf16.msra.mxu0 %v8256
        %10229 = vmatprep.subr.bf16.mxu0 %v8213
        %10230 = vmatpush1.bf16.msra.mxu0 %v8212
        %10231 = vmatprep.subr.bf16.mxu0 %v8169
        %10232 = vmatpush1.bf16.msra.mxu0 %v8168
        %10233 = vmatprep.subr.bf16.mxu0 %v8125
        %10234 = vmatpush1.bf16.msra.mxu0 %v8124
        %10235 = vmatprep.subr.bf16.mxu0 %v8081
        %10236 = vmatpush1.bf16.msra.mxu0 %v8080
        %10237 = vmatprep.subr.bf16.mxu0 %v8037
        %10238 = vmatpush1.bf16.msra.mxu0 %v8036
        %10239 = vmatprep.subr.bf16.mxu0 %v7993
        %10240 = vmatpush1.bf16.msra.mxu0 %v7992
        %10241 = vmatprep.subr.bf16.mxu0 %v8653
        %10242 = vmatpush2.bf16.msra.mxu0 %v8652
        %10243 = vmatprep.subr.bf16.mxu0 %v8609
        %10244 = vmatpush2.bf16.msra.mxu0 %v8608
        %10245 = vmatprep.subr.bf16.mxu0 %v8565
        %10246 = vmatpush2.bf16.msra.mxu0 %v8564
        %10247 = vmatprep.subr.bf16.mxu0 %v8521
        %10248 = vmatpush2.bf16.msra.mxu0 %v8520
        %10249 = vmatprep.subr.bf16.mxu0 %v8477
        %10250 = vmatpush2.bf16.msra.mxu0 %v8476
        %10251 = vmatprep.subr.bf16.mxu0 %v8433
        %10252 = vmatpush2.bf16.msra.mxu0 %v8432
        %10253 = vmatprep.subr.bf16.mxu0 %v8389
        %10254 = vmatpush2.bf16.msra.mxu0 %v8388
        %10255 = vmatprep.subr.bf16.mxu0 %v8345
        %10256 = vmatpush2.bf16.msra.mxu0 %v8344
        %10257 = vmatprep.mubr.bf16.mxu0 %v1421
        %10258 = vmatmul.mubr.bf16.gmra.mxu0 %v1420
        %v10259 = vpop.f32.mrf.mxu0
        %v10260 = vadd.f32 %v10219, %v10259
        %v10261 = vpop.f32.mrf.mxu0
        %v10262 = vadd.f32 %v10221, %v10261
        %v10263 = vpop.f32.mrf.mxu0
        %v10264 = vpop.f32.mrf.mxu0
        %10265 = vdwg.mxu0
        %10266 = vmatprep.subr.bf16.mxu0 %v7599
        %10267 = vmatpush1.bf16.msra.mxu0 %v7598
        %10268 = vmatprep.subr.bf16.mxu0 %v7555
        %10269 = vmatpush1.bf16.msra.mxu0 %v7554
        %10270 = vmatprep.subr.bf16.mxu0 %v7511
        %10271 = vmatpush1.bf16.msra.mxu0 %v7510
        %10272 = vmatprep.subr.bf16.mxu0 %v7467
        %10273 = vmatpush1.bf16.msra.mxu0 %v7466
        %10274 = vmatprep.subr.bf16.mxu0 %v7423
        %10275 = vmatpush1.bf16.msra.mxu0 %v7422
        %10276 = vmatprep.subr.bf16.mxu0 %v7379
        %10277 = vmatpush1.bf16.msra.mxu0 %v7378
        %10278 = vmatprep.subr.bf16.mxu0 %v7335
        %10279 = vmatpush1.bf16.msra.mxu0 %v7334
        %10280 = vmatprep.subr.bf16.mxu0 %v7291
        %10281 = vmatpush1.bf16.msra.mxu0 %v7290
        %10282 = vmatprep.subr.bf16.mxu0 %v7951
        %10283 = vmatpush2.bf16.msra.mxu0 %v7950
        %10284 = vmatprep.subr.bf16.mxu0 %v7907
        %10285 = vmatpush2.bf16.msra.mxu0 %v7906
        %10286 = vmatprep.subr.bf16.mxu0 %v7863
        %10287 = vmatpush2.bf16.msra.mxu0 %v7862
        %10288 = vmatprep.subr.bf16.mxu0 %v7819
        %10289 = vmatpush2.bf16.msra.mxu0 %v7818
        %10290 = vmatprep.subr.bf16.mxu0 %v7775
        %10291 = vmatpush2.bf16.msra.mxu0 %v7774
        %10292 = vmatprep.subr.bf16.mxu0 %v7731
        %10293 = vmatpush2.bf16.msra.mxu0 %v7730
        %10294 = vmatprep.subr.bf16.mxu0 %v7687
        %10295 = vmatpush2.bf16.msra.mxu0 %v7686
        %10296 = vmatprep.subr.bf16.mxu0 %v7643
        %10297 = vmatpush2.bf16.msra.mxu0 %v7642
        %10298 = vmatprep.mubr.bf16.mxu0 %v1419
        %10299 = vmatmul.mubr.bf16.gmra.mxu0 %v1418
        %v10300 = vpop.f32.mrf.mxu0
        %v10301 = vadd.f32 %v2861, %v10300
        %v10302 = vpop.f32.mrf.mxu0
        %v10303 = vadd.f32 %v2865, %v10302
        %v10304 = vpop.f32.mrf.mxu0
        %v10305 = vpop.f32.mrf.mxu0
        %10306 = vdwg.mxu0
        %10307 = vmatprep.subr.bf16.mxu0 %v8303
        %10308 = vmatpush1.bf16.msra.mxu0 %v8302
        %10309 = vmatprep.subr.bf16.mxu0 %v8259
        %10310 = vmatpush1.bf16.msra.mxu0 %v8258
        %10311 = vmatprep.subr.bf16.mxu0 %v8215
        %10312 = vmatpush1.bf16.msra.mxu0 %v8214
        %10313 = vmatprep.subr.bf16.mxu0 %v8171
        %10314 = vmatpush1.bf16.msra.mxu0 %v8170
        %10315 = vmatprep.subr.bf16.mxu0 %v8127
        %10316 = vmatpush1.bf16.msra.mxu0 %v8126
        %10317 = vmatprep.subr.bf16.mxu0 %v8083
        %10318 = vmatpush1.bf16.msra.mxu0 %v8082
        %10319 = vmatprep.subr.bf16.mxu0 %v8039
        %10320 = vmatpush1.bf16.msra.mxu0 %v8038
        %10321 = vmatprep.subr.bf16.mxu0 %v7995
        %10322 = vmatpush1.bf16.msra.mxu0 %v7994
        %10323 = vmatprep.subr.bf16.mxu0 %v8655
        %10324 = vmatpush2.bf16.msra.mxu0 %v8654
        %10325 = vmatprep.subr.bf16.mxu0 %v8611
        %10326 = vmatpush2.bf16.msra.mxu0 %v8610
        %10327 = vmatprep.subr.bf16.mxu0 %v8567
        %10328 = vmatpush2.bf16.msra.mxu0 %v8566
        %10329 = vmatprep.subr.bf16.mxu0 %v8523
        %10330 = vmatpush2.bf16.msra.mxu0 %v8522
        %10331 = vmatprep.subr.bf16.mxu0 %v8479
        %10332 = vmatpush2.bf16.msra.mxu0 %v8478
        %10333 = vmatprep.subr.bf16.mxu0 %v8435
        %10334 = vmatpush2.bf16.msra.mxu0 %v8434
        %10335 = vmatprep.subr.bf16.mxu0 %v8391
        %10336 = vmatpush2.bf16.msra.mxu0 %v8390
        %10337 = vmatprep.subr.bf16.mxu0 %v8347
        %10338 = vmatpush2.bf16.msra.mxu0 %v8346
        %10339 = vmatprep.mubr.bf16.mxu0 %v1421
        %10340 = vmatmul.mubr.bf16.gmra.mxu0 %v1420
        %v10341 = vpop.f32.mrf.mxu0
        %v10342 = vadd.f32 %v10301, %v10341
        %v10343 = vpop.f32.mrf.mxu0
        %v10344 = vadd.f32 %v10303, %v10343
        %v10345 = vpop.f32.mrf.mxu0
        %v10346 = vpop.f32.mrf.mxu0
        %10347 = vdwg.mxu0
        %10348 = vmatprep.subr.bf16.mxu0 %v7601
        %10349 = vmatpush1.bf16.msra.mxu0 %v7600
        %10350 = vmatprep.subr.bf16.mxu0 %v7557
        %10351 = vmatpush1.bf16.msra.mxu0 %v7556
        %10352 = vmatprep.subr.bf16.mxu0 %v7513
        %10353 = vmatpush1.bf16.msra.mxu0 %v7512
        %10354 = vmatprep.subr.bf16.mxu0 %v7469
        %10355 = vmatpush1.bf16.msra.mxu0 %v7468
        %10356 = vmatprep.subr.bf16.mxu0 %v7425
        %10357 = vmatpush1.bf16.msra.mxu0 %v7424
        %10358 = vmatprep.subr.bf16.mxu0 %v7381
        %10359 = vmatpush1.bf16.msra.mxu0 %v7380
        %10360 = vmatprep.subr.bf16.mxu0 %v7337
        %10361 = vmatpush1.bf16.msra.mxu0 %v7336
        %10362 = vmatprep.subr.bf16.mxu0 %v7293
        %10363 = vmatpush1.bf16.msra.mxu0 %v7292
        %10364 = vmatprep.subr.bf16.mxu0 %v7953
        %10365 = vmatpush2.bf16.msra.mxu0 %v7952
        %10366 = vmatprep.subr.bf16.mxu0 %v7909
        %10367 = vmatpush2.bf16.msra.mxu0 %v7908
        %10368 = vmatprep.subr.bf16.mxu0 %v7865
        %10369 = vmatpush2.bf16.msra.mxu0 %v7864
        %10370 = vmatprep.subr.bf16.mxu0 %v7821
        %10371 = vmatpush2.bf16.msra.mxu0 %v7820
        %10372 = vmatprep.subr.bf16.mxu0 %v7777
        %10373 = vmatpush2.bf16.msra.mxu0 %v7776
        %10374 = vmatprep.subr.bf16.mxu0 %v7733
        %10375 = vmatpush2.bf16.msra.mxu0 %v7732
        %10376 = vmatprep.subr.bf16.mxu0 %v7689
        %10377 = vmatpush2.bf16.msra.mxu0 %v7688
        %10378 = vmatprep.subr.bf16.mxu0 %v7645
        %10379 = vmatpush2.bf16.msra.mxu0 %v7644
        %10380 = vmatprep.mubr.bf16.mxu0 %v1419
        %10381 = vmatmul.mubr.bf16.gmra.mxu0 %v1418
        %v10382 = vpop.f32.mrf.mxu0
        %v10383 = vadd.f32 %v2869, %v10382
        %v10384 = vpop.f32.mrf.mxu0
        %v10385 = vadd.f32 %v2873, %v10384
        %v10386 = vpop.f32.mrf.mxu0
        %v10387 = vpop.f32.mrf.mxu0
        %10388 = vdwg.mxu0
        %10389 = vmatprep.subr.bf16.mxu0 %v8305
        %10390 = vmatpush1.bf16.msra.mxu0 %v8304
        %10391 = vmatprep.subr.bf16.mxu0 %v8261
        %10392 = vmatpush1.bf16.msra.mxu0 %v8260
        %10393 = vmatprep.subr.bf16.mxu0 %v8217
        %10394 = vmatpush1.bf16.msra.mxu0 %v8216
        %10395 = vmatprep.subr.bf16.mxu0 %v8173
        %10396 = vmatpush1.bf16.msra.mxu0 %v8172
        %10397 = vmatprep.subr.bf16.mxu0 %v8129
        %10398 = vmatpush1.bf16.msra.mxu0 %v8128
        %10399 = vmatprep.subr.bf16.mxu0 %v8085
        %10400 = vmatpush1.bf16.msra.mxu0 %v8084
        %10401 = vmatprep.subr.bf16.mxu0 %v8041
        %10402 = vmatpush1.bf16.msra.mxu0 %v8040
        %10403 = vmatprep.subr.bf16.mxu0 %v7997
        %10404 = vmatpush1.bf16.msra.mxu0 %v7996
        %10405 = vmatprep.subr.bf16.mxu0 %v8657
        %10406 = vmatpush2.bf16.msra.mxu0 %v8656
        %10407 = vmatprep.subr.bf16.mxu0 %v8613
        %10408 = vmatpush2.bf16.msra.mxu0 %v8612
        %10409 = vmatprep.subr.bf16.mxu0 %v8569
        %10410 = vmatpush2.bf16.msra.mxu0 %v8568
        %10411 = vmatprep.subr.bf16.mxu0 %v8525
        %10412 = vmatpush2.bf16.msra.mxu0 %v8524
        %10413 = vmatprep.subr.bf16.mxu0 %v8481
        %10414 = vmatpush2.bf16.msra.mxu0 %v8480
        %10415 = vmatprep.subr.bf16.mxu0 %v8437
        %10416 = vmatpush2.bf16.msra.mxu0 %v8436
        %10417 = vmatprep.subr.bf16.mxu0 %v8393
        %10418 = vmatpush2.bf16.msra.mxu0 %v8392
        %10419 = vmatprep.subr.bf16.mxu0 %v8349
        %10420 = vmatpush2.bf16.msra.mxu0 %v8348
        %10421 = vmatprep.mubr.bf16.mxu0 %v1421
        %10422 = vmatmul.mubr.bf16.gmra.mxu0 %v1420
        %v10423 = vpop.f32.mrf.mxu0
        %v10424 = vadd.f32 %v10383, %v10423
        %v10425 = vpop.f32.mrf.mxu0
        %v10426 = vadd.f32 %v10385, %v10425
        %v10427 = vpop.f32.mrf.mxu0
        %v10428 = vpop.f32.mrf.mxu0
        %10429 = vdwg.mxu0
        %10430 = vmatprep.subr.bf16.mxu0 %v7603
        %10431 = vmatpush1.bf16.msra.mxu0 %v7602
        %10432 = vmatprep.subr.bf16.mxu0 %v7559
        %10433 = vmatpush1.bf16.msra.mxu0 %v7558
        %10434 = vmatprep.subr.bf16.mxu0 %v7515
        %10435 = vmatpush1.bf16.msra.mxu0 %v7514
        %10436 = vmatprep.subr.bf16.mxu0 %v7471
        %10437 = vmatpush1.bf16.msra.mxu0 %v7470
        %10438 = vmatprep.subr.bf16.mxu0 %v7427
        %10439 = vmatpush1.bf16.msra.mxu0 %v7426
        %10440 = vmatprep.subr.bf16.mxu0 %v7383
        %10441 = vmatpush1.bf16.msra.mxu0 %v7382
        %10442 = vmatprep.subr.bf16.mxu0 %v7339
        %10443 = vmatpush1.bf16.msra.mxu0 %v7338
        %10444 = vmatprep.subr.bf16.mxu0 %v7295
        %10445 = vmatpush1.bf16.msra.mxu0 %v7294
        %10446 = vmatprep.subr.bf16.mxu0 %v7955
        %10447 = vmatpush2.bf16.msra.mxu0 %v7954
        %10448 = vmatprep.subr.bf16.mxu0 %v7911
        %10449 = vmatpush2.bf16.msra.mxu0 %v7910
        %10450 = vmatprep.subr.bf16.mxu0 %v7867
        %10451 = vmatpush2.bf16.msra.mxu0 %v7866
        %10452 = vmatprep.subr.bf16.mxu0 %v7823
        %10453 = vmatpush2.bf16.msra.mxu0 %v7822
        %10454 = vmatprep.subr.bf16.mxu0 %v7779
        %10455 = vmatpush2.bf16.msra.mxu0 %v7778
        %10456 = vmatprep.subr.bf16.mxu0 %v7735
        %10457 = vmatpush2.bf16.msra.mxu0 %v7734
        %10458 = vmatprep.subr.bf16.mxu0 %v7691
        %10459 = vmatpush2.bf16.msra.mxu0 %v7690
        %10460 = vmatprep.subr.bf16.mxu0 %v7647
        %10461 = vmatpush2.bf16.msra.mxu0 %v7646
        %10462 = vmatprep.mubr.bf16.mxu0 %v1419
        %10463 = vmatmul.mubr.bf16.gmra.mxu0 %v1418
        %v10464 = vpop.f32.mrf.mxu0
        %v10465 = vadd.f32 %v2877, %v10464
        %v10466 = vpop.f32.mrf.mxu0
        %v10467 = vadd.f32 %v2881, %v10466
        %v10468 = vpop.f32.mrf.mxu0
        %v10469 = vpop.f32.mrf.mxu0
        %10470 = vdwg.mxu0
        %10471 = vmatprep.subr.bf16.mxu0 %v8307
        %10472 = vmatpush1.bf16.msra.mxu0 %v8306
        %10473 = vmatprep.subr.bf16.mxu0 %v8263
        %10474 = vmatpush1.bf16.msra.mxu0 %v8262
        %10475 = vmatprep.subr.bf16.mxu0 %v8219
        %10476 = vmatpush1.bf16.msra.mxu0 %v8218
        %10477 = vmatprep.subr.bf16.mxu0 %v8175
        %10478 = vmatpush1.bf16.msra.mxu0 %v8174
        %10479 = vmatprep.subr.bf16.mxu0 %v8131
        %10480 = vmatpush1.bf16.msra.mxu0 %v8130
        %10481 = vmatprep.subr.bf16.mxu0 %v8087
        %10482 = vmatpush1.bf16.msra.mxu0 %v8086
        %10483 = vmatprep.subr.bf16.mxu0 %v8043
        %10484 = vmatpush1.bf16.msra.mxu0 %v8042
        %10485 = vmatprep.subr.bf16.mxu0 %v7999
        %10486 = vmatpush1.bf16.msra.mxu0 %v7998
        %10487 = vmatprep.subr.bf16.mxu0 %v8659
        %10488 = vmatpush2.bf16.msra.mxu0 %v8658
        %10489 = vmatprep.subr.bf16.mxu0 %v8615
        %10490 = vmatpush2.bf16.msra.mxu0 %v8614
        %10491 = vmatprep.subr.bf16.mxu0 %v8571
        %10492 = vmatpush2.bf16.msra.mxu0 %v8570
        %10493 = vmatprep.subr.bf16.mxu0 %v8527
        %10494 = vmatpush2.bf16.msra.mxu0 %v8526
        %10495 = vmatprep.subr.bf16.mxu0 %v8483
        %10496 = vmatpush2.bf16.msra.mxu0 %v8482
        %10497 = vmatprep.subr.bf16.mxu0 %v8439
        %10498 = vmatpush2.bf16.msra.mxu0 %v8438
        %10499 = vmatprep.subr.bf16.mxu0 %v8395
        %10500 = vmatpush2.bf16.msra.mxu0 %v8394
        %10501 = vmatprep.subr.bf16.mxu0 %v8351
        %10502 = vmatpush2.bf16.msra.mxu0 %v8350
        %10503 = vmatprep.mubr.bf16.mxu0 %v1421
        %10504 = vmatmul.mubr.bf16.gmra.mxu0 %v1420
        %v10505 = vpop.f32.mrf.mxu0
        %v10506 = vadd.f32 %v10465, %v10505
        %v10507 = vpop.f32.mrf.mxu0
        %v10508 = vadd.f32 %v10467, %v10507
        %v10509 = vpop.f32.mrf.mxu0
        %v10510 = vpop.f32.mrf.mxu0
        %10511 = vdwg.mxu0
        %10512 = vmatprep.subr.bf16.mxu0 %v7605
        %10513 = vmatpush1.bf16.msra.mxu0 %v7604
        %10514 = vmatprep.subr.bf16.mxu0 %v7561
        %10515 = vmatpush1.bf16.msra.mxu0 %v7560
        %10516 = vmatprep.subr.bf16.mxu0 %v7517
        %10517 = vmatpush1.bf16.msra.mxu0 %v7516
        %10518 = vmatprep.subr.bf16.mxu0 %v7473
        %10519 = vmatpush1.bf16.msra.mxu0 %v7472
        %10520 = vmatprep.subr.bf16.mxu0 %v7429
        %10521 = vmatpush1.bf16.msra.mxu0 %v7428
        %10522 = vmatprep.subr.bf16.mxu0 %v7385
        %10523 = vmatpush1.bf16.msra.mxu0 %v7384
        %10524 = vmatprep.subr.bf16.mxu0 %v7341
        %10525 = vmatpush1.bf16.msra.mxu0 %v7340
        %10526 = vmatprep.subr.bf16.mxu0 %v7297
        %10527 = vmatpush1.bf16.msra.mxu0 %v7296
        %10528 = vmatprep.subr.bf16.mxu0 %v7957
        %10529 = vmatpush2.bf16.msra.mxu0 %v7956
        %10530 = vmatprep.subr.bf16.mxu0 %v7913
        %10531 = vmatpush2.bf16.msra.mxu0 %v7912
        %10532 = vmatprep.subr.bf16.mxu0 %v7869
        %10533 = vmatpush2.bf16.msra.mxu0 %v7868
        %10534 = vmatprep.subr.bf16.mxu0 %v7825
        %10535 = vmatpush2.bf16.msra.mxu0 %v7824
        %10536 = vmatprep.subr.bf16.mxu0 %v7781
        %10537 = vmatpush2.bf16.msra.mxu0 %v7780
        %10538 = vmatprep.subr.bf16.mxu0 %v7737
        %10539 = vmatpush2.bf16.msra.mxu0 %v7736
        %10540 = vmatprep.subr.bf16.mxu0 %v7693
        %10541 = vmatpush2.bf16.msra.mxu0 %v7692
        %10542 = vmatprep.subr.bf16.mxu0 %v7649
        %10543 = vmatpush2.bf16.msra.mxu0 %v7648
        %10544 = vmatprep.mubr.bf16.mxu0 %v1419
        %10545 = vmatmul.mubr.bf16.gmra.mxu0 %v1418
        %v10546 = vpop.f32.mrf.mxu0
        %v10547 = vadd.f32 %v2885, %v10546
        %v10548 = vpop.f32.mrf.mxu0
        %v10549 = vadd.f32 %v2889, %v10548
        %v10550 = vpop.f32.mrf.mxu0
        %v10551 = vpop.f32.mrf.mxu0
        %10552 = vdwg.mxu0
        %10553 = vmatprep.subr.bf16.mxu0 %v8309
        %10554 = vmatpush1.bf16.msra.mxu0 %v8308
        %10555 = vmatprep.subr.bf16.mxu0 %v8265
        %10556 = vmatpush1.bf16.msra.mxu0 %v8264
        %10557 = vmatprep.subr.bf16.mxu0 %v8221
        %10558 = vmatpush1.bf16.msra.mxu0 %v8220
        %10559 = vmatprep.subr.bf16.mxu0 %v8177
        %10560 = vmatpush1.bf16.msra.mxu0 %v8176
        %10561 = vmatprep.subr.bf16.mxu0 %v8133
        %10562 = vmatpush1.bf16.msra.mxu0 %v8132
        %10563 = vmatprep.subr.bf16.mxu0 %v8089
        %10564 = vmatpush1.bf16.msra.mxu0 %v8088
        %10565 = vmatprep.subr.bf16.mxu0 %v8045
        %10566 = vmatpush1.bf16.msra.mxu0 %v8044
        %10567 = vmatprep.subr.bf16.mxu0 %v8001
        %10568 = vmatpush1.bf16.msra.mxu0 %v8000
        %10569 = vmatprep.subr.bf16.mxu0 %v8661
        %10570 = vmatpush2.bf16.msra.mxu0 %v8660
        %10571 = vmatprep.subr.bf16.mxu0 %v8617
        %10572 = vmatpush2.bf16.msra.mxu0 %v8616
        %10573 = vmatprep.subr.bf16.mxu0 %v8573
        %10574 = vmatpush2.bf16.msra.mxu0 %v8572
        %10575 = vmatprep.subr.bf16.mxu0 %v8529
        %10576 = vmatpush2.bf16.msra.mxu0 %v8528
        %10577 = vmatprep.subr.bf16.mxu0 %v8485
        %10578 = vmatpush2.bf16.msra.mxu0 %v8484
        %10579 = vmatprep.subr.bf16.mxu0 %v8441
        %10580 = vmatpush2.bf16.msra.mxu0 %v8440
        %10581 = vmatprep.subr.bf16.mxu0 %v8397
        %10582 = vmatpush2.bf16.msra.mxu0 %v8396
        %10583 = vmatprep.subr.bf16.mxu0 %v8353
        %10584 = vmatpush2.bf16.msra.mxu0 %v8352
        %10585 = vmatprep.mubr.bf16.mxu0 %v1421
        %10586 = vmatmul.mubr.bf16.gmra.mxu0 %v1420
        %v10587 = vpop.f32.mrf.mxu0
        %v10588 = vadd.f32 %v10547, %v10587
        %v10589 = vpop.f32.mrf.mxu0
        %v10590 = vadd.f32 %v10549, %v10589
        %v10591 = vpop.f32.mrf.mxu0
        %v10592 = vpop.f32.mrf.mxu0
        %10593 = vdwg.mxu0
        %10594 = vmatprep.subr.bf16.mxu0 %v7607
        %10595 = vmatpush1.bf16.msra.mxu0 %v7606
        %10596 = vmatprep.subr.bf16.mxu0 %v7563
        %10597 = vmatpush1.bf16.msra.mxu0 %v7562
        %10598 = vmatprep.subr.bf16.mxu0 %v7519
        %10599 = vmatpush1.bf16.msra.mxu0 %v7518
        %10600 = vmatprep.subr.bf16.mxu0 %v7475
        %10601 = vmatpush1.bf16.msra.mxu0 %v7474
        %10602 = vmatprep.subr.bf16.mxu0 %v7431
        %10603 = vmatpush1.bf16.msra.mxu0 %v7430
        %10604 = vmatprep.subr.bf16.mxu0 %v7387
        %10605 = vmatpush1.bf16.msra.mxu0 %v7386
        %10606 = vmatprep.subr.bf16.mxu0 %v7343
        %10607 = vmatpush1.bf16.msra.mxu0 %v7342
        %10608 = vmatprep.subr.bf16.mxu0 %v7299
        %10609 = vmatpush1.bf16.msra.mxu0 %v7298
        %10610 = vmatprep.subr.bf16.mxu0 %v7959
        %10611 = vmatpush2.bf16.msra.mxu0 %v7958
        %10612 = vmatprep.subr.bf16.mxu0 %v7915
        %10613 = vmatpush2.bf16.msra.mxu0 %v7914
        %10614 = vmatprep.subr.bf16.mxu0 %v7871
        %10615 = vmatpush2.bf16.msra.mxu0 %v7870
        %10616 = vmatprep.subr.bf16.mxu0 %v7827
        %10617 = vmatpush2.bf16.msra.mxu0 %v7826
        %10618 = vmatprep.subr.bf16.mxu0 %v7783
        %10619 = vmatpush2.bf16.msra.mxu0 %v7782
        %10620 = vmatprep.subr.bf16.mxu0 %v7739
        %10621 = vmatpush2.bf16.msra.mxu0 %v7738
        %10622 = vmatprep.subr.bf16.mxu0 %v7695
        %10623 = vmatpush2.bf16.msra.mxu0 %v7694
        %10624 = vmatprep.subr.bf16.mxu0 %v7651
        %10625 = vmatpush2.bf16.msra.mxu0 %v7650
        %10626 = vmatprep.mubr.bf16.mxu0 %v1419
        %10627 = vmatmul.mubr.bf16.gmra.mxu0 %v1418
        %v10628 = vpop.f32.mrf.mxu0
        %v10629 = vadd.f32 %v2893, %v10628
        %v10630 = vpop.f32.mrf.mxu0
        %v10631 = vadd.f32 %v2897, %v10630
        %v10632 = vpop.f32.mrf.mxu0
        %v10633 = vpop.f32.mrf.mxu0
        %10634 = vdwg.mxu0
        %10635 = vmatprep.subr.bf16.mxu0 %v8311
        %10636 = vmatpush1.bf16.msra.mxu0 %v8310
        %10637 = vmatprep.subr.bf16.mxu0 %v8267
        %10638 = vmatpush1.bf16.msra.mxu0 %v8266
        %10639 = vmatprep.subr.bf16.mxu0 %v8223
        %10640 = vmatpush1.bf16.msra.mxu0 %v8222
        %10641 = vmatprep.subr.bf16.mxu0 %v8179
        %10642 = vmatpush1.bf16.msra.mxu0 %v8178
        %10643 = vmatprep.subr.bf16.mxu0 %v8135
        %10644 = vmatpush1.bf16.msra.mxu0 %v8134
        %10645 = vmatprep.subr.bf16.mxu0 %v8091
        %10646 = vmatpush1.bf16.msra.mxu0 %v8090
        %10647 = vmatprep.subr.bf16.mxu0 %v8047
        %10648 = vmatpush1.bf16.msra.mxu0 %v8046
        %10649 = vmatprep.subr.bf16.mxu0 %v8003
        %10650 = vmatpush1.bf16.msra.mxu0 %v8002
        %10651 = vmatprep.subr.bf16.mxu0 %v8663
        %10652 = vmatpush2.bf16.msra.mxu0 %v8662
        %10653 = vmatprep.subr.bf16.mxu0 %v8619
        %10654 = vmatpush2.bf16.msra.mxu0 %v8618
        %10655 = vmatprep.subr.bf16.mxu0 %v8575
        %10656 = vmatpush2.bf16.msra.mxu0 %v8574
        %10657 = vmatprep.subr.bf16.mxu0 %v8531
        %10658 = vmatpush2.bf16.msra.mxu0 %v8530
        %10659 = vmatprep.subr.bf16.mxu0 %v8487
        %10660 = vmatpush2.bf16.msra.mxu0 %v8486
        %10661 = vmatprep.subr.bf16.mxu0 %v8443
        %10662 = vmatpush2.bf16.msra.mxu0 %v8442
        %10663 = vmatprep.subr.bf16.mxu0 %v8399
        %10664 = vmatpush2.bf16.msra.mxu0 %v8398
        %10665 = vmatprep.subr.bf16.mxu0 %v8355
        %10666 = vmatpush2.bf16.msra.mxu0 %v8354
        %10667 = vmatprep.mubr.bf16.mxu0 %v1421
        %10668 = vmatmul.mubr.bf16.gmra.mxu0 %v1420
        %v10669 = vpop.f32.mrf.mxu0
        %v10670 = vadd.f32 %v10629, %v10669
        %v10671 = vpop.f32.mrf.mxu0
        %v10672 = vadd.f32 %v10631, %v10671
        %v10673 = vpop.f32.mrf.mxu0
        %v10674 = vpop.f32.mrf.mxu0
        %10675 = vdwg.mxu0
        %10676 = vmatprep.subr.bf16.mxu0 %v7609
        %10677 = vmatpush1.bf16.msra.mxu0 %v7608
        %10678 = vmatprep.subr.bf16.mxu0 %v7565
        %10679 = vmatpush1.bf16.msra.mxu0 %v7564
        %10680 = vmatprep.subr.bf16.mxu0 %v7521
        %10681 = vmatpush1.bf16.msra.mxu0 %v7520
        %10682 = vmatprep.subr.bf16.mxu0 %v7477
        %10683 = vmatpush1.bf16.msra.mxu0 %v7476
        %10684 = vmatprep.subr.bf16.mxu0 %v7433
        %10685 = vmatpush1.bf16.msra.mxu0 %v7432
        %10686 = vmatprep.subr.bf16.mxu0 %v7389
        %10687 = vmatpush1.bf16.msra.mxu0 %v7388
        %10688 = vmatprep.subr.bf16.mxu0 %v7345
        %10689 = vmatpush1.bf16.msra.mxu0 %v7344
        %10690 = vmatprep.subr.bf16.mxu0 %v7301
        %10691 = vmatpush1.bf16.msra.mxu0 %v7300
        %10692 = vmatprep.subr.bf16.mxu0 %v7961
        %10693 = vmatpush2.bf16.msra.mxu0 %v7960
        %10694 = vmatprep.subr.bf16.mxu0 %v7917
        %10695 = vmatpush2.bf16.msra.mxu0 %v7916
        %10696 = vmatprep.subr.bf16.mxu0 %v7873
        %10697 = vmatpush2.bf16.msra.mxu0 %v7872
        %10698 = vmatprep.subr.bf16.mxu0 %v7829
        %10699 = vmatpush2.bf16.msra.mxu0 %v7828
        %10700 = vmatprep.subr.bf16.mxu0 %v7785
        %10701 = vmatpush2.bf16.msra.mxu0 %v7784
        %10702 = vmatprep.subr.bf16.mxu0 %v7741
        %10703 = vmatpush2.bf16.msra.mxu0 %v7740
        %10704 = vmatprep.subr.bf16.mxu0 %v7697
        %10705 = vmatpush2.bf16.msra.mxu0 %v7696
        %10706 = vmatprep.subr.bf16.mxu0 %v7653
        %10707 = vmatpush2.bf16.msra.mxu0 %v7652
        %10708 = vmatprep.mubr.bf16.mxu0 %v1419
        %10709 = vmatmul.mubr.bf16.gmra.mxu0 %v1418
        %v10710 = vpop.f32.mrf.mxu0
        %v10711 = vadd.f32 %v2901, %v10710
        %v10712 = vpop.f32.mrf.mxu0
        %v10713 = vadd.f32 %v2905, %v10712
        %v10714 = vpop.f32.mrf.mxu0
        %v10715 = vpop.f32.mrf.mxu0
        %10716 = vdwg.mxu0
        %10717 = vmatprep.subr.bf16.mxu0 %v8313
        %10718 = vmatpush1.bf16.msra.mxu0 %v8312
        %10719 = vmatprep.subr.bf16.mxu0 %v8269
        %10720 = vmatpush1.bf16.msra.mxu0 %v8268
        %10721 = vmatprep.subr.bf16.mxu0 %v8225
        %10722 = vmatpush1.bf16.msra.mxu0 %v8224
        %10723 = vmatprep.subr.bf16.mxu0 %v8181
        %10724 = vmatpush1.bf16.msra.mxu0 %v8180
        %10725 = vmatprep.subr.bf16.mxu0 %v8137
        %10726 = vmatpush1.bf16.msra.mxu0 %v8136
        %10727 = vmatprep.subr.bf16.mxu0 %v8093
        %10728 = vmatpush1.bf16.msra.mxu0 %v8092
        %10729 = vmatprep.subr.bf16.mxu0 %v8049
        %10730 = vmatpush1.bf16.msra.mxu0 %v8048
        %10731 = vmatprep.subr.bf16.mxu0 %v8005
        %10732 = vmatpush1.bf16.msra.mxu0 %v8004
        %10733 = vmatprep.subr.bf16.mxu0 %v8665
        %10734 = vmatpush2.bf16.msra.mxu0 %v8664
        %10735 = vmatprep.subr.bf16.mxu0 %v8621
        %10736 = vmatpush2.bf16.msra.mxu0 %v8620
        %10737 = vmatprep.subr.bf16.mxu0 %v8577
        %10738 = vmatpush2.bf16.msra.mxu0 %v8576
        %10739 = vmatprep.subr.bf16.mxu0 %v8533
        %10740 = vmatpush2.bf16.msra.mxu0 %v8532
        %10741 = vmatprep.subr.bf16.mxu0 %v8489
        %10742 = vmatpush2.bf16.msra.mxu0 %v8488
        %10743 = vmatprep.subr.bf16.mxu0 %v8445
        %10744 = vmatpush2.bf16.msra.mxu0 %v8444
        %10745 = vmatprep.subr.bf16.mxu0 %v8401
        %10746 = vmatpush2.bf16.msra.mxu0 %v8400
        %10747 = vmatprep.subr.bf16.mxu0 %v8357
        %10748 = vmatpush2.bf16.msra.mxu0 %v8356
        %10749 = vmatprep.mubr.bf16.mxu0 %v1421
        %10750 = vmatmul.mubr.bf16.gmra.mxu0 %v1420
        %v10751 = vpop.f32.mrf.mxu0
        %v10752 = vadd.f32 %v10711, %v10751
        %v10753 = vpop.f32.mrf.mxu0
        %v10754 = vadd.f32 %v10713, %v10753
        %v10755 = vpop.f32.mrf.mxu0
        %v10756 = vpop.f32.mrf.mxu0
        %10757 = vdwg.mxu0
        %10758 = vmatprep.subr.bf16.mxu0 %v7611
        %10759 = vmatpush1.bf16.msra.mxu0 %v7610
        %10760 = vmatprep.subr.bf16.mxu0 %v7567
        %10761 = vmatpush1.bf16.msra.mxu0 %v7566
        %10762 = vmatprep.subr.bf16.mxu0 %v7523
        %10763 = vmatpush1.bf16.msra.mxu0 %v7522
        %10764 = vmatprep.subr.bf16.mxu0 %v7479
        %10765 = vmatpush1.bf16.msra.mxu0 %v7478
        %10766 = vmatprep.subr.bf16.mxu0 %v7435
        %10767 = vmatpush1.bf16.msra.mxu0 %v7434
        %10768 = vmatprep.subr.bf16.mxu0 %v7391
        %10769 = vmatpush1.bf16.msra.mxu0 %v7390
        %10770 = vmatprep.subr.bf16.mxu0 %v7347
        %10771 = vmatpush1.bf16.msra.mxu0 %v7346
        %10772 = vmatprep.subr.bf16.mxu0 %v7303
        %10773 = vmatpush1.bf16.msra.mxu0 %v7302
        %10774 = vmatprep.subr.bf16.mxu0 %v7963
        %10775 = vmatpush2.bf16.msra.mxu0 %v7962
        %10776 = vmatprep.subr.bf16.mxu0 %v7919
        %10777 = vmatpush2.bf16.msra.mxu0 %v7918
        %10778 = vmatprep.subr.bf16.mxu0 %v7875
        %10779 = vmatpush2.bf16.msra.mxu0 %v7874
        %10780 = vmatprep.subr.bf16.mxu0 %v7831
        %10781 = vmatpush2.bf16.msra.mxu0 %v7830
        %10782 = vmatprep.subr.bf16.mxu0 %v7787
        %10783 = vmatpush2.bf16.msra.mxu0 %v7786
        %10784 = vmatprep.subr.bf16.mxu0 %v7743
        %10785 = vmatpush2.bf16.msra.mxu0 %v7742
        %10786 = vmatprep.subr.bf16.mxu0 %v7699
        %10787 = vmatpush2.bf16.msra.mxu0 %v7698
        %10788 = vmatprep.subr.bf16.mxu0 %v7655
        %10789 = vmatpush2.bf16.msra.mxu0 %v7654
        %10790 = vmatprep.mubr.bf16.mxu0 %v1419
        %10791 = vmatmul.mubr.bf16.gmra.mxu0 %v1418
        %v10792 = vpop.f32.mrf.mxu0
        %v10793 = vadd.f32 %v2909, %v10792
        %v10794 = vpop.f32.mrf.mxu0
        %v10795 = vadd.f32 %v2913, %v10794
        %v10796 = vpop.f32.mrf.mxu0
        %v10797 = vpop.f32.mrf.mxu0
        %10798 = vdwg.mxu0
        %10799 = vmatprep.subr.bf16.mxu0 %v8315
        %10800 = vmatpush1.bf16.msra.mxu0 %v8314
        %10801 = vmatprep.subr.bf16.mxu0 %v8271
        %10802 = vmatpush1.bf16.msra.mxu0 %v8270
        %10803 = vmatprep.subr.bf16.mxu0 %v8227
        %10804 = vmatpush1.bf16.msra.mxu0 %v8226
        %10805 = vmatprep.subr.bf16.mxu0 %v8183
        %10806 = vmatpush1.bf16.msra.mxu0 %v8182
        %10807 = vmatprep.subr.bf16.mxu0 %v8139
        %10808 = vmatpush1.bf16.msra.mxu0 %v8138
        %10809 = vmatprep.subr.bf16.mxu0 %v8095
        %10810 = vmatpush1.bf16.msra.mxu0 %v8094
        %10811 = vmatprep.subr.bf16.mxu0 %v8051
        %10812 = vmatpush1.bf16.msra.mxu0 %v8050
        %10813 = vmatprep.subr.bf16.mxu0 %v8007
        %10814 = vmatpush1.bf16.msra.mxu0 %v8006
        %10815 = vmatprep.subr.bf16.mxu0 %v8667
        %10816 = vmatpush2.bf16.msra.mxu0 %v8666
        %10817 = vmatprep.subr.bf16.mxu0 %v8623
        %10818 = vmatpush2.bf16.msra.mxu0 %v8622
        %10819 = vmatprep.subr.bf16.mxu0 %v8579
        %10820 = vmatpush2.bf16.msra.mxu0 %v8578
        %10821 = vmatprep.subr.bf16.mxu0 %v8535
        %10822 = vmatpush2.bf16.msra.mxu0 %v8534
        %10823 = vmatprep.subr.bf16.mxu0 %v8491
        %10824 = vmatpush2.bf16.msra.mxu0 %v8490
        %10825 = vmatprep.subr.bf16.mxu0 %v8447
        %10826 = vmatpush2.bf16.msra.mxu0 %v8446
        %10827 = vmatprep.subr.bf16.mxu0 %v8403
        %10828 = vmatpush2.bf16.msra.mxu0 %v8402
        %10829 = vmatprep.subr.bf16.mxu0 %v8359
        %10830 = vmatpush2.bf16.msra.mxu0 %v8358
        %10831 = vmatprep.mubr.bf16.mxu0 %v1421
        %10832 = vmatmul.mubr.bf16.gmra.mxu0 %v1420
        %v10833 = vpop.f32.mrf.mxu0
        %v10834 = vadd.f32 %v10793, %v10833
        %v10835 = vpop.f32.mrf.mxu0
        %v10836 = vadd.f32 %v10795, %v10835
        %v10837 = vpop.f32.mrf.mxu0
        %v10838 = vpop.f32.mrf.mxu0
        %10839 = vdwg.mxu0
        %10840 = vmatprep.subr.bf16.mxu0 %v7613
        %10841 = vmatpush1.bf16.msra.mxu0 %v7612
        %10842 = vmatprep.subr.bf16.mxu0 %v7569
        %10843 = vmatpush1.bf16.msra.mxu0 %v7568
        %10844 = vmatprep.subr.bf16.mxu0 %v7525
        %10845 = vmatpush1.bf16.msra.mxu0 %v7524
        %10846 = vmatprep.subr.bf16.mxu0 %v7481
        %10847 = vmatpush1.bf16.msra.mxu0 %v7480
        %10848 = vmatprep.subr.bf16.mxu0 %v7437
        %10849 = vmatpush1.bf16.msra.mxu0 %v7436
        %10850 = vmatprep.subr.bf16.mxu0 %v7393
        %10851 = vmatpush1.bf16.msra.mxu0 %v7392
        %10852 = vmatprep.subr.bf16.mxu0 %v7349
        %10853 = vmatpush1.bf16.msra.mxu0 %v7348
        %10854 = vmatprep.subr.bf16.mxu0 %v7305
        %10855 = vmatpush1.bf16.msra.mxu0 %v7304
        %10856 = vmatprep.subr.bf16.mxu0 %v7965
        %10857 = vmatpush2.bf16.msra.mxu0 %v7964
        %10858 = vmatprep.subr.bf16.mxu0 %v7921
        %10859 = vmatpush2.bf16.msra.mxu0 %v7920
        %10860 = vmatprep.subr.bf16.mxu0 %v7877
        %10861 = vmatpush2.bf16.msra.mxu0 %v7876
        %10862 = vmatprep.subr.bf16.mxu0 %v7833
        %10863 = vmatpush2.bf16.msra.mxu0 %v7832
        %10864 = vmatprep.subr.bf16.mxu0 %v7789
        %10865 = vmatpush2.bf16.msra.mxu0 %v7788
        %10866 = vmatprep.subr.bf16.mxu0 %v7745
        %10867 = vmatpush2.bf16.msra.mxu0 %v7744
        %10868 = vmatprep.subr.bf16.mxu0 %v7701
        %10869 = vmatpush2.bf16.msra.mxu0 %v7700
        %10870 = vmatprep.subr.bf16.mxu0 %v7657
        %10871 = vmatpush2.bf16.msra.mxu0 %v7656
        %10872 = vmatprep.mubr.bf16.mxu0 %v1419
        %10873 = vmatmul.mubr.bf16.gmra.mxu0 %v1418
        %v10874 = vpop.f32.mrf.mxu0
        %v10875 = vadd.f32 %v2917, %v10874
        %v10876 = vpop.f32.mrf.mxu0
        %v10877 = vadd.f32 %v2921, %v10876
        %v10878 = vpop.f32.mrf.mxu0
        %v10879 = vpop.f32.mrf.mxu0
        %10880 = vdwg.mxu0
        %10881 = vmatprep.subr.bf16.mxu0 %v8317
        %10882 = vmatpush1.bf16.msra.mxu0 %v8316
        %10883 = vmatprep.subr.bf16.mxu0 %v8273
        %10884 = vmatpush1.bf16.msra.mxu0 %v8272
        %10885 = vmatprep.subr.bf16.mxu0 %v8229
        %10886 = vmatpush1.bf16.msra.mxu0 %v8228
        %10887 = vmatprep.subr.bf16.mxu0 %v8185
        %10888 = vmatpush1.bf16.msra.mxu0 %v8184
        %10889 = vmatprep.subr.bf16.mxu0 %v8141
        %10890 = vmatpush1.bf16.msra.mxu0 %v8140
        %10891 = vmatprep.subr.bf16.mxu0 %v8097
        %10892 = vmatpush1.bf16.msra.mxu0 %v8096
        %10893 = vmatprep.subr.bf16.mxu0 %v8053
        %10894 = vmatpush1.bf16.msra.mxu0 %v8052
        %10895 = vmatprep.subr.bf16.mxu0 %v8009
        %10896 = vmatpush1.bf16.msra.mxu0 %v8008
        %10897 = vmatprep.subr.bf16.mxu0 %v8669
        %10898 = vmatpush2.bf16.msra.mxu0 %v8668
        %10899 = vmatprep.subr.bf16.mxu0 %v8625
        %10900 = vmatpush2.bf16.msra.mxu0 %v8624
        %10901 = vmatprep.subr.bf16.mxu0 %v8581
        %10902 = vmatpush2.bf16.msra.mxu0 %v8580
        %10903 = vmatprep.subr.bf16.mxu0 %v8537
        %10904 = vmatpush2.bf16.msra.mxu0 %v8536
        %10905 = vmatprep.subr.bf16.mxu0 %v8493
        %10906 = vmatpush2.bf16.msra.mxu0 %v8492
        %10907 = vmatprep.subr.bf16.mxu0 %v8449
        %10908 = vmatpush2.bf16.msra.mxu0 %v8448
        %10909 = vmatprep.subr.bf16.mxu0 %v8405
        %10910 = vmatpush2.bf16.msra.mxu0 %v8404
        %10911 = vmatprep.subr.bf16.mxu0 %v8361
        %10912 = vmatpush2.bf16.msra.mxu0 %v8360
        %10913 = vmatprep.mubr.bf16.mxu0 %v1421
        %10914 = vmatmul.mubr.bf16.gmra.mxu0 %v1420
        %v10915 = vpop.f32.mrf.mxu0
        %v10916 = vadd.f32 %v10875, %v10915
        %v10917 = vpop.f32.mrf.mxu0
        %v10918 = vadd.f32 %v10877, %v10917
        %v10919 = vpop.f32.mrf.mxu0
        %v10920 = vpop.f32.mrf.mxu0
        %10921 = vdwg.mxu0
        %10922 = vmatprep.subr.bf16.mxu0 %v7615
        %10923 = vmatpush1.bf16.msra.mxu0 %v7614
        %10924 = vmatprep.subr.bf16.mxu0 %v7571
        %10925 = vmatpush1.bf16.msra.mxu0 %v7570
        %10926 = vmatprep.subr.bf16.mxu0 %v7527
        %10927 = vmatpush1.bf16.msra.mxu0 %v7526
        %10928 = vmatprep.subr.bf16.mxu0 %v7483
        %10929 = vmatpush1.bf16.msra.mxu0 %v7482
        %10930 = vmatprep.subr.bf16.mxu0 %v7439
        %10931 = vmatpush1.bf16.msra.mxu0 %v7438
        %10932 = vmatprep.subr.bf16.mxu0 %v7395
        %10933 = vmatpush1.bf16.msra.mxu0 %v7394
        %10934 = vmatprep.subr.bf16.mxu0 %v7351
        %10935 = vmatpush1.bf16.msra.mxu0 %v7350
        %10936 = vmatprep.subr.bf16.mxu0 %v7307
        %10937 = vmatpush1.bf16.msra.mxu0 %v7306
        %10938 = vmatprep.subr.bf16.mxu0 %v7967
        %10939 = vmatpush2.bf16.msra.mxu0 %v7966
        %10940 = vmatprep.subr.bf16.mxu0 %v7923
        %10941 = vmatpush2.bf16.msra.mxu0 %v7922
        %10942 = vmatprep.subr.bf16.mxu0 %v7879
        %10943 = vmatpush2.bf16.msra.mxu0 %v7878
        %10944 = vmatprep.subr.bf16.mxu0 %v7835
        %10945 = vmatpush2.bf16.msra.mxu0 %v7834
        %10946 = vmatprep.subr.bf16.mxu0 %v7791
        %10947 = vmatpush2.bf16.msra.mxu0 %v7790
        %10948 = vmatprep.subr.bf16.mxu0 %v7747
        %10949 = vmatpush2.bf16.msra.mxu0 %v7746
        %10950 = vmatprep.subr.bf16.mxu0 %v7703
        %10951 = vmatpush2.bf16.msra.mxu0 %v7702
        %10952 = vmatprep.subr.bf16.mxu0 %v7659
        %10953 = vmatpush2.bf16.msra.mxu0 %v7658
        %10954 = vmatprep.mubr.bf16.mxu0 %v1419
        %10955 = vmatmul.mubr.bf16.gmra.mxu0 %v1418
        %v10956 = vpop.f32.mrf.mxu0
        %v10957 = vadd.f32 %v2925, %v10956
        %v10958 = vpop.f32.mrf.mxu0
        %v10959 = vadd.f32 %v2929, %v10958
        %v10960 = vpop.f32.mrf.mxu0
        %v10961 = vpop.f32.mrf.mxu0
        %10962 = vdwg.mxu0
        %10963 = vmatprep.subr.bf16.mxu0 %v8319
        %10964 = vmatpush1.bf16.msra.mxu0 %v8318
        %10965 = vmatprep.subr.bf16.mxu0 %v8275
        %10966 = vmatpush1.bf16.msra.mxu0 %v8274
        %10967 = vmatprep.subr.bf16.mxu0 %v8231
        %10968 = vmatpush1.bf16.msra.mxu0 %v8230
        %10969 = vmatprep.subr.bf16.mxu0 %v8187
        %10970 = vmatpush1.bf16.msra.mxu0 %v8186
        %10971 = vmatprep.subr.bf16.mxu0 %v8143
        %10972 = vmatpush1.bf16.msra.mxu0 %v8142
        %10973 = vmatprep.subr.bf16.mxu0 %v8099
        %10974 = vmatpush1.bf16.msra.mxu0 %v8098
        %10975 = vmatprep.subr.bf16.mxu0 %v8055
        %10976 = vmatpush1.bf16.msra.mxu0 %v8054
        %10977 = vmatprep.subr.bf16.mxu0 %v8011
        %10978 = vmatpush1.bf16.msra.mxu0 %v8010
        %10979 = vmatprep.subr.bf16.mxu0 %v8671
        %10980 = vmatpush2.bf16.msra.mxu0 %v8670
        %10981 = vmatprep.subr.bf16.mxu0 %v8627
        %10982 = vmatpush2.bf16.msra.mxu0 %v8626
        %10983 = vmatprep.subr.bf16.mxu0 %v8583
        %10984 = vmatpush2.bf16.msra.mxu0 %v8582
        %10985 = vmatprep.subr.bf16.mxu0 %v8539
        %10986 = vmatpush2.bf16.msra.mxu0 %v8538
        %10987 = vmatprep.subr.bf16.mxu0 %v8495
        %10988 = vmatpush2.bf16.msra.mxu0 %v8494
        %10989 = vmatprep.subr.bf16.mxu0 %v8451
        %10990 = vmatpush2.bf16.msra.mxu0 %v8450
        %10991 = vmatprep.subr.bf16.mxu0 %v8407
        %10992 = vmatpush2.bf16.msra.mxu0 %v8406
        %10993 = vmatprep.subr.bf16.mxu0 %v8363
        %10994 = vmatpush2.bf16.msra.mxu0 %v8362
        %10995 = vmatprep.mubr.bf16.mxu0 %v1421
        %10996 = vmatmul.mubr.bf16.gmra.mxu0 %v1420
        %v10997 = vpop.f32.mrf.mxu0
        %v10998 = vadd.f32 %v10957, %v10997
        %v10999 = vpop.f32.mrf.mxu0
        %v11000 = vadd.f32 %v10959, %v10999
        %v11001 = vpop.f32.mrf.mxu0
        %v11002 = vpop.f32.mrf.mxu0
        %11003 = vdwg.mxu0
        %11004 = vmatprep.subr.bf16.mxu0 %v7617
        %11005 = vmatpush1.bf16.msra.mxu0 %v7616
        %11006 = vmatprep.subr.bf16.mxu0 %v7573
        %11007 = vmatpush1.bf16.msra.mxu0 %v7572
        %11008 = vmatprep.subr.bf16.mxu0 %v7529
        %11009 = vmatpush1.bf16.msra.mxu0 %v7528
        %11010 = vmatprep.subr.bf16.mxu0 %v7485
        %11011 = vmatpush1.bf16.msra.mxu0 %v7484
        %11012 = vmatprep.subr.bf16.mxu0 %v7441
        %11013 = vmatpush1.bf16.msra.mxu0 %v7440
        %11014 = vmatprep.subr.bf16.mxu0 %v7397
        %11015 = vmatpush1.bf16.msra.mxu0 %v7396
        %11016 = vmatprep.subr.bf16.mxu0 %v7353
        %11017 = vmatpush1.bf16.msra.mxu0 %v7352
        %11018 = vmatprep.subr.bf16.mxu0 %v7309
        %11019 = vmatpush1.bf16.msra.mxu0 %v7308
        %11020 = vmatprep.subr.bf16.mxu0 %v7969
        %11021 = vmatpush2.bf16.msra.mxu0 %v7968
        %11022 = vmatprep.subr.bf16.mxu0 %v7925
        %11023 = vmatpush2.bf16.msra.mxu0 %v7924
        %11024 = vmatprep.subr.bf16.mxu0 %v7881
        %11025 = vmatpush2.bf16.msra.mxu0 %v7880
        %11026 = vmatprep.subr.bf16.mxu0 %v7837
        %11027 = vmatpush2.bf16.msra.mxu0 %v7836
        %11028 = vmatprep.subr.bf16.mxu0 %v7793
        %11029 = vmatpush2.bf16.msra.mxu0 %v7792
        %11030 = vmatprep.subr.bf16.mxu0 %v7749
        %11031 = vmatpush2.bf16.msra.mxu0 %v7748
        %11032 = vmatprep.subr.bf16.mxu0 %v7705
        %11033 = vmatpush2.bf16.msra.mxu0 %v7704
        %11034 = vmatprep.subr.bf16.mxu0 %v7661
        %11035 = vmatpush2.bf16.msra.mxu0 %v7660
        %11036 = vmatprep.mubr.bf16.mxu0 %v1419
        %11037 = vmatmul.mubr.bf16.gmra.mxu0 %v1418
        %v11038 = vpop.f32.mrf.mxu0
        %v11039 = vadd.f32 %v2933, %v11038
        %v11040 = vpop.f32.mrf.mxu0
        %v11041 = vadd.f32 %v2937, %v11040
        %v11042 = vpop.f32.mrf.mxu0
        %v11043 = vpop.f32.mrf.mxu0
        %11044 = vdwg.mxu0
        %11045 = vmatprep.subr.bf16.mxu0 %v8321
        %11046 = vmatpush1.bf16.msra.mxu0 %v8320
        %11047 = vmatprep.subr.bf16.mxu0 %v8277
        %11048 = vmatpush1.bf16.msra.mxu0 %v8276
        %11049 = vmatprep.subr.bf16.mxu0 %v8233
        %11050 = vmatpush1.bf16.msra.mxu0 %v8232
        %11051 = vmatprep.subr.bf16.mxu0 %v8189
        %11052 = vmatpush1.bf16.msra.mxu0 %v8188
        %11053 = vmatprep.subr.bf16.mxu0 %v8145
        %11054 = vmatpush1.bf16.msra.mxu0 %v8144
        %11055 = vmatprep.subr.bf16.mxu0 %v8101
        %11056 = vmatpush1.bf16.msra.mxu0 %v8100
        %11057 = vmatprep.subr.bf16.mxu0 %v8057
        %11058 = vmatpush1.bf16.msra.mxu0 %v8056
        %11059 = vmatprep.subr.bf16.mxu0 %v8013
        %11060 = vmatpush1.bf16.msra.mxu0 %v8012
        %11061 = vmatprep.subr.bf16.mxu0 %v8673
        %11062 = vmatpush2.bf16.msra.mxu0 %v8672
        %11063 = vmatprep.subr.bf16.mxu0 %v8629
        %11064 = vmatpush2.bf16.msra.mxu0 %v8628
        %11065 = vmatprep.subr.bf16.mxu0 %v8585
        %11066 = vmatpush2.bf16.msra.mxu0 %v8584
        %11067 = vmatprep.subr.bf16.mxu0 %v8541
        %11068 = vmatpush2.bf16.msra.mxu0 %v8540
        %11069 = vmatprep.subr.bf16.mxu0 %v8497
        %11070 = vmatpush2.bf16.msra.mxu0 %v8496
        %11071 = vmatprep.subr.bf16.mxu0 %v8453
        %11072 = vmatpush2.bf16.msra.mxu0 %v8452
        %11073 = vmatprep.subr.bf16.mxu0 %v8409
        %11074 = vmatpush2.bf16.msra.mxu0 %v8408
        %11075 = vmatprep.subr.bf16.mxu0 %v8365
        %11076 = vmatpush2.bf16.msra.mxu0 %v8364
        %11077 = vmatprep.mubr.bf16.mxu0 %v1421
        %11078 = vmatmul.mubr.bf16.gmra.mxu0 %v1420
        %v11079 = vpop.f32.mrf.mxu0
        %v11080 = vadd.f32 %v11039, %v11079
        %v11081 = vpop.f32.mrf.mxu0
        %v11082 = vadd.f32 %v11041, %v11081
        %v11083 = vpop.f32.mrf.mxu0
        %v11084 = vpop.f32.mrf.mxu0
        %11085 = vdwg.mxu0
        %11086 = vmatprep.subr.bf16.mxu0 %v7619
        %11087 = vmatpush1.bf16.msra.mxu0 %v7618
        %11088 = vmatprep.subr.bf16.mxu0 %v7575
        %11089 = vmatpush1.bf16.msra.mxu0 %v7574
        %11090 = vmatprep.subr.bf16.mxu0 %v7531
        %11091 = vmatpush1.bf16.msra.mxu0 %v7530
        %11092 = vmatprep.subr.bf16.mxu0 %v7487
        %11093 = vmatpush1.bf16.msra.mxu0 %v7486
        %11094 = vmatprep.subr.bf16.mxu0 %v7443
        %11095 = vmatpush1.bf16.msra.mxu0 %v7442
        %11096 = vmatprep.subr.bf16.mxu0 %v7399
        %11097 = vmatpush1.bf16.msra.mxu0 %v7398
        %11098 = vmatprep.subr.bf16.mxu0 %v7355
        %11099 = vmatpush1.bf16.msra.mxu0 %v7354
        %11100 = vmatprep.subr.bf16.mxu0 %v7311
        %11101 = vmatpush1.bf16.msra.mxu0 %v7310
        %11102 = vmatprep.subr.bf16.mxu0 %v7971
        %11103 = vmatpush2.bf16.msra.mxu0 %v7970
        %11104 = vmatprep.subr.bf16.mxu0 %v7927
        %11105 = vmatpush2.bf16.msra.mxu0 %v7926
        %11106 = vmatprep.subr.bf16.mxu0 %v7883
        %11107 = vmatpush2.bf16.msra.mxu0 %v7882
        %11108 = vmatprep.subr.bf16.mxu0 %v7839
        %11109 = vmatpush2.bf16.msra.mxu0 %v7838
        %11110 = vmatprep.subr.bf16.mxu0 %v7795
        %11111 = vmatpush2.bf16.msra.mxu0 %v7794
        %11112 = vmatprep.subr.bf16.mxu0 %v7751
        %11113 = vmatpush2.bf16.msra.mxu0 %v7750
        %11114 = vmatprep.subr.bf16.mxu0 %v7707
        %11115 = vmatpush2.bf16.msra.mxu0 %v7706
        %11116 = vmatprep.subr.bf16.mxu0 %v7663
        %11117 = vmatpush2.bf16.msra.mxu0 %v7662
        %11118 = vmatprep.mubr.bf16.mxu0 %v1419
        %11119 = vmatmul.mubr.bf16.gmra.mxu0 %v1418
        %v11120 = vpop.f32.mrf.mxu0
        %v11121 = vadd.f32 %v2941, %v11120
        %v11122 = vpop.f32.mrf.mxu0
        %v11123 = vadd.f32 %v2945, %v11122
        %v11124 = vpop.f32.mrf.mxu0
        %v11125 = vpop.f32.mrf.mxu0
        %11126 = vdwg.mxu0
        %11127 = vmatprep.subr.bf16.mxu0 %v8323
        %11128 = vmatpush1.bf16.msra.mxu0 %v8322
        %11129 = vmatprep.subr.bf16.mxu0 %v8279
        %11130 = vmatpush1.bf16.msra.mxu0 %v8278
        %11131 = vmatprep.subr.bf16.mxu0 %v8235
        %11132 = vmatpush1.bf16.msra.mxu0 %v8234
        %11133 = vmatprep.subr.bf16.mxu0 %v8191
        %11134 = vmatpush1.bf16.msra.mxu0 %v8190
        %11135 = vmatprep.subr.bf16.mxu0 %v8147
        %11136 = vmatpush1.bf16.msra.mxu0 %v8146
        %11137 = vmatprep.subr.bf16.mxu0 %v8103
        %11138 = vmatpush1.bf16.msra.mxu0 %v8102
        %11139 = vmatprep.subr.bf16.mxu0 %v8059
        %11140 = vmatpush1.bf16.msra.mxu0 %v8058
        %11141 = vmatprep.subr.bf16.mxu0 %v8015
        %11142 = vmatpush1.bf16.msra.mxu0 %v8014
        %11143 = vmatprep.subr.bf16.mxu0 %v8675
        %11144 = vmatpush2.bf16.msra.mxu0 %v8674
        %11145 = vmatprep.subr.bf16.mxu0 %v8631
        %11146 = vmatpush2.bf16.msra.mxu0 %v8630
        %11147 = vmatprep.subr.bf16.mxu0 %v8587
        %11148 = vmatpush2.bf16.msra.mxu0 %v8586
        %11149 = vmatprep.subr.bf16.mxu0 %v8543
        %11150 = vmatpush2.bf16.msra.mxu0 %v8542
        %11151 = vmatprep.subr.bf16.mxu0 %v8499
        %11152 = vmatpush2.bf16.msra.mxu0 %v8498
        %11153 = vmatprep.subr.bf16.mxu0 %v8455
        %11154 = vmatpush2.bf16.msra.mxu0 %v8454
        %11155 = vmatprep.subr.bf16.mxu0 %v8411
        %11156 = vmatpush2.bf16.msra.mxu0 %v8410
        %11157 = vmatprep.subr.bf16.mxu0 %v8367
        %11158 = vmatpush2.bf16.msra.mxu0 %v8366
        %11159 = vmatprep.mubr.bf16.mxu0 %v1421
        %11160 = vmatmul.mubr.bf16.gmra.mxu0 %v1420
        %v11161 = vpop.f32.mrf.mxu0
        %v11162 = vadd.f32 %v11121, %v11161
        %v11163 = vpop.f32.mrf.mxu0
        %v11164 = vadd.f32 %v11123, %v11163
        %v11165 = vpop.f32.mrf.mxu0
        %v11166 = vpop.f32.mrf.mxu0
        %11167 = vdwg.mxu0
        %11168 = vmatprep.subr.bf16.mxu0 %v7621
        %11169 = vmatpush1.bf16.msra.mxu0 %v7620
        %11170 = vmatprep.subr.bf16.mxu0 %v7577
        %11171 = vmatpush1.bf16.msra.mxu0 %v7576
        %11172 = vmatprep.subr.bf16.mxu0 %v7533
        %11173 = vmatpush1.bf16.msra.mxu0 %v7532
        %11174 = vmatprep.subr.bf16.mxu0 %v7489
        %11175 = vmatpush1.bf16.msra.mxu0 %v7488
        %11176 = vmatprep.subr.bf16.mxu0 %v7445
        %11177 = vmatpush1.bf16.msra.mxu0 %v7444
        %11178 = vmatprep.subr.bf16.mxu0 %v7401
        %11179 = vmatpush1.bf16.msra.mxu0 %v7400
        %11180 = vmatprep.subr.bf16.mxu0 %v7357
        %11181 = vmatpush1.bf16.msra.mxu0 %v7356
        %11182 = vmatprep.subr.bf16.mxu0 %v7313
        %11183 = vmatpush1.bf16.msra.mxu0 %v7312
        %11184 = vmatprep.subr.bf16.mxu0 %v7973
        %11185 = vmatpush2.bf16.msra.mxu0 %v7972
        %11186 = vmatprep.subr.bf16.mxu0 %v7929
        %11187 = vmatpush2.bf16.msra.mxu0 %v7928
        %11188 = vmatprep.subr.bf16.mxu0 %v7885
        %11189 = vmatpush2.bf16.msra.mxu0 %v7884
        %11190 = vmatprep.subr.bf16.mxu0 %v7841
        %11191 = vmatpush2.bf16.msra.mxu0 %v7840
        %11192 = vmatprep.subr.bf16.mxu0 %v7797
        %11193 = vmatpush2.bf16.msra.mxu0 %v7796
        %11194 = vmatprep.subr.bf16.mxu0 %v7753
        %11195 = vmatpush2.bf16.msra.mxu0 %v7752
        %11196 = vmatprep.subr.bf16.mxu0 %v7709
        %11197 = vmatpush2.bf16.msra.mxu0 %v7708
        %11198 = vmatprep.subr.bf16.mxu0 %v7665
        %11199 = vmatpush2.bf16.msra.mxu0 %v7664
        %11200 = vmatprep.mubr.bf16.mxu0 %v1419
        %11201 = vmatmul.mubr.bf16.gmra.mxu0 %v1418
        %v11202 = vpop.f32.mrf.mxu0
        %v11203 = vadd.f32 %v2949, %v11202
        %v11204 = vpop.f32.mrf.mxu0
        %v11205 = vadd.f32 %v2953, %v11204
        %v11206 = vpop.f32.mrf.mxu0
        %v11207 = vpop.f32.mrf.mxu0
        %11208 = vdwg.mxu0
        %11209 = vmatprep.subr.bf16.mxu0 %v8325
        %11210 = vmatpush1.bf16.msra.mxu0 %v8324
        %11211 = vmatprep.subr.bf16.mxu0 %v8281
        %11212 = vmatpush1.bf16.msra.mxu0 %v8280
        %11213 = vmatprep.subr.bf16.mxu0 %v8237
        %11214 = vmatpush1.bf16.msra.mxu0 %v8236
        %11215 = vmatprep.subr.bf16.mxu0 %v8193
        %11216 = vmatpush1.bf16.msra.mxu0 %v8192
        %11217 = vmatprep.subr.bf16.mxu0 %v8149
        %11218 = vmatpush1.bf16.msra.mxu0 %v8148
        %11219 = vmatprep.subr.bf16.mxu0 %v8105
        %11220 = vmatpush1.bf16.msra.mxu0 %v8104
        %11221 = vmatprep.subr.bf16.mxu0 %v8061
        %11222 = vmatpush1.bf16.msra.mxu0 %v8060
        %11223 = vmatprep.subr.bf16.mxu0 %v8017
        %11224 = vmatpush1.bf16.msra.mxu0 %v8016
        %11225 = vmatprep.subr.bf16.mxu0 %v8677
        %11226 = vmatpush2.bf16.msra.mxu0 %v8676
        %11227 = vmatprep.subr.bf16.mxu0 %v8633
        %11228 = vmatpush2.bf16.msra.mxu0 %v8632
        %11229 = vmatprep.subr.bf16.mxu0 %v8589
        %11230 = vmatpush2.bf16.msra.mxu0 %v8588
        %11231 = vmatprep.subr.bf16.mxu0 %v8545
        %11232 = vmatpush2.bf16.msra.mxu0 %v8544
        %11233 = vmatprep.subr.bf16.mxu0 %v8501
        %11234 = vmatpush2.bf16.msra.mxu0 %v8500
        %11235 = vmatprep.subr.bf16.mxu0 %v8457
        %11236 = vmatpush2.bf16.msra.mxu0 %v8456
        %11237 = vmatprep.subr.bf16.mxu0 %v8413
        %11238 = vmatpush2.bf16.msra.mxu0 %v8412
        %11239 = vmatprep.subr.bf16.mxu0 %v8369
        %11240 = vmatpush2.bf16.msra.mxu0 %v8368
        %11241 = vmatprep.mubr.bf16.mxu0 %v1421
        %11242 = vmatmul.mubr.bf16.gmra.mxu0 %v1420
        %v11243 = vpop.f32.mrf.mxu0
        %v11244 = vadd.f32 %v11203, %v11243
        %v11245 = vpop.f32.mrf.mxu0
        %v11246 = vadd.f32 %v11205, %v11245
        %v11247 = vpop.f32.mrf.mxu0
        %v11248 = vpop.f32.mrf.mxu0
        %11249 = vdwg.mxu0
        %11250 = vmatprep.subr.bf16.mxu0 %v7623
        %11251 = vmatpush1.bf16.msra.mxu0 %v7622
        %11252 = vmatprep.subr.bf16.mxu0 %v7579
        %11253 = vmatpush1.bf16.msra.mxu0 %v7578
        %11254 = vmatprep.subr.bf16.mxu0 %v7535
        %11255 = vmatpush1.bf16.msra.mxu0 %v7534
        %11256 = vmatprep.subr.bf16.mxu0 %v7491
        %11257 = vmatpush1.bf16.msra.mxu0 %v7490
        %11258 = vmatprep.subr.bf16.mxu0 %v7447
        %11259 = vmatpush1.bf16.msra.mxu0 %v7446
        %11260 = vmatprep.subr.bf16.mxu0 %v7403
        %11261 = vmatpush1.bf16.msra.mxu0 %v7402
        %11262 = vmatprep.subr.bf16.mxu0 %v7359
        %11263 = vmatpush1.bf16.msra.mxu0 %v7358
        %11264 = vmatprep.subr.bf16.mxu0 %v7315
        %11265 = vmatpush1.bf16.msra.mxu0 %v7314
        %11266 = vmatprep.subr.bf16.mxu0 %v7975
        %11267 = vmatpush2.bf16.msra.mxu0 %v7974
        %11268 = vmatprep.subr.bf16.mxu0 %v7931
        %11269 = vmatpush2.bf16.msra.mxu0 %v7930
        %11270 = vmatprep.subr.bf16.mxu0 %v7887
        %11271 = vmatpush2.bf16.msra.mxu0 %v7886
        %11272 = vmatprep.subr.bf16.mxu0 %v7843
        %11273 = vmatpush2.bf16.msra.mxu0 %v7842
        %11274 = vmatprep.subr.bf16.mxu0 %v7799
        %11275 = vmatpush2.bf16.msra.mxu0 %v7798
        %11276 = vmatprep.subr.bf16.mxu0 %v7755
        %11277 = vmatpush2.bf16.msra.mxu0 %v7754
        %11278 = vmatprep.subr.bf16.mxu0 %v7711
        %11279 = vmatpush2.bf16.msra.mxu0 %v7710
        %11280 = vmatprep.subr.bf16.mxu0 %v7667
        %11281 = vmatpush2.bf16.msra.mxu0 %v7666
        %11282 = vmatprep.mubr.bf16.mxu0 %v1419
        %11283 = vmatmul.mubr.bf16.gmra.mxu0 %v1418
        %v11284 = vpop.f32.mrf.mxu0
        %v11285 = vadd.f32 %v2957, %v11284
        %v11286 = vpop.f32.mrf.mxu0
        %v11287 = vadd.f32 %v2961, %v11286
        %v11288 = vpop.f32.mrf.mxu0
        %v11289 = vpop.f32.mrf.mxu0
        %11290 = vdwg.mxu0
        %11291 = vmatprep.subr.bf16.mxu0 %v8327
        %11292 = vmatpush1.bf16.msra.mxu0 %v8326
        %11293 = vmatprep.subr.bf16.mxu0 %v8283
        %11294 = vmatpush1.bf16.msra.mxu0 %v8282
        %11295 = vmatprep.subr.bf16.mxu0 %v8239
        %11296 = vmatpush1.bf16.msra.mxu0 %v8238
        %11297 = vmatprep.subr.bf16.mxu0 %v8195
        %11298 = vmatpush1.bf16.msra.mxu0 %v8194
        %11299 = vmatprep.subr.bf16.mxu0 %v8151
        %11300 = vmatpush1.bf16.msra.mxu0 %v8150
        %11301 = vmatprep.subr.bf16.mxu0 %v8107
        %11302 = vmatpush1.bf16.msra.mxu0 %v8106
        %11303 = vmatprep.subr.bf16.mxu0 %v8063
        %11304 = vmatpush1.bf16.msra.mxu0 %v8062
        %11305 = vmatprep.subr.bf16.mxu0 %v8019
        %11306 = vmatpush1.bf16.msra.mxu0 %v8018
        %11307 = vmatprep.subr.bf16.mxu0 %v8679
        %11308 = vmatpush2.bf16.msra.mxu0 %v8678
        %11309 = vmatprep.subr.bf16.mxu0 %v8635
        %11310 = vmatpush2.bf16.msra.mxu0 %v8634
        %11311 = vmatprep.subr.bf16.mxu0 %v8591
        %11312 = vmatpush2.bf16.msra.mxu0 %v8590
        %11313 = vmatprep.subr.bf16.mxu0 %v8547
        %11314 = vmatpush2.bf16.msra.mxu0 %v8546
        %11315 = vmatprep.subr.bf16.mxu0 %v8503
        %11316 = vmatpush2.bf16.msra.mxu0 %v8502
        %11317 = vmatprep.subr.bf16.mxu0 %v8459
        %11318 = vmatpush2.bf16.msra.mxu0 %v8458
        %11319 = vmatprep.subr.bf16.mxu0 %v8415
        %11320 = vmatpush2.bf16.msra.mxu0 %v8414
        %11321 = vmatprep.subr.bf16.mxu0 %v8371
        %11322 = vmatpush2.bf16.msra.mxu0 %v8370
        %11323 = vmatprep.mubr.bf16.mxu0 %v1421
        %11324 = vmatmul.mubr.bf16.gmra.mxu0 %v1420
        %v11325 = vpop.f32.mrf.mxu0
        %v11326 = vadd.f32 %v11285, %v11325
        %v11327 = vpop.f32.mrf.mxu0
        %v11328 = vadd.f32 %v11287, %v11327
        %v11329 = vpop.f32.mrf.mxu0
        %v11330 = vpop.f32.mrf.mxu0
        %11331 = vdwg.mxu0
        %11332 = vmatprep.subr.bf16.mxu0 %v7625
        %11333 = vmatpush1.bf16.msra.mxu0 %v7624
        %11334 = vmatprep.subr.bf16.mxu0 %v7581
        %11335 = vmatpush1.bf16.msra.mxu0 %v7580
        %11336 = vmatprep.subr.bf16.mxu0 %v7537
        %11337 = vmatpush1.bf16.msra.mxu0 %v7536
        %11338 = vmatprep.subr.bf16.mxu0 %v7493
        %11339 = vmatpush1.bf16.msra.mxu0 %v7492
        %11340 = vmatprep.subr.bf16.mxu0 %v7449
        %11341 = vmatpush1.bf16.msra.mxu0 %v7448
        %11342 = vmatprep.subr.bf16.mxu0 %v7405
        %11343 = vmatpush1.bf16.msra.mxu0 %v7404
        %11344 = vmatprep.subr.bf16.mxu0 %v7361
        %11345 = vmatpush1.bf16.msra.mxu0 %v7360
        %11346 = vmatprep.subr.bf16.mxu0 %v7317
        %11347 = vmatpush1.bf16.msra.mxu0 %v7316
        %11348 = vmatprep.subr.bf16.mxu0 %v7977
        %11349 = vmatpush2.bf16.msra.mxu0 %v7976
        %11350 = vmatprep.subr.bf16.mxu0 %v7933
        %11351 = vmatpush2.bf16.msra.mxu0 %v7932
        %11352 = vmatprep.subr.bf16.mxu0 %v7889
        %11353 = vmatpush2.bf16.msra.mxu0 %v7888
        %11354 = vmatprep.subr.bf16.mxu0 %v7845
        %11355 = vmatpush2.bf16.msra.mxu0 %v7844
        %11356 = vmatprep.subr.bf16.mxu0 %v7801
        %11357 = vmatpush2.bf16.msra.mxu0 %v7800
        %11358 = vmatprep.subr.bf16.mxu0 %v7757
        %11359 = vmatpush2.bf16.msra.mxu0 %v7756
        %11360 = vmatprep.subr.bf16.mxu0 %v7713
        %11361 = vmatpush2.bf16.msra.mxu0 %v7712
        %11362 = vmatprep.subr.bf16.mxu0 %v7669
        %11363 = vmatpush2.bf16.msra.mxu0 %v7668
        %11364 = vmatprep.mubr.bf16.mxu0 %v1419
        %11365 = vmatmul.mubr.bf16.gmra.mxu0 %v1418
        %v11366 = vpop.f32.mrf.mxu0
        %v11367 = vadd.f32 %v2965, %v11366
        %v11368 = vpop.f32.mrf.mxu0
        %v11369 = vadd.f32 %v2969, %v11368
        %v11370 = vpop.f32.mrf.mxu0
        %v11371 = vpop.f32.mrf.mxu0
        %11372 = vdwg.mxu0
        %11373 = vmatprep.subr.bf16.mxu0 %v8329
        %11374 = vmatpush1.bf16.msra.mxu0 %v8328
        %11375 = vmatprep.subr.bf16.mxu0 %v8285
        %11376 = vmatpush1.bf16.msra.mxu0 %v8284
        %11377 = vmatprep.subr.bf16.mxu0 %v8241
        %11378 = vmatpush1.bf16.msra.mxu0 %v8240
        %11379 = vmatprep.subr.bf16.mxu0 %v8197
        %11380 = vmatpush1.bf16.msra.mxu0 %v8196
        %11381 = vmatprep.subr.bf16.mxu0 %v8153
        %11382 = vmatpush1.bf16.msra.mxu0 %v8152
        %11383 = vmatprep.subr.bf16.mxu0 %v8109
        %11384 = vmatpush1.bf16.msra.mxu0 %v8108
        %11385 = vmatprep.subr.bf16.mxu0 %v8065
        %11386 = vmatpush1.bf16.msra.mxu0 %v8064
        %11387 = vmatprep.subr.bf16.mxu0 %v8021
        %11388 = vmatpush1.bf16.msra.mxu0 %v8020
        %11389 = vmatprep.subr.bf16.mxu0 %v8681
        %11390 = vmatpush2.bf16.msra.mxu0 %v8680
        %11391 = vmatprep.subr.bf16.mxu0 %v8637
        %11392 = vmatpush2.bf16.msra.mxu0 %v8636
        %11393 = vmatprep.subr.bf16.mxu0 %v8593
        %11394 = vmatpush2.bf16.msra.mxu0 %v8592
        %11395 = vmatprep.subr.bf16.mxu0 %v8549
        %11396 = vmatpush2.bf16.msra.mxu0 %v8548
        %11397 = vmatprep.subr.bf16.mxu0 %v8505
        %11398 = vmatpush2.bf16.msra.mxu0 %v8504
        %11399 = vmatprep.subr.bf16.mxu0 %v8461
        %11400 = vmatpush2.bf16.msra.mxu0 %v8460
        %11401 = vmatprep.subr.bf16.mxu0 %v8417
        %11402 = vmatpush2.bf16.msra.mxu0 %v8416
        %11403 = vmatprep.subr.bf16.mxu0 %v8373
        %11404 = vmatpush2.bf16.msra.mxu0 %v8372
        %11405 = vmatprep.mubr.bf16.mxu0 %v1421
        %11406 = vmatmul.mubr.bf16.gmra.mxu0 %v1420
        %v11407 = vpop.f32.mrf.mxu0
        %v11408 = vadd.f32 %v11367, %v11407
        %v11409 = vpop.f32.mrf.mxu0
        %v11410 = vadd.f32 %v11369, %v11409
        %v11411 = vpop.f32.mrf.mxu0
        %v11412 = vpop.f32.mrf.mxu0
        %11413 = vdwg.mxu0
        %11414 = vmatprep.subr.bf16.mxu0 %v7627
        %11415 = vmatpush1.bf16.msra.mxu0 %v7626
        %11416 = vmatprep.subr.bf16.mxu0 %v7583
        %11417 = vmatpush1.bf16.msra.mxu0 %v7582
        %11418 = vmatprep.subr.bf16.mxu0 %v7539
        %11419 = vmatpush1.bf16.msra.mxu0 %v7538
        %11420 = vmatprep.subr.bf16.mxu0 %v7495
        %11421 = vmatpush1.bf16.msra.mxu0 %v7494
        %11422 = vmatprep.subr.bf16.mxu0 %v7451
        %11423 = vmatpush1.bf16.msra.mxu0 %v7450
        %11424 = vmatprep.subr.bf16.mxu0 %v7407
        %11425 = vmatpush1.bf16.msra.mxu0 %v7406
        %11426 = vmatprep.subr.bf16.mxu0 %v7363
        %11427 = vmatpush1.bf16.msra.mxu0 %v7362
        %11428 = vmatprep.subr.bf16.mxu0 %v7319
        %11429 = vmatpush1.bf16.msra.mxu0 %v7318
        %11430 = vmatprep.subr.bf16.mxu0 %v7979
        %11431 = vmatpush2.bf16.msra.mxu0 %v7978
        %11432 = vmatprep.subr.bf16.mxu0 %v7935
        %11433 = vmatpush2.bf16.msra.mxu0 %v7934
        %11434 = vmatprep.subr.bf16.mxu0 %v7891
        %11435 = vmatpush2.bf16.msra.mxu0 %v7890
        %11436 = vmatprep.subr.bf16.mxu0 %v7847
        %11437 = vmatpush2.bf16.msra.mxu0 %v7846
        %11438 = vmatprep.subr.bf16.mxu0 %v7803
        %11439 = vmatpush2.bf16.msra.mxu0 %v7802
        %11440 = vmatprep.subr.bf16.mxu0 %v7759
        %11441 = vmatpush2.bf16.msra.mxu0 %v7758
        %11442 = vmatprep.subr.bf16.mxu0 %v7715
        %11443 = vmatpush2.bf16.msra.mxu0 %v7714
        %11444 = vmatprep.subr.bf16.mxu0 %v7671
        %11445 = vmatpush2.bf16.msra.mxu0 %v7670
        %11446 = vmatprep.mubr.bf16.mxu0 %v1419
        %11447 = vmatmul.mubr.bf16.gmra.mxu0 %v1418
        %v11448 = vpop.f32.mrf.mxu0
        %v11449 = vadd.f32 %v2973, %v11448
        %v11450 = vpop.f32.mrf.mxu0
        %v11451 = vadd.f32 %v2977, %v11450
        %v11452 = vpop.f32.mrf.mxu0
        %v11453 = vpop.f32.mrf.mxu0
        %11454 = vdwg.mxu0
        %11455 = vmatprep.subr.bf16.mxu0 %v8331
        %11456 = vmatpush1.bf16.msra.mxu0 %v8330
        %11457 = vmatprep.subr.bf16.mxu0 %v8287
        %11458 = vmatpush1.bf16.msra.mxu0 %v8286
        %11459 = vmatprep.subr.bf16.mxu0 %v8243
        %11460 = vmatpush1.bf16.msra.mxu0 %v8242
        %11461 = vmatprep.subr.bf16.mxu0 %v8199
        %11462 = vmatpush1.bf16.msra.mxu0 %v8198
        %11463 = vmatprep.subr.bf16.mxu0 %v8155
        %11464 = vmatpush1.bf16.msra.mxu0 %v8154
        %11465 = vmatprep.subr.bf16.mxu0 %v8111
        %11466 = vmatpush1.bf16.msra.mxu0 %v8110
        %11467 = vmatprep.subr.bf16.mxu0 %v8067
        %11468 = vmatpush1.bf16.msra.mxu0 %v8066
        %11469 = vmatprep.subr.bf16.mxu0 %v8023
        %11470 = vmatpush1.bf16.msra.mxu0 %v8022
        %11471 = vmatprep.subr.bf16.mxu0 %v8683
        %11472 = vmatpush2.bf16.msra.mxu0 %v8682
        %11473 = vmatprep.subr.bf16.mxu0 %v8639
        %11474 = vmatpush2.bf16.msra.mxu0 %v8638
        %11475 = vmatprep.subr.bf16.mxu0 %v8595
        %11476 = vmatpush2.bf16.msra.mxu0 %v8594
        %11477 = vmatprep.subr.bf16.mxu0 %v8551
        %11478 = vmatpush2.bf16.msra.mxu0 %v8550
        %11479 = vmatprep.subr.bf16.mxu0 %v8507
        %11480 = vmatpush2.bf16.msra.mxu0 %v8506
        %11481 = vmatprep.subr.bf16.mxu0 %v8463
        %11482 = vmatpush2.bf16.msra.mxu0 %v8462
        %11483 = vmatprep.subr.bf16.mxu0 %v8419
        %11484 = vmatpush2.bf16.msra.mxu0 %v8418
        %11485 = vmatprep.subr.bf16.mxu0 %v8375
        %11486 = vmatpush2.bf16.msra.mxu0 %v8374
        %11487 = vmatprep.mubr.bf16.mxu0 %v1421
        %11488 = vmatmul.mubr.bf16.gmra.mxu0 %v1420
        %v11489 = vpop.f32.mrf.mxu0
        %v11490 = vadd.f32 %v11449, %v11489
        %v11491 = vpop.f32.mrf.mxu0
        %v11492 = vadd.f32 %v11451, %v11491
        %v11493 = vpop.f32.mrf.mxu0
        %v11494 = vpop.f32.mrf.mxu0
        %11495 = vdwg.mxu0
        %11496 = vmatprep.subr.bf16.mxu0 %v7629
        %11497 = vmatpush1.bf16.msra.mxu0 %v7628
        %11498 = vmatprep.subr.bf16.mxu0 %v7585
        %11499 = vmatpush1.bf16.msra.mxu0 %v7584
        %11500 = vmatprep.subr.bf16.mxu0 %v7541
        %11501 = vmatpush1.bf16.msra.mxu0 %v7540
        %11502 = vmatprep.subr.bf16.mxu0 %v7497
        %11503 = vmatpush1.bf16.msra.mxu0 %v7496
        %11504 = vmatprep.subr.bf16.mxu0 %v7453
        %11505 = vmatpush1.bf16.msra.mxu0 %v7452
        %11506 = vmatprep.subr.bf16.mxu0 %v7409
        %11507 = vmatpush1.bf16.msra.mxu0 %v7408
        %11508 = vmatprep.subr.bf16.mxu0 %v7365
        %11509 = vmatpush1.bf16.msra.mxu0 %v7364
        %11510 = vmatprep.subr.bf16.mxu0 %v7321
        %11511 = vmatpush1.bf16.msra.mxu0 %v7320
        %11512 = vmatprep.subr.bf16.mxu0 %v7981
        %11513 = vmatpush2.bf16.msra.mxu0 %v7980
        %11514 = vmatprep.subr.bf16.mxu0 %v7937
        %11515 = vmatpush2.bf16.msra.mxu0 %v7936
        %11516 = vmatprep.subr.bf16.mxu0 %v7893
        %11517 = vmatpush2.bf16.msra.mxu0 %v7892
        %11518 = vmatprep.subr.bf16.mxu0 %v7849
        %11519 = vmatpush2.bf16.msra.mxu0 %v7848
        %11520 = vmatprep.subr.bf16.mxu0 %v7805
        %11521 = vmatpush2.bf16.msra.mxu0 %v7804
        %11522 = vmatprep.subr.bf16.mxu0 %v7761
        %11523 = vmatpush2.bf16.msra.mxu0 %v7760
        %11524 = vmatprep.subr.bf16.mxu0 %v7717
        %11525 = vmatpush2.bf16.msra.mxu0 %v7716
        %11526 = vmatprep.subr.bf16.mxu0 %v7673
        %11527 = vmatpush2.bf16.msra.mxu0 %v7672
        %11528 = vmatprep.mubr.bf16.mxu0 %v1419
        %11529 = vmatmul.mubr.bf16.gmra.mxu0 %v1418
        %v11530 = vpop.f32.mrf.mxu0
        %v11531 = vadd.f32 %v2981, %v11530
        %v11532 = vpop.f32.mrf.mxu0
        %v11533 = vadd.f32 %v2985, %v11532
        %v11534 = vpop.f32.mrf.mxu0
        %v11535 = vpop.f32.mrf.mxu0
        %11536 = vdwg.mxu0
        %11537 = vmatprep.subr.bf16.mxu0 %v8333
        %11538 = vmatpush1.bf16.msra.mxu0 %v8332
        %11539 = vmatprep.subr.bf16.mxu0 %v8289
        %11540 = vmatpush1.bf16.msra.mxu0 %v8288
        %11541 = vmatprep.subr.bf16.mxu0 %v8245
        %11542 = vmatpush1.bf16.msra.mxu0 %v8244
        %11543 = vmatprep.subr.bf16.mxu0 %v8201
        %11544 = vmatpush1.bf16.msra.mxu0 %v8200
        %11545 = vmatprep.subr.bf16.mxu0 %v8157
        %11546 = vmatpush1.bf16.msra.mxu0 %v8156
        %11547 = vmatprep.subr.bf16.mxu0 %v8113
        %11548 = vmatpush1.bf16.msra.mxu0 %v8112
        %11549 = vmatprep.subr.bf16.mxu0 %v8069
        %11550 = vmatpush1.bf16.msra.mxu0 %v8068
        %11551 = vmatprep.subr.bf16.mxu0 %v8025
        %11552 = vmatpush1.bf16.msra.mxu0 %v8024
        %11553 = vmatprep.subr.bf16.mxu0 %v8685
        %11554 = vmatpush2.bf16.msra.mxu0 %v8684
        %11555 = vmatprep.subr.bf16.mxu0 %v8641
        %11556 = vmatpush2.bf16.msra.mxu0 %v8640
        %11557 = vmatprep.subr.bf16.mxu0 %v8597
        %11558 = vmatpush2.bf16.msra.mxu0 %v8596
        %11559 = vmatprep.subr.bf16.mxu0 %v8553
        %11560 = vmatpush2.bf16.msra.mxu0 %v8552
        %11561 = vmatprep.subr.bf16.mxu0 %v8509
        %11562 = vmatpush2.bf16.msra.mxu0 %v8508
        %11563 = vmatprep.subr.bf16.mxu0 %v8465
        %11564 = vmatpush2.bf16.msra.mxu0 %v8464
        %11565 = vmatprep.subr.bf16.mxu0 %v8421
        %11566 = vmatpush2.bf16.msra.mxu0 %v8420
        %11567 = vmatprep.subr.bf16.mxu0 %v8377
        %11568 = vmatpush2.bf16.msra.mxu0 %v8376
        %11569 = vmatprep.mubr.bf16.mxu0 %v1421
        %11570 = vmatmul.mubr.bf16.gmra.mxu0 %v1420
        %v11571 = vpop.f32.mrf.mxu0
        %v11572 = vadd.f32 %v11531, %v11571
        %v11573 = vpop.f32.mrf.mxu0
        %v11574 = vadd.f32 %v11533, %v11573
        %v11575 = vpop.f32.mrf.mxu0
        %v11576 = vpop.f32.mrf.mxu0
        %11577 = vdwg.mxu0
        %11578 = vmatprep.subr.bf16.mxu0 %v7631
        %11579 = vmatpush1.bf16.msra.mxu0 %v7630
        %11580 = vmatprep.subr.bf16.mxu0 %v7587
        %11581 = vmatpush1.bf16.msra.mxu0 %v7586
        %11582 = vmatprep.subr.bf16.mxu0 %v7543
        %11583 = vmatpush1.bf16.msra.mxu0 %v7542
        %11584 = vmatprep.subr.bf16.mxu0 %v7499
        %11585 = vmatpush1.bf16.msra.mxu0 %v7498
        %11586 = vmatprep.subr.bf16.mxu0 %v7455
        %11587 = vmatpush1.bf16.msra.mxu0 %v7454
        %11588 = vmatprep.subr.bf16.mxu0 %v7411
        %11589 = vmatpush1.bf16.msra.mxu0 %v7410
        %11590 = vmatprep.subr.bf16.mxu0 %v7367
        %11591 = vmatpush1.bf16.msra.mxu0 %v7366
        %11592 = vmatprep.subr.bf16.mxu0 %v7323
        %11593 = vmatpush1.bf16.msra.mxu0 %v7322
        %11594 = vmatprep.subr.bf16.mxu0 %v7983
        %11595 = vmatpush2.bf16.msra.mxu0 %v7982
        %11596 = vmatprep.subr.bf16.mxu0 %v7939
        %11597 = vmatpush2.bf16.msra.mxu0 %v7938
        %11598 = vmatprep.subr.bf16.mxu0 %v7895
        %11599 = vmatpush2.bf16.msra.mxu0 %v7894
        %11600 = vmatprep.subr.bf16.mxu0 %v7851
        %11601 = vmatpush2.bf16.msra.mxu0 %v7850
        %11602 = vmatprep.subr.bf16.mxu0 %v7807
        %11603 = vmatpush2.bf16.msra.mxu0 %v7806
        %11604 = vmatprep.subr.bf16.mxu0 %v7763
        %11605 = vmatpush2.bf16.msra.mxu0 %v7762
        %11606 = vmatprep.subr.bf16.mxu0 %v7719
        %11607 = vmatpush2.bf16.msra.mxu0 %v7718
        %11608 = vmatprep.subr.bf16.mxu0 %v7675
        %11609 = vmatpush2.bf16.msra.mxu0 %v7674
        %11610 = vmatprep.mubr.bf16.mxu0 %v1419
        %11611 = vmatmul.mubr.bf16.gmra.mxu0 %v1418
        %v11612 = vpop.f32.mrf.mxu0
        %v11613 = vadd.f32 %v2989, %v11612
        %v11614 = vpop.f32.mrf.mxu0
        %v11615 = vadd.f32 %v2993, %v11614
        %v11616 = vpop.f32.mrf.mxu0
        %v11617 = vpop.f32.mrf.mxu0
        %11618 = vdwg.mxu0
        %11619 = vmatprep.subr.bf16.mxu0 %v8335
        %11620 = vmatpush1.bf16.msra.mxu0 %v8334
        %11621 = vmatprep.subr.bf16.mxu0 %v8291
        %11622 = vmatpush1.bf16.msra.mxu0 %v8290
        %11623 = vmatprep.subr.bf16.mxu0 %v8247
        %11624 = vmatpush1.bf16.msra.mxu0 %v8246
        %11625 = vmatprep.subr.bf16.mxu0 %v8203
        %11626 = vmatpush1.bf16.msra.mxu0 %v8202
        %11627 = vmatprep.subr.bf16.mxu0 %v8159
        %11628 = vmatpush1.bf16.msra.mxu0 %v8158
        %11629 = vmatprep.subr.bf16.mxu0 %v8115
        %11630 = vmatpush1.bf16.msra.mxu0 %v8114
        %11631 = vmatprep.subr.bf16.mxu0 %v8071
        %11632 = vmatpush1.bf16.msra.mxu0 %v8070
        %11633 = vmatprep.subr.bf16.mxu0 %v8027
        %11634 = vmatpush1.bf16.msra.mxu0 %v8026
        %11635 = vmatprep.subr.bf16.mxu0 %v8687
        %11636 = vmatpush2.bf16.msra.mxu0 %v8686
        %11637 = vmatprep.subr.bf16.mxu0 %v8643
        %11638 = vmatpush2.bf16.msra.mxu0 %v8642
        %11639 = vmatprep.subr.bf16.mxu0 %v8599
        %11640 = vmatpush2.bf16.msra.mxu0 %v8598
        %11641 = vmatprep.subr.bf16.mxu0 %v8555
        %11642 = vmatpush2.bf16.msra.mxu0 %v8554
        %11643 = vmatprep.subr.bf16.mxu0 %v8511
        %11644 = vmatpush2.bf16.msra.mxu0 %v8510
        %11645 = vmatprep.subr.bf16.mxu0 %v8467
        %11646 = vmatpush2.bf16.msra.mxu0 %v8466
        %11647 = vmatprep.subr.bf16.mxu0 %v8423
        %11648 = vmatpush2.bf16.msra.mxu0 %v8422
        %11649 = vmatprep.subr.bf16.mxu0 %v8379
        %11650 = vmatpush2.bf16.msra.mxu0 %v8378
        %11651 = vmatprep.mubr.bf16.mxu0 %v1421
        %11652 = vmatmul.mubr.bf16.gmra.mxu0 %v1420
        %v11653 = vpop.f32.mrf.mxu0
        %v11654 = vadd.f32 %v11613, %v11653
        %v11655 = vpop.f32.mrf.mxu0
        %v11656 = vadd.f32 %v11615, %v11655
        %v11657 = vpop.f32.mrf.mxu0
        %v11658 = vpop.f32.mrf.mxu0
        %11659 = vdwg.mxu0
        %11660 = vmatprep.subr.bf16.mxu0 %v7633
        %11661 = vmatpush1.bf16.msra.mxu0 %v7632
        %11662 = vmatprep.subr.bf16.mxu0 %v7589
        %11663 = vmatpush1.bf16.msra.mxu0 %v7588
        %11664 = vmatprep.subr.bf16.mxu0 %v7545
        %11665 = vmatpush1.bf16.msra.mxu0 %v7544
        %11666 = vmatprep.subr.bf16.mxu0 %v7501
        %11667 = vmatpush1.bf16.msra.mxu0 %v7500
        %11668 = vmatprep.subr.bf16.mxu0 %v7457
        %11669 = vmatpush1.bf16.msra.mxu0 %v7456
        %11670 = vmatprep.subr.bf16.mxu0 %v7413
        %11671 = vmatpush1.bf16.msra.mxu0 %v7412
        %11672 = vmatprep.subr.bf16.mxu0 %v7369
        %11673 = vmatpush1.bf16.msra.mxu0 %v7368
        %11674 = vmatprep.subr.bf16.mxu0 %v7325
        %11675 = vmatpush1.bf16.msra.mxu0 %v7324
        %11676 = vmatprep.subr.bf16.mxu0 %v7985
        %11677 = vmatpush2.bf16.msra.mxu0 %v7984
        %11678 = vmatprep.subr.bf16.mxu0 %v7941
        %11679 = vmatpush2.bf16.msra.mxu0 %v7940
        %11680 = vmatprep.subr.bf16.mxu0 %v7897
        %11681 = vmatpush2.bf16.msra.mxu0 %v7896
        %11682 = vmatprep.subr.bf16.mxu0 %v7853
        %11683 = vmatpush2.bf16.msra.mxu0 %v7852
        %11684 = vmatprep.subr.bf16.mxu0 %v7809
        %11685 = vmatpush2.bf16.msra.mxu0 %v7808
        %11686 = vmatprep.subr.bf16.mxu0 %v7765
        %11687 = vmatpush2.bf16.msra.mxu0 %v7764
        %11688 = vmatprep.subr.bf16.mxu0 %v7721
        %11689 = vmatpush2.bf16.msra.mxu0 %v7720
        %11690 = vmatprep.subr.bf16.mxu0 %v7677
        %11691 = vmatpush2.bf16.msra.mxu0 %v7676
        %11692 = vmatprep.mubr.bf16.mxu0 %v1419
        %11693 = vmatmul.mubr.bf16.gmra.mxu0 %v1418
        %v11694 = vpop.f32.mrf.mxu0
        %v11695 = vadd.f32 %v2997, %v11694
        %v11696 = vpop.f32.mrf.mxu0
        %v11697 = vadd.f32 %v3001, %v11696
        %v11698 = vpop.f32.mrf.mxu0
        %v11699 = vpop.f32.mrf.mxu0
        %11700 = vdwg.mxu0
        %11701 = vmatprep.subr.bf16.mxu0 %v8337
        %11702 = vmatpush1.bf16.msra.mxu0 %v8336
        %11703 = vmatprep.subr.bf16.mxu0 %v8293
        %11704 = vmatpush1.bf16.msra.mxu0 %v8292
        %11705 = vmatprep.subr.bf16.mxu0 %v8249
        %11706 = vmatpush1.bf16.msra.mxu0 %v8248
        %11707 = vmatprep.subr.bf16.mxu0 %v8205
        %11708 = vmatpush1.bf16.msra.mxu0 %v8204
        %11709 = vmatprep.subr.bf16.mxu0 %v8161
        %11710 = vmatpush1.bf16.msra.mxu0 %v8160
        %11711 = vmatprep.subr.bf16.mxu0 %v8117
        %11712 = vmatpush1.bf16.msra.mxu0 %v8116
        %11713 = vmatprep.subr.bf16.mxu0 %v8073
        %11714 = vmatpush1.bf16.msra.mxu0 %v8072
        %11715 = vmatprep.subr.bf16.mxu0 %v8029
        %11716 = vmatpush1.bf16.msra.mxu0 %v8028
        %11717 = vmatprep.subr.bf16.mxu0 %v8689
        %11718 = vmatpush2.bf16.msra.mxu0 %v8688
        %11719 = vmatprep.subr.bf16.mxu0 %v8645
        %11720 = vmatpush2.bf16.msra.mxu0 %v8644
        %11721 = vmatprep.subr.bf16.mxu0 %v8601
        %11722 = vmatpush2.bf16.msra.mxu0 %v8600
        %11723 = vmatprep.subr.bf16.mxu0 %v8557
        %11724 = vmatpush2.bf16.msra.mxu0 %v8556
        %11725 = vmatprep.subr.bf16.mxu0 %v8513
        %11726 = vmatpush2.bf16.msra.mxu0 %v8512
        %11727 = vmatprep.subr.bf16.mxu0 %v8469
        %11728 = vmatpush2.bf16.msra.mxu0 %v8468
        %11729 = vmatprep.subr.bf16.mxu0 %v8425
        %11730 = vmatpush2.bf16.msra.mxu0 %v8424
        %11731 = vmatprep.subr.bf16.mxu0 %v8381
        %11732 = vmatpush2.bf16.msra.mxu0 %v8380
        %11733 = vmatprep.mubr.bf16.mxu0 %v1421
        %11734 = vmatmul.mubr.bf16.gmra.mxu0 %v1420
        %v11735 = vpop.f32.mrf.mxu0
        %v11736 = vadd.f32 %v11695, %v11735
        %v11737 = vpop.f32.mrf.mxu0
        %v11738 = vadd.f32 %v11697, %v11737
        %v11739 = vpop.f32.mrf.mxu0
        %v11740 = vpop.f32.mrf.mxu0
        %11741 = vdwg.mxu0
        %11742 = vmatprep.subr.bf16.mxu0 %v7635
        %11743 = vmatpush1.bf16.msra.mxu0 %v7634
        %11744 = vmatprep.subr.bf16.mxu0 %v7591
        %11745 = vmatpush1.bf16.msra.mxu0 %v7590
        %11746 = vmatprep.subr.bf16.mxu0 %v7547
        %11747 = vmatpush1.bf16.msra.mxu0 %v7546
        %11748 = vmatprep.subr.bf16.mxu0 %v7503
        %11749 = vmatpush1.bf16.msra.mxu0 %v7502
        %11750 = vmatprep.subr.bf16.mxu0 %v7459
        %11751 = vmatpush1.bf16.msra.mxu0 %v7458
        %11752 = vmatprep.subr.bf16.mxu0 %v7415
        %11753 = vmatpush1.bf16.msra.mxu0 %v7414
        %11754 = vmatprep.subr.bf16.mxu0 %v7371
        %11755 = vmatpush1.bf16.msra.mxu0 %v7370
        %11756 = vmatprep.subr.bf16.mxu0 %v7327
        %11757 = vmatpush1.bf16.msra.mxu0 %v7326
        %11758 = vmatprep.subr.bf16.mxu0 %v7987
        %11759 = vmatpush2.bf16.msra.mxu0 %v7986
        %11760 = vmatprep.subr.bf16.mxu0 %v7943
        %11761 = vmatpush2.bf16.msra.mxu0 %v7942
        %11762 = vmatprep.subr.bf16.mxu0 %v7899
        %11763 = vmatpush2.bf16.msra.mxu0 %v7898
        %11764 = vmatprep.subr.bf16.mxu0 %v7855
        %11765 = vmatpush2.bf16.msra.mxu0 %v7854
        %11766 = vmatprep.subr.bf16.mxu0 %v7811
        %11767 = vmatpush2.bf16.msra.mxu0 %v7810
        %11768 = vmatprep.subr.bf16.mxu0 %v7767
        %11769 = vmatpush2.bf16.msra.mxu0 %v7766
        %11770 = vmatprep.subr.bf16.mxu0 %v7723
        %11771 = vmatpush2.bf16.msra.mxu0 %v7722
        %11772 = vmatprep.subr.bf16.mxu0 %v7679
        %11773 = vmatpush2.bf16.msra.mxu0 %v7678
        %11774 = vmatprep.mubr.bf16.mxu0 %v1419
        %11775 = vmatmul.mubr.bf16.gmra.mxu0 %v1418
        %v11776 = vpop.f32.mrf.mxu0
        %v11777 = vadd.f32 %v3005, %v11776
        %v11778 = vpop.f32.mrf.mxu0
        %v11779 = vadd.f32 %v3009, %v11778
        %v11780 = vpop.f32.mrf.mxu0
        %v11781 = vpop.f32.mrf.mxu0
        %11782 = vdwg.mxu0
        %11783 = vmatprep.subr.bf16.mxu0 %v8339
        %11784 = vmatpush1.bf16.msra.mxu0 %v8338
        %11785 = vmatprep.subr.bf16.mxu0 %v8295
        %11786 = vmatpush1.bf16.msra.mxu0 %v8294
        %11787 = vmatprep.subr.bf16.mxu0 %v8251
        %11788 = vmatpush1.bf16.msra.mxu0 %v8250
        %11789 = vmatprep.subr.bf16.mxu0 %v8207
        %11790 = vmatpush1.bf16.msra.mxu0 %v8206
        %11791 = vmatprep.subr.bf16.mxu0 %v8163
        %11792 = vmatpush1.bf16.msra.mxu0 %v8162
        %11793 = vmatprep.subr.bf16.mxu0 %v8119
        %11794 = vmatpush1.bf16.msra.mxu0 %v8118
        %11795 = vmatprep.subr.bf16.mxu0 %v8075
        %11796 = vmatpush1.bf16.msra.mxu0 %v8074
        %11797 = vmatprep.subr.bf16.mxu0 %v8031
        %11798 = vmatpush1.bf16.msra.mxu0 %v8030
        %11799 = vmatprep.subr.bf16.mxu0 %v8691
        %11800 = vmatpush2.bf16.msra.mxu0 %v8690
        %11801 = vmatprep.subr.bf16.mxu0 %v8647
        %11802 = vmatpush2.bf16.msra.mxu0 %v8646
        %11803 = vmatprep.subr.bf16.mxu0 %v8603
        %11804 = vmatpush2.bf16.msra.mxu0 %v8602
        %11805 = vmatprep.subr.bf16.mxu0 %v8559
        %11806 = vmatpush2.bf16.msra.mxu0 %v8558
        %11807 = vmatprep.subr.bf16.mxu0 %v8515
        %11808 = vmatpush2.bf16.msra.mxu0 %v8514
        %11809 = vmatprep.subr.bf16.mxu0 %v8471
        %11810 = vmatpush2.bf16.msra.mxu0 %v8470
        %11811 = vmatprep.subr.bf16.mxu0 %v8427
        %11812 = vmatpush2.bf16.msra.mxu0 %v8426
        %11813 = vmatprep.subr.bf16.mxu0 %v8383
        %11814 = vmatpush2.bf16.msra.mxu0 %v8382
        %11815 = vmatprep.mubr.bf16.mxu0 %v1421
        %11816 = vmatmul.mubr.bf16.gmra.mxu0 %v1420
        %v11817 = vpop.f32.mrf.mxu0
        %v11818 = vadd.f32 %v11777, %v11817
        %v11819 = vpop.f32.mrf.mxu0
        %v11820 = vadd.f32 %v11779, %v11819
        %v11821 = vpop.f32.mrf.mxu0
        %v11822 = vpop.f32.mrf.mxu0
        %11823 = vdwg.mxu0
        %11824 = vmatprep.subr.bf16.mxu0 %v7637
        %11825 = vmatpush1.bf16.msra.mxu0 %v7636
        %11826 = vmatprep.subr.bf16.mxu0 %v7593
        %11827 = vmatpush1.bf16.msra.mxu0 %v7592
        %11828 = vmatprep.subr.bf16.mxu0 %v7549
        %11829 = vmatpush1.bf16.msra.mxu0 %v7548
        %11830 = vmatprep.subr.bf16.mxu0 %v7505
        %11831 = vmatpush1.bf16.msra.mxu0 %v7504
        %11832 = vmatprep.subr.bf16.mxu0 %v7461
        %11833 = vmatpush1.bf16.msra.mxu0 %v7460
        %11834 = vmatprep.subr.bf16.mxu0 %v7417
        %11835 = vmatpush1.bf16.msra.mxu0 %v7416
        %11836 = vmatprep.subr.bf16.mxu0 %v7373
        %11837 = vmatpush1.bf16.msra.mxu0 %v7372
        %11838 = vmatprep.subr.bf16.mxu0 %v7329
        %11839 = vmatpush1.bf16.msra.mxu0 %v7328
        %11840 = vmatprep.subr.bf16.mxu0 %v7989
        %11841 = vmatpush2.bf16.msra.mxu0 %v7988
        %11842 = vmatprep.subr.bf16.mxu0 %v7945
        %11843 = vmatpush2.bf16.msra.mxu0 %v7944
        %11844 = vmatprep.subr.bf16.mxu0 %v7901
        %11845 = vmatpush2.bf16.msra.mxu0 %v7900
        %11846 = vmatprep.subr.bf16.mxu0 %v7857
        %11847 = vmatpush2.bf16.msra.mxu0 %v7856
        %11848 = vmatprep.subr.bf16.mxu0 %v7813
        %11849 = vmatpush2.bf16.msra.mxu0 %v7812
        %11850 = vmatprep.subr.bf16.mxu0 %v7769
        %11851 = vmatpush2.bf16.msra.mxu0 %v7768
        %11852 = vmatprep.subr.bf16.mxu0 %v7725
        %11853 = vmatpush2.bf16.msra.mxu0 %v7724
        %11854 = vmatprep.subr.bf16.mxu0 %v7681
        %11855 = vmatpush2.bf16.msra.mxu0 %v7680
        %11856 = vmatprep.mubr.bf16.mxu0 %v1419
        %11857 = vmatmul.mubr.bf16.gmra.mxu0 %v1418
        %v11858 = vpop.f32.mrf.mxu0
        %v11859 = vadd.f32 %v3013, %v11858
        %v11860 = vpop.f32.mrf.mxu0
        %v11861 = vadd.f32 %v3017, %v11860
        %v11862 = vpop.f32.mrf.mxu0
        %v11863 = vpop.f32.mrf.mxu0
        %11864 = vdwg.mxu0
        %11865 = vmatprep.subr.bf16.mxu0 %v8341
        %11866 = vmatpush1.bf16.msra.mxu0 %v8340
        %11867 = vmatprep.subr.bf16.mxu0 %v8297
        %11868 = vmatpush1.bf16.msra.mxu0 %v8296
        %11869 = vmatprep.subr.bf16.mxu0 %v8253
        %11870 = vmatpush1.bf16.msra.mxu0 %v8252
        %11871 = vmatprep.subr.bf16.mxu0 %v8209
        %11872 = vmatpush1.bf16.msra.mxu0 %v8208
        %11873 = vmatprep.subr.bf16.mxu0 %v8165
        %11874 = vmatpush1.bf16.msra.mxu0 %v8164
        %11875 = vmatprep.subr.bf16.mxu0 %v8121
        %11876 = vmatpush1.bf16.msra.mxu0 %v8120
        %11877 = vmatprep.subr.bf16.mxu0 %v8077
        %11878 = vmatpush1.bf16.msra.mxu0 %v8076
        %11879 = vmatprep.subr.bf16.mxu0 %v8033
        %11880 = vmatpush1.bf16.msra.mxu0 %v8032
        %11881 = vmatprep.subr.bf16.mxu0 %v8693
        %11882 = vmatpush2.bf16.msra.mxu0 %v8692
        %11883 = vmatprep.subr.bf16.mxu0 %v8649
        %11884 = vmatpush2.bf16.msra.mxu0 %v8648
        %11885 = vmatprep.subr.bf16.mxu0 %v8605
        %11886 = vmatpush2.bf16.msra.mxu0 %v8604
        %11887 = vmatprep.subr.bf16.mxu0 %v8561
        %11888 = vmatpush2.bf16.msra.mxu0 %v8560
        %11889 = vmatprep.subr.bf16.mxu0 %v8517
        %11890 = vmatpush2.bf16.msra.mxu0 %v8516
        %11891 = vmatprep.subr.bf16.mxu0 %v8473
        %11892 = vmatpush2.bf16.msra.mxu0 %v8472
        %11893 = vmatprep.subr.bf16.mxu0 %v8429
        %11894 = vmatpush2.bf16.msra.mxu0 %v8428
        %11895 = vmatprep.subr.bf16.mxu0 %v8385
        %11896 = vmatpush2.bf16.msra.mxu0 %v8384
        %11897 = vmatprep.mubr.bf16.mxu0 %v1421
        %11898 = vmatmul.mubr.bf16.gmra.mxu0 %v1420
        %v11899 = vpop.f32.mrf.mxu0
        %v11900 = vadd.f32 %v11859, %v11899
        %v11901 = vpop.f32.mrf.mxu0
        %v11902 = vadd.f32 %v11861, %v11901
        %v11903 = vpop.f32.mrf.mxu0
        %v11904 = vpop.f32.mrf.mxu0
        %11905 = vdwg.mxu0
        %v11906 = vtanh.pop %v10178
        %v11907 = vtanh.pop %v10180
        %v11908 = vtanh.pop %v10260
        %v11909 = vtanh.pop %v10262
        %v11910 = vtanh.pop %v10342
        %v11911 = vtanh.pop %v10344
        %v11912 = vtanh.pop %v10424
        %v11913 = vtanh.pop %v10426
        %v11914 = vtanh.pop %v10506
        %v11915 = vtanh.pop %v10508
        %v11916 = vtanh.pop %v10588
        %v11917 = vtanh.pop %v10590
        %v11918 = vtanh.pop %v10670
        %v11919 = vtanh.pop %v10672
        %v11920 = vtanh.pop %v10752
        %v11921 = vtanh.pop %v10754
        %v11922 = vtanh.pop %v10834
        %v11923 = vtanh.pop %v10836
        %v11924 = vtanh.pop %v10916
        %v11925 = vtanh.pop %v10918
        %v11926 = vtanh.pop %v10998
        %v11927 = vtanh.pop %v11000
        %v11928 = vtanh.pop %v11080
        %v11929 = vtanh.pop %v11082
        %v11930 = vtanh.pop %v11162
        %v11931 = vtanh.pop %v11164
        %v11932 = vtanh.pop %v11244
        %v11933 = vtanh.pop %v11246
        %v11934 = vtanh.pop %v11326
        %v11935 = vtanh.pop %v11328
        %v11936 = vtanh.pop %v11408
        %v11937 = vtanh.pop %v11410
        %v11938 = vtanh.pop %v11490
        %v11939 = vtanh.pop %v11492
        %v11940 = vtanh.pop %v11572
        %v11941 = vtanh.pop %v11574
        %v11942 = vtanh.pop %v11654
        %v11943 = vtanh.pop %v11656
        %v11944 = vtanh.pop %v11736
        %v11945 = vtanh.pop %v11738
        %v11946 = vtanh.pop %v11818
        %v11947 = vtanh.pop %v11820
        %v11948 = vtanh.pop %v11900
        %v11949 = vtanh.pop %v11902
        %v11994 = vcombine.low %v11906, %v11907
        %v11995 = vcombine.low %v11908, %v11909
        %v11996 = vcombine.low %v11910, %v11911
        %v11997 = vcombine.low %v11912, %v11913
        %v11998 = vcombine.low %v11914, %v11915
        %v11999 = vcombine.low %v11916, %v11917
        %v12000 = vcombine.low %v11918, %v11919
        %v12001 = vcombine.low %v11920, %v11921
        %v12002 = vcombine.low %v11922, %v11923
        %v12003 = vcombine.low %v11924, %v11925
        %v12004 = vcombine.low %v11926, %v11927
        %v12005 = vcombine.low %v11928, %v11929
        %v12006 = vcombine.low %v11930, %v11931
        %v12007 = vcombine.low %v11932, %v11933
        %v12008 = vcombine.low %v11934, %v11935
        %v12009 = vcombine.low %v11936, %v11937
        %v12010 = vcombine.low %v11938, %v11939
        %v12011 = vcombine.low %v11940, %v11941
        %v12012 = vcombine.low %v11942, %v11943
        %v12013 = vcombine.low %v11944, %v11945
        %v12014 = vcombine.low %v11946, %v11947
        %v12015 = vcombine.low %v11948, %v11949
        %12038 = vst [vmem:[%s479] sm:$0xff] %v11994
        %12039 = vst [vmem:[%s479 + $0x8] sm:$0xff] %v11995
        %12040 = vst [vmem:[%s479 + $0x10] sm:$0xff] %v11996
        %12041 = vst [vmem:[%s479 + $0x18] sm:$0xff] %v11997
        %12042 = vst [vmem:[%s479 + $0x20] sm:$0xff] %v11998
        %12043 = vst [vmem:[%s479 + $0x28] sm:$0xff] %v11999
        %12044 = vst [vmem:[%s479 + $0x30] sm:$0xff] %v12000
        %12045 = vst [vmem:[%s479 + $0x38] sm:$0xff] %v12001
        %12046 = vst [vmem:[%s479 + $0x40] sm:$0xff] %v12002
        %12047 = vst [vmem:[%s479 + $0x48] sm:$0xff] %v12003
        %12048 = vst [vmem:[%s479 + $0x50] sm:$0xff] %v12004
        %12049 = vst [vmem:[%s479 + $0x58] sm:$0xff] %v12005
        %12050 = vst [vmem:[%s479 + $0x60] sm:$0xff] %v12006
        %12051 = vst [vmem:[%s479 + $0x68] sm:$0xff] %v12007
        %12052 = vst [vmem:[%s479 + $0x70] sm:$0xff] %v12008
        %12053 = vst [vmem:[%s479 + $0x78] sm:$0xff] %v12009
        %12054 = vst [vmem:[%s479 + $0x80] sm:$0xff] %v12010
        %12055 = vst [vmem:[%s479 + $0x88] sm:$0xff] %v12011
        %12056 = vst [vmem:[%s479 + $0x90] sm:$0xff] %v12012
        %12057 = vst [vmem:[%s479 + $0x98] sm:$0xff] %v12013
        %12058 = vst [vmem:[%s479 + $0xa0] sm:$0xff] %v12014
        %12059 = vst [vmem:[%s479 + $0xa8] sm:$0xff] %v12015
        %s12060 = smul.u32 44, %s27
        %p12061 = scmp.lt.s32.totalorder %s12060, 175
        %s12062 = scalar_select %p12061, %s12060, 175
        %s12063 = smul.addr %s12062, 4
        %s12064 = scalar_lea.vmem %s9, %s12063
        // Predicated region
        $region93: #{decoder_forward.1} parent=55 // pred_check
          %p12065 = pneg %p244
        $region94: #{decoder_forward.1} parent=55 // pred_check_branch
          %12067 = sbr.rel (%p12065) target = $region96
        $region95: #{decoder_forward.1} parent=55 // pred_region
          %s12068 = smul.u32 44, %s27
        $region96: #{decoder_forward.1} parent=55 // pred_fallthru
          _
      $region56: #{decoder_forward.1} parent=5 // pred_fallthru
        _
      %p12069 = scmp.le.s32.totalorder 2, %s22
      // Predicated region
      $region97: #{decoder_forward.1} parent=5 // pred_check
        %p12070 = pneg %p12069
      $region98: #{decoder_forward.1} parent=5 // pred_check_branch
        %12072 = sbr.rel (%p12070) target = $region100
      $region99: #{decoder_forward.1} parent=5 // pred_region
        %s12073 = ssub.s32 %s22, 2
        // Predicated region
        $region101: #{decoder_forward.1} parent=99 // pred_check
          %p12074 = pneg %p250
        $region102: #{decoder_forward.1} parent=99 // pred_check_branch
          %12076 = sbr.rel (%p12074) target = $region104
        $region103: #{decoder_forward.1} parent=99 // pred_region
          %s12077 = smul.u32 44, %s28
          %p12078 = scmp.lt.s32.totalorder %s12077, 175
          %s12079 = scalar_select %p12078, %s12077, 175
          %s12080 = smul.addr %s12079, 4
          %s12081 = scalar_lea.vmem %s9, %s12080
        $region104: #{decoder_forward.1} parent=99 // pred_fallthru
          _
      $region100: #{decoder_forward.1} parent=5 // pred_fallthru
        _
    $region6: #{decoder_forward.1} parent=1 // loop_footer
      %s26 = sadd.s32 1, %s22
    $region7: #{decoder_forward.1} parent=1 // loop_footer_branch
      %21 = sbr.rel target = $region3
    $region8: #{decoder_forward.1} parent=1 // loop_exit
      _
    %12082 = vsyncpa [#allocation3], 1
    %s12083 = scalar_lea.sflag [#allocation3], 1
    %12084 = vsyncpa %s12083, 1
    %12085 = vsyncpa [#allocation5], 1
    %12086 = vsyncpa [#allocation8], 1
    %12087 = vsyncpa [#allocation11], 1
    %12088 = vsyncpa [#allocation14], 1
    %s12089 = scalar_lea.sflag [#allocation14], 1
    %12090 = vsyncpa %s12089, 1

</llo_original>
